<compile_context>
chip_gen: v7x
topology: tpu7x:2x2x1
jax: 0.10.0
libtpu: 0.0.40
codegen_flags: <defaults>
</compile_context>

<pallas_src>
import numpy as np
import jax
import jax.numpy as jnp
from jax.experimental import pallas as pl
from jax.experimental.pallas import tpu as pltpu

TB = 32        # images per grid step
KSZ = 5        # conv kernel size
PAD_ROWS = 8   # zero rows appended to the staged pool1 output (kh-tap overrun)


# ----------------------------------------------------------------------------
# Host-side parameter repacking (done once, outside the forward hot path)
# ----------------------------------------------------------------------------
def _band_conv_weights(w, w_in):
    """PyTorch conv weight [Cout,Cin,K,K] -> per-kh banded matmul weights.

    Returns B of shape [K, W_in*Cin, W_out*Cout] with
      B[kh, wi*Cin+ci, wo*Cout+co] = w[co, ci, kh, wi-wo]   (0 <= wi-wo < K)
    so that, with A_kh[(b,h), wi*Cin+ci] = act[b, h+kh, wi, ci],
      conv_out[(b,h), wo*Cout+co] = sum_kh  A_kh @ B[kh].
    """
    cout, cin, k, _ = w.shape
    w_out = w_in - k + 1
    kw = np.arange(k)[:, None, None]
    wi = np.arange(w_in)[None, :, None]
    wo = np.arange(w_out)[None, None, :]
    sel = jnp.asarray((wi == wo + kw).astype(np.float32))             # [K, W_in, W_out]
    # band[kh, wi, ci, wo, co] = w[co, ci, kh, wi-wo]
    band = jnp.einsum("qio,cdhq->hidoc", sel, w.astype(jnp.float32))
    return band.reshape(k, w_in * cin, w_out * cout)


def _pool_w_matrix(w_in, c):
    """0/1 matrix summing adjacent W pairs along the (w, c) lane axis."""
    w_out = w_in // 2
    wi = np.arange(w_in)[:, None, None, None]
    ci = np.arange(c)[None, :, None, None]
    wo = np.arange(w_out)[None, None, :, None]
    co = np.arange(c)[None, None, None, :]
    m = ((ci == co) & (wi // 2 == wo)).astype(np.float32)
    return m.reshape(w_in * c, w_out * c)


def _pool_h_matrix(tb, h_grid, h_out, pad_rows=0):
    """[tb*h_out + pad_rows, tb*h_grid] matrix: 0.25 where the batch matches
    and h_in in {2*h_out, 2*h_out+1}.  Drops dead/bled conv rows and appends
    `pad_rows` all-zero rows (so the consumer can stage it with an overrun
    margin).  The 0.25 average-pool scale is folded in here."""
    r = np.arange(tb * h_out)
    s = np.arange(tb * h_grid)
    b_r, h_o = r // h_out, r % h_out
    b_s, h_i = s // h_grid, s % h_grid
    m = (b_r[:, None] == b_s[None, :]) & ((h_i[None, :] // 2) == h_o[:, None])
    m = 0.25 * m.astype(np.float32)
    if pad_rows:
        m = np.concatenate([m, np.zeros((pad_rows, m.shape[1]), np.float32)], 0)
    return m


def _gather_row_matrices(tb, h_grid, k):
    """sel[kh, b, b*h_grid + kh] = 1: gathers conv3's kh-th input row per image."""
    out = np.zeros((k, tb, tb * h_grid), np.float32)
    for kh in range(k):
        out[kh, np.arange(tb), np.arange(tb) * h_grid + kh] = 1.0
    return out


def preprocess_params(params, batch_tile=TB):
    bf, f32 = jnp.bfloat16, jnp.float32

    def tiled_bias(b, w_out):
        return jnp.tile(b, w_out).reshape(1, -1).astype(f32)

    w1 = _band_conv_weights(params["conv1_w"], 32)        # [5, 32, 168]
    w2 = _band_conv_weights(params["conv2_w"], 14)        # [5, 84, 160]
    w3 = _band_conv_weights(params["conv3_w"], 5)         # [5, 80, 120]
    return {
        # conv1: the 5 kh taps are concatenated along K (input is im2col'd on host)
        "c1w": w1.reshape(KSZ * 32, 28 * 6).astype(bf),                    # [160, 168]
        "c1b": tiled_bias(params["conv1_b"], 28),                          # [1, 168]
        "pw1": jnp.asarray(_pool_w_matrix(28, 6), bf),                     # [168, 84]
        "ph1": jnp.asarray(_pool_h_matrix(batch_tile, 32, 14, PAD_ROWS), bf),
        "c2w": w2.astype(bf),                                              # [5, 84, 160]
        "c2b": tiled_bias(params["conv2_b"], 10),                          # [1, 160]
        "pw2": jnp.asarray(_pool_w_matrix(10, 16), bf),                    # [160, 80]
        "ph2": jnp.asarray(_pool_h_matrix(batch_tile, 14, 5), bf),         # [TB*5, TB*14]
        "sel3": jnp.asarray(_gather_row_matrices(batch_tile, 5, KSZ), bf), # [5, TB, TB*5]
        "c3w": w3.astype(bf),                                              # [5, 80, 120]
        "c3b": tiled_bias(params["conv3_b"], 1),                           # [1, 120]
        "f1w": params["fc1_w"].T.astype(bf),                               # [120, 84]
        "f1b": params["fc1_b"].reshape(1, 84).astype(f32),
        "f2w": jnp.pad(params["fc2_w"].T, ((0, 0), (0, 118))).astype(bf),  # [84, 128]
        "f2b": jnp.pad(params["fc2_b"], (0, 118)).reshape(1, 128).astype(f32),
    }


# ----------------------------------------------------------------------------
# The fused Pallas kernel (one batch tile per grid step)
# ----------------------------------------------------------------------------
def _lenet5_kernel(x_ref,
                   c1w_ref, c1b_ref, pw1_ref, ph1_ref,
                   c2w_ref, c2b_ref, pw2_ref, ph2_ref,
                   sel3_ref, c3w_ref, c3b_ref,
                   f1w_ref, f1b_ref, f2w_ref, f2b_ref,
                   o_ref, p1_buf):
    f32, bf = jnp.float32, jnp.bfloat16

    def mxu(a, b):
        return jnp.dot(a.astype(bf), b.astype(bf), preferred_element_type=f32)

    m2 = ph2_ref.shape[1]                      # TB*14 : conv2-grid rows per tile

    # conv1 + tanh: input was im2col'd over kh host-side -> one K=160 matmul.
    a1 = jnp.tanh(mxu(x_ref[...], c1w_ref[...]) + c1b_ref[...])         # [TB*32, 168]

    # pool1 (2x2 avg): W pairs via a lane-side matmul; H pairs + dropping the
    # dead conv rows (0.25 folded in) via a row-side matmul.  The result is
    # staged in VMEM with 8 trailing zero rows so conv2's kh taps can overrun.
    t1 = mxu(a1, pw1_ref[...])                                           # [TB*32, 84]
    p1_buf[...] = mxu(ph1_ref[...], t1)                                  # [TB*14+8, 84]

    # conv2 + tanh: each kh tap is a row-offset read of the staged activation
    # (replaces the O(TB^2) SEL shift matmuls); rows that bleed across images
    # are dropped later by ph2.
    z2 = c2b_ref[...]
    for kh in range(KSZ):
        z2 = z2 + mxu(p1_buf[pl.ds(kh, m2), :], c2w_ref[kh])
    a2 = jnp.tanh(z2)                                                    # [TB*14, 160]

    # pool2 (2x2 avg)
    t2 = mxu(a2, pw2_ref[...])                                           # [TB*14, 80]
    p2 = mxu(ph2_ref[...], t2)                                           # [TB*5, 80]
    p2b = p2.astype(bf)                                                  # cast hoisted out of the kh loop

    # conv3 + tanh: one valid 5x5 window per image; gather its kh-th row with
    # a tiny 0/1 matmul so the result is already batch-compact ([TB, 120]).
    z3 = c3b_ref[...]
    for kh in range(KSZ):
        z3 = z3 + mxu(mxu(sel3_ref[kh], p2b), c3w_ref[kh])
    a3 = jnp.tanh(z3)                                                    # [TB, 120]

    # fc1 + tanh, fc2 (padded to 128 lanes -> lane-dense HBM store).
    a4 = jnp.tanh(mxu(a3, f1w_ref[...]) + f1b_ref[...])                  # [TB, 84]
    o_ref[...] = (mxu(a4, f2w_ref[...]) + f2b_ref[...]).astype(o_ref.dtype)   # [TB, 128]


def lenet5_forward(x, prepped):
    """x: [B, 1, 28, 28] f32 (NCHW, like PyTorch) -> logits [B, 10] f32."""
    B = x.shape[0]
    tb = prepped["sel3"].shape[1]                         # static batch tile
    b_pad = -(-B // tb) * tb

    # Layout-only host prep: conv1 "same" padding, batch padding to the tile,
    # im2col over kh (5 H-shifted copies stacked on the lane axis), bf16.
    xp = jnp.pad(x.reshape(B, 28, 28), ((0, b_pad - B), (2, 2), (2, 2)))   # [b_pad,32,32]
    xp = jnp.pad(xp, ((0, 0), (0, KSZ - 1), (0, 0)))                        # [b_pad,36,32]
    xcat = jnp.stack([xp[:, kh:kh + 32, :] for kh in range(KSZ)], axis=2)   # [b_pad,32,5,32]
    xcat = xcat.reshape(b_pad * 32, KSZ * 32).astype(jnp.bfloat16)

    consts = (prepped["c1w"], prepped["c1b"], prepped["pw1"], prepped["ph1"],
              prepped["c2w"], prepped["c2b"], prepped["pw2"], prepped["ph2"],
              prepped["sel3"], prepped["c3w"], prepped["c3b"],
              prepped["f1w"], prepped["f1b"], prepped["f2w"], prepped["f2b"])

    def const_spec(a):
        nd = a.ndim

        def index_map(i):
            return (0,) * nd

        return pl.BlockSpec(a.shape, index_map)            # resident: fetched once

    out = pl.pallas_call(
        _lenet5_kernel,
        out_shape=jax.ShapeDtypeStruct((b_pad, 128), jnp.float32),
        grid=(b_pad // tb,),
        in_specs=[pl.BlockSpec((tb * 32, KSZ * 32), lambda i: (i, 0))]
                 + [const_spec(a) for a in consts],
        out_specs=pl.BlockSpec((tb, 128), lambda i: (i, 0)),
        scratch_shapes=[pltpu.VMEM((tb * 14 + PAD_ROWS, 84), jnp.float32)],
        compiler_params=pltpu.CompilerParams(
            dimension_semantics=("parallel",),
            vmem_limit_bytes=32 * 1024 * 1024),
    )(xcat, *consts)
    return out[:B, :10]


# ----------------------------------------------------------------------------
# Params + pure-XLA reference (numerical sanity check)
# ----------------------------------------------------------------------------
def init_params(key):
    ks = jax.random.split(key, 10)
    s = 0.1
    return {
        "conv1_w": jax.random.normal(ks[0], (6, 1, 5, 5), jnp.float32) * s,
        "conv1_b": jax.random.normal(ks[1], (6,), jnp.float32) * s,
        "conv2_w": jax.random.normal(ks[2], (16, 6, 5, 5), jnp.float32) * s,
        "conv2_b": jax.random.normal(ks[3], (16,), jnp.float32) * s,
        "conv3_w": jax.random.normal(ks[4], (120, 16, 5, 5), jnp.float32) * s,
        "conv3_b": jax.random.normal(ks[5], (120,), jnp.float32) * s,
        "fc1_w": jax.random.normal(ks[6], (84, 120), jnp.float32) * s,   # PyTorch [out, in]
        "fc1_b": jax.random.normal(ks[7], (84,), jnp.float32) * s,
        "fc2_w": jax.random.normal(ks[8], (10, 84), jnp.float32) * s,
        "fc2_b": jax.random.normal(ks[9], (10,), jnp.float32) * s,
    }


def reference_forward(x, params):
    dn = ("NCHW", "OIHW", "NCHW")

    def conv(v, w, b, pad):
        y = jax.lax.conv_general_dilated(
            v, w, window_strides=(1, 1),
            padding=[(pad, pad), (pad, pad)], dimension_numbers=dn)
        return jnp.tanh(y + b[None, :, None, None])

    def pool(v):
        return jax.lax.reduce_window(
            v, 0.0, jax.lax.add, (1, 1, 2, 2), (1, 1, 2, 2), "VALID") * 0.25

    v = pool(conv(x, params["conv1_w"], params["conv1_b"], 2))
    v = pool(conv(v, params["conv2_w"], params["conv2_b"], 0))
    v = conv(v, params["conv3_w"], params["conv3_b"], 0)
    v = v.reshape(v.shape[0], -1)
    v = jnp.tanh(v @ params["fc1_w"].T + params["fc1_b"])
    return v @ params["fc2_w"].T + params["fc2_b"]


if __name__ == "__main__":
    key = jax.random.PRNGKey(0)
    k_x, k_p = jax.random.split(key)

    batch = 2                       # LeNet5 geometry fixes the input at 1x28x28
    x = jax.random.normal(k_x, (batch, 1, 28, 28), jnp.float32)
    params = init_params(k_p)

    prepped = preprocess_params(params)          # one-time weight repacking
    fwd = jax.jit(lenet5_forward)
    out = fwd(x, prepped)
    jax.block_until_ready(out)
    assert out.shape == (batch, 10), out.shape

    # sanity check against plain XLA (bf16 MXU inputs -> tolerance scaled)
    ref = reference_forward(x, params)
    err = float(jnp.max(jnp.abs(out - ref)))
    tol = 0.04 + 0.04 * float(jnp.max(jnp.abs(ref)))
    assert err <= tol, (err, tol)

    print("KERNEL_OK")
</pallas_src>

<mosaic_0001>
module attributes {stable_mosaic.version = 11 : i64} {
  func.func @_lenet5_kernel(%arg0: i32, %arg1: memref<1024x160xbf16, #tpu.memory_space<vmem>>, %arg2: memref<160x168xbf16, #tpu.memory_space<vmem>>, %arg3: memref<1x168xf32, #tpu.memory_space<vmem>>, %arg4: memref<168x84xbf16, #tpu.memory_space<vmem>>, %arg5: memref<456x1024xbf16, #tpu.memory_space<vmem>>, %arg6: memref<5x84x160xbf16, #tpu.memory_space<vmem>>, %arg7: memref<1x160xf32, #tpu.memory_space<vmem>>, %arg8: memref<160x80xbf16, #tpu.memory_space<vmem>>, %arg9: memref<160x448xbf16, #tpu.memory_space<vmem>>, %arg10: memref<5x32x160xbf16, #tpu.memory_space<vmem>>, %arg11: memref<5x80x120xbf16, #tpu.memory_space<vmem>>, %arg12: memref<1x120xf32, #tpu.memory_space<vmem>>, %arg13: memref<120x84xbf16, #tpu.memory_space<vmem>>, %arg14: memref<1x84xf32, #tpu.memory_space<vmem>>, %arg15: memref<84x128xbf16, #tpu.memory_space<vmem>>, %arg16: memref<1x128xf32, #tpu.memory_space<vmem>>, %arg17: memref<32x128xf32, #tpu.memory_space<vmem>>, %arg18: memref<456x84xf32, #tpu.memory_space<vmem>>) attributes {dimension_semantics = [#tpu.dimension_semantics<parallel>], iteration_bounds = array<i64: 1>, scalar_prefetch = 0 : i64, scratch_operands = 1 : i64, tpu.core_type = #tpu.core_type<tc>, window_params = [{transform_indices = @transform_0, window_bounds = array<i64: 1024, 160>}, {pipeline_mode = #tpu.pipeline_mode<synchronous>, transform_indices = @transform_1, window_bounds = array<i64: 160, 168>}, {pipeline_mode = #tpu.pipeline_mode<synchronous>, transform_indices = @transform_2, window_bounds = array<i64: 1, 168>}, {pipeline_mode = #tpu.pipeline_mode<synchronous>, transform_indices = @transform_3, window_bounds = array<i64: 168, 84>}, {pipeline_mode = #tpu.pipeline_mode<synchronous>, transform_indices = @transform_4, window_bounds = array<i64: 456, 1024>}, {pipeline_mode = #tpu.pipeline_mode<synchronous>, transform_indices = @transform_5, window_bounds = array<i64: 5, 84, 160>}, {pipeline_mode = #tpu.pipeline_mode<synchronous>, transform_indices = @transform_6, window_bounds = array<i64: 1, 160>}, {pipeline_mode = #tpu.pipeline_mode<synchronous>, transform_indices = @transform_7, window_bounds = array<i64: 160, 80>}, {pipeline_mode = #tpu.pipeline_mode<synchronous>, transform_indices = @transform_8, window_bounds = array<i64: 160, 448>}, {pipeline_mode = #tpu.pipeline_mode<synchronous>, transform_indices = @transform_9, window_bounds = array<i64: 5, 32, 160>}, {pipeline_mode = #tpu.pipeline_mode<synchronous>, transform_indices = @transform_10, window_bounds = array<i64: 5, 80, 120>}, {pipeline_mode = #tpu.pipeline_mode<synchronous>, transform_indices = @transform_11, window_bounds = array<i64: 1, 120>}, {pipeline_mode = #tpu.pipeline_mode<synchronous>, transform_indices = @transform_12, window_bounds = array<i64: 120, 84>}, {pipeline_mode = #tpu.pipeline_mode<synchronous>, transform_indices = @transform_13, window_bounds = array<i64: 1, 84>}, {pipeline_mode = #tpu.pipeline_mode<synchronous>, transform_indices = @transform_14, window_bounds = array<i64: 84, 128>}, {pipeline_mode = #tpu.pipeline_mode<synchronous>, transform_indices = @transform_15, window_bounds = array<i64: 1, 128>}, {transform_indices = @transform_16, window_bounds = array<i64: 32, 128>}]} {
    %c0 = arith.constant 0 : index
    %c0_0 = arith.constant 0 : index
    %0 = vector.load %arg1[%c0, %c0_0] : memref<1024x160xbf16, #tpu.memory_space<vmem>>, vector<1024x160xbf16>
    %c0_1 = arith.constant 0 : index
    %c0_2 = arith.constant 0 : index
    %1 = vector.load %arg2[%c0_1, %c0_2] : memref<160x168xbf16, #tpu.memory_space<vmem>>, vector<160x168xbf16>
    %cst = arith.constant dense<0.000000e+00> : vector<1024x168xf32>
    %2 = tpu.matmul %0, %1, %cst {dimension_numbers = #tpu.dot_dimension_numbers<[1], [0], [0], [1], [0, 0, 1, 1], [], []>} : vector<1024x160xbf16>, vector<160x168xbf16>, vector<1024x168xf32> -> vector<1024x168xf32>
    %c0_3 = arith.constant 0 : index
    %c0_4 = arith.constant 0 : index
    %3 = vector.load %arg3[%c0_3, %c0_4] : memref<1x168xf32, #tpu.memory_space<vmem>>, vector<1x168xf32>
    %4 = vector.broadcast %3 : vector<1x168xf32> to vector<1024x168xf32>
    %5 = arith.addf %2, %4 : vector<1024x168xf32>
    %6 = math.tanh %5 : vector<1024x168xf32>
    %c0_5 = arith.constant 0 : index
    %c0_6 = arith.constant 0 : index
    %7 = vector.load %arg4[%c0_5, %c0_6] : memref<168x84xbf16, #tpu.memory_space<vmem>>, vector<168x84xbf16>
    %8 = arith.truncf %6 : vector<1024x168xf32> to vector<1024x168xbf16>
    %cst_7 = arith.constant dense<0.000000e+00> : vector<1024x84xf32>
    %9 = tpu.matmul %8, %7, %cst_7 {dimension_numbers = #tpu.dot_dimension_numbers<[1], [0], [0], [1], [0, 0, 1, 1], [], []>} : vector<1024x168xbf16>, vector<168x84xbf16>, vector<1024x84xf32> -> vector<1024x84xf32>
    %c0_8 = arith.constant 0 : index
    %c0_9 = arith.constant 0 : index
    %10 = vector.load %arg5[%c0_8, %c0_9] : memref<456x1024xbf16, #tpu.memory_space<vmem>>, vector<456x1024xbf16>
    %11 = arith.truncf %9 : vector<1024x84xf32> to vector<1024x84xbf16>
    %cst_10 = arith.constant dense<0.000000e+00> : vector<456x84xf32>
    %12 = tpu.matmul %10, %11, %cst_10 {dimension_numbers = #tpu.dot_dimension_numbers<[1], [0], [0], [1], [0, 0, 1, 1], [], []>} : vector<456x1024xbf16>, vector<1024x84xbf16>, vector<456x84xf32> -> vector<456x84xf32>
    %c0_11 = arith.constant 0 : index
    %c0_12 = arith.constant 0 : index
    %13 = vector.load %arg18[%c0_11, %c0_12] : memref<456x84xf32, #tpu.memory_space<vmem>>, vector<456x84xf32>
    tpu.vector_store %arg18[%c0_11, %c0_12], %12 {strides = array<i32>} : memref<456x84xf32, #tpu.memory_space<vmem>>, vector<456x84xf32>,
    %c0_13 = arith.constant 0 : index
    %c0_14 = arith.constant 0 : index
    %14 = vector.load %arg7[%c0_13, %c0_14] : memref<1x160xf32, #tpu.memory_space<vmem>>, vector<1x160xf32>
    %c0_15 = arith.constant 0 : index
    %c0_16 = arith.constant 0 : index
    %15 = vector.load %arg18[%c0_15, %c0_16] : memref<456x84xf32, #tpu.memory_space<vmem>>, vector<448x84xf32>
    %c0_17 = arith.constant 0 : index
    %c0_18 = arith.constant 0 : index
    %c0_19 = arith.constant 0 : index
    %16 = vector.load %arg6[%c0_17, %c0_18, %c0_19] : memref<5x84x160xbf16, #tpu.memory_space<vmem>>, vector<1x84x160xbf16>
    %17 = vector.shape_cast %16 : vector<1x84x160xbf16> to vector<84x160xbf16>
    %18 = arith.truncf %15 : vector<448x84xf32> to vector<448x84xbf16>
    %cst_20 = arith.constant dense<0.000000e+00> : vector<448x160xf32>
    %19 = tpu.matmul %18, %17, %cst_20 {dimension_numbers = #tpu.dot_dimension_numbers<[1], [0], [0], [1], [0, 0, 1, 1], [], []>} : vector<448x84xbf16>, vector<84x160xbf16>, vector<448x160xf32> -> vector<448x160xf32>
    %20 = vector.broadcast %14 : vector<1x160xf32> to vector<448x160xf32>
    %21 = arith.addf %20, %19 : vector<448x160xf32>
    %c1 = arith.constant 1 : index
    %c0_21 = arith.constant 0 : index
    %22 = vector.load %arg18[%c1, %c0_21] : memref<456x84xf32, #tpu.memory_space<vmem>>, vector<448x84xf32>
    %c1_22 = arith.constant 1 : index
    %c0_23 = arith.constant 0 : index
    %c0_24 = arith.constant 0 : index
    %23 = vector.load %arg6[%c1_22, %c0_23, %c0_24] : memref<5x84x160xbf16, #tpu.memory_space<vmem>>, vector<1x84x160xbf16>
    %24 = vector.shape_cast %23 : vector<1x84x160xbf16> to vector<84x160xbf16>
    %25 = arith.truncf %22 : vector<448x84xf32> to vector<448x84xbf16>
    %cst_25 = arith.constant dense<0.000000e+00> : vector<448x160xf32>
    %26 = tpu.matmul %25, %24, %cst_25 {dimension_numbers = #tpu.dot_dimension_numbers<[1], [0], [0], [1], [0, 0, 1, 1], [], []>} : vector<448x84xbf16>, vector<84x160xbf16>, vector<448x160xf32> -> vector<448x160xf32>
    %27 = arith.addf %21, %26 : vector<448x160xf32>
    %c2 = arith.constant 2 : index
    %c0_26 = arith.constant 0 : index
    %28 = vector.load %arg18[%c2, %c0_26] : memref<456x84xf32, #tpu.memory_space<vmem>>, vector<448x84xf32>
    %c2_27 = arith.constant 2 : index
    %c0_28 = arith.constant 0 : index
    %c0_29 = arith.constant 0 : index
    %29 = vector.load %arg6[%c2_27, %c0_28, %c0_29] : memref<5x84x160xbf16, #tpu.memory_space<vmem>>, vector<1x84x160xbf16>
    %30 = vector.shape_cast %29 : vector<1x84x160xbf16> to vector<84x160xbf16>
    %31 = arith.truncf %28 : vector<448x84xf32> to vector<448x84xbf16>
    %cst_30 = arith.constant dense<0.000000e+00> : vector<448x160xf32>
    %32 = tpu.matmul %31, %30, %cst_30 {dimension_numbers = #tpu.dot_dimension_numbers<[1], [0], [0], [1], [0, 0, 1, 1], [], []>} : vector<448x84xbf16>, vector<84x160xbf16>, vector<448x160xf32> -> vector<448x160xf32>
    %33 = arith.addf %27, %32 : vector<448x160xf32>
    %c3 = arith.constant 3 : index
    %c0_31 = arith.constant 0 : index
    %34 = vector.load %arg18[%c3, %c0_31] : memref<456x84xf32, #tpu.memory_space<vmem>>, vector<448x84xf32>
    %c3_32 = arith.constant 3 : index
    %c0_33 = arith.constant 0 : index
    %c0_34 = arith.constant 0 : index
    %35 = vector.load %arg6[%c3_32, %c0_33, %c0_34] : memref<5x84x160xbf16, #tpu.memory_space<vmem>>, vector<1x84x160xbf16>
    %36 = vector.shape_cast %35 : vector<1x84x160xbf16> to vector<84x160xbf16>
    %37 = arith.truncf %34 : vector<448x84xf32> to vector<448x84xbf16>
    %cst_35 = arith.constant dense<0.000000e+00> : vector<448x160xf32>
    %38 = tpu.matmul %37, %36, %cst_35 {dimension_numbers = #tpu.dot_dimension_numbers<[1], [0], [0], [1], [0, 0, 1, 1], [], []>} : vector<448x84xbf16>, vector<84x160xbf16>, vector<448x160xf32> -> vector<448x160xf32>
    %39 = arith.addf %33, %38 : vector<448x160xf32>
    %c4 = arith.constant 4 : index
    %c0_36 = arith.constant 0 : index
    %40 = vector.load %arg18[%c4, %c0_36] : memref<456x84xf32, #tpu.memory_space<vmem>>, vector<448x84xf32>
    %c4_37 = arith.constant 4 : index
    %c0_38 = arith.constant 0 : index
    %c0_39 = arith.constant 0 : index
    %41 = vector.load %arg6[%c4_37, %c0_38, %c0_39] : memref<5x84x160xbf16, #tpu.memory_space<vmem>>, vector<1x84x160xbf16>
    %42 = vector.shape_cast %41 : vector<1x84x160xbf16> to vector<84x160xbf16>
    %43 = arith.truncf %40 : vector<448x84xf32> to vector<448x84xbf16>
    %cst_40 = arith.constant dense<0.000000e+00> : vector<448x160xf32>
    %44 = tpu.matmul %43, %42, %cst_40 {dimension_numbers = #tpu.dot_dimension_numbers<[1], [0], [0], [1], [0, 0, 1, 1], [], []>} : vector<448x84xbf16>, vector<84x160xbf16>, vector<448x160xf32> -> vector<448x160xf32>
    %45 = arith.addf %39, %44 : vector<448x160xf32>
    %46 = math.tanh %45 : vector<448x160xf32>
    %c0_41 = arith.constant 0 : index
    %c0_42 = arith.constant 0 : index
    %47 = vector.load %arg8[%c0_41, %c0_42] : memref<160x80xbf16, #tpu.memory_space<vmem>>, vector<160x80xbf16>
    %48 = arith.truncf %46 : vector<448x160xf32> to vector<448x160xbf16>
    %cst_43 = arith.constant dense<0.000000e+00> : vector<448x80xf32>
    %49 = tpu.matmul %48, %47, %cst_43 {dimension_numbers = #tpu.dot_dimension_numbers<[1], [0], [0], [1], [0, 0, 1, 1], [], []>} : vector<448x160xbf16>, vector<160x80xbf16>, vector<448x80xf32> -> vector<448x80xf32>
    %c0_44 = arith.constant 0 : index
    %c0_45 = arith.constant 0 : index
    %50 = vector.load %arg9[%c0_44, %c0_45] : memref<160x448xbf16, #tpu.memory_space<vmem>>, vector<160x448xbf16>
    %51 = arith.truncf %49 : vector<448x80xf32> to vector<448x80xbf16>
    %cst_46 = arith.constant dense<0.000000e+00> : vector<160x80xf32>
    %52 = tpu.matmul %50, %51, %cst_46 {dimension_numbers = #tpu.dot_dimension_numbers<[1], [0], [0], [1], [0, 0, 1, 1], [], []>} : vector<160x448xbf16>, vector<448x80xbf16>, vector<160x80xf32> -> vector<160x80xf32>
    %53 = arith.truncf %52 : vector<160x80xf32> to vector<160x80xbf16>
    %c0_47 = arith.constant 0 : index
    %c0_48 = arith.constant 0 : index
    %54 = vector.load %arg12[%c0_47, %c0_48] : memref<1x120xf32, #tpu.memory_space<vmem>>, vector<1x120xf32>
    %c0_49 = arith.constant 0 : index
    %c0_50 = arith.constant 0 : index
    %c0_51 = arith.constant 0 : index
    %55 = vector.load %arg10[%c0_49, %c0_50, %c0_51] : memref<5x32x160xbf16, #tpu.memory_space<vmem>>, vector<1x32x160xbf16>
    %56 = vector.shape_cast %55 : vector<1x32x160xbf16> to vector<32x160xbf16>
    %cst_52 = arith.constant dense<0.000000e+00> : vector<32x80xf32>
    %57 = tpu.matmul %56, %53, %cst_52 {dimension_numbers = #tpu.dot_dimension_numbers<[1], [0], [0], [1], [0, 0, 1, 1], [], []>} : vector<32x160xbf16>, vector<160x80xbf16>, vector<32x80xf32> -> vector<32x80xf32>
    %c0_53 = arith.constant 0 : index
    %c0_54 = arith.constant 0 : index
    %c0_55 = arith.constant 0 : index
    %58 = vector.load %arg11[%c0_53, %c0_54, %c0_55] : memref<5x80x120xbf16, #tpu.memory_space<vmem>>, vector<1x80x120xbf16>
    %59 = vector.shape_cast %58 : vector<1x80x120xbf16> to vector<80x120xbf16>
    %60 = arith.truncf %57 : vector<32x80xf32> to vector<32x80xbf16>
    %cst_56 = arith.constant dense<0.000000e+00> : vector<32x120xf32>
    %61 = tpu.matmul %60, %59, %cst_56 {dimension_numbers = #tpu.dot_dimension_numbers<[1], [0], [0], [1], [0, 0, 1, 1], [], []>} : vector<32x80xbf16>, vector<80x120xbf16>, vector<32x120xf32> -> vector<32x120xf32>
    %62 = vector.broadcast %54 : vector<1x120xf32> to vector<32x120xf32>
    %63 = arith.addf %62, %61 : vector<32x120xf32>
    %c1_57 = arith.constant 1 : index
    %c0_58 = arith.constant 0 : index
    %c0_59 = arith.constant 0 : index
    %64 = vector.load %arg10[%c1_57, %c0_58, %c0_59] : memref<5x32x160xbf16, #tpu.memory_space<vmem>>, vector<1x32x160xbf16>
    %65 = vector.shape_cast %64 : vector<1x32x160xbf16> to vector<32x160xbf16>
    %cst_60 = arith.constant dense<0.000000e+00> : vector<32x80xf32>
    %66 = tpu.matmul %65, %53, %cst_60 {dimension_numbers = #tpu.dot_dimension_numbers<[1], [0], [0], [1], [0, 0, 1, 1], [], []>} : vector<32x160xbf16>, vector<160x80xbf16>, vector<32x80xf32> -> vector<32x80xf32>
    %c1_61 = arith.constant 1 : index
    %c0_62 = arith.constant 0 : index
    %c0_63 = arith.constant 0 : index
    %67 = vector.load %arg11[%c1_61, %c0_62, %c0_63] : memref<5x80x120xbf16, #tpu.memory_space<vmem>>, vector<1x80x120xbf16>
    %68 = vector.shape_cast %67 : vector<1x80x120xbf16> to vector<80x120xbf16>
    %69 = arith.truncf %66 : vector<32x80xf32> to vector<32x80xbf16>
    %cst_64 = arith.constant dense<0.000000e+00> : vector<32x120xf32>
    %70 = tpu.matmul %69, %68, %cst_64 {dimension_numbers = #tpu.dot_dimension_numbers<[1], [0], [0], [1], [0, 0, 1, 1], [], []>} : vector<32x80xbf16>, vector<80x120xbf16>, vector<32x120xf32> -> vector<32x120xf32>
    %71 = arith.addf %63, %70 : vector<32x120xf32>
    %c2_65 = arith.constant 2 : index
    %c0_66 = arith.constant 0 : index
    %c0_67 = arith.constant 0 : index
    %72 = vector.load %arg10[%c2_65, %c0_66, %c0_67] : memref<5x32x160xbf16, #tpu.memory_space<vmem>>, vector<1x32x160xbf16>
    %73 = vector.shape_cast %72 : vector<1x32x160xbf16> to vector<32x160xbf16>
    %cst_68 = arith.constant dense<0.000000e+00> : vector<32x80xf32>
    %74 = tpu.matmul %73, %53, %cst_68 {dimension_numbers = #tpu.dot_dimension_numbers<[1], [0], [0], [1], [0, 0, 1, 1], [], []>} : vector<32x160xbf16>, vector<160x80xbf16>, vector<32x80xf32> -> vector<32x80xf32>
    %c2_69 = arith.constant 2 : index
    %c0_70 = arith.constant 0 : index
    %c0_71 = arith.constant 0 : index
    %75 = vector.load %arg11[%c2_69, %c0_70, %c0_71] : memref<5x80x120xbf16, #tpu.memory_space<vmem>>, vector<1x80x120xbf16>
    %76 = vector.shape_cast %75 : vector<1x80x120xbf16> to vector<80x120xbf16>
    %77 = arith.truncf %74 : vector<32x80xf32> to vector<32x80xbf16>
    %cst_72 = arith.constant dense<0.000000e+00> : vector<32x120xf32>
    %78 = tpu.matmul %77, %76, %cst_72 {dimension_numbers = #tpu.dot_dimension_numbers<[1], [0], [0], [1], [0, 0, 1, 1], [], []>} : vector<32x80xbf16>, vector<80x120xbf16>, vector<32x120xf32> -> vector<32x120xf32>
    %79 = arith.addf %71, %78 : vector<32x120xf32>
    %c3_73 = arith.constant 3 : index
    %c0_74 = arith.constant 0 : index
    %c0_75 = arith.constant 0 : index
    %80 = vector.load %arg10[%c3_73, %c0_74, %c0_75] : memref<5x32x160xbf16, #tpu.memory_space<vmem>>, vector<1x32x160xbf16>
    %81 = vector.shape_cast %80 : vector<1x32x160xbf16> to vector<32x160xbf16>
    %cst_76 = arith.constant dense<0.000000e+00> : vector<32x80xf32>
    %82 = tpu.matmul %81, %53, %cst_76 {dimension_numbers = #tpu.dot_dimension_numbers<[1], [0], [0], [1], [0, 0, 1, 1], [], []>} : vector<32x160xbf16>, vector<160x80xbf16>, vector<32x80xf32> -> vector<32x80xf32>
    %c3_77 = arith.constant 3 : index
    %c0_78 = arith.constant 0 : index
    %c0_79 = arith.constant 0 : index
    %83 = vector.load %arg11[%c3_77, %c0_78, %c0_79] : memref<5x80x120xbf16, #tpu.memory_space<vmem>>, vector<1x80x120xbf16>
    %84 = vector.shape_cast %83 : vector<1x80x120xbf16> to vector<80x120xbf16>
    %85 = arith.truncf %82 : vector<32x80xf32> to vector<32x80xbf16>
    %cst_80 = arith.constant dense<0.000000e+00> : vector<32x120xf32>
    %86 = tpu.matmul %85, %84, %cst_80 {dimension_numbers = #tpu.dot_dimension_numbers<[1], [0], [0], [1], [0, 0, 1, 1], [], []>} : vector<32x80xbf16>, vector<80x120xbf16>, vector<32x120xf32> -> vector<32x120xf32>
    %87 = arith.addf %79, %86 : vector<32x120xf32>
    %c4_81 = arith.constant 4 : index
    %c0_82 = arith.constant 0 : index
    %c0_83 = arith.constant 0 : index
    %88 = vector.load %arg10[%c4_81, %c0_82, %c0_83] : memref<5x32x160xbf16, #tpu.memory_space<vmem>>, vector<1x32x160xbf16>
    %89 = vector.shape_cast %88 : vector<1x32x160xbf16> to vector<32x160xbf16>
    %cst_84 = arith.constant dense<0.000000e+00> : vector<32x80xf32>
    %90 = tpu.matmul %89, %53, %cst_84 {dimension_numbers = #tpu.dot_dimension_numbers<[1], [0], [0], [1], [0, 0, 1, 1], [], []>} : vector<32x160xbf16>, vector<160x80xbf16>, vector<32x80xf32> -> vector<32x80xf32>
    %c4_85 = arith.constant 4 : index
    %c0_86 = arith.constant 0 : index
    %c0_87 = arith.constant 0 : index
    %91 = vector.load %arg11[%c4_85, %c0_86, %c0_87] : memref<5x80x120xbf16, #tpu.memory_space<vmem>>, vector<1x80x120xbf16>
    %92 = vector.shape_cast %91 : vector<1x80x120xbf16> to vector<80x120xbf16>
    %93 = arith.truncf %90 : vector<32x80xf32> to vector<32x80xbf16>
    %cst_88 = arith.constant dense<0.000000e+00> : vector<32x120xf32>
    %94 = tpu.matmul %93, %92, %cst_88 {dimension_numbers = #tpu.dot_dimension_numbers<[1], [0], [0], [1], [0, 0, 1, 1], [], []>} : vector<32x80xbf16>, vector<80x120xbf16>, vector<32x120xf32> -> vector<32x120xf32>
    %95 = arith.addf %87, %94 : vector<32x120xf32>
    %96 = math.tanh %95 : vector<32x120xf32>
    %c0_89 = arith.constant 0 : index
    %c0_90 = arith.constant 0 : index
    %97 = vector.load %arg13[%c0_89, %c0_90] : memref<120x84xbf16, #tpu.memory_space<vmem>>, vector<120x84xbf16>
    %98 = arith.truncf %96 : vector<32x120xf32> to vector<32x120xbf16>
    %cst_91 = arith.constant dense<0.000000e+00> : vector<32x84xf32>
    %99 = tpu.matmul %98, %97, %cst_91 {dimension_numbers = #tpu.dot_dimension_numbers<[1], [0], [0], [1], [0, 0, 1, 1], [], []>} : vector<32x120xbf16>, vector<120x84xbf16>, vector<32x84xf32> -> vector<32x84xf32>
    %c0_92 = arith.constant 0 : index
    %c0_93 = arith.constant 0 : index
    %100 = vector.load %arg14[%c0_92, %c0_93] : memref<1x84xf32, #tpu.memory_space<vmem>>, vector<1x84xf32>
    %101 = vector.broadcast %100 : vector<1x84xf32> to vector<32x84xf32>
    %102 = arith.addf %99, %101 : vector<32x84xf32>
    %103 = math.tanh %102 : vector<32x84xf32>
    %c0_94 = arith.constant 0 : index
    %c0_95 = arith.constant 0 : index
    %104 = vector.load %arg15[%c0_94, %c0_95] : memref<84x128xbf16, #tpu.memory_space<vmem>>, vector<84x128xbf16>
    %105 = arith.truncf %103 : vector<32x84xf32> to vector<32x84xbf16>
    %cst_96 = arith.constant dense<0.000000e+00> : vector<32x128xf32>
    %106 = tpu.matmul %105, %104, %cst_96 {dimension_numbers = #tpu.dot_dimension_numbers<[1], [0], [0], [1], [0, 0, 1, 1], [], []>} : vector<32x84xbf16>, vector<84x128xbf16>, vector<32x128xf32> -> vector<32x128xf32>
    %c0_97 = arith.constant 0 : index
    %c0_98 = arith.constant 0 : index
    %107 = vector.load %arg16[%c0_97, %c0_98] : memref<1x128xf32, #tpu.memory_space<vmem>>, vector<1x128xf32>
    %108 = vector.broadcast %107 : vector<1x128xf32> to vector<32x128xf32>
    %109 = arith.addf %106, %108 : vector<32x128xf32>
    %c0_99 = arith.constant 0 : index
    %c0_100 = arith.constant 0 : index
    %110 = vector.load %arg17[%c0_99, %c0_100] : memref<32x128xf32, #tpu.memory_space<vmem>>, vector<32x128xf32>
    tpu.vector_store %arg17[%c0_99, %c0_100], %109 {strides = array<i32>} : memref<32x128xf32, #tpu.memory_space<vmem>>, vector<32x128xf32>,
    return
  }
  func.func @transform_0(%arg0: i32) -> (i32, i32) {
    %c0_i32 = arith.constant 0 : i32
    %c0_i32_0 = arith.constant 0 : i32
    return %arg0, %c0_i32 : i32, i32
  }
  func.func @transform_1(%arg0: i32) -> (i32, i32) {
    %c0_i32 = arith.constant 0 : i32
    %c0_i32_0 = arith.constant 0 : i32
    %c0_i32_1 = arith.constant 0 : i32
    return %c0_i32, %c0_i32_0 : i32, i32
  }
  func.func @transform_2(%arg0: i32) -> (i32, i32) {
    %c0_i32 = arith.constant 0 : i32
    %c0_i32_0 = arith.constant 0 : i32
    %c0_i32_1 = arith.constant 0 : i32
    return %c0_i32, %c0_i32_0 : i32, i32
  }
  func.func @transform_3(%arg0: i32) -> (i32, i32) {
    %c0_i32 = arith.constant 0 : i32
    %c0_i32_0 = arith.constant 0 : i32
    %c0_i32_1 = arith.constant 0 : i32
    return %c0_i32, %c0_i32_0 : i32, i32
  }
  func.func @transform_4(%arg0: i32) -> (i32, i32) {
    %c0_i32 = arith.constant 0 : i32
    %c0_i32_0 = arith.constant 0 : i32
    %c0_i32_1 = arith.constant 0 : i32
    return %c0_i32, %c0_i32_0 : i32, i32
  }
  func.func @transform_5(%arg0: i32) -> (i32, i32, i32) {
    %c0_i32 = arith.constant 0 : i32
    %c0_i32_0 = arith.constant 0 : i32
    %c0_i32_1 = arith.constant 0 : i32
    %c0_i32_2 = arith.constant 0 : i32
    return %c0_i32, %c0_i32_0, %c0_i32_1 : i32, i32, i32
  }
  func.func @transform_6(%arg0: i32) -> (i32, i32) {
    %c0_i32 = arith.constant 0 : i32
    %c0_i32_0 = arith.constant 0 : i32
    %c0_i32_1 = arith.constant 0 : i32
    return %c0_i32, %c0_i32_0 : i32, i32
  }
  func.func @transform_7(%arg0: i32) -> (i32, i32) {
    %c0_i32 = arith.constant 0 : i32
    %c0_i32_0 = arith.constant 0 : i32
    %c0_i32_1 = arith.constant 0 : i32
    return %c0_i32, %c0_i32_0 : i32, i32
  }
  func.func @transform_8(%arg0: i32) -> (i32, i32) {
    %c0_i32 = arith.constant 0 : i32
    %c0_i32_0 = arith.constant 0 : i32
    %c0_i32_1 = arith.constant 0 : i32
    return %c0_i32, %c0_i32_0 : i32, i32
  }
  func.func @transform_9(%arg0: i32) -> (i32, i32, i32) {
    %c0_i32 = arith.constant 0 : i32
    %c0_i32_0 = arith.constant 0 : i32
    %c0_i32_1 = arith.constant 0 : i32
    %c0_i32_2 = arith.constant 0 : i32
    return %c0_i32, %c0_i32_0, %c0_i32_1 : i32, i32, i32
  }
  func.func @transform_10(%arg0: i32) -> (i32, i32, i32) {
    %c0_i32 = arith.constant 0 : i32
    %c0_i32_0 = arith.constant 0 : i32
    %c0_i32_1 = arith.constant 0 : i32
    %c0_i32_2 = arith.constant 0 : i32
    return %c0_i32, %c0_i32_0, %c0_i32_1 : i32, i32, i32
  }
  func.func @transform_11(%arg0: i32) -> (i32, i32) {
    %c0_i32 = arith.constant 0 : i32
    %c0_i32_0 = arith.constant 0 : i32
    %c0_i32_1 = arith.constant 0 : i32
    return %c0_i32, %c0_i32_0 : i32, i32
  }
  func.func @transform_12(%arg0: i32) -> (i32, i32) {
    %c0_i32 = arith.constant 0 : i32
    %c0_i32_0 = arith.constant 0 : i32
    %c0_i32_1 = arith.constant 0 : i32
    return %c0_i32, %c0_i32_0 : i32, i32
  }
  func.func @transform_13(%arg0: i32) -> (i32, i32) {
    %c0_i32 = arith.constant 0 : i32
    %c0_i32_0 = arith.constant 0 : i32
    %c0_i32_1 = arith.constant 0 : i32
    return %c0_i32, %c0_i32_0 : i32, i32
  }
  func.func @transform_14(%arg0: i32) -> (i32, i32) {
    %c0_i32 = arith.constant 0 : i32
    %c0_i32_0 = arith.constant 0 : i32
    %c0_i32_1 = arith.constant 0 : i32
    return %c0_i32, %c0_i32_0 : i32, i32
  }
  func.func @transform_15(%arg0: i32) -> (i32, i32) {
    %c0_i32 = arith.constant 0 : i32
    %c0_i32_0 = arith.constant 0 : i32
    %c0_i32_1 = arith.constant 0 : i32
    return %c0_i32, %c0_i32_0 : i32, i32
  }
  func.func @transform_16(%arg0: i32) -> (i32, i32) {
    %c0_i32 = arith.constant 0 : i32
    %c0_i32_0 = arith.constant 0 : i32
    return %arg0, %c0_i32 : i32, i32
  }
}

</mosaic_0001>

<llo_original>
// kernel: lenet5_forward.1
$region0: #{lenet5_forward.1}
  #allocation0 [shape = 'u32[]', space=smem, size = 0x4, offset = 0x4, fixed_abs, tag = 'smem constant byte address 0x4 - core index']
  #allocation1 [shape = 'u32[144,128]{1,0:T(1,128)}', space=vmem, size = 0x12000, scoped, tag = 'internal scratch']
  #allocation2 [shape = 'f32[456,84]{1,0:T(8,128)}', space=vmem, size = 0x39000, scoped, tag = 'scratch operand']
  %s0 = inlined_call_operand.vmem [shape: bf16[1024,160], index: 0, kind: input, shape index: {}]
  %s1 = inlined_call_operand.vmem [shape: bf16[160,168], index: 1, kind: input, shape index: {}]
  %s2 = inlined_call_operand.vmem [shape: f32[1,168], index: 2, kind: input, shape index: {}]
  %s3 = inlined_call_operand.vmem [shape: bf16[168,84], index: 3, kind: input, shape index: {}]
  %s4 = inlined_call_operand.vmem [shape: bf16[456,1024], index: 4, kind: input, shape index: {}]
  %s5 = inlined_call_operand.vmem [shape: bf16[5,84,160], index: 5, kind: input, shape index: {}]
  %s6 = inlined_call_operand.vmem [shape: f32[1,160], index: 6, kind: input, shape index: {}]
  %s7 = inlined_call_operand.vmem [shape: bf16[160,80], index: 7, kind: input, shape index: {}]
  %s8 = inlined_call_operand.vmem [shape: bf16[160,448], index: 8, kind: input, shape index: {}]
  %s9 = inlined_call_operand.vmem [shape: bf16[5,32,160], index: 9, kind: input, shape index: {}]
  %s10 = inlined_call_operand.vmem [shape: bf16[5,80,120], index: 10, kind: input, shape index: {}]
  %s11 = inlined_call_operand.vmem [shape: f32[1,120], index: 11, kind: input, shape index: {}]
  %s12 = inlined_call_operand.vmem [shape: bf16[120,84], index: 12, kind: input, shape index: {}]
  %s13 = inlined_call_operand.vmem [shape: f32[1,84], index: 13, kind: input, shape index: {}]
  %s14 = inlined_call_operand.vmem [shape: bf16[84,128], index: 14, kind: input, shape index: {}]
  %s15 = inlined_call_operand.vmem [shape: f32[1,128], index: 15, kind: input, shape index: {}]
  %s16 = inlined_call_operand.vmem [shape: f32[32,128], index: 16, kind: output, shape index: {}]
  %s17 = sld [smem:[#allocation0]]
  $region74: #{lenet5_forward.1} parent=0
    _
  %s19 = ssub.s32 1, %s17
  %s20 = scalar_select 0, %s19, %s17
  // Predicated region
  $region2: #{lenet5_forward.1} parent=0 // pred_check
    _
  $region3: #{lenet5_forward.1} parent=0 // pred_check_branch
    %22 = sbr.rel (0) target = $region5
  $region4: #{lenet5_forward.1} parent=0 // pred_region
    _
  $region5: #{lenet5_forward.1} parent=0 // pred_fallthru
    _
  // Predicated region
  $region6: #{lenet5_forward.1} parent=0 // pred_check
    _
  $region7: #{lenet5_forward.1} parent=0 // pred_check_branch
    %24 = sbr.rel (0) target = $region9
  $region8: #{lenet5_forward.1} parent=0 // pred_region
    _
  $region9: #{lenet5_forward.1} parent=0 // pred_fallthru
    _
  // Predicated region
  $region10: #{lenet5_forward.1} parent=0 // pred_check
    _
  $region11: #{lenet5_forward.1} parent=0 // pred_check_branch
    %26 = sbr.rel (0) target = $region13
  $region12: #{lenet5_forward.1} parent=0 // pred_region
    _
  $region13: #{lenet5_forward.1} parent=0 // pred_fallthru
    _
  // Predicated region
  $region14: #{lenet5_forward.1} parent=0 // pred_check
    _
  $region15: #{lenet5_forward.1} parent=0 // pred_check_branch
    %28 = sbr.rel (0) target = $region17
  $region16: #{lenet5_forward.1} parent=0 // pred_region
    _
  $region17: #{lenet5_forward.1} parent=0 // pred_fallthru
    _
  // Predicated region
  $region18: #{lenet5_forward.1} parent=0 // pred_check
    _
  $region19: #{lenet5_forward.1} parent=0 // pred_check_branch
    %30 = sbr.rel (0) target = $region21
  $region20: #{lenet5_forward.1} parent=0 // pred_region
    _
  $region21: #{lenet5_forward.1} parent=0 // pred_fallthru
    _
  // Predicated region
  $region22: #{lenet5_forward.1} parent=0 // pred_check
    _
  $region23: #{lenet5_forward.1} parent=0 // pred_check_branch
    %32 = sbr.rel (0) target = $region25
  $region24: #{lenet5_forward.1} parent=0 // pred_region
    _
  $region25: #{lenet5_forward.1} parent=0 // pred_fallthru
    _
  // Predicated region
  $region26: #{lenet5_forward.1} parent=0 // pred_check
    _
  $region27: #{lenet5_forward.1} parent=0 // pred_check_branch
    %34 = sbr.rel (0) target = $region29
  $region28: #{lenet5_forward.1} parent=0 // pred_region
    _
  $region29: #{lenet5_forward.1} parent=0 // pred_fallthru
    _
  // Predicated region
  $region30: #{lenet5_forward.1} parent=0 // pred_check
    _
  $region31: #{lenet5_forward.1} parent=0 // pred_check_branch
    %36 = sbr.rel (0) target = $region33
  $region32: #{lenet5_forward.1} parent=0 // pred_region
    _
  $region33: #{lenet5_forward.1} parent=0 // pred_fallthru
    _
  // Predicated region
  $region34: #{lenet5_forward.1} parent=0 // pred_check
    _
  $region35: #{lenet5_forward.1} parent=0 // pred_check_branch
    %38 = sbr.rel (0) target = $region37
  $region36: #{lenet5_forward.1} parent=0 // pred_region
    _
  $region37: #{lenet5_forward.1} parent=0 // pred_fallthru
    _
  // Predicated region
  $region38: #{lenet5_forward.1} parent=0 // pred_check
    _
  $region39: #{lenet5_forward.1} parent=0 // pred_check_branch
    %40 = sbr.rel (0) target = $region41
  $region40: #{lenet5_forward.1} parent=0 // pred_region
    _
  $region41: #{lenet5_forward.1} parent=0 // pred_fallthru
    _
  // Predicated region
  $region42: #{lenet5_forward.1} parent=0 // pred_check
    _
  $region43: #{lenet5_forward.1} parent=0 // pred_check_branch
    %42 = sbr.rel (0) target = $region45
  $region44: #{lenet5_forward.1} parent=0 // pred_region
    _
  $region45: #{lenet5_forward.1} parent=0 // pred_fallthru
    _
  // Predicated region
  $region46: #{lenet5_forward.1} parent=0 // pred_check
    _
  $region47: #{lenet5_forward.1} parent=0 // pred_check_branch
    %44 = sbr.rel (0) target = $region49
  $region48: #{lenet5_forward.1} parent=0 // pred_region
    _
  $region49: #{lenet5_forward.1} parent=0 // pred_fallthru
    _
  // Predicated region
  $region50: #{lenet5_forward.1} parent=0 // pred_check
    _
  $region51: #{lenet5_forward.1} parent=0 // pred_check_branch
    %46 = sbr.rel (0) target = $region53
  $region52: #{lenet5_forward.1} parent=0 // pred_region
    _
  $region53: #{lenet5_forward.1} parent=0 // pred_fallthru
    _
  // Predicated region
  $region54: #{lenet5_forward.1} parent=0 // pred_check
    _
  $region55: #{lenet5_forward.1} parent=0 // pred_check_branch
    %48 = sbr.rel (0) target = $region57
  $region56: #{lenet5_forward.1} parent=0 // pred_region
    _
  $region57: #{lenet5_forward.1} parent=0 // pred_fallthru
    _
  // Predicated region
  $region58: #{lenet5_forward.1} parent=0 // pred_check
    _
  $region59: #{lenet5_forward.1} parent=0 // pred_check_branch
    %50 = sbr.rel (0) target = $region61
  $region60: #{lenet5_forward.1} parent=0 // pred_region
    _
  $region61: #{lenet5_forward.1} parent=0 // pred_fallthru
    _
  // Predicated region
  $region62: #{lenet5_forward.1} parent=0 // pred_check
    _
  $region63: #{lenet5_forward.1} parent=0 // pred_check_branch
    %52 = sbr.rel (0) target = $region65
  $region64: #{lenet5_forward.1} parent=0 // pred_region
    _
  $region65: #{lenet5_forward.1} parent=0 // pred_fallthru
    _
  %v54 = vld [vmem:[%s0] sm:$0xff]
  %v55 = vld [vmem:[%s0 + $0x8] sm:$0xff]
  %v56 = vld [vmem:[%s0 + $0x10] sm:$0xff]
  %v57 = vld [vmem:[%s0 + $0x18] sm:$0xff]
  %v58 = vld [vmem:[%s0 + $0x20] sm:$0xff]
  %v59 = vld [vmem:[%s0 + $0x28] sm:$0xff]
  %v60 = vld [vmem:[%s0 + $0x30] sm:$0xff]
  %v61 = vld [vmem:[%s0 + $0x38] sm:$0xff]
  %v62 = vld [vmem:[%s0 + $0x40] sm:$0xff]
  %v63 = vld [vmem:[%s0 + $0x48] sm:$0xff]
  %v64 = vld [vmem:[%s0 + $0x50] sm:$0xff]
  %v65 = vld [vmem:[%s0 + $0x58] sm:$0xff]
  %v66 = vld [vmem:[%s0 + $0x60] sm:$0xff]
  %v67 = vld [vmem:[%s0 + $0x68] sm:$0xff]
  %v68 = vld [vmem:[%s0 + $0x70] sm:$0xff]
  %v69 = vld [vmem:[%s0 + $0x78] sm:$0xff]
  %v70 = vld [vmem:[%s0 + $0x80] sm:$0xff]
  %v71 = vld [vmem:[%s0 + $0x88] sm:$0xff]
  %v72 = vld [vmem:[%s0 + $0x90] sm:$0xff]
  %v73 = vld [vmem:[%s0 + $0x98] sm:$0xff]
  %v74 = vld [vmem:[%s0 + $0xa0] sm:$0xff]
  %v75 = vld [vmem:[%s0 + $0xa8] sm:$0xff]
  %v76 = vld [vmem:[%s0 + $0xb0] sm:$0xff]
  %v77 = vld [vmem:[%s0 + $0xb8] sm:$0xff]
  %v78 = vld [vmem:[%s0 + $0xc0] sm:$0xff]
  %v79 = vld [vmem:[%s0 + $0xc8] sm:$0xff]
  %v80 = vld [vmem:[%s0 + $0xd0] sm:$0xff]
  %v81 = vld [vmem:[%s0 + $0xd8] sm:$0xff]
  %v82 = vld [vmem:[%s0 + $0xe0] sm:$0xff]
  %v83 = vld [vmem:[%s0 + $0xe8] sm:$0xff]
  %v84 = vld [vmem:[%s0 + $0xf0] sm:$0xff]
  %v85 = vld [vmem:[%s0 + $0xf8] sm:$0xff]
  %v86 = vld [vmem:[%s0 + $0x100] sm:$0xff]
  %v87 = vld [vmem:[%s0 + $0x108] sm:$0xff]
  %v88 = vld [vmem:[%s0 + $0x110] sm:$0xff]
  %v89 = vld [vmem:[%s0 + $0x118] sm:$0xff]
  %v90 = vld [vmem:[%s0 + $0x120] sm:$0xff]
  %v91 = vld [vmem:[%s0 + $0x128] sm:$0xff]
  %v92 = vld [vmem:[%s0 + $0x130] sm:$0xff]
  %v93 = vld [vmem:[%s0 + $0x138] sm:$0xff]
  %v94 = vld [vmem:[%s0 + $0x140] sm:$0xff]
  %v95 = vld [vmem:[%s0 + $0x148] sm:$0xff]
  %v96 = vld [vmem:[%s0 + $0x150] sm:$0xff]
  %v97 = vld [vmem:[%s0 + $0x158] sm:$0xff]
  %v98 = vld [vmem:[%s0 + $0x160] sm:$0xff]
  %v99 = vld [vmem:[%s0 + $0x168] sm:$0xff]
  %v100 = vld [vmem:[%s0 + $0x170] sm:$0xff]
  %v101 = vld [vmem:[%s0 + $0x178] sm:$0xff]
  %v102 = vld [vmem:[%s0 + $0x180] sm:$0xff]
  %v103 = vld [vmem:[%s0 + $0x188] sm:$0xff]
  %v104 = vld [vmem:[%s0 + $0x190] sm:$0xff]
  %v105 = vld [vmem:[%s0 + $0x198] sm:$0xff]
  %v106 = vld [vmem:[%s0 + $0x1a0] sm:$0xff]
  %v107 = vld [vmem:[%s0 + $0x1a8] sm:$0xff]
  %v108 = vld [vmem:[%s0 + $0x1b0] sm:$0xff]
  %v109 = vld [vmem:[%s0 + $0x1b8] sm:$0xff]
  %v110 = vld [vmem:[%s0 + $0x1c0] sm:$0xff]
  %v111 = vld [vmem:[%s0 + $0x1c8] sm:$0xff]
  %v112 = vld [vmem:[%s0 + $0x1d0] sm:$0xff]
  %v113 = vld [vmem:[%s0 + $0x1d8] sm:$0xff]
  %v114 = vld [vmem:[%s0 + $0x1e0] sm:$0xff]
  %v115 = vld [vmem:[%s0 + $0x1e8] sm:$0xff]
  %v116 = vld [vmem:[%s0 + $0x1f0] sm:$0xff]
  %v117 = vld [vmem:[%s0 + $0x1f8] sm:$0xff]
  %v118 = vld [vmem:[%s0 + $0x200] sm:$0xff]
  %v119 = vld [vmem:[%s0 + $0x208] sm:$0xff]
  %v120 = vld [vmem:[%s0 + $0x210] sm:$0xff]
  %v121 = vld [vmem:[%s0 + $0x218] sm:$0xff]
  %v122 = vld [vmem:[%s0 + $0x220] sm:$0xff]
  %v123 = vld [vmem:[%s0 + $0x228] sm:$0xff]
  %v124 = vld [vmem:[%s0 + $0x230] sm:$0xff]
  %v125 = vld [vmem:[%s0 + $0x238] sm:$0xff]
  %v126 = vld [vmem:[%s0 + $0x240] sm:$0xff]
  %v127 = vld [vmem:[%s0 + $0x248] sm:$0xff]
  %v128 = vld [vmem:[%s0 + $0x250] sm:$0xff]
  %v129 = vld [vmem:[%s0 + $0x258] sm:$0xff]
  %v130 = vld [vmem:[%s0 + $0x260] sm:$0xff]
  %v131 = vld [vmem:[%s0 + $0x268] sm:$0xff]
  %v132 = vld [vmem:[%s0 + $0x270] sm:$0xff]
  %v133 = vld [vmem:[%s0 + $0x278] sm:$0xff]
  %v134 = vld [vmem:[%s0 + $0x280] sm:$0xff]
  %v135 = vld [vmem:[%s0 + $0x288] sm:$0xff]
  %v136 = vld [vmem:[%s0 + $0x290] sm:$0xff]
  %v137 = vld [vmem:[%s0 + $0x298] sm:$0xff]
  %v138 = vld [vmem:[%s0 + $0x2a0] sm:$0xff]
  %v139 = vld [vmem:[%s0 + $0x2a8] sm:$0xff]
  %v140 = vld [vmem:[%s0 + $0x2b0] sm:$0xff]
  %v141 = vld [vmem:[%s0 + $0x2b8] sm:$0xff]
  %v142 = vld [vmem:[%s0 + $0x2c0] sm:$0xff]
  %v143 = vld [vmem:[%s0 + $0x2c8] sm:$0xff]
  %v144 = vld [vmem:[%s0 + $0x2d0] sm:$0xff]
  %v145 = vld [vmem:[%s0 + $0x2d8] sm:$0xff]
  %v146 = vld [vmem:[%s0 + $0x2e0] sm:$0xff]
  %v147 = vld [vmem:[%s0 + $0x2e8] sm:$0xff]
  %v148 = vld [vmem:[%s0 + $0x2f0] sm:$0xff]
  %v149 = vld [vmem:[%s0 + $0x2f8] sm:$0xff]
  %v150 = vld [vmem:[%s0 + $0x300] sm:$0xff]
  %v151 = vld [vmem:[%s0 + $0x308] sm:$0xff]
  %v152 = vld [vmem:[%s0 + $0x310] sm:$0xff]
  %v153 = vld [vmem:[%s0 + $0x318] sm:$0xff]
  %v154 = vld [vmem:[%s0 + $0x320] sm:$0xff]
  %v155 = vld [vmem:[%s0 + $0x328] sm:$0xff]
  %v156 = vld [vmem:[%s0 + $0x330] sm:$0xff]
  %v157 = vld [vmem:[%s0 + $0x338] sm:$0xff]
  %v158 = vld [vmem:[%s0 + $0x340] sm:$0xff]
  %v159 = vld [vmem:[%s0 + $0x348] sm:$0xff]
  %v160 = vld [vmem:[%s0 + $0x350] sm:$0xff]
  %v161 = vld [vmem:[%s0 + $0x358] sm:$0xff]
  %v162 = vld [vmem:[%s0 + $0x360] sm:$0xff]
  %v163 = vld [vmem:[%s0 + $0x368] sm:$0xff]
  %v164 = vld [vmem:[%s0 + $0x370] sm:$0xff]
  %v165 = vld [vmem:[%s0 + $0x378] sm:$0xff]
  %v166 = vld [vmem:[%s0 + $0x380] sm:$0xff]
  %v167 = vld [vmem:[%s0 + $0x388] sm:$0xff]
  %v168 = vld [vmem:[%s0 + $0x390] sm:$0xff]
  %v169 = vld [vmem:[%s0 + $0x398] sm:$0xff]
  %v170 = vld [vmem:[%s0 + $0x3a0] sm:$0xff]
  %v171 = vld [vmem:[%s0 + $0x3a8] sm:$0xff]
  %v172 = vld [vmem:[%s0 + $0x3b0] sm:$0xff]
  %v173 = vld [vmem:[%s0 + $0x3b8] sm:$0xff]
  %v174 = vld [vmem:[%s0 + $0x3c0] sm:$0xff]
  %v175 = vld [vmem:[%s0 + $0x3c8] sm:$0xff]
  %v176 = vld [vmem:[%s0 + $0x3d0] sm:$0xff]
  %v177 = vld [vmem:[%s0 + $0x3d8] sm:$0xff]
  %v178 = vld [vmem:[%s0 + $0x3e0] sm:$0xff]
  %v179 = vld [vmem:[%s0 + $0x3e8] sm:$0xff]
  %v180 = vld [vmem:[%s0 + $0x3f0] sm:$0xff]
  %v181 = vld [vmem:[%s0 + $0x3f8] sm:$0xff]
  %v182 = vld [vmem:[%s1] sm:$0xff]
  %v183 = vld [vmem:[%s1 + $0x8] sm:$0xff]
  %v184 = vld [vmem:[%s1 + $0x10] sm:$0xff]
  %v185 = vld [vmem:[%s1 + $0x18] sm:$0xff]
  %v186 = vld [vmem:[%s1 + $0x20] sm:$0xff]
  %v187 = vld [vmem:[%s1 + $0x28] sm:$0xff]
  %v188 = vld [vmem:[%s1 + $0x30] sm:$0xff]
  %v189 = vld [vmem:[%s1 + $0x38] sm:$0xff]
  %v190 = vld [vmem:[%s1 + $0x40] sm:$0xff]
  %v191 = vld [vmem:[%s1 + $0x48] sm:$0xff]
  %v192 = vld [vmem:[%s1 + $0x50] sm:$0xff]
  %v193 = vld [vmem:[%s1 + $0x58] sm:$0xff]
  %v194 = vld [vmem:[%s1 + $0x60] sm:$0xff]
  %v195 = vld [vmem:[%s1 + $0x68] sm:$0xff]
  %v196 = vld [vmem:[%s1 + $0x70] sm:$0xff]
  %v197 = vld [vmem:[%s1 + $0x78] sm:$0xff]
  %v198 = vld [vmem:[%s1 + $0x80] sm:$0xff]
  %v199 = vld [vmem:[%s1 + $0x88] sm:$0xff]
  %v200 = vld [vmem:[%s1 + $0x90] sm:$0xff]
  %v201 = vld [vmem:[%s1 + $0x98] sm:$0xff]
  %v202 = vld [vmem:[%s2] sm:$0x3]
  %v204 = vlaneseq
  %v205 = vshrl.u32 %v204, 7
  %v206 = vsub.s32 0, %v205
  %v207 = vrot.slane %v202, %v206
  %v208 = vlaneseq
  %v209 = vshrl.u32 %v208, 7
  %v210 = vsub.s32 1, %v209
  %v211 = vrot.slane %v202, %v210
  %v342 = vunpack.c.l.b16 %v54
  %v343 = vunpack.c.h.b16 %v54
  %v344 = vunpack.c.l.b16 %v55
  %v345 = vunpack.c.h.b16 %v55
  %v346 = vunpack.c.l.b16 %v56
  %v347 = vunpack.c.h.b16 %v56
  %v348 = vunpack.c.l.b16 %v57
  %v349 = vunpack.c.h.b16 %v57
  %v350 = vunpack.c.l.b16 %v58
  %v351 = vunpack.c.h.b16 %v58
  %v352 = vunpack.c.l.b16 %v59
  %v353 = vunpack.c.h.b16 %v59
  %v354 = vunpack.c.l.b16 %v60
  %v355 = vunpack.c.h.b16 %v60
  %v356 = vunpack.c.l.b16 %v61
  %v357 = vunpack.c.h.b16 %v61
  %v358 = vunpack.c.l.b16 %v62
  %v359 = vunpack.c.h.b16 %v62
  %v360 = vunpack.c.l.b16 %v63
  %v361 = vunpack.c.h.b16 %v63
  %v362 = vunpack.c.l.b16 %v64
  %v363 = vunpack.c.h.b16 %v64
  %v364 = vunpack.c.l.b16 %v65
  %v365 = vunpack.c.h.b16 %v65
  %v366 = vunpack.c.l.b16 %v66
  %v367 = vunpack.c.h.b16 %v66
  %v368 = vunpack.c.l.b16 %v67
  %v369 = vunpack.c.h.b16 %v67
  %v370 = vunpack.c.l.b16 %v68
  %v371 = vunpack.c.h.b16 %v68
  %v372 = vunpack.c.l.b16 %v69
  %v373 = vunpack.c.h.b16 %v69
  %v374 = vunpack.c.l.b16 %v70
  %v375 = vunpack.c.h.b16 %v70
  %v376 = vunpack.c.l.b16 %v71
  %v377 = vunpack.c.h.b16 %v71
  %v378 = vunpack.c.l.b16 %v72
  %v379 = vunpack.c.h.b16 %v72
  %v380 = vunpack.c.l.b16 %v73
  %v381 = vunpack.c.h.b16 %v73
  %v382 = vunpack.c.l.b16 %v74
  %v383 = vunpack.c.h.b16 %v74
  %v384 = vunpack.c.l.b16 %v75
  %v385 = vunpack.c.h.b16 %v75
  %v386 = vunpack.c.l.b16 %v76
  %v387 = vunpack.c.h.b16 %v76
  %v388 = vunpack.c.l.b16 %v77
  %v389 = vunpack.c.h.b16 %v77
  %v390 = vunpack.c.l.b16 %v78
  %v391 = vunpack.c.h.b16 %v78
  %v392 = vunpack.c.l.b16 %v79
  %v393 = vunpack.c.h.b16 %v79
  %v394 = vunpack.c.l.b16 %v80
  %v395 = vunpack.c.h.b16 %v80
  %v396 = vunpack.c.l.b16 %v81
  %v397 = vunpack.c.h.b16 %v81
  %v398 = vunpack.c.l.b16 %v82
  %v399 = vunpack.c.h.b16 %v82
  %v400 = vunpack.c.l.b16 %v83
  %v401 = vunpack.c.h.b16 %v83
  %v402 = vunpack.c.l.b16 %v84
  %v403 = vunpack.c.h.b16 %v84
  %v404 = vunpack.c.l.b16 %v85
  %v405 = vunpack.c.h.b16 %v85
  %v406 = vunpack.c.l.b16 %v86
  %v407 = vunpack.c.h.b16 %v86
  %v408 = vunpack.c.l.b16 %v87
  %v409 = vunpack.c.h.b16 %v87
  %v410 = vunpack.c.l.b16 %v88
  %v411 = vunpack.c.h.b16 %v88
  %v412 = vunpack.c.l.b16 %v89
  %v413 = vunpack.c.h.b16 %v89
  %v414 = vunpack.c.l.b16 %v90
  %v415 = vunpack.c.h.b16 %v90
  %v416 = vunpack.c.l.b16 %v91
  %v417 = vunpack.c.h.b16 %v91
  %v418 = vunpack.c.l.b16 %v92
  %v419 = vunpack.c.h.b16 %v92
  %v420 = vunpack.c.l.b16 %v93
  %v421 = vunpack.c.h.b16 %v93
  %v422 = vunpack.c.l.b16 %v94
  %v423 = vunpack.c.h.b16 %v94
  %v424 = vunpack.c.l.b16 %v95
  %v425 = vunpack.c.h.b16 %v95
  %v426 = vunpack.c.l.b16 %v96
  %v427 = vunpack.c.h.b16 %v96
  %v428 = vunpack.c.l.b16 %v97
  %v429 = vunpack.c.h.b16 %v97
  %v430 = vunpack.c.l.b16 %v98
  %v431 = vunpack.c.h.b16 %v98
  %v432 = vunpack.c.l.b16 %v99
  %v433 = vunpack.c.h.b16 %v99
  %v434 = vunpack.c.l.b16 %v100
  %v435 = vunpack.c.h.b16 %v100
  %v436 = vunpack.c.l.b16 %v101
  %v437 = vunpack.c.h.b16 %v101
  %v438 = vunpack.c.l.b16 %v102
  %v439 = vunpack.c.h.b16 %v102
  %v440 = vunpack.c.l.b16 %v103
  %v441 = vunpack.c.h.b16 %v103
  %v442 = vunpack.c.l.b16 %v104
  %v443 = vunpack.c.h.b16 %v104
  %v444 = vunpack.c.l.b16 %v105
  %v445 = vunpack.c.h.b16 %v105
  %v446 = vunpack.c.l.b16 %v106
  %v447 = vunpack.c.h.b16 %v106
  %v448 = vunpack.c.l.b16 %v107
  %v449 = vunpack.c.h.b16 %v107
  %v450 = vunpack.c.l.b16 %v108
  %v451 = vunpack.c.h.b16 %v108
  %v452 = vunpack.c.l.b16 %v109
  %v453 = vunpack.c.h.b16 %v109
  %v454 = vunpack.c.l.b16 %v110
  %v455 = vunpack.c.h.b16 %v110
  %v456 = vunpack.c.l.b16 %v111
  %v457 = vunpack.c.h.b16 %v111
  %v458 = vunpack.c.l.b16 %v112
  %v459 = vunpack.c.h.b16 %v112
  %v460 = vunpack.c.l.b16 %v113
  %v461 = vunpack.c.h.b16 %v113
  %v462 = vunpack.c.l.b16 %v114
  %v463 = vunpack.c.h.b16 %v114
  %v464 = vunpack.c.l.b16 %v115
  %v465 = vunpack.c.h.b16 %v115
  %v466 = vunpack.c.l.b16 %v116
  %v467 = vunpack.c.h.b16 %v116
  %v468 = vunpack.c.l.b16 %v117
  %v469 = vunpack.c.h.b16 %v117
  %v470 = vunpack.c.l.b16 %v118
  %v471 = vunpack.c.h.b16 %v118
  %v472 = vunpack.c.l.b16 %v119
  %v473 = vunpack.c.h.b16 %v119
  %v474 = vunpack.c.l.b16 %v120
  %v475 = vunpack.c.h.b16 %v120
  %v476 = vunpack.c.l.b16 %v121
  %v477 = vunpack.c.h.b16 %v121
  %v478 = vunpack.c.l.b16 %v122
  %v479 = vunpack.c.h.b16 %v122
  %v480 = vunpack.c.l.b16 %v123
  %v481 = vunpack.c.h.b16 %v123
  %v482 = vunpack.c.l.b16 %v124
  %v483 = vunpack.c.h.b16 %v124
  %v484 = vunpack.c.l.b16 %v125
  %v485 = vunpack.c.h.b16 %v125
  %v486 = vunpack.c.l.b16 %v126
  %v487 = vunpack.c.h.b16 %v126
  %v488 = vunpack.c.l.b16 %v127
  %v489 = vunpack.c.h.b16 %v127
  %v490 = vunpack.c.l.b16 %v128
  %v491 = vunpack.c.h.b16 %v128
  %v492 = vunpack.c.l.b16 %v129
  %v493 = vunpack.c.h.b16 %v129
  %v494 = vunpack.c.l.b16 %v130
  %v495 = vunpack.c.h.b16 %v130
  %v496 = vunpack.c.l.b16 %v131
  %v497 = vunpack.c.h.b16 %v131
  %v498 = vunpack.c.l.b16 %v132
  %v499 = vunpack.c.h.b16 %v132
  %v500 = vunpack.c.l.b16 %v133
  %v501 = vunpack.c.h.b16 %v133
  %v502 = vunpack.c.l.b16 %v134
  %v503 = vunpack.c.h.b16 %v134
  %v504 = vunpack.c.l.b16 %v135
  %v505 = vunpack.c.h.b16 %v135
  %v506 = vunpack.c.l.b16 %v136
  %v507 = vunpack.c.h.b16 %v136
  %v508 = vunpack.c.l.b16 %v137
  %v509 = vunpack.c.h.b16 %v137
  %v510 = vunpack.c.l.b16 %v138
  %v511 = vunpack.c.h.b16 %v138
  %v512 = vunpack.c.l.b16 %v139
  %v513 = vunpack.c.h.b16 %v139
  %v514 = vunpack.c.l.b16 %v140
  %v515 = vunpack.c.h.b16 %v140
  %v516 = vunpack.c.l.b16 %v141
  %v517 = vunpack.c.h.b16 %v141
  %v518 = vunpack.c.l.b16 %v142
  %v519 = vunpack.c.h.b16 %v142
  %v520 = vunpack.c.l.b16 %v143
  %v521 = vunpack.c.h.b16 %v143
  %v522 = vunpack.c.l.b16 %v144
  %v523 = vunpack.c.h.b16 %v144
  %v524 = vunpack.c.l.b16 %v145
  %v525 = vunpack.c.h.b16 %v145
  %v526 = vunpack.c.l.b16 %v146
  %v527 = vunpack.c.h.b16 %v146
  %v528 = vunpack.c.l.b16 %v147
  %v529 = vunpack.c.h.b16 %v147
  %v530 = vunpack.c.l.b16 %v148
  %v531 = vunpack.c.h.b16 %v148
  %v532 = vunpack.c.l.b16 %v149
  %v533 = vunpack.c.h.b16 %v149
  %v534 = vunpack.c.l.b16 %v150
  %v535 = vunpack.c.h.b16 %v150
  %v536 = vunpack.c.l.b16 %v151
  %v537 = vunpack.c.h.b16 %v151
  %v538 = vunpack.c.l.b16 %v152
  %v539 = vunpack.c.h.b16 %v152
  %v540 = vunpack.c.l.b16 %v153
  %v541 = vunpack.c.h.b16 %v153
  %v542 = vunpack.c.l.b16 %v154
  %v543 = vunpack.c.h.b16 %v154
  %v544 = vunpack.c.l.b16 %v155
  %v545 = vunpack.c.h.b16 %v155
  %v546 = vunpack.c.l.b16 %v156
  %v547 = vunpack.c.h.b16 %v156
  %v548 = vunpack.c.l.b16 %v157
  %v549 = vunpack.c.h.b16 %v157
  %v550 = vunpack.c.l.b16 %v158
  %v551 = vunpack.c.h.b16 %v158
  %v552 = vunpack.c.l.b16 %v159
  %v553 = vunpack.c.h.b16 %v159
  %v554 = vunpack.c.l.b16 %v160
  %v555 = vunpack.c.h.b16 %v160
  %v556 = vunpack.c.l.b16 %v161
  %v557 = vunpack.c.h.b16 %v161
  %v558 = vunpack.c.l.b16 %v162
  %v559 = vunpack.c.h.b16 %v162
  %v560 = vunpack.c.l.b16 %v163
  %v561 = vunpack.c.h.b16 %v163
  %v562 = vunpack.c.l.b16 %v164
  %v563 = vunpack.c.h.b16 %v164
  %v564 = vunpack.c.l.b16 %v165
  %v565 = vunpack.c.h.b16 %v165
  %v566 = vunpack.c.l.b16 %v166
  %v567 = vunpack.c.h.b16 %v166
  %v568 = vunpack.c.l.b16 %v167
  %v569 = vunpack.c.h.b16 %v167
  %v570 = vunpack.c.l.b16 %v168
  %v571 = vunpack.c.h.b16 %v168
  %v572 = vunpack.c.l.b16 %v169
  %v573 = vunpack.c.h.b16 %v169
  %v574 = vunpack.c.l.b16 %v170
  %v575 = vunpack.c.h.b16 %v170
  %v576 = vunpack.c.l.b16 %v171
  %v577 = vunpack.c.h.b16 %v171
  %v578 = vunpack.c.l.b16 %v172
  %v579 = vunpack.c.h.b16 %v172
  %v580 = vunpack.c.l.b16 %v173
  %v581 = vunpack.c.h.b16 %v173
  %v582 = vunpack.c.l.b16 %v174
  %v583 = vunpack.c.h.b16 %v174
  %v584 = vunpack.c.l.b16 %v175
  %v585 = vunpack.c.h.b16 %v175
  %v586 = vunpack.c.l.b16 %v176
  %v587 = vunpack.c.h.b16 %v176
  %v588 = vunpack.c.l.b16 %v177
  %v589 = vunpack.c.h.b16 %v177
  %v590 = vunpack.c.l.b16 %v178
  %v591 = vunpack.c.h.b16 %v178
  %v592 = vunpack.c.l.b16 %v179
  %v593 = vunpack.c.h.b16 %v179
  %v594 = vunpack.c.l.b16 %v180
  %v595 = vunpack.c.h.b16 %v180
  %v596 = vunpack.c.l.b16 %v181
  %v597 = vunpack.c.h.b16 %v181
  %v598 = vpack.c.b16 %v344, %v342
  %v599 = vpack.c.b16 %v345, %v343
  %v600 = vpack.c.b16 %v348, %v346
  %v601 = vpack.c.b16 %v349, %v347
  %v602 = vpack.c.b16 %v352, %v350
  %v603 = vpack.c.b16 %v353, %v351
  %v604 = vpack.c.b16 %v356, %v354
  %v605 = vpack.c.b16 %v357, %v355
  %v606 = vpack.c.b16 %v360, %v358
  %v607 = vpack.c.b16 %v361, %v359
  %v608 = vpack.c.b16 %v364, %v362
  %v609 = vpack.c.b16 %v365, %v363
  %v610 = vpack.c.b16 %v368, %v366
  %v611 = vpack.c.b16 %v369, %v367
  %v612 = vpack.c.b16 %v372, %v370
  %v613 = vpack.c.b16 %v373, %v371
  %v614 = vpack.c.b16 %v376, %v374
  %v615 = vpack.c.b16 %v377, %v375
  %v616 = vpack.c.b16 %v380, %v378
  %v617 = vpack.c.b16 %v381, %v379
  %v618 = vpack.c.b16 %v384, %v382
  %v619 = vpack.c.b16 %v385, %v383
  %v620 = vpack.c.b16 %v388, %v386
  %v621 = vpack.c.b16 %v389, %v387
  %v622 = vpack.c.b16 %v392, %v390
  %v623 = vpack.c.b16 %v393, %v391
  %v624 = vpack.c.b16 %v396, %v394
  %v625 = vpack.c.b16 %v397, %v395
  %v626 = vpack.c.b16 %v400, %v398
  %v627 = vpack.c.b16 %v401, %v399
  %v628 = vpack.c.b16 %v404, %v402
  %v629 = vpack.c.b16 %v405, %v403
  %v630 = vpack.c.b16 %v408, %v406
  %v631 = vpack.c.b16 %v409, %v407
  %v632 = vpack.c.b16 %v412, %v410
  %v633 = vpack.c.b16 %v413, %v411
  %v634 = vpack.c.b16 %v416, %v414
  %v635 = vpack.c.b16 %v417, %v415
  %v636 = vpack.c.b16 %v420, %v418
  %v637 = vpack.c.b16 %v421, %v419
  %v638 = vpack.c.b16 %v424, %v422
  %v639 = vpack.c.b16 %v425, %v423
  %v640 = vpack.c.b16 %v428, %v426
  %v641 = vpack.c.b16 %v429, %v427
  %v642 = vpack.c.b16 %v432, %v430
  %v643 = vpack.c.b16 %v433, %v431
  %v644 = vpack.c.b16 %v436, %v434
  %v645 = vpack.c.b16 %v437, %v435
  %v646 = vpack.c.b16 %v440, %v438
  %v647 = vpack.c.b16 %v441, %v439
  %v648 = vpack.c.b16 %v444, %v442
  %v649 = vpack.c.b16 %v445, %v443
  %v650 = vpack.c.b16 %v448, %v446
  %v651 = vpack.c.b16 %v449, %v447
  %v652 = vpack.c.b16 %v452, %v450
  %v653 = vpack.c.b16 %v453, %v451
  %v654 = vpack.c.b16 %v456, %v454
  %v655 = vpack.c.b16 %v457, %v455
  %v656 = vpack.c.b16 %v460, %v458
  %v657 = vpack.c.b16 %v461, %v459
  %v658 = vpack.c.b16 %v464, %v462
  %v659 = vpack.c.b16 %v465, %v463
  %v660 = vpack.c.b16 %v468, %v466
  %v661 = vpack.c.b16 %v469, %v467
  %v662 = vpack.c.b16 %v472, %v470
  %v663 = vpack.c.b16 %v473, %v471
  %v664 = vpack.c.b16 %v476, %v474
  %v665 = vpack.c.b16 %v477, %v475
  %v666 = vpack.c.b16 %v480, %v478
  %v667 = vpack.c.b16 %v481, %v479
  %v668 = vpack.c.b16 %v484, %v482
  %v669 = vpack.c.b16 %v485, %v483
  %v670 = vpack.c.b16 %v488, %v486
  %v671 = vpack.c.b16 %v489, %v487
  %v672 = vpack.c.b16 %v492, %v490
  %v673 = vpack.c.b16 %v493, %v491
  %v674 = vpack.c.b16 %v496, %v494
  %v675 = vpack.c.b16 %v497, %v495
  %v676 = vpack.c.b16 %v500, %v498
  %v677 = vpack.c.b16 %v501, %v499
  %v678 = vpack.c.b16 %v504, %v502
  %v679 = vpack.c.b16 %v505, %v503
  %v680 = vpack.c.b16 %v508, %v506
  %v681 = vpack.c.b16 %v509, %v507
  %v682 = vpack.c.b16 %v512, %v510
  %v683 = vpack.c.b16 %v513, %v511
  %v684 = vpack.c.b16 %v516, %v514
  %v685 = vpack.c.b16 %v517, %v515
  %v686 = vpack.c.b16 %v520, %v518
  %v687 = vpack.c.b16 %v521, %v519
  %v688 = vpack.c.b16 %v524, %v522
  %v689 = vpack.c.b16 %v525, %v523
  %v690 = vpack.c.b16 %v528, %v526
  %v691 = vpack.c.b16 %v529, %v527
  %v692 = vpack.c.b16 %v532, %v530
  %v693 = vpack.c.b16 %v533, %v531
  %v694 = vpack.c.b16 %v536, %v534
  %v695 = vpack.c.b16 %v537, %v535
  %v696 = vpack.c.b16 %v540, %v538
  %v697 = vpack.c.b16 %v541, %v539
  %v698 = vpack.c.b16 %v544, %v542
  %v699 = vpack.c.b16 %v545, %v543
  %v700 = vpack.c.b16 %v548, %v546
  %v701 = vpack.c.b16 %v549, %v547
  %v702 = vpack.c.b16 %v552, %v550
  %v703 = vpack.c.b16 %v553, %v551
  %v704 = vpack.c.b16 %v556, %v554
  %v705 = vpack.c.b16 %v557, %v555
  %v706 = vpack.c.b16 %v560, %v558
  %v707 = vpack.c.b16 %v561, %v559
  %v708 = vpack.c.b16 %v564, %v562
  %v709 = vpack.c.b16 %v565, %v563
  %v710 = vpack.c.b16 %v568, %v566
  %v711 = vpack.c.b16 %v569, %v567
  %v712 = vpack.c.b16 %v572, %v570
  %v713 = vpack.c.b16 %v573, %v571
  %v714 = vpack.c.b16 %v576, %v574
  %v715 = vpack.c.b16 %v577, %v575
  %v716 = vpack.c.b16 %v580, %v578
  %v717 = vpack.c.b16 %v581, %v579
  %v718 = vpack.c.b16 %v584, %v582
  %v719 = vpack.c.b16 %v585, %v583
  %v720 = vpack.c.b16 %v588, %v586
  %v721 = vpack.c.b16 %v589, %v587
  %v722 = vpack.c.b16 %v592, %v590
  %v723 = vpack.c.b16 %v593, %v591
  %v724 = vpack.c.b16 %v596, %v594
  %v725 = vpack.c.b16 %v597, %v595
  %v810 = vunpack.c.l.b16 %v182
  %v811 = vunpack.c.h.b16 %v182
  %v812 = vunpack.c.l.b16 %v183
  %v813 = vunpack.c.h.b16 %v183
  %v814 = vunpack.c.l.b16 %v184
  %v815 = vunpack.c.h.b16 %v184
  %v816 = vunpack.c.l.b16 %v185
  %v817 = vunpack.c.h.b16 %v185
  %v818 = vunpack.c.l.b16 %v186
  %v819 = vunpack.c.h.b16 %v186
  %v820 = vunpack.c.l.b16 %v187
  %v821 = vunpack.c.h.b16 %v187
  %v822 = vunpack.c.l.b16 %v188
  %v823 = vunpack.c.h.b16 %v188
  %v824 = vunpack.c.l.b16 %v189
  %v825 = vunpack.c.h.b16 %v189
  %v826 = vunpack.c.l.b16 %v190
  %v827 = vunpack.c.h.b16 %v190
  %v828 = vunpack.c.l.b16 %v191
  %v829 = vunpack.c.h.b16 %v191
  %v830 = vunpack.c.l.b16 %v192
  %v831 = vunpack.c.h.b16 %v192
  %v832 = vunpack.c.l.b16 %v193
  %v833 = vunpack.c.h.b16 %v193
  %v834 = vunpack.c.l.b16 %v194
  %v835 = vunpack.c.h.b16 %v194
  %v836 = vunpack.c.l.b16 %v195
  %v837 = vunpack.c.h.b16 %v195
  %v838 = vunpack.c.l.b16 %v196
  %v839 = vunpack.c.h.b16 %v196
  %v840 = vunpack.c.l.b16 %v197
  %v841 = vunpack.c.h.b16 %v197
  %v842 = vunpack.c.l.b16 %v198
  %v843 = vunpack.c.h.b16 %v198
  %v844 = vunpack.c.l.b16 %v199
  %v845 = vunpack.c.h.b16 %v199
  %v846 = vunpack.c.l.b16 %v200
  %v847 = vunpack.c.h.b16 %v200
  %v848 = vunpack.c.l.b16 %v201
  %v849 = vunpack.c.h.b16 %v201
  %v850 = vpack.c.b16 %v812, %v810
  %v851 = vpack.c.b16 %v813, %v811
  %v852 = vpack.c.b16 %v816, %v814
  %v853 = vpack.c.b16 %v817, %v815
  %v854 = vpack.c.b16 %v820, %v818
  %v855 = vpack.c.b16 %v821, %v819
  %v856 = vpack.c.b16 %v824, %v822
  %v857 = vpack.c.b16 %v825, %v823
  %v858 = vpack.c.b16 %v828, %v826
  %v859 = vpack.c.b16 %v829, %v827
  %v860 = vpack.c.b16 %v832, %v830
  %v861 = vpack.c.b16 %v833, %v831
  %v862 = vpack.c.b16 %v836, %v834
  %v863 = vpack.c.b16 %v837, %v835
  %v864 = vpack.c.b16 %v840, %v838
  %v865 = vpack.c.b16 %v841, %v839
  %v866 = vpack.c.b16 %v844, %v842
  %v867 = vpack.c.b16 %v845, %v843
  %v868 = vpack.c.b16 %v848, %v846
  %v869 = vpack.c.b16 %v849, %v847
  %vm890 = vcmask 261120
  %v892 = vsel %vm890, %v599, 0
  %v895 = vsel %vm890, %v601, 0
  %v898 = vsel %vm890, %v603, 0
  %v901 = vsel %vm890, %v605, 0
  %v904 = vsel %vm890, %v607, 0
  %v907 = vsel %vm890, %v609, 0
  %v910 = vsel %vm890, %v611, 0
  %v913 = vsel %vm890, %v613, 0
  %v916 = vsel %vm890, %v615, 0
  %v919 = vsel %vm890, %v617, 0
  %v922 = vsel %vm890, %v619, 0
  %v925 = vsel %vm890, %v621, 0
  %v928 = vsel %vm890, %v623, 0
  %v931 = vsel %vm890, %v625, 0
  %v934 = vsel %vm890, %v627, 0
  %v937 = vsel %vm890, %v629, 0
  %v940 = vsel %vm890, %v631, 0
  %v943 = vsel %vm890, %v633, 0
  %v946 = vsel %vm890, %v635, 0
  %v949 = vsel %vm890, %v637, 0
  %v952 = vsel %vm890, %v639, 0
  %v955 = vsel %vm890, %v641, 0
  %v958 = vsel %vm890, %v643, 0
  %v961 = vsel %vm890, %v645, 0
  %v964 = vsel %vm890, %v647, 0
  %v967 = vsel %vm890, %v649, 0
  %v970 = vsel %vm890, %v651, 0
  %v973 = vsel %vm890, %v653, 0
  %v976 = vsel %vm890, %v655, 0
  %v979 = vsel %vm890, %v657, 0
  %v982 = vsel %vm890, %v659, 0
  %v985 = vsel %vm890, %v661, 0
  %v988 = vsel %vm890, %v663, 0
  %v991 = vsel %vm890, %v665, 0
  %v994 = vsel %vm890, %v667, 0
  %v997 = vsel %vm890, %v669, 0
  %v1000 = vsel %vm890, %v671, 0
  %v1003 = vsel %vm890, %v673, 0
  %v1006 = vsel %vm890, %v675, 0
  %v1009 = vsel %vm890, %v677, 0
  %v1012 = vsel %vm890, %v679, 0
  %v1015 = vsel %vm890, %v681, 0
  %v1018 = vsel %vm890, %v683, 0
  %v1021 = vsel %vm890, %v685, 0
  %v1024 = vsel %vm890, %v687, 0
  %v1027 = vsel %vm890, %v689, 0
  %v1030 = vsel %vm890, %v691, 0
  %v1033 = vsel %vm890, %v693, 0
  %v1036 = vsel %vm890, %v695, 0
  %v1039 = vsel %vm890, %v697, 0
  %v1042 = vsel %vm890, %v699, 0
  %v1045 = vsel %vm890, %v701, 0
  %v1048 = vsel %vm890, %v703, 0
  %v1051 = vsel %vm890, %v705, 0
  %v1054 = vsel %vm890, %v707, 0
  %v1057 = vsel %vm890, %v709, 0
  %v1060 = vsel %vm890, %v711, 0
  %v1063 = vsel %vm890, %v713, 0
  %v1066 = vsel %vm890, %v715, 0
  %v1069 = vsel %vm890, %v717, 0
  %v1072 = vsel %vm890, %v719, 0
  %v1075 = vsel %vm890, %v721, 0
  %v1078 = vsel %vm890, %v723, 0
  %v1081 = vsel %vm890, %v725, 0
  %1083 = vmatprep.subr.bf16.mxu0 %v851
  %1084 = vmatpush1.bf16.msra.mxu0 %v850
  %1085 = vmatprep.subr.bf16.mxu0 %v853
  %1086 = vmatpush1.bf16.msra.mxu0 %v852
  %1087 = vmatprep.subr.bf16.mxu0 %v855
  %1088 = vmatpush1.bf16.msra.mxu0 %v854
  %1089 = vmatprep.subr.bf16.mxu0 %v857
  %1090 = vmatpush1.bf16.msra.mxu0 %v856
  %1091 = vmatprep.subr.bf16.mxu0 %v859
  %1092 = vmatpush1.bf16.msra.mxu0 %v858
  %1093 = vmatprep.subr.bf16.mxu0 %v861
  %1094 = vmatpush1.bf16.msra.mxu0 %v860
  %1095 = vmatprep.subr.bf16.mxu0 %v863
  %1096 = vmatpush1.bf16.msra.mxu0 %v862
  %1097 = vmatprep.subr.bf16.mxu0 %v865
  %1098 = vmatpush1.bf16.msra.mxu0 %v864
  %1099 = vmatprep.subr.bf16.mxu0 %v867
  %1100 = vmatpush1.bf16.msra.mxu0 %v866
  %1101 = vmatprep.subr.bf16.mxu0 %v869
  %1102 = vmatpush1.bf16.msra.mxu0 %v868
  %1103 = vmatprep.subr.bf16.mxu0 0
  %1104 = vmatpush1.bf16.msra.mxu0 0
  %1105 = vmatprep.subr.bf16.mxu0 0
  %1106 = vmatpush1.bf16.msra.mxu0 0
  %1107 = vmatprep.subr.bf16.mxu0 0
  %1108 = vmatpush1.bf16.msra.mxu0 0
  %1109 = vmatprep.subr.bf16.mxu0 0
  %1110 = vmatpush1.bf16.msra.mxu0 0
  %1111 = vmatprep.subr.bf16.mxu0 0
  %1112 = vmatpush1.bf16.msra.mxu0 0
  %1113 = vmatprep.subr.bf16.mxu0 0
  %1114 = vmatpush1.bf16.msra.mxu0 0
  %1115 = vmatprep.mubr.bf16.mxu0 %v892
  %1116 = vmatmul.mubr.bf16.gmra.mrb[0].mxu0 %v598
  %v1117 = vpop.f32.mrb[0].mxu0
  %v1118 = vadd.f32 %v207, %v1117
  %v1119 = vpop.f32.mrb[0].mxu0
  %v1120 = vadd.f32 %v211, %v1119
  %v1121 = vpop.f32.mrb[0].mxu0
  %v1122 = vadd.f32 %v207, %v1121
  %v1123 = vpop.f32.mrb[0].mxu0
  %v1124 = vadd.f32 %v211, %v1123
  %1125 = vmatprep.mubr.bf16.mxu0 %v895
  %1126 = vmatmul.mubr.bf16.gmra.mrb[0].mxu0 %v600
  %v1127 = vpop.f32.mrb[0].mxu0
  %v1128 = vadd.f32 %v207, %v1127
  %v1129 = vpop.f32.mrb[0].mxu0
  %v1130 = vadd.f32 %v211, %v1129
  %v1131 = vpop.f32.mrb[0].mxu0
  %v1132 = vadd.f32 %v207, %v1131
  %v1133 = vpop.f32.mrb[0].mxu0
  %v1134 = vadd.f32 %v211, %v1133
  %1135 = vmatprep.mubr.bf16.mxu0 %v898
  %1136 = vmatmul.mubr.bf16.gmra.mrb[0].mxu0 %v602
  %v1137 = vpop.f32.mrb[0].mxu0
  %v1138 = vadd.f32 %v207, %v1137
  %v1139 = vpop.f32.mrb[0].mxu0
  %v1140 = vadd.f32 %v211, %v1139
  %v1141 = vpop.f32.mrb[0].mxu0
  %v1142 = vadd.f32 %v207, %v1141
  %v1143 = vpop.f32.mrb[0].mxu0
  %v1144 = vadd.f32 %v211, %v1143
  %1145 = vmatprep.mubr.bf16.mxu0 %v901
  %1146 = vmatmul.mubr.bf16.gmra.mrb[0].mxu0 %v604
  %v1147 = vpop.f32.mrb[0].mxu0
  %v1148 = vadd.f32 %v207, %v1147
  %v1149 = vpop.f32.mrb[0].mxu0
  %v1150 = vadd.f32 %v211, %v1149
  %v1151 = vpop.f32.mrb[0].mxu0
  %v1152 = vadd.f32 %v207, %v1151
  %v1153 = vpop.f32.mrb[0].mxu0
  %v1154 = vadd.f32 %v211, %v1153
  %1155 = vmatprep.mubr.bf16.mxu0 %v904
  %1156 = vmatmul.mubr.bf16.gmra.mrb[0].mxu0 %v606
  %v1157 = vpop.f32.mrb[0].mxu0
  %v1158 = vadd.f32 %v207, %v1157
  %v1159 = vpop.f32.mrb[0].mxu0
  %v1160 = vadd.f32 %v211, %v1159
  %v1161 = vpop.f32.mrb[0].mxu0
  %v1162 = vadd.f32 %v207, %v1161
  %v1163 = vpop.f32.mrb[0].mxu0
  %v1164 = vadd.f32 %v211, %v1163
  %1165 = vmatprep.mubr.bf16.mxu0 %v907
  %1166 = vmatmul.mubr.bf16.gmra.mrb[0].mxu0 %v608
  %v1167 = vpop.f32.mrb[0].mxu0
  %v1168 = vadd.f32 %v207, %v1167
  %v1169 = vpop.f32.mrb[0].mxu0
  %v1170 = vadd.f32 %v211, %v1169
  %v1171 = vpop.f32.mrb[0].mxu0
  %v1172 = vadd.f32 %v207, %v1171
  %v1173 = vpop.f32.mrb[0].mxu0
  %v1174 = vadd.f32 %v211, %v1173
  %1175 = vmatprep.mubr.bf16.mxu0 %v910
  %1176 = vmatmul.mubr.bf16.gmra.mrb[0].mxu0 %v610
  %v1177 = vpop.f32.mrb[0].mxu0
  %v1178 = vadd.f32 %v207, %v1177
  %v1179 = vpop.f32.mrb[0].mxu0
  %v1180 = vadd.f32 %v211, %v1179
  %v1181 = vpop.f32.mrb[0].mxu0
  %v1182 = vadd.f32 %v207, %v1181
  %v1183 = vpop.f32.mrb[0].mxu0
  %v1184 = vadd.f32 %v211, %v1183
  %1185 = vmatprep.mubr.bf16.mxu0 %v913
  %1186 = vmatmul.mubr.bf16.gmra.mrb[0].mxu0 %v612
  %v1187 = vpop.f32.mrb[0].mxu0
  %v1188 = vadd.f32 %v207, %v1187
  %v1189 = vpop.f32.mrb[0].mxu0
  %v1190 = vadd.f32 %v211, %v1189
  %v1191 = vpop.f32.mrb[0].mxu0
  %v1192 = vadd.f32 %v207, %v1191
  %v1193 = vpop.f32.mrb[0].mxu0
  %v1194 = vadd.f32 %v211, %v1193
  %1195 = vmatprep.mubr.bf16.mxu0 %v916
  %1196 = vmatmul.mubr.bf16.gmra.mrb[0].mxu0 %v614
  %v1197 = vpop.f32.mrb[0].mxu0
  %v1198 = vadd.f32 %v207, %v1197
  %v1199 = vpop.f32.mrb[0].mxu0
  %v1200 = vadd.f32 %v211, %v1199
  %v1201 = vpop.f32.mrb[0].mxu0
  %v1202 = vadd.f32 %v207, %v1201
  %v1203 = vpop.f32.mrb[0].mxu0
  %v1204 = vadd.f32 %v211, %v1203
  %1205 = vmatprep.mubr.bf16.mxu0 %v919
  %1206 = vmatmul.mubr.bf16.gmra.mrb[0].mxu0 %v616
  %v1207 = vpop.f32.mrb[0].mxu0
  %v1208 = vadd.f32 %v207, %v1207
  %v1209 = vpop.f32.mrb[0].mxu0
  %v1210 = vadd.f32 %v211, %v1209
  %v1211 = vpop.f32.mrb[0].mxu0
  %v1212 = vadd.f32 %v207, %v1211
  %v1213 = vpop.f32.mrb[0].mxu0
  %v1214 = vadd.f32 %v211, %v1213
  %1215 = vmatprep.mubr.bf16.mxu0 %v922
  %1216 = vmatmul.mubr.bf16.gmra.mrb[0].mxu0 %v618
  %v1217 = vpop.f32.mrb[0].mxu0
  %v1218 = vadd.f32 %v207, %v1217
  %v1219 = vpop.f32.mrb[0].mxu0
  %v1220 = vadd.f32 %v211, %v1219
  %v1221 = vpop.f32.mrb[0].mxu0
  %v1222 = vadd.f32 %v207, %v1221
  %v1223 = vpop.f32.mrb[0].mxu0
  %v1224 = vadd.f32 %v211, %v1223
  %1225 = vmatprep.mubr.bf16.mxu0 %v925
  %1226 = vmatmul.mubr.bf16.gmra.mrb[0].mxu0 %v620
  %v1227 = vpop.f32.mrb[0].mxu0
  %v1228 = vadd.f32 %v207, %v1227
  %v1229 = vpop.f32.mrb[0].mxu0
  %v1230 = vadd.f32 %v211, %v1229
  %v1231 = vpop.f32.mrb[0].mxu0
  %v1232 = vadd.f32 %v207, %v1231
  %v1233 = vpop.f32.mrb[0].mxu0
  %v1234 = vadd.f32 %v211, %v1233
  %1235 = vmatprep.mubr.bf16.mxu0 %v928
  %1236 = vmatmul.mubr.bf16.gmra.mrb[0].mxu0 %v622
  %v1237 = vpop.f32.mrb[0].mxu0
  %v1238 = vadd.f32 %v207, %v1237
  %v1239 = vpop.f32.mrb[0].mxu0
  %v1240 = vadd.f32 %v211, %v1239
  %v1241 = vpop.f32.mrb[0].mxu0
  %v1242 = vadd.f32 %v207, %v1241
  %v1243 = vpop.f32.mrb[0].mxu0
  %v1244 = vadd.f32 %v211, %v1243
  %1245 = vmatprep.mubr.bf16.mxu0 %v931
  %1246 = vmatmul.mubr.bf16.gmra.mrb[0].mxu0 %v624
  %v1247 = vpop.f32.mrb[0].mxu0
  %v1248 = vadd.f32 %v207, %v1247
  %v1249 = vpop.f32.mrb[0].mxu0
  %v1250 = vadd.f32 %v211, %v1249
  %v1251 = vpop.f32.mrb[0].mxu0
  %v1252 = vadd.f32 %v207, %v1251
  %v1253 = vpop.f32.mrb[0].mxu0
  %v1254 = vadd.f32 %v211, %v1253
  %1255 = vmatprep.mubr.bf16.mxu0 %v934
  %1256 = vmatmul.mubr.bf16.gmra.mrb[0].mxu0 %v626
  %v1257 = vpop.f32.mrb[0].mxu0
  %v1258 = vadd.f32 %v207, %v1257
  %v1259 = vpop.f32.mrb[0].mxu0
  %v1260 = vadd.f32 %v211, %v1259
  %v1261 = vpop.f32.mrb[0].mxu0
  %v1262 = vadd.f32 %v207, %v1261
  %v1263 = vpop.f32.mrb[0].mxu0
  %v1264 = vadd.f32 %v211, %v1263
  %1265 = vmatprep.mubr.bf16.mxu0 %v937
  %1266 = vmatmul.mubr.bf16.gmra.mrb[0].mxu0 %v628
  %v1267 = vpop.f32.mrb[0].mxu0
  %v1268 = vadd.f32 %v207, %v1267
  %v1269 = vpop.f32.mrb[0].mxu0
  %v1270 = vadd.f32 %v211, %v1269
  %v1271 = vpop.f32.mrb[0].mxu0
  %v1272 = vadd.f32 %v207, %v1271
  %v1273 = vpop.f32.mrb[0].mxu0
  %v1274 = vadd.f32 %v211, %v1273
  %1275 = vmatprep.mubr.bf16.mxu0 %v940
  %1276 = vmatmul.mubr.bf16.gmra.mrb[0].mxu0 %v630
  %v1277 = vpop.f32.mrb[0].mxu0
  %v1278 = vadd.f32 %v207, %v1277
  %v1279 = vpop.f32.mrb[0].mxu0
  %v1280 = vadd.f32 %v211, %v1279
  %v1281 = vpop.f32.mrb[0].mxu0
  %v1282 = vadd.f32 %v207, %v1281
  %v1283 = vpop.f32.mrb[0].mxu0
  %v1284 = vadd.f32 %v211, %v1283
  %1285 = vmatprep.mubr.bf16.mxu0 %v943
  %1286 = vmatmul.mubr.bf16.gmra.mrb[0].mxu0 %v632
  %v1287 = vpop.f32.mrb[0].mxu0
  %v1288 = vadd.f32 %v207, %v1287
  %v1289 = vpop.f32.mrb[0].mxu0
  %v1290 = vadd.f32 %v211, %v1289
  %v1291 = vpop.f32.mrb[0].mxu0
  %v1292 = vadd.f32 %v207, %v1291
  %v1293 = vpop.f32.mrb[0].mxu0
  %v1294 = vadd.f32 %v211, %v1293
  %1295 = vmatprep.mubr.bf16.mxu0 %v946
  %1296 = vmatmul.mubr.bf16.gmra.mrb[0].mxu0 %v634
  %v1297 = vpop.f32.mrb[0].mxu0
  %v1298 = vadd.f32 %v207, %v1297
  %v1299 = vpop.f32.mrb[0].mxu0
  %v1300 = vadd.f32 %v211, %v1299
  %v1301 = vpop.f32.mrb[0].mxu0
  %v1302 = vadd.f32 %v207, %v1301
  %v1303 = vpop.f32.mrb[0].mxu0
  %v1304 = vadd.f32 %v211, %v1303
  %1305 = vmatprep.mubr.bf16.mxu0 %v949
  %1306 = vmatmul.mubr.bf16.gmra.mrb[0].mxu0 %v636
  %v1307 = vpop.f32.mrb[0].mxu0
  %v1308 = vadd.f32 %v207, %v1307
  %v1309 = vpop.f32.mrb[0].mxu0
  %v1310 = vadd.f32 %v211, %v1309
  %v1311 = vpop.f32.mrb[0].mxu0
  %v1312 = vadd.f32 %v207, %v1311
  %v1313 = vpop.f32.mrb[0].mxu0
  %v1314 = vadd.f32 %v211, %v1313
  %1315 = vmatprep.mubr.bf16.mxu0 %v952
  %1316 = vmatmul.mubr.bf16.gmra.mrb[0].mxu0 %v638
  %v1317 = vpop.f32.mrb[0].mxu0
  %v1318 = vadd.f32 %v207, %v1317
  %v1319 = vpop.f32.mrb[0].mxu0
  %v1320 = vadd.f32 %v211, %v1319
  %v1321 = vpop.f32.mrb[0].mxu0
  %v1322 = vadd.f32 %v207, %v1321
  %v1323 = vpop.f32.mrb[0].mxu0
  %v1324 = vadd.f32 %v211, %v1323
  %1325 = vmatprep.mubr.bf16.mxu0 %v955
  %1326 = vmatmul.mubr.bf16.gmra.mrb[0].mxu0 %v640
  %v1327 = vpop.f32.mrb[0].mxu0
  %v1328 = vadd.f32 %v207, %v1327
  %v1329 = vpop.f32.mrb[0].mxu0
  %v1330 = vadd.f32 %v211, %v1329
  %v1331 = vpop.f32.mrb[0].mxu0
  %v1332 = vadd.f32 %v207, %v1331
  %v1333 = vpop.f32.mrb[0].mxu0
  %v1334 = vadd.f32 %v211, %v1333
  %1335 = vmatprep.mubr.bf16.mxu0 %v958
  %1336 = vmatmul.mubr.bf16.gmra.mrb[0].mxu0 %v642
  %v1337 = vpop.f32.mrb[0].mxu0
  %v1338 = vadd.f32 %v207, %v1337
  %v1339 = vpop.f32.mrb[0].mxu0
  %v1340 = vadd.f32 %v211, %v1339
  %v1341 = vpop.f32.mrb[0].mxu0
  %v1342 = vadd.f32 %v207, %v1341
  %v1343 = vpop.f32.mrb[0].mxu0
  %v1344 = vadd.f32 %v211, %v1343
  %1345 = vmatprep.mubr.bf16.mxu0 %v961
  %1346 = vmatmul.mubr.bf16.gmra.mrb[0].mxu0 %v644
  %v1347 = vpop.f32.mrb[0].mxu0
  %v1348 = vadd.f32 %v207, %v1347
  %v1349 = vpop.f32.mrb[0].mxu0
  %v1350 = vadd.f32 %v211, %v1349
  %v1351 = vpop.f32.mrb[0].mxu0
  %v1352 = vadd.f32 %v207, %v1351
  %v1353 = vpop.f32.mrb[0].mxu0
  %v1354 = vadd.f32 %v211, %v1353
  %1355 = vmatprep.mubr.bf16.mxu0 %v964
  %1356 = vmatmul.mubr.bf16.gmra.mrb[0].mxu0 %v646
  %v1357 = vpop.f32.mrb[0].mxu0
  %v1358 = vadd.f32 %v207, %v1357
  %v1359 = vpop.f32.mrb[0].mxu0
  %v1360 = vadd.f32 %v211, %v1359
  %v1361 = vpop.f32.mrb[0].mxu0
  %v1362 = vadd.f32 %v207, %v1361
  %v1363 = vpop.f32.mrb[0].mxu0
  %v1364 = vadd.f32 %v211, %v1363
  %1365 = vmatprep.mubr.bf16.mxu0 %v967
  %1366 = vmatmul.mubr.bf16.gmra.mrb[0].mxu0 %v648
  %v1367 = vpop.f32.mrb[0].mxu0
  %v1368 = vadd.f32 %v207, %v1367
  %v1369 = vpop.f32.mrb[0].mxu0
  %v1370 = vadd.f32 %v211, %v1369
  %v1371 = vpop.f32.mrb[0].mxu0
  %v1372 = vadd.f32 %v207, %v1371
  %v1373 = vpop.f32.mrb[0].mxu0
  %v1374 = vadd.f32 %v211, %v1373
  %1375 = vmatprep.mubr.bf16.mxu0 %v970
  %1376 = vmatmul.mubr.bf16.gmra.mrb[0].mxu0 %v650
  %v1377 = vpop.f32.mrb[0].mxu0
  %v1378 = vadd.f32 %v207, %v1377
  %v1379 = vpop.f32.mrb[0].mxu0
  %v1380 = vadd.f32 %v211, %v1379
  %v1381 = vpop.f32.mrb[0].mxu0
  %v1382 = vadd.f32 %v207, %v1381
  %v1383 = vpop.f32.mrb[0].mxu0
  %v1384 = vadd.f32 %v211, %v1383
  %1385 = vmatprep.mubr.bf16.mxu0 %v973
  %1386 = vmatmul.mubr.bf16.gmra.mrb[0].mxu0 %v652
  %v1387 = vpop.f32.mrb[0].mxu0
  %v1388 = vadd.f32 %v207, %v1387
  %v1389 = vpop.f32.mrb[0].mxu0
  %v1390 = vadd.f32 %v211, %v1389
  %v1391 = vpop.f32.mrb[0].mxu0
  %v1392 = vadd.f32 %v207, %v1391
  %v1393 = vpop.f32.mrb[0].mxu0
  %v1394 = vadd.f32 %v211, %v1393
  %1395 = vmatprep.mubr.bf16.mxu0 %v976
  %1396 = vmatmul.mubr.bf16.gmra.mrb[0].mxu0 %v654
  %v1397 = vpop.f32.mrb[0].mxu0
  %v1398 = vadd.f32 %v207, %v1397
  %v1399 = vpop.f32.mrb[0].mxu0
  %v1400 = vadd.f32 %v211, %v1399
  %v1401 = vpop.f32.mrb[0].mxu0
  %v1402 = vadd.f32 %v207, %v1401
  %v1403 = vpop.f32.mrb[0].mxu0
  %v1404 = vadd.f32 %v211, %v1403
  %1405 = vmatprep.mubr.bf16.mxu0 %v979
  %1406 = vmatmul.mubr.bf16.gmra.mrb[0].mxu0 %v656
  %v1407 = vpop.f32.mrb[0].mxu0
  %v1408 = vadd.f32 %v207, %v1407
  %v1409 = vpop.f32.mrb[0].mxu0
  %v1410 = vadd.f32 %v211, %v1409
  %v1411 = vpop.f32.mrb[0].mxu0
  %v1412 = vadd.f32 %v207, %v1411
  %v1413 = vpop.f32.mrb[0].mxu0
  %v1414 = vadd.f32 %v211, %v1413
  %1415 = vmatprep.mubr.bf16.mxu0 %v982
  %1416 = vmatmul.mubr.bf16.gmra.mrb[0].mxu0 %v658
  %v1417 = vpop.f32.mrb[0].mxu0
  %v1418 = vadd.f32 %v207, %v1417
  %v1419 = vpop.f32.mrb[0].mxu0
  %v1420 = vadd.f32 %v211, %v1419
  %v1421 = vpop.f32.mrb[0].mxu0
  %v1422 = vadd.f32 %v207, %v1421
  %v1423 = vpop.f32.mrb[0].mxu0
  %v1424 = vadd.f32 %v211, %v1423
  %1425 = vmatprep.mubr.bf16.mxu0 %v985
  %1426 = vmatmul.mubr.bf16.gmra.mrb[0].mxu0 %v660
  %v1427 = vpop.f32.mrb[0].mxu0
  %v1428 = vadd.f32 %v207, %v1427
  %v1429 = vpop.f32.mrb[0].mxu0
  %v1430 = vadd.f32 %v211, %v1429
  %v1431 = vpop.f32.mrb[0].mxu0
  %v1432 = vadd.f32 %v207, %v1431
  %v1433 = vpop.f32.mrb[0].mxu0
  %v1434 = vadd.f32 %v211, %v1433
  %1435 = vmatprep.mubr.bf16.mxu0 %v988
  %1436 = vmatmul.mubr.bf16.gmra.mrb[0].mxu0 %v662
  %v1437 = vpop.f32.mrb[0].mxu0
  %v1438 = vadd.f32 %v207, %v1437
  %v1439 = vpop.f32.mrb[0].mxu0
  %v1440 = vadd.f32 %v211, %v1439
  %v1441 = vpop.f32.mrb[0].mxu0
  %v1442 = vadd.f32 %v207, %v1441
  %v1443 = vpop.f32.mrb[0].mxu0
  %v1444 = vadd.f32 %v211, %v1443
  %1445 = vmatprep.mubr.bf16.mxu0 %v991
  %1446 = vmatmul.mubr.bf16.gmra.mrb[0].mxu0 %v664
  %v1447 = vpop.f32.mrb[0].mxu0
  %v1448 = vadd.f32 %v207, %v1447
  %v1449 = vpop.f32.mrb[0].mxu0
  %v1450 = vadd.f32 %v211, %v1449
  %v1451 = vpop.f32.mrb[0].mxu0
  %v1452 = vadd.f32 %v207, %v1451
  %v1453 = vpop.f32.mrb[0].mxu0
  %v1454 = vadd.f32 %v211, %v1453
  %1455 = vmatprep.mubr.bf16.mxu0 %v994
  %1456 = vmatmul.mubr.bf16.gmra.mrb[0].mxu0 %v666
  %v1457 = vpop.f32.mrb[0].mxu0
  %v1458 = vadd.f32 %v207, %v1457
  %v1459 = vpop.f32.mrb[0].mxu0
  %v1460 = vadd.f32 %v211, %v1459
  %v1461 = vpop.f32.mrb[0].mxu0
  %v1462 = vadd.f32 %v207, %v1461
  %v1463 = vpop.f32.mrb[0].mxu0
  %v1464 = vadd.f32 %v211, %v1463
  %1465 = vmatprep.mubr.bf16.mxu0 %v997
  %1466 = vmatmul.mubr.bf16.gmra.mrb[0].mxu0 %v668
  %v1467 = vpop.f32.mrb[0].mxu0
  %v1468 = vadd.f32 %v207, %v1467
  %v1469 = vpop.f32.mrb[0].mxu0
  %v1470 = vadd.f32 %v211, %v1469
  %v1471 = vpop.f32.mrb[0].mxu0
  %v1472 = vadd.f32 %v207, %v1471
  %v1473 = vpop.f32.mrb[0].mxu0
  %v1474 = vadd.f32 %v211, %v1473
  %1475 = vmatprep.mubr.bf16.mxu0 %v1000
  %1476 = vmatmul.mubr.bf16.gmra.mrb[0].mxu0 %v670
  %v1477 = vpop.f32.mrb[0].mxu0
  %v1478 = vadd.f32 %v207, %v1477
  %v1479 = vpop.f32.mrb[0].mxu0
  %v1480 = vadd.f32 %v211, %v1479
  %v1481 = vpop.f32.mrb[0].mxu0
  %v1482 = vadd.f32 %v207, %v1481
  %v1483 = vpop.f32.mrb[0].mxu0
  %v1484 = vadd.f32 %v211, %v1483
  %1485 = vmatprep.mubr.bf16.mxu0 %v1003
  %1486 = vmatmul.mubr.bf16.gmra.mrb[0].mxu0 %v672
  %v1487 = vpop.f32.mrb[0].mxu0
  %v1488 = vadd.f32 %v207, %v1487
  %v1489 = vpop.f32.mrb[0].mxu0
  %v1490 = vadd.f32 %v211, %v1489
  %v1491 = vpop.f32.mrb[0].mxu0
  %v1492 = vadd.f32 %v207, %v1491
  %v1493 = vpop.f32.mrb[0].mxu0
  %v1494 = vadd.f32 %v211, %v1493
  %1495 = vmatprep.mubr.bf16.mxu0 %v1006
  %1496 = vmatmul.mubr.bf16.gmra.mrb[0].mxu0 %v674
  %v1497 = vpop.f32.mrb[0].mxu0
  %v1498 = vadd.f32 %v207, %v1497
  %v1499 = vpop.f32.mrb[0].mxu0
  %v1500 = vadd.f32 %v211, %v1499
  %v1501 = vpop.f32.mrb[0].mxu0
  %v1502 = vadd.f32 %v207, %v1501
  %v1503 = vpop.f32.mrb[0].mxu0
  %v1504 = vadd.f32 %v211, %v1503
  %1505 = vmatprep.mubr.bf16.mxu0 %v1009
  %1506 = vmatmul.mubr.bf16.gmra.mrb[0].mxu0 %v676
  %v1507 = vpop.f32.mrb[0].mxu0
  %v1508 = vadd.f32 %v207, %v1507
  %v1509 = vpop.f32.mrb[0].mxu0
  %v1510 = vadd.f32 %v211, %v1509
  %v1511 = vpop.f32.mrb[0].mxu0
  %v1512 = vadd.f32 %v207, %v1511
  %v1513 = vpop.f32.mrb[0].mxu0
  %v1514 = vadd.f32 %v211, %v1513
  %1515 = vmatprep.mubr.bf16.mxu0 %v1012
  %1516 = vmatmul.mubr.bf16.gmra.mrb[0].mxu0 %v678
  %v1517 = vpop.f32.mrb[0].mxu0
  %v1518 = vadd.f32 %v207, %v1517
  %v1519 = vpop.f32.mrb[0].mxu0
  %v1520 = vadd.f32 %v211, %v1519
  %v1521 = vpop.f32.mrb[0].mxu0
  %v1522 = vadd.f32 %v207, %v1521
  %v1523 = vpop.f32.mrb[0].mxu0
  %v1524 = vadd.f32 %v211, %v1523
  %1525 = vmatprep.mubr.bf16.mxu0 %v1015
  %1526 = vmatmul.mubr.bf16.gmra.mrb[0].mxu0 %v680
  %v1527 = vpop.f32.mrb[0].mxu0
  %v1528 = vadd.f32 %v207, %v1527
  %v1529 = vpop.f32.mrb[0].mxu0
  %v1530 = vadd.f32 %v211, %v1529
  %v1531 = vpop.f32.mrb[0].mxu0
  %v1532 = vadd.f32 %v207, %v1531
  %v1533 = vpop.f32.mrb[0].mxu0
  %v1534 = vadd.f32 %v211, %v1533
  %1535 = vmatprep.mubr.bf16.mxu0 %v1018
  %1536 = vmatmul.mubr.bf16.gmra.mrb[0].mxu0 %v682
  %v1537 = vpop.f32.mrb[0].mxu0
  %v1538 = vadd.f32 %v207, %v1537
  %v1539 = vpop.f32.mrb[0].mxu0
  %v1540 = vadd.f32 %v211, %v1539
  %v1541 = vpop.f32.mrb[0].mxu0
  %v1542 = vadd.f32 %v207, %v1541
  %v1543 = vpop.f32.mrb[0].mxu0
  %v1544 = vadd.f32 %v211, %v1543
  %1545 = vmatprep.mubr.bf16.mxu0 %v1021
  %1546 = vmatmul.mubr.bf16.gmra.mrb[0].mxu0 %v684
  %v1547 = vpop.f32.mrb[0].mxu0
  %v1548 = vadd.f32 %v207, %v1547
  %v1549 = vpop.f32.mrb[0].mxu0
  %v1550 = vadd.f32 %v211, %v1549
  %v1551 = vpop.f32.mrb[0].mxu0
  %v1552 = vadd.f32 %v207, %v1551
  %v1553 = vpop.f32.mrb[0].mxu0
  %v1554 = vadd.f32 %v211, %v1553
  %1555 = vmatprep.mubr.bf16.mxu0 %v1024
  %1556 = vmatmul.mubr.bf16.gmra.mrb[0].mxu0 %v686
  %v1557 = vpop.f32.mrb[0].mxu0
  %v1558 = vadd.f32 %v207, %v1557
  %v1559 = vpop.f32.mrb[0].mxu0
  %v1560 = vadd.f32 %v211, %v1559
  %v1561 = vpop.f32.mrb[0].mxu0
  %v1562 = vadd.f32 %v207, %v1561
  %v1563 = vpop.f32.mrb[0].mxu0
  %v1564 = vadd.f32 %v211, %v1563
  %1565 = vmatprep.mubr.bf16.mxu0 %v1027
  %1566 = vmatmul.mubr.bf16.gmra.mrb[0].mxu0 %v688
  %v1567 = vpop.f32.mrb[0].mxu0
  %v1568 = vadd.f32 %v207, %v1567
  %v1569 = vpop.f32.mrb[0].mxu0
  %v1570 = vadd.f32 %v211, %v1569
  %v1571 = vpop.f32.mrb[0].mxu0
  %v1572 = vadd.f32 %v207, %v1571
  %v1573 = vpop.f32.mrb[0].mxu0
  %v1574 = vadd.f32 %v211, %v1573
  %1575 = vmatprep.mubr.bf16.mxu0 %v1030
  %1576 = vmatmul.mubr.bf16.gmra.mrb[0].mxu0 %v690
  %v1577 = vpop.f32.mrb[0].mxu0
  %v1578 = vadd.f32 %v207, %v1577
  %v1579 = vpop.f32.mrb[0].mxu0
  %v1580 = vadd.f32 %v211, %v1579
  %v1581 = vpop.f32.mrb[0].mxu0
  %v1582 = vadd.f32 %v207, %v1581
  %v1583 = vpop.f32.mrb[0].mxu0
  %v1584 = vadd.f32 %v211, %v1583
  %1585 = vmatprep.mubr.bf16.mxu0 %v1033
  %1586 = vmatmul.mubr.bf16.gmra.mrb[0].mxu0 %v692
  %v1587 = vpop.f32.mrb[0].mxu0
  %v1588 = vadd.f32 %v207, %v1587
  %v1589 = vpop.f32.mrb[0].mxu0
  %v1590 = vadd.f32 %v211, %v1589
  %v1591 = vpop.f32.mrb[0].mxu0
  %v1592 = vadd.f32 %v207, %v1591
  %v1593 = vpop.f32.mrb[0].mxu0
  %v1594 = vadd.f32 %v211, %v1593
  %1595 = vmatprep.mubr.bf16.mxu0 %v1036
  %1596 = vmatmul.mubr.bf16.gmra.mrb[0].mxu0 %v694
  %v1597 = vpop.f32.mrb[0].mxu0
  %v1598 = vadd.f32 %v207, %v1597
  %v1599 = vpop.f32.mrb[0].mxu0
  %v1600 = vadd.f32 %v211, %v1599
  %v1601 = vpop.f32.mrb[0].mxu0
  %v1602 = vadd.f32 %v207, %v1601
  %v1603 = vpop.f32.mrb[0].mxu0
  %v1604 = vadd.f32 %v211, %v1603
  %1605 = vmatprep.mubr.bf16.mxu0 %v1039
  %1606 = vmatmul.mubr.bf16.gmra.mrb[0].mxu0 %v696
  %v1607 = vpop.f32.mrb[0].mxu0
  %v1608 = vadd.f32 %v207, %v1607
  %v1609 = vpop.f32.mrb[0].mxu0
  %v1610 = vadd.f32 %v211, %v1609
  %v1611 = vpop.f32.mrb[0].mxu0
  %v1612 = vadd.f32 %v207, %v1611
  %v1613 = vpop.f32.mrb[0].mxu0
  %v1614 = vadd.f32 %v211, %v1613
  %1615 = vmatprep.mubr.bf16.mxu0 %v1042
  %1616 = vmatmul.mubr.bf16.gmra.mrb[0].mxu0 %v698
  %v1617 = vpop.f32.mrb[0].mxu0
  %v1618 = vadd.f32 %v207, %v1617
  %v1619 = vpop.f32.mrb[0].mxu0
  %v1620 = vadd.f32 %v211, %v1619
  %v1621 = vpop.f32.mrb[0].mxu0
  %v1622 = vadd.f32 %v207, %v1621
  %v1623 = vpop.f32.mrb[0].mxu0
  %v1624 = vadd.f32 %v211, %v1623
  %1625 = vmatprep.mubr.bf16.mxu0 %v1045
  %1626 = vmatmul.mubr.bf16.gmra.mrb[0].mxu0 %v700
  %v1627 = vpop.f32.mrb[0].mxu0
  %v1628 = vadd.f32 %v207, %v1627
  %v1629 = vpop.f32.mrb[0].mxu0
  %v1630 = vadd.f32 %v211, %v1629
  %v1631 = vpop.f32.mrb[0].mxu0
  %v1632 = vadd.f32 %v207, %v1631
  %v1633 = vpop.f32.mrb[0].mxu0
  %v1634 = vadd.f32 %v211, %v1633
  %1635 = vmatprep.mubr.bf16.mxu0 %v1048
  %1636 = vmatmul.mubr.bf16.gmra.mrb[0].mxu0 %v702
  %v1637 = vpop.f32.mrb[0].mxu0
  %v1638 = vadd.f32 %v207, %v1637
  %v1639 = vpop.f32.mrb[0].mxu0
  %v1640 = vadd.f32 %v211, %v1639
  %v1641 = vpop.f32.mrb[0].mxu0
  %v1642 = vadd.f32 %v207, %v1641
  %v1643 = vpop.f32.mrb[0].mxu0
  %v1644 = vadd.f32 %v211, %v1643
  %1645 = vmatprep.mubr.bf16.mxu0 %v1051
  %1646 = vmatmul.mubr.bf16.gmra.mrb[0].mxu0 %v704
  %v1647 = vpop.f32.mrb[0].mxu0
  %v1648 = vadd.f32 %v207, %v1647
  %v1649 = vpop.f32.mrb[0].mxu0
  %v1650 = vadd.f32 %v211, %v1649
  %v1651 = vpop.f32.mrb[0].mxu0
  %v1652 = vadd.f32 %v207, %v1651
  %v1653 = vpop.f32.mrb[0].mxu0
  %v1654 = vadd.f32 %v211, %v1653
  %1655 = vmatprep.mubr.bf16.mxu0 %v1054
  %1656 = vmatmul.mubr.bf16.gmra.mrb[0].mxu0 %v706
  %v1657 = vpop.f32.mrb[0].mxu0
  %v1658 = vadd.f32 %v207, %v1657
  %v1659 = vpop.f32.mrb[0].mxu0
  %v1660 = vadd.f32 %v211, %v1659
  %v1661 = vpop.f32.mrb[0].mxu0
  %v1662 = vadd.f32 %v207, %v1661
  %v1663 = vpop.f32.mrb[0].mxu0
  %v1664 = vadd.f32 %v211, %v1663
  %1665 = vmatprep.mubr.bf16.mxu0 %v1057
  %1666 = vmatmul.mubr.bf16.gmra.mrb[0].mxu0 %v708
  %v1667 = vpop.f32.mrb[0].mxu0
  %v1668 = vadd.f32 %v207, %v1667
  %v1669 = vpop.f32.mrb[0].mxu0
  %v1670 = vadd.f32 %v211, %v1669
  %v1671 = vpop.f32.mrb[0].mxu0
  %v1672 = vadd.f32 %v207, %v1671
  %v1673 = vpop.f32.mrb[0].mxu0
  %v1674 = vadd.f32 %v211, %v1673
  %1675 = vmatprep.mubr.bf16.mxu0 %v1060
  %1676 = vmatmul.mubr.bf16.gmra.mrb[0].mxu0 %v710
  %v1677 = vpop.f32.mrb[0].mxu0
  %v1678 = vadd.f32 %v207, %v1677
  %v1679 = vpop.f32.mrb[0].mxu0
  %v1680 = vadd.f32 %v211, %v1679
  %v1681 = vpop.f32.mrb[0].mxu0
  %v1682 = vadd.f32 %v207, %v1681
  %v1683 = vpop.f32.mrb[0].mxu0
  %v1684 = vadd.f32 %v211, %v1683
  %1685 = vmatprep.mubr.bf16.mxu0 %v1063
  %1686 = vmatmul.mubr.bf16.gmra.mrb[0].mxu0 %v712
  %v1687 = vpop.f32.mrb[0].mxu0
  %v1688 = vadd.f32 %v207, %v1687
  %v1689 = vpop.f32.mrb[0].mxu0
  %v1690 = vadd.f32 %v211, %v1689
  %v1691 = vpop.f32.mrb[0].mxu0
  %v1692 = vadd.f32 %v207, %v1691
  %v1693 = vpop.f32.mrb[0].mxu0
  %v1694 = vadd.f32 %v211, %v1693
  %1695 = vmatprep.mubr.bf16.mxu0 %v1066
  %1696 = vmatmul.mubr.bf16.gmra.mrb[0].mxu0 %v714
  %v1697 = vpop.f32.mrb[0].mxu0
  %v1698 = vadd.f32 %v207, %v1697
  %v1699 = vpop.f32.mrb[0].mxu0
  %v1700 = vadd.f32 %v211, %v1699
  %v1701 = vpop.f32.mrb[0].mxu0
  %v1702 = vadd.f32 %v207, %v1701
  %v1703 = vpop.f32.mrb[0].mxu0
  %v1704 = vadd.f32 %v211, %v1703
  %1705 = vmatprep.mubr.bf16.mxu0 %v1069
  %1706 = vmatmul.mubr.bf16.gmra.mrb[0].mxu0 %v716
  %v1707 = vpop.f32.mrb[0].mxu0
  %v1708 = vadd.f32 %v207, %v1707
  %v1709 = vpop.f32.mrb[0].mxu0
  %v1710 = vadd.f32 %v211, %v1709
  %v1711 = vpop.f32.mrb[0].mxu0
  %v1712 = vadd.f32 %v207, %v1711
  %v1713 = vpop.f32.mrb[0].mxu0
  %v1714 = vadd.f32 %v211, %v1713
  %1715 = vmatprep.mubr.bf16.mxu0 %v1072
  %1716 = vmatmul.mubr.bf16.gmra.mrb[0].mxu0 %v718
  %v1717 = vpop.f32.mrb[0].mxu0
  %v1718 = vadd.f32 %v207, %v1717
  %v1719 = vpop.f32.mrb[0].mxu0
  %v1720 = vadd.f32 %v211, %v1719
  %v1721 = vpop.f32.mrb[0].mxu0
  %v1722 = vadd.f32 %v207, %v1721
  %v1723 = vpop.f32.mrb[0].mxu0
  %v1724 = vadd.f32 %v211, %v1723
  %1725 = vmatprep.mubr.bf16.mxu0 %v1075
  %1726 = vmatmul.mubr.bf16.gmra.mrb[0].mxu0 %v720
  %v1727 = vpop.f32.mrb[0].mxu0
  %v1728 = vadd.f32 %v207, %v1727
  %v1729 = vpop.f32.mrb[0].mxu0
  %v1730 = vadd.f32 %v211, %v1729
  %v1731 = vpop.f32.mrb[0].mxu0
  %v1732 = vadd.f32 %v207, %v1731
  %v1733 = vpop.f32.mrb[0].mxu0
  %v1734 = vadd.f32 %v211, %v1733
  %1735 = vmatprep.mubr.bf16.mxu0 %v1078
  %1736 = vmatmul.mubr.bf16.gmra.mrb[0].mxu0 %v722
  %v1737 = vpop.f32.mrb[0].mxu0
  %v1738 = vadd.f32 %v207, %v1737
  %v1739 = vpop.f32.mrb[0].mxu0
  %v1740 = vadd.f32 %v211, %v1739
  %v1741 = vpop.f32.mrb[0].mxu0
  %v1742 = vadd.f32 %v207, %v1741
  %v1743 = vpop.f32.mrb[0].mxu0
  %v1744 = vadd.f32 %v211, %v1743
  %1745 = vmatprep.mubr.bf16.mxu0 %v1081
  %1746 = vmatmul.mubr.bf16.gmra.mrb[0].mxu0 %v724
  %v1747 = vpop.f32.mrb[0].mxu0
  %v1748 = vadd.f32 %v207, %v1747
  %v1749 = vpop.f32.mrb[0].mxu0
  %v1750 = vadd.f32 %v211, %v1749
  %v1751 = vpop.f32.mrb[0].mxu0
  %v1752 = vadd.f32 %v207, %v1751
  %v1753 = vpop.f32.mrb[0].mxu0
  %v1754 = vadd.f32 %v211, %v1753
  %1755 = vdwg.mxu0
  %v1756 = vtanh.pop %v1118
  %v1757 = vtanh.pop %v1120
  %v1758 = vtanh.pop %v1122
  %v1759 = vtanh.pop %v1124
  %v1760 = vtanh.pop %v1128
  %v1761 = vtanh.pop %v1130
  %v1762 = vtanh.pop %v1132
  %v1763 = vtanh.pop %v1134
  %v1764 = vtanh.pop %v1138
  %v1765 = vtanh.pop %v1140
  %v1766 = vtanh.pop %v1142
  %v1767 = vtanh.pop %v1144
  %v1768 = vtanh.pop %v1148
  %v1769 = vtanh.pop %v1150
  %v1770 = vtanh.pop %v1152
  %v1771 = vtanh.pop %v1154
  %v1772 = vtanh.pop %v1158
  %v1773 = vtanh.pop %v1160
  %v1774 = vtanh.pop %v1162
  %v1775 = vtanh.pop %v1164
  %v1776 = vtanh.pop %v1168
  %v1777 = vtanh.pop %v1170
  %v1778 = vtanh.pop %v1172
  %v1779 = vtanh.pop %v1174
  %v1780 = vtanh.pop %v1178
  %v1781 = vtanh.pop %v1180
  %v1782 = vtanh.pop %v1182
  %v1783 = vtanh.pop %v1184
  %v1784 = vtanh.pop %v1188
  %v1785 = vtanh.pop %v1190
  %v1786 = vtanh.pop %v1192
  %v1787 = vtanh.pop %v1194
  %v1788 = vtanh.pop %v1198
  %v1789 = vtanh.pop %v1200
  %v1790 = vtanh.pop %v1202
  %v1791 = vtanh.pop %v1204
  %v1792 = vtanh.pop %v1208
  %v1793 = vtanh.pop %v1210
  %v1794 = vtanh.pop %v1212
  %v1795 = vtanh.pop %v1214
  %v1796 = vtanh.pop %v1218
  %v1797 = vtanh.pop %v1220
  %v1798 = vtanh.pop %v1222
  %v1799 = vtanh.pop %v1224
  %v1800 = vtanh.pop %v1228
  %v1801 = vtanh.pop %v1230
  %v1802 = vtanh.pop %v1232
  %v1803 = vtanh.pop %v1234
  %v1804 = vtanh.pop %v1238
  %v1805 = vtanh.pop %v1240
  %v1806 = vtanh.pop %v1242
  %v1807 = vtanh.pop %v1244
  %v1808 = vtanh.pop %v1248
  %v1809 = vtanh.pop %v1250
  %v1810 = vtanh.pop %v1252
  %v1811 = vtanh.pop %v1254
  %v1812 = vtanh.pop %v1258
  %v1813 = vtanh.pop %v1260
  %v1814 = vtanh.pop %v1262
  %v1815 = vtanh.pop %v1264
  %v1816 = vtanh.pop %v1268
  %v1817 = vtanh.pop %v1270
  %v1818 = vtanh.pop %v1272
  %v1819 = vtanh.pop %v1274
  %v1820 = vtanh.pop %v1278
  %v1821 = vtanh.pop %v1280
  %v1822 = vtanh.pop %v1282
  %v1823 = vtanh.pop %v1284
  %v1824 = vtanh.pop %v1288
  %v1825 = vtanh.pop %v1290
  %v1826 = vtanh.pop %v1292
  %v1827 = vtanh.pop %v1294
  %v1828 = vtanh.pop %v1298
  %v1829 = vtanh.pop %v1300
  %v1830 = vtanh.pop %v1302
  %v1831 = vtanh.pop %v1304
  %v1832 = vtanh.pop %v1308
  %v1833 = vtanh.pop %v1310
  %v1834 = vtanh.pop %v1312
  %v1835 = vtanh.pop %v1314
  %v1836 = vtanh.pop %v1318
  %v1837 = vtanh.pop %v1320
  %v1838 = vtanh.pop %v1322
  %v1839 = vtanh.pop %v1324
  %v1840 = vtanh.pop %v1328
  %v1841 = vtanh.pop %v1330
  %v1842 = vtanh.pop %v1332
  %v1843 = vtanh.pop %v1334
  %v1844 = vtanh.pop %v1338
  %v1845 = vtanh.pop %v1340
  %v1846 = vtanh.pop %v1342
  %v1847 = vtanh.pop %v1344
  %v1848 = vtanh.pop %v1348
  %v1849 = vtanh.pop %v1350
  %v1850 = vtanh.pop %v1352
  %v1851 = vtanh.pop %v1354
  %v1852 = vtanh.pop %v1358
  %v1853 = vtanh.pop %v1360
  %v1854 = vtanh.pop %v1362
  %v1855 = vtanh.pop %v1364
  %v1856 = vtanh.pop %v1368
  %v1857 = vtanh.pop %v1370
  %v1858 = vtanh.pop %v1372
  %v1859 = vtanh.pop %v1374
  %v1860 = vtanh.pop %v1378
  %v1861 = vtanh.pop %v1380
  %v1862 = vtanh.pop %v1382
  %v1863 = vtanh.pop %v1384
  %v1864 = vtanh.pop %v1388
  %v1865 = vtanh.pop %v1390
  %v1866 = vtanh.pop %v1392
  %v1867 = vtanh.pop %v1394
  %v1868 = vtanh.pop %v1398
  %v1869 = vtanh.pop %v1400
  %v1870 = vtanh.pop %v1402
  %v1871 = vtanh.pop %v1404
  %v1872 = vtanh.pop %v1408
  %v1873 = vtanh.pop %v1410
  %v1874 = vtanh.pop %v1412
  %v1875 = vtanh.pop %v1414
  %v1876 = vtanh.pop %v1418
  %v1877 = vtanh.pop %v1420
  %v1878 = vtanh.pop %v1422
  %v1879 = vtanh.pop %v1424
  %v1880 = vtanh.pop %v1428
  %v1881 = vtanh.pop %v1430
  %v1882 = vtanh.pop %v1432
  %v1883 = vtanh.pop %v1434
  %v1884 = vtanh.pop %v1438
  %v1885 = vtanh.pop %v1440
  %v1886 = vtanh.pop %v1442
  %v1887 = vtanh.pop %v1444
  %v1888 = vtanh.pop %v1448
  %v1889 = vtanh.pop %v1450
  %v1890 = vtanh.pop %v1452
  %v1891 = vtanh.pop %v1454
  %v1892 = vtanh.pop %v1458
  %v1893 = vtanh.pop %v1460
  %v1894 = vtanh.pop %v1462
  %v1895 = vtanh.pop %v1464
  %v1896 = vtanh.pop %v1468
  %v1897 = vtanh.pop %v1470
  %v1898 = vtanh.pop %v1472
  %v1899 = vtanh.pop %v1474
  %v1900 = vtanh.pop %v1478
  %v1901 = vtanh.pop %v1480
  %v1902 = vtanh.pop %v1482
  %v1903 = vtanh.pop %v1484
  %v1904 = vtanh.pop %v1488
  %v1905 = vtanh.pop %v1490
  %v1906 = vtanh.pop %v1492
  %v1907 = vtanh.pop %v1494
  %v1908 = vtanh.pop %v1498
  %v1909 = vtanh.pop %v1500
  %v1910 = vtanh.pop %v1502
  %v1911 = vtanh.pop %v1504
  %v1912 = vtanh.pop %v1508
  %v1913 = vtanh.pop %v1510
  %v1914 = vtanh.pop %v1512
  %v1915 = vtanh.pop %v1514
  %v1916 = vtanh.pop %v1518
  %v1917 = vtanh.pop %v1520
  %v1918 = vtanh.pop %v1522
  %v1919 = vtanh.pop %v1524
  %v1920 = vtanh.pop %v1528
  %v1921 = vtanh.pop %v1530
  %v1922 = vtanh.pop %v1532
  %v1923 = vtanh.pop %v1534
  %v1924 = vtanh.pop %v1538
  %v1925 = vtanh.pop %v1540
  %v1926 = vtanh.pop %v1542
  %v1927 = vtanh.pop %v1544
  %v1928 = vtanh.pop %v1548
  %v1929 = vtanh.pop %v1550
  %v1930 = vtanh.pop %v1552
  %v1931 = vtanh.pop %v1554
  %v1932 = vtanh.pop %v1558
  %v1933 = vtanh.pop %v1560
  %v1934 = vtanh.pop %v1562
  %v1935 = vtanh.pop %v1564
  %v1936 = vtanh.pop %v1568
  %v1937 = vtanh.pop %v1570
  %v1938 = vtanh.pop %v1572
  %v1939 = vtanh.pop %v1574
  %v1940 = vtanh.pop %v1578
  %v1941 = vtanh.pop %v1580
  %v1942 = vtanh.pop %v1582
  %v1943 = vtanh.pop %v1584
  %v1944 = vtanh.pop %v1588
  %v1945 = vtanh.pop %v1590
  %v1946 = vtanh.pop %v1592
  %v1947 = vtanh.pop %v1594
  %v1948 = vtanh.pop %v1598
  %v1949 = vtanh.pop %v1600
  %v1950 = vtanh.pop %v1602
  %v1951 = vtanh.pop %v1604
  %v1952 = vtanh.pop %v1608
  %v1953 = vtanh.pop %v1610
  %v1954 = vtanh.pop %v1612
  %v1955 = vtanh.pop %v1614
  %v1956 = vtanh.pop %v1618
  %v1957 = vtanh.pop %v1620
  %v1958 = vtanh.pop %v1622
  %v1959 = vtanh.pop %v1624
  %v1960 = vtanh.pop %v1628
  %v1961 = vtanh.pop %v1630
  %v1962 = vtanh.pop %v1632
  %v1963 = vtanh.pop %v1634
  %v1964 = vtanh.pop %v1638
  %v1965 = vtanh.pop %v1640
  %v1966 = vtanh.pop %v1642
  %v1967 = vtanh.pop %v1644
  %v1968 = vtanh.pop %v1648
  %v1969 = vtanh.pop %v1650
  %v1970 = vtanh.pop %v1652
  %v1971 = vtanh.pop %v1654
  %v1972 = vtanh.pop %v1658
  %v1973 = vtanh.pop %v1660
  %v1974 = vtanh.pop %v1662
  %v1975 = vtanh.pop %v1664
  %v1976 = vtanh.pop %v1668
  %v1977 = vtanh.pop %v1670
  %v1978 = vtanh.pop %v1672
  %v1979 = vtanh.pop %v1674
  %v1980 = vtanh.pop %v1678
  %v1981 = vtanh.pop %v1680
  %v1982 = vtanh.pop %v1682
  %v1983 = vtanh.pop %v1684
  %v1984 = vtanh.pop %v1688
  %v1985 = vtanh.pop %v1690
  %v1986 = vtanh.pop %v1692
  %v1987 = vtanh.pop %v1694
  %v1988 = vtanh.pop %v1698
  %v1989 = vtanh.pop %v1700
  %v1990 = vtanh.pop %v1702
  %v1991 = vtanh.pop %v1704
  %v1992 = vtanh.pop %v1708
  %v1993 = vtanh.pop %v1710
  %v1994 = vtanh.pop %v1712
  %v1995 = vtanh.pop %v1714
  %v1996 = vtanh.pop %v1718
  %v1997 = vtanh.pop %v1720
  %v1998 = vtanh.pop %v1722
  %v1999 = vtanh.pop %v1724
  %v2000 = vtanh.pop %v1728
  %v2001 = vtanh.pop %v1730
  %v2002 = vtanh.pop %v1732
  %v2003 = vtanh.pop %v1734
  %v2004 = vtanh.pop %v1738
  %v2005 = vtanh.pop %v1740
  %v2006 = vtanh.pop %v1742
  %v2007 = vtanh.pop %v1744
  %v2008 = vtanh.pop %v1748
  %v2009 = vtanh.pop %v1750
  %v2010 = vtanh.pop %v1752
  %v2011 = vtanh.pop %v1754
  %v2012 = vld [vmem:[%s3] sm:$0xf]
  %v2013 = vld [vmem:[%s3 + $0x4] sm:$0xf]
  %v2014 = vld [vmem:[%s3 + $0x8] sm:$0xf]
  %v2015 = vld [vmem:[%s3 + $0xc] sm:$0xf]
  %v2016 = vld [vmem:[%s3 + $0x10] sm:$0xf]
  %v2017 = vld [vmem:[%s3 + $0x14] sm:$0xf]
  %v2018 = vld [vmem:[%s3 + $0x18] sm:$0xf]
  %v2019 = vld [vmem:[%s3 + $0x1c] sm:$0xf]
  %v2020 = vld [vmem:[%s3 + $0x20] sm:$0xf]
  %v2021 = vld [vmem:[%s3 + $0x24] sm:$0xf]
  %v2022 = vld [vmem:[%s3 + $0x28] sm:$0xf]
  %v2023 = vld [vmem:[%s3 + $0x2c] sm:$0xf]
  %v2024 = vld [vmem:[%s3 + $0x30] sm:$0xf]
  %v2025 = vld [vmem:[%s3 + $0x34] sm:$0xf]
  %v2026 = vld [vmem:[%s3 + $0x38] sm:$0xf]
  %v2027 = vld [vmem:[%s3 + $0x3c] sm:$0xf]
  %v2028 = vld [vmem:[%s3 + $0x40] sm:$0xf]
  %v2029 = vld [vmem:[%s3 + $0x44] sm:$0xf]
  %v2030 = vld [vmem:[%s3 + $0x48] sm:$0xf]
  %v2031 = vld [vmem:[%s3 + $0x4c] sm:$0xf]
  %v2032 = vld [vmem:[%s3 + $0x50] sm:$0xf]
  %v2033 = vpack.c.bf16 %v1758, %v1756
  %v2034 = vpack.c.bf16 %v1759, %v1757
  %v2035 = vpack.c.bf16 %v1762, %v1760
  %v2036 = vpack.c.bf16 %v1763, %v1761
  %v2037 = vpack.c.bf16 %v1766, %v1764
  %v2038 = vpack.c.bf16 %v1767, %v1765
  %v2039 = vpack.c.bf16 %v1770, %v1768
  %v2040 = vpack.c.bf16 %v1771, %v1769
  %v2041 = vpack.c.bf16 %v1774, %v1772
  %v2042 = vpack.c.bf16 %v1775, %v1773
  %v2043 = vpack.c.bf16 %v1778, %v1776
  %v2044 = vpack.c.bf16 %v1779, %v1777
  %v2045 = vpack.c.bf16 %v1782, %v1780
  %v2046 = vpack.c.bf16 %v1783, %v1781
  %v2047 = vpack.c.bf16 %v1786, %v1784
  %v2048 = vpack.c.bf16 %v1787, %v1785
  %v2049 = vpack.c.bf16 %v1790, %v1788
  %v2050 = vpack.c.bf16 %v1791, %v1789
  %v2051 = vpack.c.bf16 %v1794, %v1792
  %v2052 = vpack.c.bf16 %v1795, %v1793
  %v2053 = vpack.c.bf16 %v1798, %v1796
  %v2054 = vpack.c.bf16 %v1799, %v1797
  %v2055 = vpack.c.bf16 %v1802, %v1800
  %v2056 = vpack.c.bf16 %v1803, %v1801
  %v2057 = vpack.c.bf16 %v1806, %v1804
  %v2058 = vpack.c.bf16 %v1807, %v1805
  %v2059 = vpack.c.bf16 %v1810, %v1808
  %v2060 = vpack.c.bf16 %v1811, %v1809
  %v2061 = vpack.c.bf16 %v1814, %v1812
  %v2062 = vpack.c.bf16 %v1815, %v1813
  %v2063 = vpack.c.bf16 %v1818, %v1816
  %v2064 = vpack.c.bf16 %v1819, %v1817
  %v2065 = vpack.c.bf16 %v1822, %v1820
  %v2066 = vpack.c.bf16 %v1823, %v1821
  %v2067 = vpack.c.bf16 %v1826, %v1824
  %v2068 = vpack.c.bf16 %v1827, %v1825
  %v2069 = vpack.c.bf16 %v1830, %v1828
  %v2070 = vpack.c.bf16 %v1831, %v1829
  %v2071 = vpack.c.bf16 %v1834, %v1832
  %v2072 = vpack.c.bf16 %v1835, %v1833
  %v2073 = vpack.c.bf16 %v1838, %v1836
  %v2074 = vpack.c.bf16 %v1839, %v1837
  %v2075 = vpack.c.bf16 %v1842, %v1840
  %v2076 = vpack.c.bf16 %v1843, %v1841
  %v2077 = vpack.c.bf16 %v1846, %v1844
  %v2078 = vpack.c.bf16 %v1847, %v1845
  %v2079 = vpack.c.bf16 %v1850, %v1848
  %v2080 = vpack.c.bf16 %v1851, %v1849
  %v2081 = vpack.c.bf16 %v1854, %v1852
  %v2082 = vpack.c.bf16 %v1855, %v1853
  %v2083 = vpack.c.bf16 %v1858, %v1856
  %v2084 = vpack.c.bf16 %v1859, %v1857
  %v2085 = vpack.c.bf16 %v1862, %v1860
  %v2086 = vpack.c.bf16 %v1863, %v1861
  %v2087 = vpack.c.bf16 %v1866, %v1864
  %v2088 = vpack.c.bf16 %v1867, %v1865
  %v2089 = vpack.c.bf16 %v1870, %v1868
  %v2090 = vpack.c.bf16 %v1871, %v1869
  %v2091 = vpack.c.bf16 %v1874, %v1872
  %v2092 = vpack.c.bf16 %v1875, %v1873
  %v2093 = vpack.c.bf16 %v1878, %v1876
  %v2094 = vpack.c.bf16 %v1879, %v1877
  %v2095 = vpack.c.bf16 %v1882, %v1880
  %v2096 = vpack.c.bf16 %v1883, %v1881
  %v2097 = vpack.c.bf16 %v1886, %v1884
  %v2098 = vpack.c.bf16 %v1887, %v1885
  %v2099 = vpack.c.bf16 %v1890, %v1888
  %v2100 = vpack.c.bf16 %v1891, %v1889
  %v2101 = vpack.c.bf16 %v1894, %v1892
  %v2102 = vpack.c.bf16 %v1895, %v1893
  %v2103 = vpack.c.bf16 %v1898, %v1896
  %v2104 = vpack.c.bf16 %v1899, %v1897
  %v2105 = vpack.c.bf16 %v1902, %v1900
  %v2106 = vpack.c.bf16 %v1903, %v1901
  %v2107 = vpack.c.bf16 %v1906, %v1904
  %v2108 = vpack.c.bf16 %v1907, %v1905
  %v2109 = vpack.c.bf16 %v1910, %v1908
  %v2110 = vpack.c.bf16 %v1911, %v1909
  %v2111 = vpack.c.bf16 %v1914, %v1912
  %v2112 = vpack.c.bf16 %v1915, %v1913
  %v2113 = vpack.c.bf16 %v1918, %v1916
  %v2114 = vpack.c.bf16 %v1919, %v1917
  %v2115 = vpack.c.bf16 %v1922, %v1920
  %v2116 = vpack.c.bf16 %v1923, %v1921
  %v2117 = vpack.c.bf16 %v1926, %v1924
  %v2118 = vpack.c.bf16 %v1927, %v1925
  %v2119 = vpack.c.bf16 %v1930, %v1928
  %v2120 = vpack.c.bf16 %v1931, %v1929
  %v2121 = vpack.c.bf16 %v1934, %v1932
  %v2122 = vpack.c.bf16 %v1935, %v1933
  %v2123 = vpack.c.bf16 %v1938, %v1936
  %v2124 = vpack.c.bf16 %v1939, %v1937
  %v2125 = vpack.c.bf16 %v1942, %v1940
  %v2126 = vpack.c.bf16 %v1943, %v1941
  %v2127 = vpack.c.bf16 %v1946, %v1944
  %v2128 = vpack.c.bf16 %v1947, %v1945
  %v2129 = vpack.c.bf16 %v1950, %v1948
  %v2130 = vpack.c.bf16 %v1951, %v1949
  %v2131 = vpack.c.bf16 %v1954, %v1952
  %v2132 = vpack.c.bf16 %v1955, %v1953
  %v2133 = vpack.c.bf16 %v1958, %v1956
  %v2134 = vpack.c.bf16 %v1959, %v1957
  %v2135 = vpack.c.bf16 %v1962, %v1960
  %v2136 = vpack.c.bf16 %v1963, %v1961
  %v2137 = vpack.c.bf16 %v1966, %v1964
  %v2138 = vpack.c.bf16 %v1967, %v1965
  %v2139 = vpack.c.bf16 %v1970, %v1968
  %v2140 = vpack.c.bf16 %v1971, %v1969
  %v2141 = vpack.c.bf16 %v1974, %v1972
  %v2142 = vpack.c.bf16 %v1975, %v1973
  %v2143 = vpack.c.bf16 %v1978, %v1976
  %v2144 = vpack.c.bf16 %v1979, %v1977
  %v2145 = vpack.c.bf16 %v1982, %v1980
  %v2146 = vpack.c.bf16 %v1983, %v1981
  %v2147 = vpack.c.bf16 %v1986, %v1984
  %v2148 = vpack.c.bf16 %v1987, %v1985
  %v2149 = vpack.c.bf16 %v1990, %v1988
  %v2150 = vpack.c.bf16 %v1991, %v1989
  %v2151 = vpack.c.bf16 %v1994, %v1992
  %v2152 = vpack.c.bf16 %v1995, %v1993
  %v2153 = vpack.c.bf16 %v1998, %v1996
  %v2154 = vpack.c.bf16 %v1999, %v1997
  %v2155 = vpack.c.bf16 %v2002, %v2000
  %v2156 = vpack.c.bf16 %v2003, %v2001
  %v2157 = vpack.c.bf16 %v2006, %v2004
  %v2158 = vpack.c.bf16 %v2007, %v2005
  %v2159 = vpack.c.bf16 %v2010, %v2008
  %v2160 = vpack.c.bf16 %v2011, %v2009
  %v2182 = vunpack.c.l.b16 %v2012
  %v2183 = vunpack.c.l.b16 %v2013
  %v2184 = vunpack.c.l.b16 %v2014
  %v2185 = vunpack.c.l.b16 %v2015
  %v2186 = vunpack.c.l.b16 %v2016
  %v2187 = vunpack.c.l.b16 %v2017
  %v2188 = vunpack.c.l.b16 %v2018
  %v2189 = vunpack.c.l.b16 %v2019
  %v2190 = vunpack.c.l.b16 %v2020
  %v2191 = vunpack.c.l.b16 %v2021
  %v2192 = vunpack.c.l.b16 %v2022
  %v2193 = vunpack.c.l.b16 %v2023
  %v2194 = vunpack.c.l.b16 %v2024
  %v2195 = vunpack.c.l.b16 %v2025
  %v2196 = vunpack.c.l.b16 %v2026
  %v2197 = vunpack.c.l.b16 %v2027
  %v2198 = vunpack.c.l.b16 %v2028
  %v2199 = vunpack.c.l.b16 %v2029
  %v2200 = vunpack.c.l.b16 %v2030
  %v2201 = vunpack.c.l.b16 %v2031
  %v2202 = vunpack.c.l.b16 %v2032
  %v2203 = vpack.c.b16 %v2183, %v2182
  %v2204 = vpack.c.b16 %v2185, %v2184
  %v2205 = vpack.c.b16 %v2187, %v2186
  %v2206 = vpack.c.b16 %v2189, %v2188
  %v2207 = vpack.c.b16 %v2191, %v2190
  %v2208 = vpack.c.b16 %v2193, %v2192
  %v2209 = vpack.c.b16 %v2195, %v2194
  %v2210 = vpack.c.b16 %v2197, %v2196
  %v2211 = vpack.c.b16 %v2199, %v2198
  %v2212 = vpack.c.b16 %v2201, %v2200
  %v2213 = vpack.c.b16 %v2202, %v2202
  %vm2224 = vcmask 326656
  %v2226 = vsel %vm2224, %v2034, 0
  %v2229 = vsel %vm2224, %v2036, 0
  %v2232 = vsel %vm2224, %v2038, 0
  %v2235 = vsel %vm2224, %v2040, 0
  %v2238 = vsel %vm2224, %v2042, 0
  %v2241 = vsel %vm2224, %v2044, 0
  %v2244 = vsel %vm2224, %v2046, 0
  %v2247 = vsel %vm2224, %v2048, 0
  %v2250 = vsel %vm2224, %v2050, 0
  %v2253 = vsel %vm2224, %v2052, 0
  %v2256 = vsel %vm2224, %v2054, 0
  %v2259 = vsel %vm2224, %v2056, 0
  %v2262 = vsel %vm2224, %v2058, 0
  %v2265 = vsel %vm2224, %v2060, 0
  %v2268 = vsel %vm2224, %v2062, 0
  %v2271 = vsel %vm2224, %v2064, 0
  %v2274 = vsel %vm2224, %v2066, 0
  %v2277 = vsel %vm2224, %v2068, 0
  %v2280 = vsel %vm2224, %v2070, 0
  %v2283 = vsel %vm2224, %v2072, 0
  %v2286 = vsel %vm2224, %v2074, 0
  %v2289 = vsel %vm2224, %v2076, 0
  %v2292 = vsel %vm2224, %v2078, 0
  %v2295 = vsel %vm2224, %v2080, 0
  %v2298 = vsel %vm2224, %v2082, 0
  %v2301 = vsel %vm2224, %v2084, 0
  %v2304 = vsel %vm2224, %v2086, 0
  %v2307 = vsel %vm2224, %v2088, 0
  %v2310 = vsel %vm2224, %v2090, 0
  %v2313 = vsel %vm2224, %v2092, 0
  %v2316 = vsel %vm2224, %v2094, 0
  %v2319 = vsel %vm2224, %v2096, 0
  %v2322 = vsel %vm2224, %v2098, 0
  %v2325 = vsel %vm2224, %v2100, 0
  %v2328 = vsel %vm2224, %v2102, 0
  %v2331 = vsel %vm2224, %v2104, 0
  %v2334 = vsel %vm2224, %v2106, 0
  %v2337 = vsel %vm2224, %v2108, 0
  %v2340 = vsel %vm2224, %v2110, 0
  %v2343 = vsel %vm2224, %v2112, 0
  %v2346 = vsel %vm2224, %v2114, 0
  %v2349 = vsel %vm2224, %v2116, 0
  %v2352 = vsel %vm2224, %v2118, 0
  %v2355 = vsel %vm2224, %v2120, 0
  %v2358 = vsel %vm2224, %v2122, 0
  %v2361 = vsel %vm2224, %v2124, 0
  %v2364 = vsel %vm2224, %v2126, 0
  %v2367 = vsel %vm2224, %v2128, 0
  %v2370 = vsel %vm2224, %v2130, 0
  %v2373 = vsel %vm2224, %v2132, 0
  %v2376 = vsel %vm2224, %v2134, 0
  %v2379 = vsel %vm2224, %v2136, 0
  %v2382 = vsel %vm2224, %v2138, 0
  %v2385 = vsel %vm2224, %v2140, 0
  %v2388 = vsel %vm2224, %v2142, 0
  %v2391 = vsel %vm2224, %v2144, 0
  %v2394 = vsel %vm2224, %v2146, 0
  %v2397 = vsel %vm2224, %v2148, 0
  %v2400 = vsel %vm2224, %v2150, 0
  %v2403 = vsel %vm2224, %v2152, 0
  %v2406 = vsel %vm2224, %v2154, 0
  %v2409 = vsel %vm2224, %v2156, 0
  %v2412 = vsel %vm2224, %v2158, 0
  %v2415 = vsel %vm2224, %v2160, 0
  %vm2417 = vcmask 1043456
  %v2419 = vsel %vm2417, %v2213, 0
  %2421 = vmatprep.subr.bf16.mxu0 0
  %2422 = vmatpush1.bf16.msra.mxu0 %v2203
  %2423 = vmatprep.subr.bf16.mxu0 0
  %2424 = vmatpush1.bf16.msra.mxu0 %v2204
  %2425 = vmatprep.subr.bf16.mxu0 0
  %2426 = vmatpush1.bf16.msra.mxu0 %v2205
  %2427 = vmatprep.subr.bf16.mxu0 0
  %2428 = vmatpush1.bf16.msra.mxu0 %v2206
  %2429 = vmatprep.subr.bf16.mxu0 0
  %2430 = vmatpush1.bf16.msra.mxu0 %v2207
  %2431 = vmatprep.subr.bf16.mxu0 0
  %2432 = vmatpush1.bf16.msra.mxu0 %v2208
  %2433 = vmatprep.subr.bf16.mxu0 0
  %2434 = vmatpush1.bf16.msra.mxu0 %v2209
  %2435 = vmatprep.subr.bf16.mxu0 0
  %2436 = vmatpush1.bf16.msra.mxu0 %v2210
  %2437 = vmatprep.subr.bf16.mxu0 0
  %2438 = vmatpush1.bf16.msra.mxu0 %v2211
  %2439 = vmatprep.subr.bf16.mxu0 0
  %2440 = vmatpush1.bf16.msra.mxu0 %v2212
  %2441 = vmatprep.subr.bf16.mxu0 0
  %2442 = vmatpush1.bf16.msra.mxu0 %v2419
  %2443 = vmatprep.subr.bf16.mxu0 0
  %2444 = vmatpush1.bf16.msra.mxu0 0
  %2445 = vmatprep.subr.bf16.mxu0 0
  %2446 = vmatpush1.bf16.msra.mxu0 0
  %2447 = vmatprep.subr.bf16.mxu0 0
  %2448 = vmatpush1.bf16.msra.mxu0 0
  %2449 = vmatprep.subr.bf16.mxu0 0
  %2450 = vmatpush1.bf16.msra.mxu0 0
  %2451 = vmatprep.subr.bf16.mxu0 0
  %2452 = vmatpush1.bf16.msra.mxu0 0
  %2453 = vmatprep.mubr.bf16.mxu0 %v2226
  %2454 = vmatmul.mubr.bf16.gmra.mrb[0].mxu0 %v2033
  %v2455 = vpop.f32.mrb[0].mxu0
  %v2456 = vadd.f32 0.0, %v2455
  %v2457 = vpop.f32.mrb[0].mxu0
  %v2458 = vpop.f32.mrb[0].mxu0
  %v2459 = vadd.f32 0.0, %v2458
  %v2460 = vpop.f32.mrb[0].mxu0
  %2461 = vmatprep.mubr.bf16.mxu0 %v2229
  %2462 = vmatmul.mubr.bf16.gmra.mrb[0].mxu0 %v2035
  %v2463 = vpop.f32.mrb[0].mxu0
  %v2464 = vadd.f32 0.0, %v2463
  %v2465 = vpop.f32.mrb[0].mxu0
  %v2466 = vpop.f32.mrb[0].mxu0
  %v2467 = vadd.f32 0.0, %v2466
  %v2468 = vpop.f32.mrb[0].mxu0
  %2469 = vmatprep.mubr.bf16.mxu0 %v2232
  %2470 = vmatmul.mubr.bf16.gmra.mrb[0].mxu0 %v2037
  %v2471 = vpop.f32.mrb[0].mxu0
  %v2472 = vadd.f32 0.0, %v2471
  %v2473 = vpop.f32.mrb[0].mxu0
  %v2474 = vpop.f32.mrb[0].mxu0
  %v2475 = vadd.f32 0.0, %v2474
  %v2476 = vpop.f32.mrb[0].mxu0
  %2477 = vmatprep.mubr.bf16.mxu0 %v2235
  %2478 = vmatmul.mubr.bf16.gmra.mrb[0].mxu0 %v2039
  %v2479 = vpop.f32.mrb[0].mxu0
  %v2480 = vadd.f32 0.0, %v2479
  %v2481 = vpop.f32.mrb[0].mxu0
  %v2482 = vpop.f32.mrb[0].mxu0
  %v2483 = vadd.f32 0.0, %v2482
  %v2484 = vpop.f32.mrb[0].mxu0
  %2485 = vmatprep.mubr.bf16.mxu0 %v2238
  %2486 = vmatmul.mubr.bf16.gmra.mrb[0].mxu0 %v2041
  %v2487 = vpop.f32.mrb[0].mxu0
  %v2488 = vadd.f32 0.0, %v2487
  %v2489 = vpop.f32.mrb[0].mxu0
  %v2490 = vpop.f32.mrb[0].mxu0
  %v2491 = vadd.f32 0.0, %v2490
  %v2492 = vpop.f32.mrb[0].mxu0
  %2493 = vmatprep.mubr.bf16.mxu0 %v2241
  %2494 = vmatmul.mubr.bf16.gmra.mrb[0].mxu0 %v2043
  %v2495 = vpop.f32.mrb[0].mxu0
  %v2496 = vadd.f32 0.0, %v2495
  %v2497 = vpop.f32.mrb[0].mxu0
  %v2498 = vpop.f32.mrb[0].mxu0
  %v2499 = vadd.f32 0.0, %v2498
  %v2500 = vpop.f32.mrb[0].mxu0
  %2501 = vmatprep.mubr.bf16.mxu0 %v2244
  %2502 = vmatmul.mubr.bf16.gmra.mrb[0].mxu0 %v2045
  %v2503 = vpop.f32.mrb[0].mxu0
  %v2504 = vadd.f32 0.0, %v2503
  %v2505 = vpop.f32.mrb[0].mxu0
  %v2506 = vpop.f32.mrb[0].mxu0
  %v2507 = vadd.f32 0.0, %v2506
  %v2508 = vpop.f32.mrb[0].mxu0
  %2509 = vmatprep.mubr.bf16.mxu0 %v2247
  %2510 = vmatmul.mubr.bf16.gmra.mrb[0].mxu0 %v2047
  %v2511 = vpop.f32.mrb[0].mxu0
  %v2512 = vadd.f32 0.0, %v2511
  %v2513 = vpop.f32.mrb[0].mxu0
  %v2514 = vpop.f32.mrb[0].mxu0
  %v2515 = vadd.f32 0.0, %v2514
  %v2516 = vpop.f32.mrb[0].mxu0
  %2517 = vmatprep.mubr.bf16.mxu0 %v2250
  %2518 = vmatmul.mubr.bf16.gmra.mrb[0].mxu0 %v2049
  %v2519 = vpop.f32.mrb[0].mxu0
  %v2520 = vadd.f32 0.0, %v2519
  %v2521 = vpop.f32.mrb[0].mxu0
  %v2522 = vpop.f32.mrb[0].mxu0
  %v2523 = vadd.f32 0.0, %v2522
  %v2524 = vpop.f32.mrb[0].mxu0
  %2525 = vmatprep.mubr.bf16.mxu0 %v2253
  %2526 = vmatmul.mubr.bf16.gmra.mrb[0].mxu0 %v2051
  %v2527 = vpop.f32.mrb[0].mxu0
  %v2528 = vadd.f32 0.0, %v2527
  %v2529 = vpop.f32.mrb[0].mxu0
  %v2530 = vpop.f32.mrb[0].mxu0
  %v2531 = vadd.f32 0.0, %v2530
  %v2532 = vpop.f32.mrb[0].mxu0
  %2533 = vmatprep.mubr.bf16.mxu0 %v2256
  %2534 = vmatmul.mubr.bf16.gmra.mrb[0].mxu0 %v2053
  %v2535 = vpop.f32.mrb[0].mxu0
  %v2536 = vadd.f32 0.0, %v2535
  %v2537 = vpop.f32.mrb[0].mxu0
  %v2538 = vpop.f32.mrb[0].mxu0
  %v2539 = vadd.f32 0.0, %v2538
  %v2540 = vpop.f32.mrb[0].mxu0
  %2541 = vmatprep.mubr.bf16.mxu0 %v2259
  %2542 = vmatmul.mubr.bf16.gmra.mrb[0].mxu0 %v2055
  %v2543 = vpop.f32.mrb[0].mxu0
  %v2544 = vadd.f32 0.0, %v2543
  %v2545 = vpop.f32.mrb[0].mxu0
  %v2546 = vpop.f32.mrb[0].mxu0
  %v2547 = vadd.f32 0.0, %v2546
  %v2548 = vpop.f32.mrb[0].mxu0
  %2549 = vmatprep.mubr.bf16.mxu0 %v2262
  %2550 = vmatmul.mubr.bf16.gmra.mrb[0].mxu0 %v2057
  %v2551 = vpop.f32.mrb[0].mxu0
  %v2552 = vadd.f32 0.0, %v2551
  %v2553 = vpop.f32.mrb[0].mxu0
  %v2554 = vpop.f32.mrb[0].mxu0
  %v2555 = vadd.f32 0.0, %v2554
  %v2556 = vpop.f32.mrb[0].mxu0
  %2557 = vmatprep.mubr.bf16.mxu0 %v2265
  %2558 = vmatmul.mubr.bf16.gmra.mrb[0].mxu0 %v2059
  %v2559 = vpop.f32.mrb[0].mxu0
  %v2560 = vadd.f32 0.0, %v2559
  %v2561 = vpop.f32.mrb[0].mxu0
  %v2562 = vpop.f32.mrb[0].mxu0
  %v2563 = vadd.f32 0.0, %v2562
  %v2564 = vpop.f32.mrb[0].mxu0
  %2565 = vmatprep.mubr.bf16.mxu0 %v2268
  %2566 = vmatmul.mubr.bf16.gmra.mrb[0].mxu0 %v2061
  %v2567 = vpop.f32.mrb[0].mxu0
  %v2568 = vadd.f32 0.0, %v2567
  %v2569 = vpop.f32.mrb[0].mxu0
  %v2570 = vpop.f32.mrb[0].mxu0
  %v2571 = vadd.f32 0.0, %v2570
  %v2572 = vpop.f32.mrb[0].mxu0
  %2573 = vmatprep.mubr.bf16.mxu0 %v2271
  %2574 = vmatmul.mubr.bf16.gmra.mrb[0].mxu0 %v2063
  %v2575 = vpop.f32.mrb[0].mxu0
  %v2576 = vadd.f32 0.0, %v2575
  %v2577 = vpop.f32.mrb[0].mxu0
  %v2578 = vpop.f32.mrb[0].mxu0
  %v2579 = vadd.f32 0.0, %v2578
  %v2580 = vpop.f32.mrb[0].mxu0
  %2581 = vmatprep.mubr.bf16.mxu0 %v2274
  %2582 = vmatmul.mubr.bf16.gmra.mrb[0].mxu0 %v2065
  %v2583 = vpop.f32.mrb[0].mxu0
  %v2584 = vadd.f32 0.0, %v2583
  %v2585 = vpop.f32.mrb[0].mxu0
  %v2586 = vpop.f32.mrb[0].mxu0
  %v2587 = vadd.f32 0.0, %v2586
  %v2588 = vpop.f32.mrb[0].mxu0
  %2589 = vmatprep.mubr.bf16.mxu0 %v2277
  %2590 = vmatmul.mubr.bf16.gmra.mrb[0].mxu0 %v2067
  %v2591 = vpop.f32.mrb[0].mxu0
  %v2592 = vadd.f32 0.0, %v2591
  %v2593 = vpop.f32.mrb[0].mxu0
  %v2594 = vpop.f32.mrb[0].mxu0
  %v2595 = vadd.f32 0.0, %v2594
  %v2596 = vpop.f32.mrb[0].mxu0
  %2597 = vmatprep.mubr.bf16.mxu0 %v2280
  %2598 = vmatmul.mubr.bf16.gmra.mrb[0].mxu0 %v2069
  %v2599 = vpop.f32.mrb[0].mxu0
  %v2600 = vadd.f32 0.0, %v2599
  %v2601 = vpop.f32.mrb[0].mxu0
  %v2602 = vpop.f32.mrb[0].mxu0
  %v2603 = vadd.f32 0.0, %v2602
  %v2604 = vpop.f32.mrb[0].mxu0
  %2605 = vmatprep.mubr.bf16.mxu0 %v2283
  %2606 = vmatmul.mubr.bf16.gmra.mrb[0].mxu0 %v2071
  %v2607 = vpop.f32.mrb[0].mxu0
  %v2608 = vadd.f32 0.0, %v2607
  %v2609 = vpop.f32.mrb[0].mxu0
  %v2610 = vpop.f32.mrb[0].mxu0
  %v2611 = vadd.f32 0.0, %v2610
  %v2612 = vpop.f32.mrb[0].mxu0
  %2613 = vmatprep.mubr.bf16.mxu0 %v2286
  %2614 = vmatmul.mubr.bf16.gmra.mrb[0].mxu0 %v2073
  %v2615 = vpop.f32.mrb[0].mxu0
  %v2616 = vadd.f32 0.0, %v2615
  %v2617 = vpop.f32.mrb[0].mxu0
  %v2618 = vpop.f32.mrb[0].mxu0
  %v2619 = vadd.f32 0.0, %v2618
  %v2620 = vpop.f32.mrb[0].mxu0
  %2621 = vmatprep.mubr.bf16.mxu0 %v2289
  %2622 = vmatmul.mubr.bf16.gmra.mrb[0].mxu0 %v2075
  %v2623 = vpop.f32.mrb[0].mxu0
  %v2624 = vadd.f32 0.0, %v2623
  %v2625 = vpop.f32.mrb[0].mxu0
  %v2626 = vpop.f32.mrb[0].mxu0
  %v2627 = vadd.f32 0.0, %v2626
  %v2628 = vpop.f32.mrb[0].mxu0
  %2629 = vmatprep.mubr.bf16.mxu0 %v2292
  %2630 = vmatmul.mubr.bf16.gmra.mrb[0].mxu0 %v2077
  %v2631 = vpop.f32.mrb[0].mxu0
  %v2632 = vadd.f32 0.0, %v2631
  %v2633 = vpop.f32.mrb[0].mxu0
  %v2634 = vpop.f32.mrb[0].mxu0
  %v2635 = vadd.f32 0.0, %v2634
  %v2636 = vpop.f32.mrb[0].mxu0
  %2637 = vmatprep.mubr.bf16.mxu0 %v2295
  %2638 = vmatmul.mubr.bf16.gmra.mrb[0].mxu0 %v2079
  %v2639 = vpop.f32.mrb[0].mxu0
  %v2640 = vadd.f32 0.0, %v2639
  %v2641 = vpop.f32.mrb[0].mxu0
  %v2642 = vpop.f32.mrb[0].mxu0
  %v2643 = vadd.f32 0.0, %v2642
  %v2644 = vpop.f32.mrb[0].mxu0
  %2645 = vmatprep.mubr.bf16.mxu0 %v2298
  %2646 = vmatmul.mubr.bf16.gmra.mrb[0].mxu0 %v2081
  %v2647 = vpop.f32.mrb[0].mxu0
  %v2648 = vadd.f32 0.0, %v2647
  %v2649 = vpop.f32.mrb[0].mxu0
  %v2650 = vpop.f32.mrb[0].mxu0
  %v2651 = vadd.f32 0.0, %v2650
  %v2652 = vpop.f32.mrb[0].mxu0
  %2653 = vmatprep.mubr.bf16.mxu0 %v2301
  %2654 = vmatmul.mubr.bf16.gmra.mrb[0].mxu0 %v2083
  %v2655 = vpop.f32.mrb[0].mxu0
  %v2656 = vadd.f32 0.0, %v2655
  %v2657 = vpop.f32.mrb[0].mxu0
  %v2658 = vpop.f32.mrb[0].mxu0
  %v2659 = vadd.f32 0.0, %v2658
  %v2660 = vpop.f32.mrb[0].mxu0
  %2661 = vmatprep.mubr.bf16.mxu0 %v2304
  %2662 = vmatmul.mubr.bf16.gmra.mrb[0].mxu0 %v2085
  %v2663 = vpop.f32.mrb[0].mxu0
  %v2664 = vadd.f32 0.0, %v2663
  %v2665 = vpop.f32.mrb[0].mxu0
  %v2666 = vpop.f32.mrb[0].mxu0
  %v2667 = vadd.f32 0.0, %v2666
  %v2668 = vpop.f32.mrb[0].mxu0
  %2669 = vmatprep.mubr.bf16.mxu0 %v2307
  %2670 = vmatmul.mubr.bf16.gmra.mrb[0].mxu0 %v2087
  %v2671 = vpop.f32.mrb[0].mxu0
  %v2672 = vadd.f32 0.0, %v2671
  %v2673 = vpop.f32.mrb[0].mxu0
  %v2674 = vpop.f32.mrb[0].mxu0
  %v2675 = vadd.f32 0.0, %v2674
  %v2676 = vpop.f32.mrb[0].mxu0
  %2677 = vmatprep.mubr.bf16.mxu0 %v2310
  %2678 = vmatmul.mubr.bf16.gmra.mrb[0].mxu0 %v2089
  %v2679 = vpop.f32.mrb[0].mxu0
  %v2680 = vadd.f32 0.0, %v2679
  %v2681 = vpop.f32.mrb[0].mxu0
  %v2682 = vpop.f32.mrb[0].mxu0
  %v2683 = vadd.f32 0.0, %v2682
  %v2684 = vpop.f32.mrb[0].mxu0
  %2685 = vmatprep.mubr.bf16.mxu0 %v2313
  %2686 = vmatmul.mubr.bf16.gmra.mrb[0].mxu0 %v2091
  %v2687 = vpop.f32.mrb[0].mxu0
  %v2688 = vadd.f32 0.0, %v2687
  %v2689 = vpop.f32.mrb[0].mxu0
  %v2690 = vpop.f32.mrb[0].mxu0
  %v2691 = vadd.f32 0.0, %v2690
  %v2692 = vpop.f32.mrb[0].mxu0
  %2693 = vmatprep.mubr.bf16.mxu0 %v2316
  %2694 = vmatmul.mubr.bf16.gmra.mrb[0].mxu0 %v2093
  %v2695 = vpop.f32.mrb[0].mxu0
  %v2696 = vadd.f32 0.0, %v2695
  %v2697 = vpop.f32.mrb[0].mxu0
  %v2698 = vpop.f32.mrb[0].mxu0
  %v2699 = vadd.f32 0.0, %v2698
  %v2700 = vpop.f32.mrb[0].mxu0
  %2701 = vmatprep.mubr.bf16.mxu0 %v2319
  %2702 = vmatmul.mubr.bf16.gmra.mrb[0].mxu0 %v2095
  %v2703 = vpop.f32.mrb[0].mxu0
  %v2704 = vadd.f32 0.0, %v2703
  %v2705 = vpop.f32.mrb[0].mxu0
  %v2706 = vpop.f32.mrb[0].mxu0
  %v2707 = vadd.f32 0.0, %v2706
  %v2708 = vpop.f32.mrb[0].mxu0
  %2709 = vmatprep.mubr.bf16.mxu0 %v2322
  %2710 = vmatmul.mubr.bf16.gmra.mrb[0].mxu0 %v2097
  %v2711 = vpop.f32.mrb[0].mxu0
  %v2712 = vadd.f32 0.0, %v2711
  %v2713 = vpop.f32.mrb[0].mxu0
  %v2714 = vpop.f32.mrb[0].mxu0
  %v2715 = vadd.f32 0.0, %v2714
  %v2716 = vpop.f32.mrb[0].mxu0
  %2717 = vmatprep.mubr.bf16.mxu0 %v2325
  %2718 = vmatmul.mubr.bf16.gmra.mrb[0].mxu0 %v2099
  %v2719 = vpop.f32.mrb[0].mxu0
  %v2720 = vadd.f32 0.0, %v2719
  %v2721 = vpop.f32.mrb[0].mxu0
  %v2722 = vpop.f32.mrb[0].mxu0
  %v2723 = vadd.f32 0.0, %v2722
  %v2724 = vpop.f32.mrb[0].mxu0
  %2725 = vmatprep.mubr.bf16.mxu0 %v2328
  %2726 = vmatmul.mubr.bf16.gmra.mrb[0].mxu0 %v2101
  %v2727 = vpop.f32.mrb[0].mxu0
  %v2728 = vadd.f32 0.0, %v2727
  %v2729 = vpop.f32.mrb[0].mxu0
  %v2730 = vpop.f32.mrb[0].mxu0
  %v2731 = vadd.f32 0.0, %v2730
  %v2732 = vpop.f32.mrb[0].mxu0
  %2733 = vmatprep.mubr.bf16.mxu0 %v2331
  %2734 = vmatmul.mubr.bf16.gmra.mrb[0].mxu0 %v2103
  %v2735 = vpop.f32.mrb[0].mxu0
  %v2736 = vadd.f32 0.0, %v2735
  %v2737 = vpop.f32.mrb[0].mxu0
  %v2738 = vpop.f32.mrb[0].mxu0
  %v2739 = vadd.f32 0.0, %v2738
  %v2740 = vpop.f32.mrb[0].mxu0
  %2741 = vmatprep.mubr.bf16.mxu0 %v2334
  %2742 = vmatmul.mubr.bf16.gmra.mrb[0].mxu0 %v2105
  %v2743 = vpop.f32.mrb[0].mxu0
  %v2744 = vadd.f32 0.0, %v2743
  %v2745 = vpop.f32.mrb[0].mxu0
  %v2746 = vpop.f32.mrb[0].mxu0
  %v2747 = vadd.f32 0.0, %v2746
  %v2748 = vpop.f32.mrb[0].mxu0
  %2749 = vmatprep.mubr.bf16.mxu0 %v2337
  %2750 = vmatmul.mubr.bf16.gmra.mrb[0].mxu0 %v2107
  %v2751 = vpop.f32.mrb[0].mxu0
  %v2752 = vadd.f32 0.0, %v2751
  %v2753 = vpop.f32.mrb[0].mxu0
  %v2754 = vpop.f32.mrb[0].mxu0
  %v2755 = vadd.f32 0.0, %v2754
  %v2756 = vpop.f32.mrb[0].mxu0
  %2757 = vmatprep.mubr.bf16.mxu0 %v2340
  %2758 = vmatmul.mubr.bf16.gmra.mrb[0].mxu0 %v2109
  %v2759 = vpop.f32.mrb[0].mxu0
  %v2760 = vadd.f32 0.0, %v2759
  %v2761 = vpop.f32.mrb[0].mxu0
  %v2762 = vpop.f32.mrb[0].mxu0
  %v2763 = vadd.f32 0.0, %v2762
  %v2764 = vpop.f32.mrb[0].mxu0
  %2765 = vmatprep.mubr.bf16.mxu0 %v2343
  %2766 = vmatmul.mubr.bf16.gmra.mrb[0].mxu0 %v2111
  %v2767 = vpop.f32.mrb[0].mxu0
  %v2768 = vadd.f32 0.0, %v2767
  %v2769 = vpop.f32.mrb[0].mxu0
  %v2770 = vpop.f32.mrb[0].mxu0
  %v2771 = vadd.f32 0.0, %v2770
  %v2772 = vpop.f32.mrb[0].mxu0
  %2773 = vmatprep.mubr.bf16.mxu0 %v2346
  %2774 = vmatmul.mubr.bf16.gmra.mrb[0].mxu0 %v2113
  %v2775 = vpop.f32.mrb[0].mxu0
  %v2776 = vadd.f32 0.0, %v2775
  %v2777 = vpop.f32.mrb[0].mxu0
  %v2778 = vpop.f32.mrb[0].mxu0
  %v2779 = vadd.f32 0.0, %v2778
  %v2780 = vpop.f32.mrb[0].mxu0
  %2781 = vmatprep.mubr.bf16.mxu0 %v2349
  %2782 = vmatmul.mubr.bf16.gmra.mrb[0].mxu0 %v2115
  %v2783 = vpop.f32.mrb[0].mxu0
  %v2784 = vadd.f32 0.0, %v2783
  %v2785 = vpop.f32.mrb[0].mxu0
  %v2786 = vpop.f32.mrb[0].mxu0
  %v2787 = vadd.f32 0.0, %v2786
  %v2788 = vpop.f32.mrb[0].mxu0
  %2789 = vmatprep.mubr.bf16.mxu0 %v2352
  %2790 = vmatmul.mubr.bf16.gmra.mrb[0].mxu0 %v2117
  %v2791 = vpop.f32.mrb[0].mxu0
  %v2792 = vadd.f32 0.0, %v2791
  %v2793 = vpop.f32.mrb[0].mxu0
  %v2794 = vpop.f32.mrb[0].mxu0
  %v2795 = vadd.f32 0.0, %v2794
  %v2796 = vpop.f32.mrb[0].mxu0
  %2797 = vmatprep.mubr.bf16.mxu0 %v2355
  %2798 = vmatmul.mubr.bf16.gmra.mrb[0].mxu0 %v2119
  %v2799 = vpop.f32.mrb[0].mxu0
  %v2800 = vadd.f32 0.0, %v2799
  %v2801 = vpop.f32.mrb[0].mxu0
  %v2802 = vpop.f32.mrb[0].mxu0
  %v2803 = vadd.f32 0.0, %v2802
  %v2804 = vpop.f32.mrb[0].mxu0
  %2805 = vmatprep.mubr.bf16.mxu0 %v2358
  %2806 = vmatmul.mubr.bf16.gmra.mrb[0].mxu0 %v2121
  %v2807 = vpop.f32.mrb[0].mxu0
  %v2808 = vadd.f32 0.0, %v2807
  %v2809 = vpop.f32.mrb[0].mxu0
  %v2810 = vpop.f32.mrb[0].mxu0
  %v2811 = vadd.f32 0.0, %v2810
  %v2812 = vpop.f32.mrb[0].mxu0
  %2813 = vmatprep.mubr.bf16.mxu0 %v2361
  %2814 = vmatmul.mubr.bf16.gmra.mrb[0].mxu0 %v2123
  %v2815 = vpop.f32.mrb[0].mxu0
  %v2816 = vadd.f32 0.0, %v2815
  %v2817 = vpop.f32.mrb[0].mxu0
  %v2818 = vpop.f32.mrb[0].mxu0
  %v2819 = vadd.f32 0.0, %v2818
  %v2820 = vpop.f32.mrb[0].mxu0
  %2821 = vmatprep.mubr.bf16.mxu0 %v2364
  %2822 = vmatmul.mubr.bf16.gmra.mrb[0].mxu0 %v2125
  %v2823 = vpop.f32.mrb[0].mxu0
  %v2824 = vadd.f32 0.0, %v2823
  %v2825 = vpop.f32.mrb[0].mxu0
  %v2826 = vpop.f32.mrb[0].mxu0
  %v2827 = vadd.f32 0.0, %v2826
  %v2828 = vpop.f32.mrb[0].mxu0
  %2829 = vmatprep.mubr.bf16.mxu0 %v2367
  %2830 = vmatmul.mubr.bf16.gmra.mrb[0].mxu0 %v2127
  %v2831 = vpop.f32.mrb[0].mxu0
  %v2832 = vadd.f32 0.0, %v2831
  %v2833 = vpop.f32.mrb[0].mxu0
  %v2834 = vpop.f32.mrb[0].mxu0
  %v2835 = vadd.f32 0.0, %v2834
  %v2836 = vpop.f32.mrb[0].mxu0
  %2837 = vmatprep.mubr.bf16.mxu0 %v2370
  %2838 = vmatmul.mubr.bf16.gmra.mrb[0].mxu0 %v2129
  %v2839 = vpop.f32.mrb[0].mxu0
  %v2840 = vadd.f32 0.0, %v2839
  %v2841 = vpop.f32.mrb[0].mxu0
  %v2842 = vpop.f32.mrb[0].mxu0
  %v2843 = vadd.f32 0.0, %v2842
  %v2844 = vpop.f32.mrb[0].mxu0
  %2845 = vmatprep.mubr.bf16.mxu0 %v2373
  %2846 = vmatmul.mubr.bf16.gmra.mrb[0].mxu0 %v2131
  %v2847 = vpop.f32.mrb[0].mxu0
  %v2848 = vadd.f32 0.0, %v2847
  %v2849 = vpop.f32.mrb[0].mxu0
  %v2850 = vpop.f32.mrb[0].mxu0
  %v2851 = vadd.f32 0.0, %v2850
  %v2852 = vpop.f32.mrb[0].mxu0
  %2853 = vmatprep.mubr.bf16.mxu0 %v2376
  %2854 = vmatmul.mubr.bf16.gmra.mrb[0].mxu0 %v2133
  %v2855 = vpop.f32.mrb[0].mxu0
  %v2856 = vadd.f32 0.0, %v2855
  %v2857 = vpop.f32.mrb[0].mxu0
  %v2858 = vpop.f32.mrb[0].mxu0
  %v2859 = vadd.f32 0.0, %v2858
  %v2860 = vpop.f32.mrb[0].mxu0
  %2861 = vmatprep.mubr.bf16.mxu0 %v2379
  %2862 = vmatmul.mubr.bf16.gmra.mrb[0].mxu0 %v2135
  %v2863 = vpop.f32.mrb[0].mxu0
  %v2864 = vadd.f32 0.0, %v2863
  %v2865 = vpop.f32.mrb[0].mxu0
  %v2866 = vpop.f32.mrb[0].mxu0
  %v2867 = vadd.f32 0.0, %v2866
  %v2868 = vpop.f32.mrb[0].mxu0
  %2869 = vmatprep.mubr.bf16.mxu0 %v2382
  %2870 = vmatmul.mubr.bf16.gmra.mrb[0].mxu0 %v2137
  %v2871 = vpop.f32.mrb[0].mxu0
  %v2872 = vadd.f32 0.0, %v2871
  %v2873 = vpop.f32.mrb[0].mxu0
  %v2874 = vpop.f32.mrb[0].mxu0
  %v2875 = vadd.f32 0.0, %v2874
  %v2876 = vpop.f32.mrb[0].mxu0
  %2877 = vmatprep.mubr.bf16.mxu0 %v2385
  %2878 = vmatmul.mubr.bf16.gmra.mrb[0].mxu0 %v2139
  %v2879 = vpop.f32.mrb[0].mxu0
  %v2880 = vadd.f32 0.0, %v2879
  %v2881 = vpop.f32.mrb[0].mxu0
  %v2882 = vpop.f32.mrb[0].mxu0
  %v2883 = vadd.f32 0.0, %v2882
  %v2884 = vpop.f32.mrb[0].mxu0
  %2885 = vmatprep.mubr.bf16.mxu0 %v2388
  %2886 = vmatmul.mubr.bf16.gmra.mrb[0].mxu0 %v2141
  %v2887 = vpop.f32.mrb[0].mxu0
  %v2888 = vadd.f32 0.0, %v2887
  %v2889 = vpop.f32.mrb[0].mxu0
  %v2890 = vpop.f32.mrb[0].mxu0
  %v2891 = vadd.f32 0.0, %v2890
  %v2892 = vpop.f32.mrb[0].mxu0
  %2893 = vmatprep.mubr.bf16.mxu0 %v2391
  %2894 = vmatmul.mubr.bf16.gmra.mrb[0].mxu0 %v2143
  %v2895 = vpop.f32.mrb[0].mxu0
  %v2896 = vadd.f32 0.0, %v2895
  %v2897 = vpop.f32.mrb[0].mxu0
  %v2898 = vpop.f32.mrb[0].mxu0
  %v2899 = vadd.f32 0.0, %v2898
  %v2900 = vpop.f32.mrb[0].mxu0
  %2901 = vmatprep.mubr.bf16.mxu0 %v2394
  %2902 = vmatmul.mubr.bf16.gmra.mrb[0].mxu0 %v2145
  %v2903 = vpop.f32.mrb[0].mxu0
  %v2904 = vadd.f32 0.0, %v2903
  %v2905 = vpop.f32.mrb[0].mxu0
  %v2906 = vpop.f32.mrb[0].mxu0
  %v2907 = vadd.f32 0.0, %v2906
  %v2908 = vpop.f32.mrb[0].mxu0
  %2909 = vmatprep.mubr.bf16.mxu0 %v2397
  %2910 = vmatmul.mubr.bf16.gmra.mrb[0].mxu0 %v2147
  %v2911 = vpop.f32.mrb[0].mxu0
  %v2912 = vadd.f32 0.0, %v2911
  %v2913 = vpop.f32.mrb[0].mxu0
  %v2914 = vpop.f32.mrb[0].mxu0
  %v2915 = vadd.f32 0.0, %v2914
  %v2916 = vpop.f32.mrb[0].mxu0
  %2917 = vmatprep.mubr.bf16.mxu0 %v2400
  %2918 = vmatmul.mubr.bf16.gmra.mrb[0].mxu0 %v2149
  %v2919 = vpop.f32.mrb[0].mxu0
  %v2920 = vadd.f32 0.0, %v2919
  %v2921 = vpop.f32.mrb[0].mxu0
  %v2922 = vpop.f32.mrb[0].mxu0
  %v2923 = vadd.f32 0.0, %v2922
  %v2924 = vpop.f32.mrb[0].mxu0
  %2925 = vmatprep.mubr.bf16.mxu0 %v2403
  %2926 = vmatmul.mubr.bf16.gmra.mrb[0].mxu0 %v2151
  %v2927 = vpop.f32.mrb[0].mxu0
  %v2928 = vadd.f32 0.0, %v2927
  %v2929 = vpop.f32.mrb[0].mxu0
  %v2930 = vpop.f32.mrb[0].mxu0
  %v2931 = vadd.f32 0.0, %v2930
  %v2932 = vpop.f32.mrb[0].mxu0
  %2933 = vmatprep.mubr.bf16.mxu0 %v2406
  %2934 = vmatmul.mubr.bf16.gmra.mrb[0].mxu0 %v2153
  %v2935 = vpop.f32.mrb[0].mxu0
  %v2936 = vadd.f32 0.0, %v2935
  %v2937 = vpop.f32.mrb[0].mxu0
  %v2938 = vpop.f32.mrb[0].mxu0
  %v2939 = vadd.f32 0.0, %v2938
  %v2940 = vpop.f32.mrb[0].mxu0
  %2941 = vmatprep.mubr.bf16.mxu0 %v2409
  %2942 = vmatmul.mubr.bf16.gmra.mrb[0].mxu0 %v2155
  %v2943 = vpop.f32.mrb[0].mxu0
  %v2944 = vadd.f32 0.0, %v2943
  %v2945 = vpop.f32.mrb[0].mxu0
  %v2946 = vpop.f32.mrb[0].mxu0
  %v2947 = vadd.f32 0.0, %v2946
  %v2948 = vpop.f32.mrb[0].mxu0
  %2949 = vmatprep.mubr.bf16.mxu0 %v2412
  %2950 = vmatmul.mubr.bf16.gmra.mrb[0].mxu0 %v2157
  %v2951 = vpop.f32.mrb[0].mxu0
  %v2952 = vadd.f32 0.0, %v2951
  %v2953 = vpop.f32.mrb[0].mxu0
  %v2954 = vpop.f32.mrb[0].mxu0
  %v2955 = vadd.f32 0.0, %v2954
  %v2956 = vpop.f32.mrb[0].mxu0
  %2957 = vmatprep.mubr.bf16.mxu0 %v2415
  %2958 = vmatmul.mubr.bf16.gmra.mrb[0].mxu0 %v2159
  %v2959 = vpop.f32.mrb[0].mxu0
  %v2960 = vadd.f32 0.0, %v2959
  %v2961 = vpop.f32.mrb[0].mxu0
  %v2962 = vpop.f32.mrb[0].mxu0
  %v2963 = vadd.f32 0.0, %v2962
  %v2964 = vpop.f32.mrb[0].mxu0
  %2965 = vdwg.mxu0
  %v2966 = vld [vmem:[%s4] sm:$0xff]
  %v2967 = vld [vmem:[%s4 + $0x8] sm:$0xff]
  %v2968 = vld [vmem:[%s4 + $0x10] sm:$0xff]
  %v2969 = vld [vmem:[%s4 + $0x18] sm:$0xff]
  %v2970 = vld [vmem:[%s4 + $0x20] sm:$0xff]
  %v2971 = vld [vmem:[%s4 + $0x28] sm:$0xff]
  %v2972 = vld [vmem:[%s4 + $0x30] sm:$0xff]
  %v2973 = vld [vmem:[%s4 + $0x38] sm:$0xff]
  %v2974 = vld [vmem:[%s4 + $0x40] sm:$0xff]
  %v2975 = vld [vmem:[%s4 + $0x48] sm:$0xff]
  %v2976 = vld [vmem:[%s4 + $0x50] sm:$0xff]
  %v2977 = vld [vmem:[%s4 + $0x58] sm:$0xff]
  %v2978 = vld [vmem:[%s4 + $0x60] sm:$0xff]
  %v2979 = vld [vmem:[%s4 + $0x68] sm:$0xff]
  %v2980 = vld [vmem:[%s4 + $0x70] sm:$0xff]
  %v2981 = vld [vmem:[%s4 + $0x78] sm:$0xff]
  %v2982 = vld [vmem:[%s4 + $0x80] sm:$0xff]
  %v2983 = vld [vmem:[%s4 + $0x88] sm:$0xff]
  %v2984 = vld [vmem:[%s4 + $0x90] sm:$0xff]
  %v2985 = vld [vmem:[%s4 + $0x98] sm:$0xff]
  %v2986 = vld [vmem:[%s4 + $0xa0] sm:$0xff]
  %v2987 = vld [vmem:[%s4 + $0xa8] sm:$0xff]
  %v2988 = vld [vmem:[%s4 + $0xb0] sm:$0xff]
  %v2989 = vld [vmem:[%s4 + $0xb8] sm:$0xff]
  %v2990 = vld [vmem:[%s4 + $0xc0] sm:$0xff]
  %v2991 = vld [vmem:[%s4 + $0xc8] sm:$0xff]
  %v2992 = vld [vmem:[%s4 + $0xd0] sm:$0xff]
  %v2993 = vld [vmem:[%s4 + $0xd8] sm:$0xff]
  %v2994 = vld [vmem:[%s4 + $0xe0] sm:$0xff]
  %v2995 = vld [vmem:[%s4 + $0xe8] sm:$0xff]
  %v2996 = vld [vmem:[%s4 + $0xf0] sm:$0xff]
  %v2997 = vld [vmem:[%s4 + $0xf8] sm:$0xff]
  %v2998 = vld [vmem:[%s4 + $0x100] sm:$0xff]
  %v2999 = vld [vmem:[%s4 + $0x108] sm:$0xff]
  %v3000 = vld [vmem:[%s4 + $0x110] sm:$0xff]
  %v3001 = vld [vmem:[%s4 + $0x118] sm:$0xff]
  %v3002 = vld [vmem:[%s4 + $0x120] sm:$0xff]
  %v3003 = vld [vmem:[%s4 + $0x128] sm:$0xff]
  %v3004 = vld [vmem:[%s4 + $0x130] sm:$0xff]
  %v3005 = vld [vmem:[%s4 + $0x138] sm:$0xff]
  %v3006 = vld [vmem:[%s4 + $0x140] sm:$0xff]
  %v3007 = vld [vmem:[%s4 + $0x148] sm:$0xff]
  %v3008 = vld [vmem:[%s4 + $0x150] sm:$0xff]
  %v3009 = vld [vmem:[%s4 + $0x158] sm:$0xff]
  %v3010 = vld [vmem:[%s4 + $0x160] sm:$0xff]
  %v3011 = vld [vmem:[%s4 + $0x168] sm:$0xff]
  %v3012 = vld [vmem:[%s4 + $0x170] sm:$0xff]
  %v3013 = vld [vmem:[%s4 + $0x178] sm:$0xff]
  %v3014 = vld [vmem:[%s4 + $0x180] sm:$0xff]
  %v3015 = vld [vmem:[%s4 + $0x188] sm:$0xff]
  %v3016 = vld [vmem:[%s4 + $0x190] sm:$0xff]
  %v3017 = vld [vmem:[%s4 + $0x198] sm:$0xff]
  %v3018 = vld [vmem:[%s4 + $0x1a0] sm:$0xff]
  %v3019 = vld [vmem:[%s4 + $0x1a8] sm:$0xff]
  %v3020 = vld [vmem:[%s4 + $0x1b0] sm:$0xff]
  %v3021 = vld [vmem:[%s4 + $0x1b8] sm:$0xff]
  %v3022 = vld [vmem:[%s4 + $0x1c0] sm:$0xff]
  %v3023 = vld [vmem:[%s4 + $0x1c8] sm:$0xff]
  %v3024 = vld [vmem:[%s4 + $0x1d0] sm:$0xff]
  %v3025 = vld [vmem:[%s4 + $0x1d8] sm:$0xff]
  %v3026 = vld [vmem:[%s4 + $0x1e0] sm:$0xff]
  %v3027 = vld [vmem:[%s4 + $0x1e8] sm:$0xff]
  %v3028 = vld [vmem:[%s4 + $0x1f0] sm:$0xff]
  %v3029 = vld [vmem:[%s4 + $0x1f8] sm:$0xff]
  %v3030 = vld [vmem:[%s4 + $0x200] sm:$0xff]
  %v3031 = vld [vmem:[%s4 + $0x208] sm:$0xff]
  %v3032 = vld [vmem:[%s4 + $0x210] sm:$0xff]
  %v3033 = vld [vmem:[%s4 + $0x218] sm:$0xff]
  %v3034 = vld [vmem:[%s4 + $0x220] sm:$0xff]
  %v3035 = vld [vmem:[%s4 + $0x228] sm:$0xff]
  %v3036 = vld [vmem:[%s4 + $0x230] sm:$0xff]
  %v3037 = vld [vmem:[%s4 + $0x238] sm:$0xff]
  %v3038 = vld [vmem:[%s4 + $0x240] sm:$0xff]
  %v3039 = vld [vmem:[%s4 + $0x248] sm:$0xff]
  %v3040 = vld [vmem:[%s4 + $0x250] sm:$0xff]
  %v3041 = vld [vmem:[%s4 + $0x258] sm:$0xff]
  %v3042 = vld [vmem:[%s4 + $0x260] sm:$0xff]
  %v3043 = vld [vmem:[%s4 + $0x268] sm:$0xff]
  %v3044 = vld [vmem:[%s4 + $0x270] sm:$0xff]
  %v3045 = vld [vmem:[%s4 + $0x278] sm:$0xff]
  %v3046 = vld [vmem:[%s4 + $0x280] sm:$0xff]
  %v3047 = vld [vmem:[%s4 + $0x288] sm:$0xff]
  %v3048 = vld [vmem:[%s4 + $0x290] sm:$0xff]
  %v3049 = vld [vmem:[%s4 + $0x298] sm:$0xff]
  %v3050 = vld [vmem:[%s4 + $0x2a0] sm:$0xff]
  %v3051 = vld [vmem:[%s4 + $0x2a8] sm:$0xff]
  %v3052 = vld [vmem:[%s4 + $0x2b0] sm:$0xff]
  %v3053 = vld [vmem:[%s4 + $0x2b8] sm:$0xff]
  %v3054 = vld [vmem:[%s4 + $0x2c0] sm:$0xff]
  %v3055 = vld [vmem:[%s4 + $0x2c8] sm:$0xff]
  %v3056 = vld [vmem:[%s4 + $0x2d0] sm:$0xff]
  %v3057 = vld [vmem:[%s4 + $0x2d8] sm:$0xff]
  %v3058 = vld [vmem:[%s4 + $0x2e0] sm:$0xff]
  %v3059 = vld [vmem:[%s4 + $0x2e8] sm:$0xff]
  %v3060 = vld [vmem:[%s4 + $0x2f0] sm:$0xff]
  %v3061 = vld [vmem:[%s4 + $0x2f8] sm:$0xff]
  %v3062 = vld [vmem:[%s4 + $0x300] sm:$0xff]
  %v3063 = vld [vmem:[%s4 + $0x308] sm:$0xff]
  %v3064 = vld [vmem:[%s4 + $0x310] sm:$0xff]
  %v3065 = vld [vmem:[%s4 + $0x318] sm:$0xff]
  %v3066 = vld [vmem:[%s4 + $0x320] sm:$0xff]
  %v3067 = vld [vmem:[%s4 + $0x328] sm:$0xff]
  %v3068 = vld [vmem:[%s4 + $0x330] sm:$0xff]
  %v3069 = vld [vmem:[%s4 + $0x338] sm:$0xff]
  %v3070 = vld [vmem:[%s4 + $0x340] sm:$0xff]
  %v3071 = vld [vmem:[%s4 + $0x348] sm:$0xff]
  %v3072 = vld [vmem:[%s4 + $0x350] sm:$0xff]
  %v3073 = vld [vmem:[%s4 + $0x358] sm:$0xff]
  %v3074 = vld [vmem:[%s4 + $0x360] sm:$0xff]
  %v3075 = vld [vmem:[%s4 + $0x368] sm:$0xff]
  %v3076 = vld [vmem:[%s4 + $0x370] sm:$0xff]
  %v3077 = vld [vmem:[%s4 + $0x378] sm:$0xff]
  %v3078 = vld [vmem:[%s4 + $0x380] sm:$0xff]
  %v3079 = vld [vmem:[%s4 + $0x388] sm:$0xff]
  %v3080 = vld [vmem:[%s4 + $0x390] sm:$0xff]
  %v3081 = vld [vmem:[%s4 + $0x398] sm:$0xff]
  %v3082 = vld [vmem:[%s4 + $0x3a0] sm:$0xff]
  %v3083 = vld [vmem:[%s4 + $0x3a8] sm:$0xff]
  %v3084 = vld [vmem:[%s4 + $0x3b0] sm:$0xff]
  %v3085 = vld [vmem:[%s4 + $0x3b8] sm:$0xff]
  %v3086 = vld [vmem:[%s4 + $0x3c0] sm:$0xff]
  %v3087 = vld [vmem:[%s4 + $0x3c8] sm:$0xff]
  %v3088 = vld [vmem:[%s4 + $0x3d0] sm:$0xff]
  %v3089 = vld [vmem:[%s4 + $0x3d8] sm:$0xff]
  %v3090 = vld [vmem:[%s4 + $0x3e0] sm:$0xff]
  %v3091 = vld [vmem:[%s4 + $0x3e8] sm:$0xff]
  %v3092 = vld [vmem:[%s4 + $0x3f0] sm:$0xff]
  %v3093 = vld [vmem:[%s4 + $0x3f8] sm:$0xff]
  %v3094 = vld [vmem:[%s4 + $0x400] sm:$0xff]
  %v3095 = vld [vmem:[%s4 + $0x408] sm:$0xff]
  %v3096 = vld [vmem:[%s4 + $0x410] sm:$0xff]
  %v3097 = vld [vmem:[%s4 + $0x418] sm:$0xff]
  %v3098 = vld [vmem:[%s4 + $0x420] sm:$0xff]
  %v3099 = vld [vmem:[%s4 + $0x428] sm:$0xff]
  %v3100 = vld [vmem:[%s4 + $0x430] sm:$0xff]
  %v3101 = vld [vmem:[%s4 + $0x438] sm:$0xff]
  %v3102 = vld [vmem:[%s4 + $0x440] sm:$0xff]
  %v3103 = vld [vmem:[%s4 + $0x448] sm:$0xff]
  %v3104 = vld [vmem:[%s4 + $0x450] sm:$0xff]
  %v3105 = vld [vmem:[%s4 + $0x458] sm:$0xff]
  %v3106 = vld [vmem:[%s4 + $0x460] sm:$0xff]
  %v3107 = vld [vmem:[%s4 + $0x468] sm:$0xff]
  %v3108 = vld [vmem:[%s4 + $0x470] sm:$0xff]
  %v3109 = vld [vmem:[%s4 + $0x478] sm:$0xff]
  %v3110 = vld [vmem:[%s4 + $0x480] sm:$0xff]
  %v3111 = vld [vmem:[%s4 + $0x488] sm:$0xff]
  %v3112 = vld [vmem:[%s4 + $0x490] sm:$0xff]
  %v3113 = vld [vmem:[%s4 + $0x498] sm:$0xff]
  %v3114 = vld [vmem:[%s4 + $0x4a0] sm:$0xff]
  %v3115 = vld [vmem:[%s4 + $0x4a8] sm:$0xff]
  %v3116 = vld [vmem:[%s4 + $0x4b0] sm:$0xff]
  %v3117 = vld [vmem:[%s4 + $0x4b8] sm:$0xff]
  %v3118 = vld [vmem:[%s4 + $0x4c0] sm:$0xff]
  %v3119 = vld [vmem:[%s4 + $0x4c8] sm:$0xff]
  %v3120 = vld [vmem:[%s4 + $0x4d0] sm:$0xff]
  %v3121 = vld [vmem:[%s4 + $0x4d8] sm:$0xff]
  %v3122 = vld [vmem:[%s4 + $0x4e0] sm:$0xff]
  %v3123 = vld [vmem:[%s4 + $0x4e8] sm:$0xff]
  %v3124 = vld [vmem:[%s4 + $0x4f0] sm:$0xff]
  %v3125 = vld [vmem:[%s4 + $0x4f8] sm:$0xff]
  %v3126 = vld [vmem:[%s4 + $0x500] sm:$0xff]
  %v3127 = vld [vmem:[%s4 + $0x508] sm:$0xff]
  %v3128 = vld [vmem:[%s4 + $0x510] sm:$0xff]
  %v3129 = vld [vmem:[%s4 + $0x518] sm:$0xff]
  %v3130 = vld [vmem:[%s4 + $0x520] sm:$0xff]
  %v3131 = vld [vmem:[%s4 + $0x528] sm:$0xff]
  %v3132 = vld [vmem:[%s4 + $0x530] sm:$0xff]
  %v3133 = vld [vmem:[%s4 + $0x538] sm:$0xff]
  %v3134 = vld [vmem:[%s4 + $0x540] sm:$0xff]
  %v3135 = vld [vmem:[%s4 + $0x548] sm:$0xff]
  %v3136 = vld [vmem:[%s4 + $0x550] sm:$0xff]
  %v3137 = vld [vmem:[%s4 + $0x558] sm:$0xff]
  %v3138 = vld [vmem:[%s4 + $0x560] sm:$0xff]
  %v3139 = vld [vmem:[%s4 + $0x568] sm:$0xff]
  %v3140 = vld [vmem:[%s4 + $0x570] sm:$0xff]
  %v3141 = vld [vmem:[%s4 + $0x578] sm:$0xff]
  %v3142 = vld [vmem:[%s4 + $0x580] sm:$0xff]
  %v3143 = vld [vmem:[%s4 + $0x588] sm:$0xff]
  %v3144 = vld [vmem:[%s4 + $0x590] sm:$0xff]
  %v3145 = vld [vmem:[%s4 + $0x598] sm:$0xff]
  %v3146 = vld [vmem:[%s4 + $0x5a0] sm:$0xff]
  %v3147 = vld [vmem:[%s4 + $0x5a8] sm:$0xff]
  %v3148 = vld [vmem:[%s4 + $0x5b0] sm:$0xff]
  %v3149 = vld [vmem:[%s4 + $0x5b8] sm:$0xff]
  %v3150 = vld [vmem:[%s4 + $0x5c0] sm:$0xff]
  %v3151 = vld [vmem:[%s4 + $0x5c8] sm:$0xff]
  %v3152 = vld [vmem:[%s4 + $0x5d0] sm:$0xff]
  %v3153 = vld [vmem:[%s4 + $0x5d8] sm:$0xff]
  %v3154 = vld [vmem:[%s4 + $0x5e0] sm:$0xff]
  %v3155 = vld [vmem:[%s4 + $0x5e8] sm:$0xff]
  %v3156 = vld [vmem:[%s4 + $0x5f0] sm:$0xff]
  %v3157 = vld [vmem:[%s4 + $0x5f8] sm:$0xff]
  %v3158 = vld [vmem:[%s4 + $0x600] sm:$0xff]
  %v3159 = vld [vmem:[%s4 + $0x608] sm:$0xff]
  %v3160 = vld [vmem:[%s4 + $0x610] sm:$0xff]
  %v3161 = vld [vmem:[%s4 + $0x618] sm:$0xff]
  %v3162 = vld [vmem:[%s4 + $0x620] sm:$0xff]
  %v3163 = vld [vmem:[%s4 + $0x628] sm:$0xff]
  %v3164 = vld [vmem:[%s4 + $0x630] sm:$0xff]
  %v3165 = vld [vmem:[%s4 + $0x638] sm:$0xff]
  %v3166 = vld [vmem:[%s4 + $0x640] sm:$0xff]
  %v3167 = vld [vmem:[%s4 + $0x648] sm:$0xff]
  %v3168 = vld [vmem:[%s4 + $0x650] sm:$0xff]
  %v3169 = vld [vmem:[%s4 + $0x658] sm:$0xff]
  %v3170 = vld [vmem:[%s4 + $0x660] sm:$0xff]
  %v3171 = vld [vmem:[%s4 + $0x668] sm:$0xff]
  %v3172 = vld [vmem:[%s4 + $0x670] sm:$0xff]
  %v3173 = vld [vmem:[%s4 + $0x678] sm:$0xff]
  %v3174 = vld [vmem:[%s4 + $0x680] sm:$0xff]
  %v3175 = vld [vmem:[%s4 + $0x688] sm:$0xff]
  %v3176 = vld [vmem:[%s4 + $0x690] sm:$0xff]
  %v3177 = vld [vmem:[%s4 + $0x698] sm:$0xff]
  %v3178 = vld [vmem:[%s4 + $0x6a0] sm:$0xff]
  %v3179 = vld [vmem:[%s4 + $0x6a8] sm:$0xff]
  %v3180 = vld [vmem:[%s4 + $0x6b0] sm:$0xff]
  %v3181 = vld [vmem:[%s4 + $0x6b8] sm:$0xff]
  %v3182 = vld [vmem:[%s4 + $0x6c0] sm:$0xff]
  %v3183 = vld [vmem:[%s4 + $0x6c8] sm:$0xff]
  %v3184 = vld [vmem:[%s4 + $0x6d0] sm:$0xff]
  %v3185 = vld [vmem:[%s4 + $0x6d8] sm:$0xff]
  %v3186 = vld [vmem:[%s4 + $0x6e0] sm:$0xff]
  %v3187 = vld [vmem:[%s4 + $0x6e8] sm:$0xff]
  %v3188 = vld [vmem:[%s4 + $0x6f0] sm:$0xff]
  %v3189 = vld [vmem:[%s4 + $0x6f8] sm:$0xff]
  %v3190 = vld [vmem:[%s4 + $0x700] sm:$0xff]
  %v3191 = vld [vmem:[%s4 + $0x708] sm:$0xff]
  %v3192 = vld [vmem:[%s4 + $0x710] sm:$0xff]
  %v3193 = vld [vmem:[%s4 + $0x718] sm:$0xff]
  %v3194 = vpack.c.bf16 %v2459, %v2456
  %v3195 = vpack.c.bf16 %v2467, %v2464
  %v3196 = vpack.c.bf16 %v2475, %v2472
  %v3197 = vpack.c.bf16 %v2483, %v2480
  %v3198 = vpack.c.bf16 %v2491, %v2488
  %v3199 = vpack.c.bf16 %v2499, %v2496
  %v3200 = vpack.c.bf16 %v2507, %v2504
  %v3201 = vpack.c.bf16 %v2515, %v2512
  %v3202 = vpack.c.bf16 %v2523, %v2520
  %v3203 = vpack.c.bf16 %v2531, %v2528
  %v3204 = vpack.c.bf16 %v2539, %v2536
  %v3205 = vpack.c.bf16 %v2547, %v2544
  %v3206 = vpack.c.bf16 %v2555, %v2552
  %v3207 = vpack.c.bf16 %v2563, %v2560
  %v3208 = vpack.c.bf16 %v2571, %v2568
  %v3209 = vpack.c.bf16 %v2579, %v2576
  %v3210 = vpack.c.bf16 %v2587, %v2584
  %v3211 = vpack.c.bf16 %v2595, %v2592
  %v3212 = vpack.c.bf16 %v2603, %v2600
  %v3213 = vpack.c.bf16 %v2611, %v2608
  %v3214 = vpack.c.bf16 %v2619, %v2616
  %v3215 = vpack.c.bf16 %v2627, %v2624
  %v3216 = vpack.c.bf16 %v2635, %v2632
  %v3217 = vpack.c.bf16 %v2643, %v2640
  %v3218 = vpack.c.bf16 %v2651, %v2648
  %v3219 = vpack.c.bf16 %v2659, %v2656
  %v3220 = vpack.c.bf16 %v2667, %v2664
  %v3221 = vpack.c.bf16 %v2675, %v2672
  %v3222 = vpack.c.bf16 %v2683, %v2680
  %v3223 = vpack.c.bf16 %v2691, %v2688
  %v3224 = vpack.c.bf16 %v2699, %v2696
  %v3225 = vpack.c.bf16 %v2707, %v2704
  %v3226 = vpack.c.bf16 %v2715, %v2712
  %v3227 = vpack.c.bf16 %v2723, %v2720
  %v3228 = vpack.c.bf16 %v2731, %v2728
  %v3229 = vpack.c.bf16 %v2739, %v2736
  %v3230 = vpack.c.bf16 %v2747, %v2744
  %v3231 = vpack.c.bf16 %v2755, %v2752
  %v3232 = vpack.c.bf16 %v2763, %v2760
  %v3233 = vpack.c.bf16 %v2771, %v2768
  %v3234 = vpack.c.bf16 %v2779, %v2776
  %v3235 = vpack.c.bf16 %v2787, %v2784
  %v3236 = vpack.c.bf16 %v2795, %v2792
  %v3237 = vpack.c.bf16 %v2803, %v2800
  %v3238 = vpack.c.bf16 %v2811, %v2808
  %v3239 = vpack.c.bf16 %v2819, %v2816
  %v3240 = vpack.c.bf16 %v2827, %v2824
  %v3241 = vpack.c.bf16 %v2835, %v2832
  %v3242 = vpack.c.bf16 %v2843, %v2840
  %v3243 = vpack.c.bf16 %v2851, %v2848
  %v3244 = vpack.c.bf16 %v2859, %v2856
  %v3245 = vpack.c.bf16 %v2867, %v2864
  %v3246 = vpack.c.bf16 %v2875, %v2872
  %v3247 = vpack.c.bf16 %v2883, %v2880
  %v3248 = vpack.c.bf16 %v2891, %v2888
  %v3249 = vpack.c.bf16 %v2899, %v2896
  %v3250 = vpack.c.bf16 %v2907, %v2904
  %v3251 = vpack.c.bf16 %v2915, %v2912
  %v3252 = vpack.c.bf16 %v2923, %v2920
  %v3253 = vpack.c.bf16 %v2931, %v2928
  %v3254 = vpack.c.bf16 %v2939, %v2936
  %v3255 = vpack.c.bf16 %v2947, %v2944
  %v3256 = vpack.c.bf16 %v2955, %v2952
  %v3257 = vpack.c.bf16 %v2963, %v2960
  %v3486 = vunpack.c.l.b16 %v2966
  %v3487 = vunpack.c.h.b16 %v2966
  %v3488 = vunpack.c.l.b16 %v2967
  %v3489 = vunpack.c.h.b16 %v2967
  %v3490 = vunpack.c.l.b16 %v2968
  %v3491 = vunpack.c.h.b16 %v2968
  %v3492 = vunpack.c.l.b16 %v2969
  %v3493 = vunpack.c.h.b16 %v2969
  %v3494 = vunpack.c.l.b16 %v2970
  %v3495 = vunpack.c.h.b16 %v2970
  %v3496 = vunpack.c.l.b16 %v2971
  %v3497 = vunpack.c.h.b16 %v2971
  %v3498 = vunpack.c.l.b16 %v2972
  %v3499 = vunpack.c.h.b16 %v2972
  %v3500 = vunpack.c.l.b16 %v2973
  %v3501 = vunpack.c.h.b16 %v2973
  %v3502 = vunpack.c.l.b16 %v2974
  %v3503 = vunpack.c.h.b16 %v2974
  %v3504 = vunpack.c.l.b16 %v2975
  %v3505 = vunpack.c.h.b16 %v2975
  %v3506 = vunpack.c.l.b16 %v2976
  %v3507 = vunpack.c.h.b16 %v2976
  %v3508 = vunpack.c.l.b16 %v2977
  %v3509 = vunpack.c.h.b16 %v2977
  %v3510 = vunpack.c.l.b16 %v2978
  %v3511 = vunpack.c.h.b16 %v2978
  %v3512 = vunpack.c.l.b16 %v2979
  %v3513 = vunpack.c.h.b16 %v2979
  %v3514 = vunpack.c.l.b16 %v2980
  %v3515 = vunpack.c.h.b16 %v2980
  %v3516 = vunpack.c.l.b16 %v2981
  %v3517 = vunpack.c.h.b16 %v2981
  %v3518 = vunpack.c.l.b16 %v2982
  %v3519 = vunpack.c.h.b16 %v2982
  %v3520 = vunpack.c.l.b16 %v2983
  %v3521 = vunpack.c.h.b16 %v2983
  %v3522 = vunpack.c.l.b16 %v2984
  %v3523 = vunpack.c.h.b16 %v2984
  %v3524 = vunpack.c.l.b16 %v2985
  %v3525 = vunpack.c.h.b16 %v2985
  %v3526 = vunpack.c.l.b16 %v2986
  %v3527 = vunpack.c.h.b16 %v2986
  %v3528 = vunpack.c.l.b16 %v2987
  %v3529 = vunpack.c.h.b16 %v2987
  %v3530 = vunpack.c.l.b16 %v2988
  %v3531 = vunpack.c.h.b16 %v2988
  %v3532 = vunpack.c.l.b16 %v2989
  %v3533 = vunpack.c.h.b16 %v2989
  %v3534 = vunpack.c.l.b16 %v2990
  %v3535 = vunpack.c.h.b16 %v2990
  %v3536 = vunpack.c.l.b16 %v2991
  %v3537 = vunpack.c.h.b16 %v2991
  %v3538 = vunpack.c.l.b16 %v2992
  %v3539 = vunpack.c.h.b16 %v2992
  %v3540 = vunpack.c.l.b16 %v2993
  %v3541 = vunpack.c.h.b16 %v2993
  %v3542 = vunpack.c.l.b16 %v2994
  %v3543 = vunpack.c.h.b16 %v2994
  %v3544 = vunpack.c.l.b16 %v2995
  %v3545 = vunpack.c.h.b16 %v2995
  %v3546 = vunpack.c.l.b16 %v2996
  %v3547 = vunpack.c.h.b16 %v2996
  %v3548 = vunpack.c.l.b16 %v2997
  %v3549 = vunpack.c.h.b16 %v2997
  %v3550 = vunpack.c.l.b16 %v2998
  %v3551 = vunpack.c.h.b16 %v2998
  %v3552 = vunpack.c.l.b16 %v2999
  %v3553 = vunpack.c.h.b16 %v2999
  %v3554 = vunpack.c.l.b16 %v3000
  %v3555 = vunpack.c.h.b16 %v3000
  %v3556 = vunpack.c.l.b16 %v3001
  %v3557 = vunpack.c.h.b16 %v3001
  %v3558 = vunpack.c.l.b16 %v3002
  %v3559 = vunpack.c.h.b16 %v3002
  %v3560 = vunpack.c.l.b16 %v3003
  %v3561 = vunpack.c.h.b16 %v3003
  %v3562 = vunpack.c.l.b16 %v3004
  %v3563 = vunpack.c.h.b16 %v3004
  %v3564 = vunpack.c.l.b16 %v3005
  %v3565 = vunpack.c.h.b16 %v3005
  %v3566 = vunpack.c.l.b16 %v3006
  %v3567 = vunpack.c.h.b16 %v3006
  %v3568 = vunpack.c.l.b16 %v3007
  %v3569 = vunpack.c.h.b16 %v3007
  %v3570 = vunpack.c.l.b16 %v3008
  %v3571 = vunpack.c.h.b16 %v3008
  %v3572 = vunpack.c.l.b16 %v3009
  %v3573 = vunpack.c.h.b16 %v3009
  %v3574 = vunpack.c.l.b16 %v3010
  %v3575 = vunpack.c.h.b16 %v3010
  %v3576 = vunpack.c.l.b16 %v3011
  %v3577 = vunpack.c.h.b16 %v3011
  %v3578 = vunpack.c.l.b16 %v3012
  %v3579 = vunpack.c.h.b16 %v3012
  %v3580 = vunpack.c.l.b16 %v3013
  %v3581 = vunpack.c.h.b16 %v3013
  %v3582 = vunpack.c.l.b16 %v3014
  %v3583 = vunpack.c.h.b16 %v3014
  %v3584 = vunpack.c.l.b16 %v3015
  %v3585 = vunpack.c.h.b16 %v3015
  %v3586 = vunpack.c.l.b16 %v3016
  %v3587 = vunpack.c.h.b16 %v3016
  %v3588 = vunpack.c.l.b16 %v3017
  %v3589 = vunpack.c.h.b16 %v3017
  %v3590 = vunpack.c.l.b16 %v3018
  %v3591 = vunpack.c.h.b16 %v3018
  %v3592 = vunpack.c.l.b16 %v3019
  %v3593 = vunpack.c.h.b16 %v3019
  %v3594 = vunpack.c.l.b16 %v3020
  %v3595 = vunpack.c.h.b16 %v3020
  %v3596 = vunpack.c.l.b16 %v3021
  %v3597 = vunpack.c.h.b16 %v3021
  %v3598 = vunpack.c.l.b16 %v3022
  %v3599 = vunpack.c.h.b16 %v3022
  %v3600 = vunpack.c.l.b16 %v3023
  %v3601 = vunpack.c.h.b16 %v3023
  %v3602 = vunpack.c.l.b16 %v3024
  %v3603 = vunpack.c.h.b16 %v3024
  %v3604 = vunpack.c.l.b16 %v3025
  %v3605 = vunpack.c.h.b16 %v3025
  %v3606 = vunpack.c.l.b16 %v3026
  %v3607 = vunpack.c.h.b16 %v3026
  %v3608 = vunpack.c.l.b16 %v3027
  %v3609 = vunpack.c.h.b16 %v3027
  %v3610 = vunpack.c.l.b16 %v3028
  %v3611 = vunpack.c.h.b16 %v3028
  %v3612 = vunpack.c.l.b16 %v3029
  %v3613 = vunpack.c.h.b16 %v3029
  %v3614 = vunpack.c.l.b16 %v3030
  %v3615 = vunpack.c.h.b16 %v3030
  %v3616 = vunpack.c.l.b16 %v3031
  %v3617 = vunpack.c.h.b16 %v3031
  %v3618 = vunpack.c.l.b16 %v3032
  %v3619 = vunpack.c.h.b16 %v3032
  %v3620 = vunpack.c.l.b16 %v3033
  %v3621 = vunpack.c.h.b16 %v3033
  %v3622 = vunpack.c.l.b16 %v3034
  %v3623 = vunpack.c.h.b16 %v3034
  %v3624 = vunpack.c.l.b16 %v3035
  %v3625 = vunpack.c.h.b16 %v3035
  %v3626 = vunpack.c.l.b16 %v3036
  %v3627 = vunpack.c.h.b16 %v3036
  %v3628 = vunpack.c.l.b16 %v3037
  %v3629 = vunpack.c.h.b16 %v3037
  %v3630 = vunpack.c.l.b16 %v3038
  %v3631 = vunpack.c.h.b16 %v3038
  %v3632 = vunpack.c.l.b16 %v3039
  %v3633 = vunpack.c.h.b16 %v3039
  %v3634 = vunpack.c.l.b16 %v3040
  %v3635 = vunpack.c.h.b16 %v3040
  %v3636 = vunpack.c.l.b16 %v3041
  %v3637 = vunpack.c.h.b16 %v3041
  %v3638 = vunpack.c.l.b16 %v3042
  %v3639 = vunpack.c.h.b16 %v3042
  %v3640 = vunpack.c.l.b16 %v3043
  %v3641 = vunpack.c.h.b16 %v3043
  %v3642 = vunpack.c.l.b16 %v3044
  %v3643 = vunpack.c.h.b16 %v3044
  %v3644 = vunpack.c.l.b16 %v3045
  %v3645 = vunpack.c.h.b16 %v3045
  %v3646 = vunpack.c.l.b16 %v3046
  %v3647 = vunpack.c.h.b16 %v3046
  %v3648 = vunpack.c.l.b16 %v3047
  %v3649 = vunpack.c.h.b16 %v3047
  %v3650 = vunpack.c.l.b16 %v3048
  %v3651 = vunpack.c.h.b16 %v3048
  %v3652 = vunpack.c.l.b16 %v3049
  %v3653 = vunpack.c.h.b16 %v3049
  %v3654 = vunpack.c.l.b16 %v3050
  %v3655 = vunpack.c.h.b16 %v3050
  %v3656 = vunpack.c.l.b16 %v3051
  %v3657 = vunpack.c.h.b16 %v3051
  %v3658 = vunpack.c.l.b16 %v3052
  %v3659 = vunpack.c.h.b16 %v3052
  %v3660 = vunpack.c.l.b16 %v3053
  %v3661 = vunpack.c.h.b16 %v3053
  %v3662 = vunpack.c.l.b16 %v3054
  %v3663 = vunpack.c.h.b16 %v3054
  %v3664 = vunpack.c.l.b16 %v3055
  %v3665 = vunpack.c.h.b16 %v3055
  %v3666 = vunpack.c.l.b16 %v3056
  %v3667 = vunpack.c.h.b16 %v3056
  %v3668 = vunpack.c.l.b16 %v3057
  %v3669 = vunpack.c.h.b16 %v3057
  %v3670 = vunpack.c.l.b16 %v3058
  %v3671 = vunpack.c.h.b16 %v3058
  %v3672 = vunpack.c.l.b16 %v3059
  %v3673 = vunpack.c.h.b16 %v3059
  %v3674 = vunpack.c.l.b16 %v3060
  %v3675 = vunpack.c.h.b16 %v3060
  %v3676 = vunpack.c.l.b16 %v3061
  %v3677 = vunpack.c.h.b16 %v3061
  %v3678 = vunpack.c.l.b16 %v3062
  %v3679 = vunpack.c.h.b16 %v3062
  %v3680 = vunpack.c.l.b16 %v3063
  %v3681 = vunpack.c.h.b16 %v3063
  %v3682 = vunpack.c.l.b16 %v3064
  %v3683 = vunpack.c.h.b16 %v3064
  %v3684 = vunpack.c.l.b16 %v3065
  %v3685 = vunpack.c.h.b16 %v3065
  %v3686 = vunpack.c.l.b16 %v3066
  %v3687 = vunpack.c.h.b16 %v3066
  %v3688 = vunpack.c.l.b16 %v3067
  %v3689 = vunpack.c.h.b16 %v3067
  %v3690 = vunpack.c.l.b16 %v3068
  %v3691 = vunpack.c.h.b16 %v3068
  %v3692 = vunpack.c.l.b16 %v3069
  %v3693 = vunpack.c.h.b16 %v3069
  %v3694 = vunpack.c.l.b16 %v3070
  %v3695 = vunpack.c.h.b16 %v3070
  %v3696 = vunpack.c.l.b16 %v3071
  %v3697 = vunpack.c.h.b16 %v3071
  %v3698 = vunpack.c.l.b16 %v3072
  %v3699 = vunpack.c.h.b16 %v3072
  %v3700 = vunpack.c.l.b16 %v3073
  %v3701 = vunpack.c.h.b16 %v3073
  %v3702 = vunpack.c.l.b16 %v3074
  %v3703 = vunpack.c.h.b16 %v3074
  %v3704 = vunpack.c.l.b16 %v3075
  %v3705 = vunpack.c.h.b16 %v3075
  %v3706 = vunpack.c.l.b16 %v3076
  %v3707 = vunpack.c.h.b16 %v3076
  %v3708 = vunpack.c.l.b16 %v3077
  %v3709 = vunpack.c.h.b16 %v3077
  %v3710 = vunpack.c.l.b16 %v3078
  %v3711 = vunpack.c.h.b16 %v3078
  %v3712 = vunpack.c.l.b16 %v3079
  %v3713 = vunpack.c.h.b16 %v3079
  %v3714 = vunpack.c.l.b16 %v3080
  %v3715 = vunpack.c.h.b16 %v3080
  %v3716 = vunpack.c.l.b16 %v3081
  %v3717 = vunpack.c.h.b16 %v3081
  %v3718 = vunpack.c.l.b16 %v3082
  %v3719 = vunpack.c.h.b16 %v3082
  %v3720 = vunpack.c.l.b16 %v3083
  %v3721 = vunpack.c.h.b16 %v3083
  %v3722 = vunpack.c.l.b16 %v3084
  %v3723 = vunpack.c.h.b16 %v3084
  %v3724 = vunpack.c.l.b16 %v3085
  %v3725 = vunpack.c.h.b16 %v3085
  %v3726 = vunpack.c.l.b16 %v3086
  %v3727 = vunpack.c.h.b16 %v3086
  %v3728 = vunpack.c.l.b16 %v3087
  %v3729 = vunpack.c.h.b16 %v3087
  %v3730 = vunpack.c.l.b16 %v3088
  %v3731 = vunpack.c.h.b16 %v3088
  %v3732 = vunpack.c.l.b16 %v3089
  %v3733 = vunpack.c.h.b16 %v3089
  %v3734 = vunpack.c.l.b16 %v3090
  %v3735 = vunpack.c.h.b16 %v3090
  %v3736 = vunpack.c.l.b16 %v3091
  %v3737 = vunpack.c.h.b16 %v3091
  %v3738 = vunpack.c.l.b16 %v3092
  %v3739 = vunpack.c.h.b16 %v3092
  %v3740 = vunpack.c.l.b16 %v3093
  %v3741 = vunpack.c.h.b16 %v3093
  %v3742 = vunpack.c.l.b16 %v3094
  %v3743 = vunpack.c.h.b16 %v3094
  %v3744 = vunpack.c.l.b16 %v3095
  %v3745 = vunpack.c.h.b16 %v3095
  %v3746 = vunpack.c.l.b16 %v3096
  %v3747 = vunpack.c.h.b16 %v3096
  %v3748 = vunpack.c.l.b16 %v3097
  %v3749 = vunpack.c.h.b16 %v3097
  %v3750 = vunpack.c.l.b16 %v3098
  %v3751 = vunpack.c.h.b16 %v3098
  %v3752 = vunpack.c.l.b16 %v3099
  %v3753 = vunpack.c.h.b16 %v3099
  %v3754 = vunpack.c.l.b16 %v3100
  %v3755 = vunpack.c.h.b16 %v3100
  %v3756 = vunpack.c.l.b16 %v3101
  %v3757 = vunpack.c.h.b16 %v3101
  %v3758 = vunpack.c.l.b16 %v3102
  %v3759 = vunpack.c.h.b16 %v3102
  %v3760 = vunpack.c.l.b16 %v3103
  %v3761 = vunpack.c.h.b16 %v3103
  %v3762 = vunpack.c.l.b16 %v3104
  %v3763 = vunpack.c.h.b16 %v3104
  %v3764 = vunpack.c.l.b16 %v3105
  %v3765 = vunpack.c.h.b16 %v3105
  %v3766 = vunpack.c.l.b16 %v3106
  %v3767 = vunpack.c.h.b16 %v3106
  %v3768 = vunpack.c.l.b16 %v3107
  %v3769 = vunpack.c.h.b16 %v3107
  %v3770 = vunpack.c.l.b16 %v3108
  %v3771 = vunpack.c.h.b16 %v3108
  %v3772 = vunpack.c.l.b16 %v3109
  %v3773 = vunpack.c.h.b16 %v3109
  %v3774 = vunpack.c.l.b16 %v3110
  %v3775 = vunpack.c.h.b16 %v3110
  %v3776 = vunpack.c.l.b16 %v3111
  %v3777 = vunpack.c.h.b16 %v3111
  %v3778 = vunpack.c.l.b16 %v3112
  %v3779 = vunpack.c.h.b16 %v3112
  %v3780 = vunpack.c.l.b16 %v3113
  %v3781 = vunpack.c.h.b16 %v3113
  %v3782 = vunpack.c.l.b16 %v3114
  %v3783 = vunpack.c.h.b16 %v3114
  %v3784 = vunpack.c.l.b16 %v3115
  %v3785 = vunpack.c.h.b16 %v3115
  %v3786 = vunpack.c.l.b16 %v3116
  %v3787 = vunpack.c.h.b16 %v3116
  %v3788 = vunpack.c.l.b16 %v3117
  %v3789 = vunpack.c.h.b16 %v3117
  %v3790 = vunpack.c.l.b16 %v3118
  %v3791 = vunpack.c.h.b16 %v3118
  %v3792 = vunpack.c.l.b16 %v3119
  %v3793 = vunpack.c.h.b16 %v3119
  %v3794 = vunpack.c.l.b16 %v3120
  %v3795 = vunpack.c.h.b16 %v3120
  %v3796 = vunpack.c.l.b16 %v3121
  %v3797 = vunpack.c.h.b16 %v3121
  %v3798 = vunpack.c.l.b16 %v3122
  %v3799 = vunpack.c.h.b16 %v3122
  %v3800 = vunpack.c.l.b16 %v3123
  %v3801 = vunpack.c.h.b16 %v3123
  %v3802 = vunpack.c.l.b16 %v3124
  %v3803 = vunpack.c.h.b16 %v3124
  %v3804 = vunpack.c.l.b16 %v3125
  %v3805 = vunpack.c.h.b16 %v3125
  %v3806 = vunpack.c.l.b16 %v3126
  %v3807 = vunpack.c.h.b16 %v3126
  %v3808 = vunpack.c.l.b16 %v3127
  %v3809 = vunpack.c.h.b16 %v3127
  %v3810 = vunpack.c.l.b16 %v3128
  %v3811 = vunpack.c.h.b16 %v3128
  %v3812 = vunpack.c.l.b16 %v3129
  %v3813 = vunpack.c.h.b16 %v3129
  %v3814 = vunpack.c.l.b16 %v3130
  %v3815 = vunpack.c.h.b16 %v3130
  %v3816 = vunpack.c.l.b16 %v3131
  %v3817 = vunpack.c.h.b16 %v3131
  %v3818 = vunpack.c.l.b16 %v3132
  %v3819 = vunpack.c.h.b16 %v3132
  %v3820 = vunpack.c.l.b16 %v3133
  %v3821 = vunpack.c.h.b16 %v3133
  %v3822 = vunpack.c.l.b16 %v3134
  %v3823 = vunpack.c.h.b16 %v3134
  %v3824 = vunpack.c.l.b16 %v3135
  %v3825 = vunpack.c.h.b16 %v3135
  %v3826 = vunpack.c.l.b16 %v3136
  %v3827 = vunpack.c.h.b16 %v3136
  %v3828 = vunpack.c.l.b16 %v3137
  %v3829 = vunpack.c.h.b16 %v3137
  %v3830 = vunpack.c.l.b16 %v3138
  %v3831 = vunpack.c.h.b16 %v3138
  %v3832 = vunpack.c.l.b16 %v3139
  %v3833 = vunpack.c.h.b16 %v3139
  %v3834 = vunpack.c.l.b16 %v3140
  %v3835 = vunpack.c.h.b16 %v3140
  %v3836 = vunpack.c.l.b16 %v3141
  %v3837 = vunpack.c.h.b16 %v3141
  %v3838 = vunpack.c.l.b16 %v3142
  %v3839 = vunpack.c.h.b16 %v3142
  %v3840 = vunpack.c.l.b16 %v3143
  %v3841 = vunpack.c.h.b16 %v3143
  %v3842 = vunpack.c.l.b16 %v3144
  %v3843 = vunpack.c.h.b16 %v3144
  %v3844 = vunpack.c.l.b16 %v3145
  %v3845 = vunpack.c.h.b16 %v3145
  %v3846 = vunpack.c.l.b16 %v3146
  %v3847 = vunpack.c.h.b16 %v3146
  %v3848 = vunpack.c.l.b16 %v3147
  %v3849 = vunpack.c.h.b16 %v3147
  %v3850 = vunpack.c.l.b16 %v3148
  %v3851 = vunpack.c.h.b16 %v3148
  %v3852 = vunpack.c.l.b16 %v3149
  %v3853 = vunpack.c.h.b16 %v3149
  %v3854 = vunpack.c.l.b16 %v3150
  %v3855 = vunpack.c.h.b16 %v3150
  %v3856 = vunpack.c.l.b16 %v3151
  %v3857 = vunpack.c.h.b16 %v3151
  %v3858 = vunpack.c.l.b16 %v3152
  %v3859 = vunpack.c.h.b16 %v3152
  %v3860 = vunpack.c.l.b16 %v3153
  %v3861 = vunpack.c.h.b16 %v3153
  %v3862 = vunpack.c.l.b16 %v3154
  %v3863 = vunpack.c.h.b16 %v3154
  %v3864 = vunpack.c.l.b16 %v3155
  %v3865 = vunpack.c.h.b16 %v3155
  %v3866 = vunpack.c.l.b16 %v3156
  %v3867 = vunpack.c.h.b16 %v3156
  %v3868 = vunpack.c.l.b16 %v3157
  %v3869 = vunpack.c.h.b16 %v3157
  %v3870 = vunpack.c.l.b16 %v3158
  %v3871 = vunpack.c.h.b16 %v3158
  %v3872 = vunpack.c.l.b16 %v3159
  %v3873 = vunpack.c.h.b16 %v3159
  %v3874 = vunpack.c.l.b16 %v3160
  %v3875 = vunpack.c.h.b16 %v3160
  %v3876 = vunpack.c.l.b16 %v3161
  %v3877 = vunpack.c.h.b16 %v3161
  %v3878 = vunpack.c.l.b16 %v3162
  %v3879 = vunpack.c.h.b16 %v3162
  %v3880 = vunpack.c.l.b16 %v3163
  %v3881 = vunpack.c.h.b16 %v3163
  %v3882 = vunpack.c.l.b16 %v3164
  %v3883 = vunpack.c.h.b16 %v3164
  %v3884 = vunpack.c.l.b16 %v3165
  %v3885 = vunpack.c.h.b16 %v3165
  %v3886 = vunpack.c.l.b16 %v3166
  %v3887 = vunpack.c.h.b16 %v3166
  %v3888 = vunpack.c.l.b16 %v3167
  %v3889 = vunpack.c.h.b16 %v3167
  %v3890 = vunpack.c.l.b16 %v3168
  %v3891 = vunpack.c.h.b16 %v3168
  %v3892 = vunpack.c.l.b16 %v3169
  %v3893 = vunpack.c.h.b16 %v3169
  %v3894 = vunpack.c.l.b16 %v3170
  %v3895 = vunpack.c.h.b16 %v3170
  %v3896 = vunpack.c.l.b16 %v3171
  %v3897 = vunpack.c.h.b16 %v3171
  %v3898 = vunpack.c.l.b16 %v3172
  %v3899 = vunpack.c.h.b16 %v3172
  %v3900 = vunpack.c.l.b16 %v3173
  %v3901 = vunpack.c.h.b16 %v3173
  %v3902 = vunpack.c.l.b16 %v3174
  %v3903 = vunpack.c.h.b16 %v3174
  %v3904 = vunpack.c.l.b16 %v3175
  %v3905 = vunpack.c.h.b16 %v3175
  %v3906 = vunpack.c.l.b16 %v3176
  %v3907 = vunpack.c.h.b16 %v3176
  %v3908 = vunpack.c.l.b16 %v3177
  %v3909 = vunpack.c.h.b16 %v3177
  %v3910 = vunpack.c.l.b16 %v3178
  %v3911 = vunpack.c.h.b16 %v3178
  %v3912 = vunpack.c.l.b16 %v3179
  %v3913 = vunpack.c.h.b16 %v3179
  %v3914 = vunpack.c.l.b16 %v3180
  %v3915 = vunpack.c.h.b16 %v3180
  %v3916 = vunpack.c.l.b16 %v3181
  %v3917 = vunpack.c.h.b16 %v3181
  %v3918 = vunpack.c.l.b16 %v3182
  %v3919 = vunpack.c.h.b16 %v3182
  %v3920 = vunpack.c.l.b16 %v3183
  %v3921 = vunpack.c.h.b16 %v3183
  %v3922 = vunpack.c.l.b16 %v3184
  %v3923 = vunpack.c.h.b16 %v3184
  %v3924 = vunpack.c.l.b16 %v3185
  %v3925 = vunpack.c.h.b16 %v3185
  %v3926 = vunpack.c.l.b16 %v3186
  %v3927 = vunpack.c.h.b16 %v3186
  %v3928 = vunpack.c.l.b16 %v3187
  %v3929 = vunpack.c.h.b16 %v3187
  %v3930 = vunpack.c.l.b16 %v3188
  %v3931 = vunpack.c.h.b16 %v3188
  %v3932 = vunpack.c.l.b16 %v3189
  %v3933 = vunpack.c.h.b16 %v3189
  %v3934 = vunpack.c.l.b16 %v3190
  %v3935 = vunpack.c.h.b16 %v3190
  %v3936 = vunpack.c.l.b16 %v3191
  %v3937 = vunpack.c.h.b16 %v3191
  %v3938 = vunpack.c.l.b16 %v3192
  %v3939 = vunpack.c.h.b16 %v3192
  %v3940 = vunpack.c.l.b16 %v3193
  %v3941 = vunpack.c.h.b16 %v3193
  %v3942 = vpack.c.b16 %v3494, %v3486
  %v3943 = vpack.c.b16 %v3495, %v3487
  %v3944 = vpack.c.b16 %v3496, %v3488
  %v3945 = vpack.c.b16 %v3497, %v3489
  %v3946 = vpack.c.b16 %v3498, %v3490
  %v3947 = vpack.c.b16 %v3499, %v3491
  %v3948 = vpack.c.b16 %v3500, %v3492
  %v3949 = vpack.c.b16 %v3501, %v3493
  %v3950 = vpack.c.b16 %v3510, %v3502
  %v3951 = vpack.c.b16 %v3511, %v3503
  %v3952 = vpack.c.b16 %v3512, %v3504
  %v3953 = vpack.c.b16 %v3513, %v3505
  %v3954 = vpack.c.b16 %v3514, %v3506
  %v3955 = vpack.c.b16 %v3515, %v3507
  %v3956 = vpack.c.b16 %v3516, %v3508
  %v3957 = vpack.c.b16 %v3517, %v3509
  %v3958 = vpack.c.b16 %v3526, %v3518
  %v3959 = vpack.c.b16 %v3527, %v3519
  %v3960 = vpack.c.b16 %v3528, %v3520
  %v3961 = vpack.c.b16 %v3529, %v3521
  %v3962 = vpack.c.b16 %v3530, %v3522
  %v3963 = vpack.c.b16 %v3531, %v3523
  %v3964 = vpack.c.b16 %v3532, %v3524
  %v3965 = vpack.c.b16 %v3533, %v3525
  %v3966 = vpack.c.b16 %v3542, %v3534
  %v3967 = vpack.c.b16 %v3543, %v3535
  %v3968 = vpack.c.b16 %v3544, %v3536
  %v3969 = vpack.c.b16 %v3545, %v3537
  %v3970 = vpack.c.b16 %v3546, %v3538
  %v3971 = vpack.c.b16 %v3547, %v3539
  %v3972 = vpack.c.b16 %v3548, %v3540
  %v3973 = vpack.c.b16 %v3549, %v3541
  %v3974 = vpack.c.b16 %v3558, %v3550
  %v3975 = vpack.c.b16 %v3559, %v3551
  %v3976 = vpack.c.b16 %v3560, %v3552
  %v3977 = vpack.c.b16 %v3561, %v3553
  %v3978 = vpack.c.b16 %v3562, %v3554
  %v3979 = vpack.c.b16 %v3563, %v3555
  %v3980 = vpack.c.b16 %v3564, %v3556
  %v3981 = vpack.c.b16 %v3565, %v3557
  %v3982 = vpack.c.b16 %v3574, %v3566
  %v3983 = vpack.c.b16 %v3575, %v3567
  %v3984 = vpack.c.b16 %v3576, %v3568
  %v3985 = vpack.c.b16 %v3577, %v3569
  %v3986 = vpack.c.b16 %v3578, %v3570
  %v3987 = vpack.c.b16 %v3579, %v3571
  %v3988 = vpack.c.b16 %v3580, %v3572
  %v3989 = vpack.c.b16 %v3581, %v3573
  %v3990 = vpack.c.b16 %v3590, %v3582
  %v3991 = vpack.c.b16 %v3591, %v3583
  %v3992 = vpack.c.b16 %v3592, %v3584
  %v3993 = vpack.c.b16 %v3593, %v3585
  %v3994 = vpack.c.b16 %v3594, %v3586
  %v3995 = vpack.c.b16 %v3595, %v3587
  %v3996 = vpack.c.b16 %v3596, %v3588
  %v3997 = vpack.c.b16 %v3597, %v3589
  %v3998 = vpack.c.b16 %v3606, %v3598
  %v3999 = vpack.c.b16 %v3607, %v3599
  %v4000 = vpack.c.b16 %v3608, %v3600
  %v4001 = vpack.c.b16 %v3609, %v3601
  %v4002 = vpack.c.b16 %v3610, %v3602
  %v4003 = vpack.c.b16 %v3611, %v3603
  %v4004 = vpack.c.b16 %v3612, %v3604
  %v4005 = vpack.c.b16 %v3613, %v3605
  %v4006 = vpack.c.b16 %v3622, %v3614
  %v4007 = vpack.c.b16 %v3623, %v3615
  %v4008 = vpack.c.b16 %v3624, %v3616
  %v4009 = vpack.c.b16 %v3625, %v3617
  %v4010 = vpack.c.b16 %v3626, %v3618
  %v4011 = vpack.c.b16 %v3627, %v3619
  %v4012 = vpack.c.b16 %v3628, %v3620
  %v4013 = vpack.c.b16 %v3629, %v3621
  %v4014 = vpack.c.b16 %v3638, %v3630
  %v4015 = vpack.c.b16 %v3639, %v3631
  %v4016 = vpack.c.b16 %v3640, %v3632
  %v4017 = vpack.c.b16 %v3641, %v3633
  %v4018 = vpack.c.b16 %v3642, %v3634
  %v4019 = vpack.c.b16 %v3643, %v3635
  %v4020 = vpack.c.b16 %v3644, %v3636
  %v4021 = vpack.c.b16 %v3645, %v3637
  %v4022 = vpack.c.b16 %v3654, %v3646
  %v4023 = vpack.c.b16 %v3655, %v3647
  %v4024 = vpack.c.b16 %v3656, %v3648
  %v4025 = vpack.c.b16 %v3657, %v3649
  %v4026 = vpack.c.b16 %v3658, %v3650
  %v4027 = vpack.c.b16 %v3659, %v3651
  %v4028 = vpack.c.b16 %v3660, %v3652
  %v4029 = vpack.c.b16 %v3661, %v3653
  %v4030 = vpack.c.b16 %v3670, %v3662
  %v4031 = vpack.c.b16 %v3671, %v3663
  %v4032 = vpack.c.b16 %v3672, %v3664
  %v4033 = vpack.c.b16 %v3673, %v3665
  %v4034 = vpack.c.b16 %v3674, %v3666
  %v4035 = vpack.c.b16 %v3675, %v3667
  %v4036 = vpack.c.b16 %v3676, %v3668
  %v4037 = vpack.c.b16 %v3677, %v3669
  %v4038 = vpack.c.b16 %v3686, %v3678
  %v4039 = vpack.c.b16 %v3687, %v3679
  %v4040 = vpack.c.b16 %v3688, %v3680
  %v4041 = vpack.c.b16 %v3689, %v3681
  %v4042 = vpack.c.b16 %v3690, %v3682
  %v4043 = vpack.c.b16 %v3691, %v3683
  %v4044 = vpack.c.b16 %v3692, %v3684
  %v4045 = vpack.c.b16 %v3693, %v3685
  %v4046 = vpack.c.b16 %v3702, %v3694
  %v4047 = vpack.c.b16 %v3703, %v3695
  %v4048 = vpack.c.b16 %v3704, %v3696
  %v4049 = vpack.c.b16 %v3705, %v3697
  %v4050 = vpack.c.b16 %v3706, %v3698
  %v4051 = vpack.c.b16 %v3707, %v3699
  %v4052 = vpack.c.b16 %v3708, %v3700
  %v4053 = vpack.c.b16 %v3709, %v3701
  %v4054 = vpack.c.b16 %v3718, %v3710
  %v4055 = vpack.c.b16 %v3719, %v3711
  %v4056 = vpack.c.b16 %v3720, %v3712
  %v4057 = vpack.c.b16 %v3721, %v3713
  %v4058 = vpack.c.b16 %v3722, %v3714
  %v4059 = vpack.c.b16 %v3723, %v3715
  %v4060 = vpack.c.b16 %v3724, %v3716
  %v4061 = vpack.c.b16 %v3725, %v3717
  %v4062 = vpack.c.b16 %v3734, %v3726
  %v4063 = vpack.c.b16 %v3735, %v3727
  %v4064 = vpack.c.b16 %v3736, %v3728
  %v4065 = vpack.c.b16 %v3737, %v3729
  %v4066 = vpack.c.b16 %v3738, %v3730
  %v4067 = vpack.c.b16 %v3739, %v3731
  %v4068 = vpack.c.b16 %v3740, %v3732
  %v4069 = vpack.c.b16 %v3741, %v3733
  %v4070 = vpack.c.b16 %v3750, %v3742
  %v4071 = vpack.c.b16 %v3751, %v3743
  %v4072 = vpack.c.b16 %v3752, %v3744
  %v4073 = vpack.c.b16 %v3753, %v3745
  %v4074 = vpack.c.b16 %v3754, %v3746
  %v4075 = vpack.c.b16 %v3755, %v3747
  %v4076 = vpack.c.b16 %v3756, %v3748
  %v4077 = vpack.c.b16 %v3757, %v3749
  %v4078 = vpack.c.b16 %v3766, %v3758
  %v4079 = vpack.c.b16 %v3767, %v3759
  %v4080 = vpack.c.b16 %v3768, %v3760
  %v4081 = vpack.c.b16 %v3769, %v3761
  %v4082 = vpack.c.b16 %v3770, %v3762
  %v4083 = vpack.c.b16 %v3771, %v3763
  %v4084 = vpack.c.b16 %v3772, %v3764
  %v4085 = vpack.c.b16 %v3773, %v3765
  %v4086 = vpack.c.b16 %v3782, %v3774
  %v4087 = vpack.c.b16 %v3783, %v3775
  %v4088 = vpack.c.b16 %v3784, %v3776
  %v4089 = vpack.c.b16 %v3785, %v3777
  %v4090 = vpack.c.b16 %v3786, %v3778
  %v4091 = vpack.c.b16 %v3787, %v3779
  %v4092 = vpack.c.b16 %v3788, %v3780
  %v4093 = vpack.c.b16 %v3789, %v3781
  %v4094 = vpack.c.b16 %v3798, %v3790
  %v4095 = vpack.c.b16 %v3799, %v3791
  %v4096 = vpack.c.b16 %v3800, %v3792
  %v4097 = vpack.c.b16 %v3801, %v3793
  %v4098 = vpack.c.b16 %v3802, %v3794
  %v4099 = vpack.c.b16 %v3803, %v3795
  %v4100 = vpack.c.b16 %v3804, %v3796
  %v4101 = vpack.c.b16 %v3805, %v3797
  %v4102 = vpack.c.b16 %v3814, %v3806
  %v4103 = vpack.c.b16 %v3815, %v3807
  %v4104 = vpack.c.b16 %v3816, %v3808
  %v4105 = vpack.c.b16 %v3817, %v3809
  %v4106 = vpack.c.b16 %v3818, %v3810
  %v4107 = vpack.c.b16 %v3819, %v3811
  %v4108 = vpack.c.b16 %v3820, %v3812
  %v4109 = vpack.c.b16 %v3821, %v3813
  %v4110 = vpack.c.b16 %v3830, %v3822
  %v4111 = vpack.c.b16 %v3831, %v3823
  %v4112 = vpack.c.b16 %v3832, %v3824
  %v4113 = vpack.c.b16 %v3833, %v3825
  %v4114 = vpack.c.b16 %v3834, %v3826
  %v4115 = vpack.c.b16 %v3835, %v3827
  %v4116 = vpack.c.b16 %v3836, %v3828
  %v4117 = vpack.c.b16 %v3837, %v3829
  %v4118 = vpack.c.b16 %v3846, %v3838
  %v4119 = vpack.c.b16 %v3847, %v3839
  %v4120 = vpack.c.b16 %v3848, %v3840
  %v4121 = vpack.c.b16 %v3849, %v3841
  %v4122 = vpack.c.b16 %v3850, %v3842
  %v4123 = vpack.c.b16 %v3851, %v3843
  %v4124 = vpack.c.b16 %v3852, %v3844
  %v4125 = vpack.c.b16 %v3853, %v3845
  %v4126 = vpack.c.b16 %v3862, %v3854
  %v4127 = vpack.c.b16 %v3863, %v3855
  %v4128 = vpack.c.b16 %v3864, %v3856
  %v4129 = vpack.c.b16 %v3865, %v3857
  %v4130 = vpack.c.b16 %v3866, %v3858
  %v4131 = vpack.c.b16 %v3867, %v3859
  %v4132 = vpack.c.b16 %v3868, %v3860
  %v4133 = vpack.c.b16 %v3869, %v3861
  %v4134 = vpack.c.b16 %v3878, %v3870
  %v4135 = vpack.c.b16 %v3879, %v3871
  %v4136 = vpack.c.b16 %v3880, %v3872
  %v4137 = vpack.c.b16 %v3881, %v3873
  %v4138 = vpack.c.b16 %v3882, %v3874
  %v4139 = vpack.c.b16 %v3883, %v3875
  %v4140 = vpack.c.b16 %v3884, %v3876
  %v4141 = vpack.c.b16 %v3885, %v3877
  %v4142 = vpack.c.b16 %v3894, %v3886
  %v4143 = vpack.c.b16 %v3895, %v3887
  %v4144 = vpack.c.b16 %v3896, %v3888
  %v4145 = vpack.c.b16 %v3897, %v3889
  %v4146 = vpack.c.b16 %v3898, %v3890
  %v4147 = vpack.c.b16 %v3899, %v3891
  %v4148 = vpack.c.b16 %v3900, %v3892
  %v4149 = vpack.c.b16 %v3901, %v3893
  %v4150 = vpack.c.b16 %v3910, %v3902
  %v4151 = vpack.c.b16 %v3911, %v3903
  %v4152 = vpack.c.b16 %v3912, %v3904
  %v4153 = vpack.c.b16 %v3913, %v3905
  %v4154 = vpack.c.b16 %v3914, %v3906
  %v4155 = vpack.c.b16 %v3915, %v3907
  %v4156 = vpack.c.b16 %v3916, %v3908
  %v4157 = vpack.c.b16 %v3917, %v3909
  %v4158 = vpack.c.b16 %v3926, %v3918
  %v4159 = vpack.c.b16 %v3927, %v3919
  %v4160 = vpack.c.b16 %v3928, %v3920
  %v4161 = vpack.c.b16 %v3929, %v3921
  %v4162 = vpack.c.b16 %v3930, %v3922
  %v4163 = vpack.c.b16 %v3931, %v3923
  %v4164 = vpack.c.b16 %v3932, %v3924
  %v4165 = vpack.c.b16 %v3933, %v3925
  %v4166 = vpack.c.b16 %v3934, %v3934
  %v4167 = vpack.c.b16 %v3935, %v3935
  %v4168 = vpack.c.b16 %v3936, %v3936
  %v4169 = vpack.c.b16 %v3937, %v3937
  %v4170 = vpack.c.b16 %v3938, %v3938
  %v4171 = vpack.c.b16 %v3939, %v3939
  %v4172 = vpack.c.b16 %v3940, %v3940
  %v4173 = vpack.c.b16 %v3941, %v3941
  %4406 = vmatprep.subr.bf16.mxu0 0
  %4407 = vmatpush1.bf16.msra.mxu0 %v3194
  %4408 = vmatprep.subr.bf16.mxu0 0
  %4409 = vmatpush1.bf16.msra.mxu0 %v3195
  %4410 = vmatprep.subr.bf16.mxu0 0
  %4411 = vmatpush1.bf16.msra.mxu0 %v3196
  %4412 = vmatprep.subr.bf16.mxu0 0
  %4413 = vmatpush1.bf16.msra.mxu0 %v3197
  %4414 = vmatprep.subr.bf16.mxu0 0
  %4415 = vmatpush1.bf16.msra.mxu0 %v3198
  %4416 = vmatprep.subr.bf16.mxu0 0
  %4417 = vmatpush1.bf16.msra.mxu0 %v3199
  %4418 = vmatprep.subr.bf16.mxu0 0
  %4419 = vmatpush1.bf16.msra.mxu0 %v3200
  %4420 = vmatprep.subr.bf16.mxu0 0
  %4421 = vmatpush1.bf16.msra.mxu0 %v3201
  %4422 = vmatprep.subr.bf16.mxu0 0
  %4423 = vmatpush1.bf16.msra.mxu0 %v3202
  %4424 = vmatprep.subr.bf16.mxu0 0
  %4425 = vmatpush1.bf16.msra.mxu0 %v3203
  %4426 = vmatprep.subr.bf16.mxu0 0
  %4427 = vmatpush1.bf16.msra.mxu0 %v3204
  %4428 = vmatprep.subr.bf16.mxu0 0
  %4429 = vmatpush1.bf16.msra.mxu0 %v3205
  %4430 = vmatprep.subr.bf16.mxu0 0
  %4431 = vmatpush1.bf16.msra.mxu0 %v3206
  %4432 = vmatprep.subr.bf16.mxu0 0
  %4433 = vmatpush1.bf16.msra.mxu0 %v3207
  %4434 = vmatprep.subr.bf16.mxu0 0
  %4435 = vmatpush1.bf16.msra.mxu0 %v3208
  %4436 = vmatprep.subr.bf16.mxu0 0
  %4437 = vmatpush1.bf16.msra.mxu0 %v3209
  %4438 = vmatprep.mubr.bf16.mxu0 %v3943
  %4439 = vmatmul.mubr.bf16.gmra.mrb[0].mxu0 %v3942
  %v4440 = vpop.f32.mrb[0].mxu0
  %v4441 = vadd.f32 0.0, %v4440
  %v4442 = vpop.f32.mrb[0].mxu0
  %v4443 = vpop.f32.mrb[0].mxu0
  %v4444 = vadd.f32 0.0, %v4443
  %v4445 = vpop.f32.mrb[0].mxu0
  %4446 = vmatprep.mubr.bf16.mxu0 %v3951
  %4447 = vmatmul.mubr.bf16.gmra.mrb[0].mxu0 %v3950
  %v4448 = vpop.f32.mrb[0].mxu0
  %v4449 = vadd.f32 0.0, %v4448
  %v4450 = vpop.f32.mrb[0].mxu0
  %v4451 = vpop.f32.mrb[0].mxu0
  %v4452 = vadd.f32 0.0, %v4451
  %v4453 = vpop.f32.mrb[0].mxu0
  %4454 = vmatprep.mubr.bf16.mxu0 %v3959
  %4455 = vmatmul.mubr.bf16.gmra.mrb[0].mxu0 %v3958
  %v4456 = vpop.f32.mrb[0].mxu0
  %v4457 = vadd.f32 0.0, %v4456
  %v4458 = vpop.f32.mrb[0].mxu0
  %v4459 = vpop.f32.mrb[0].mxu0
  %v4460 = vadd.f32 0.0, %v4459
  %v4461 = vpop.f32.mrb[0].mxu0
  %4462 = vmatprep.mubr.bf16.mxu0 %v3967
  %4463 = vmatmul.mubr.bf16.gmra.mrb[0].mxu0 %v3966
  %v4464 = vpop.f32.mrb[0].mxu0
  %v4465 = vadd.f32 0.0, %v4464
  %v4466 = vpop.f32.mrb[0].mxu0
  %v4467 = vpop.f32.mrb[0].mxu0
  %v4468 = vadd.f32 0.0, %v4467
  %v4469 = vpop.f32.mrb[0].mxu0
  %4470 = vmatprep.mubr.bf16.mxu0 %v3975
  %4471 = vmatmul.mubr.bf16.gmra.mrb[0].mxu0 %v3974
  %v4472 = vpop.f32.mrb[0].mxu0
  %v4473 = vadd.f32 0.0, %v4472
  %v4474 = vpop.f32.mrb[0].mxu0
  %v4475 = vpop.f32.mrb[0].mxu0
  %v4476 = vadd.f32 0.0, %v4475
  %v4477 = vpop.f32.mrb[0].mxu0
  %4478 = vmatprep.mubr.bf16.mxu0 %v3983
  %4479 = vmatmul.mubr.bf16.gmra.mrb[0].mxu0 %v3982
  %v4480 = vpop.f32.mrb[0].mxu0
  %v4481 = vadd.f32 0.0, %v4480
  %v4482 = vpop.f32.mrb[0].mxu0
  %v4483 = vpop.f32.mrb[0].mxu0
  %v4484 = vadd.f32 0.0, %v4483
  %v4485 = vpop.f32.mrb[0].mxu0
  %4486 = vmatprep.mubr.bf16.mxu0 %v3991
  %4487 = vmatmul.mubr.bf16.gmra.mrb[0].mxu0 %v3990
  %v4488 = vpop.f32.mrb[0].mxu0
  %v4489 = vadd.f32 0.0, %v4488
  %v4490 = vpop.f32.mrb[0].mxu0
  %v4491 = vpop.f32.mrb[0].mxu0
  %v4492 = vadd.f32 0.0, %v4491
  %v4493 = vpop.f32.mrb[0].mxu0
  %4494 = vmatprep.mubr.bf16.mxu0 %v3999
  %4495 = vmatmul.mubr.bf16.gmra.mrb[0].mxu0 %v3998
  %v4496 = vpop.f32.mrb[0].mxu0
  %v4497 = vadd.f32 0.0, %v4496
  %v4498 = vpop.f32.mrb[0].mxu0
  %v4499 = vpop.f32.mrb[0].mxu0
  %v4500 = vadd.f32 0.0, %v4499
  %v4501 = vpop.f32.mrb[0].mxu0
  %4502 = vmatprep.mubr.bf16.mxu0 %v4007
  %4503 = vmatmul.mubr.bf16.gmra.mrb[0].mxu0 %v4006
  %v4504 = vpop.f32.mrb[0].mxu0
  %v4505 = vadd.f32 0.0, %v4504
  %v4506 = vpop.f32.mrb[0].mxu0
  %v4507 = vpop.f32.mrb[0].mxu0
  %v4508 = vadd.f32 0.0, %v4507
  %v4509 = vpop.f32.mrb[0].mxu0
  %4510 = vmatprep.mubr.bf16.mxu0 %v4015
  %4511 = vmatmul.mubr.bf16.gmra.mrb[0].mxu0 %v4014
  %v4512 = vpop.f32.mrb[0].mxu0
  %v4513 = vadd.f32 0.0, %v4512
  %v4514 = vpop.f32.mrb[0].mxu0
  %v4515 = vpop.f32.mrb[0].mxu0
  %v4516 = vadd.f32 0.0, %v4515
  %v4517 = vpop.f32.mrb[0].mxu0
  %4518 = vmatprep.mubr.bf16.mxu0 %v4023
  %4519 = vmatmul.mubr.bf16.gmra.mrb[0].mxu0 %v4022
  %v4520 = vpop.f32.mrb[0].mxu0
  %v4521 = vadd.f32 0.0, %v4520
  %v4522 = vpop.f32.mrb[0].mxu0
  %v4523 = vpop.f32.mrb[0].mxu0
  %v4524 = vadd.f32 0.0, %v4523
  %v4525 = vpop.f32.mrb[0].mxu0
  %4526 = vmatprep.mubr.bf16.mxu0 %v4031
  %4527 = vmatmul.mubr.bf16.gmra.mrb[0].mxu0 %v4030
  %v4528 = vpop.f32.mrb[0].mxu0
  %v4529 = vadd.f32 0.0, %v4528
  %v4530 = vpop.f32.mrb[0].mxu0
  %v4531 = vpop.f32.mrb[0].mxu0
  %v4532 = vadd.f32 0.0, %v4531
  %v4533 = vpop.f32.mrb[0].mxu0
  %4534 = vmatprep.mubr.bf16.mxu0 %v4039
  %4535 = vmatmul.mubr.bf16.gmra.mrb[0].mxu0 %v4038
  %v4536 = vpop.f32.mrb[0].mxu0
  %v4537 = vadd.f32 0.0, %v4536
  %v4538 = vpop.f32.mrb[0].mxu0
  %v4539 = vpop.f32.mrb[0].mxu0
  %v4540 = vadd.f32 0.0, %v4539
  %v4541 = vpop.f32.mrb[0].mxu0
  %4542 = vmatprep.mubr.bf16.mxu0 %v4047
  %4543 = vmatmul.mubr.bf16.gmra.mrb[0].mxu0 %v4046
  %v4544 = vpop.f32.mrb[0].mxu0
  %v4545 = vadd.f32 0.0, %v4544
  %v4546 = vpop.f32.mrb[0].mxu0
  %v4547 = vpop.f32.mrb[0].mxu0
  %v4548 = vadd.f32 0.0, %v4547
  %v4549 = vpop.f32.mrb[0].mxu0
  %4550 = vmatprep.mubr.bf16.mxu0 %v4055
  %4551 = vmatmul.mubr.bf16.gmra.mrb[0].mxu0 %v4054
  %v4552 = vpop.f32.mrb[0].mxu0
  %v4553 = vadd.f32 0.0, %v4552
  %v4554 = vpop.f32.mrb[0].mxu0
  %v4555 = vpop.f32.mrb[0].mxu0
  %v4556 = vadd.f32 0.0, %v4555
  %v4557 = vpop.f32.mrb[0].mxu0
  %4558 = vmatprep.mubr.bf16.mxu0 %v4063
  %4559 = vmatmul.mubr.bf16.gmra.mrb[0].mxu0 %v4062
  %v4560 = vpop.f32.mrb[0].mxu0
  %v4561 = vadd.f32 0.0, %v4560
  %v4562 = vpop.f32.mrb[0].mxu0
  %v4563 = vpop.f32.mrb[0].mxu0
  %v4564 = vadd.f32 0.0, %v4563
  %v4565 = vpop.f32.mrb[0].mxu0
  %4566 = vmatprep.mubr.bf16.mxu0 %v4071
  %4567 = vmatmul.mubr.bf16.gmra.mrb[0].mxu0 %v4070
  %v4568 = vpop.f32.mrb[0].mxu0
  %v4569 = vadd.f32 0.0, %v4568
  %v4570 = vpop.f32.mrb[0].mxu0
  %v4571 = vpop.f32.mrb[0].mxu0
  %v4572 = vadd.f32 0.0, %v4571
  %v4573 = vpop.f32.mrb[0].mxu0
  %4574 = vmatprep.mubr.bf16.mxu0 %v4079
  %4575 = vmatmul.mubr.bf16.gmra.mrb[0].mxu0 %v4078
  %v4576 = vpop.f32.mrb[0].mxu0
  %v4577 = vadd.f32 0.0, %v4576
  %v4578 = vpop.f32.mrb[0].mxu0
  %v4579 = vpop.f32.mrb[0].mxu0
  %v4580 = vadd.f32 0.0, %v4579
  %v4581 = vpop.f32.mrb[0].mxu0
  %4582 = vmatprep.mubr.bf16.mxu0 %v4087
  %4583 = vmatmul.mubr.bf16.gmra.mrb[0].mxu0 %v4086
  %v4584 = vpop.f32.mrb[0].mxu0
  %v4585 = vadd.f32 0.0, %v4584
  %v4586 = vpop.f32.mrb[0].mxu0
  %v4587 = vpop.f32.mrb[0].mxu0
  %v4588 = vadd.f32 0.0, %v4587
  %v4589 = vpop.f32.mrb[0].mxu0
  %4590 = vmatprep.mubr.bf16.mxu0 %v4095
  %4591 = vmatmul.mubr.bf16.gmra.mrb[0].mxu0 %v4094
  %v4592 = vpop.f32.mrb[0].mxu0
  %v4593 = vadd.f32 0.0, %v4592
  %v4594 = vpop.f32.mrb[0].mxu0
  %v4595 = vpop.f32.mrb[0].mxu0
  %v4596 = vadd.f32 0.0, %v4595
  %v4597 = vpop.f32.mrb[0].mxu0
  %4598 = vmatprep.mubr.bf16.mxu0 %v4103
  %4599 = vmatmul.mubr.bf16.gmra.mrb[0].mxu0 %v4102
  %v4600 = vpop.f32.mrb[0].mxu0
  %v4601 = vadd.f32 0.0, %v4600
  %v4602 = vpop.f32.mrb[0].mxu0
  %v4603 = vpop.f32.mrb[0].mxu0
  %v4604 = vadd.f32 0.0, %v4603
  %v4605 = vpop.f32.mrb[0].mxu0
  %4606 = vmatprep.mubr.bf16.mxu0 %v4111
  %4607 = vmatmul.mubr.bf16.gmra.mrb[0].mxu0 %v4110
  %v4608 = vpop.f32.mrb[0].mxu0
  %v4609 = vadd.f32 0.0, %v4608
  %v4610 = vpop.f32.mrb[0].mxu0
  %v4611 = vpop.f32.mrb[0].mxu0
  %v4612 = vadd.f32 0.0, %v4611
  %v4613 = vpop.f32.mrb[0].mxu0
  %4614 = vmatprep.mubr.bf16.mxu0 %v4119
  %4615 = vmatmul.mubr.bf16.gmra.mrb[0].mxu0 %v4118
  %v4616 = vpop.f32.mrb[0].mxu0
  %v4617 = vadd.f32 0.0, %v4616
  %v4618 = vpop.f32.mrb[0].mxu0
  %v4619 = vpop.f32.mrb[0].mxu0
  %v4620 = vadd.f32 0.0, %v4619
  %v4621 = vpop.f32.mrb[0].mxu0
  %4622 = vmatprep.mubr.bf16.mxu0 %v4127
  %4623 = vmatmul.mubr.bf16.gmra.mrb[0].mxu0 %v4126
  %v4624 = vpop.f32.mrb[0].mxu0
  %v4625 = vadd.f32 0.0, %v4624
  %v4626 = vpop.f32.mrb[0].mxu0
  %v4627 = vpop.f32.mrb[0].mxu0
  %v4628 = vadd.f32 0.0, %v4627
  %v4629 = vpop.f32.mrb[0].mxu0
  %4630 = vmatprep.mubr.bf16.mxu0 %v4135
  %4631 = vmatmul.mubr.bf16.gmra.mrb[0].mxu0 %v4134
  %v4632 = vpop.f32.mrb[0].mxu0
  %v4633 = vadd.f32 0.0, %v4632
  %v4634 = vpop.f32.mrb[0].mxu0
  %v4635 = vpop.f32.mrb[0].mxu0
  %v4636 = vadd.f32 0.0, %v4635
  %v4637 = vpop.f32.mrb[0].mxu0
  %4638 = vmatprep.mubr.bf16.mxu0 %v4143
  %4639 = vmatmul.mubr.bf16.gmra.mrb[0].mxu0 %v4142
  %v4640 = vpop.f32.mrb[0].mxu0
  %v4641 = vadd.f32 0.0, %v4640
  %v4642 = vpop.f32.mrb[0].mxu0
  %v4643 = vpop.f32.mrb[0].mxu0
  %v4644 = vadd.f32 0.0, %v4643
  %v4645 = vpop.f32.mrb[0].mxu0
  %4646 = vmatprep.mubr.bf16.mxu0 %v4151
  %4647 = vmatmul.mubr.bf16.gmra.mrb[0].mxu0 %v4150
  %v4648 = vpop.f32.mrb[0].mxu0
  %v4649 = vadd.f32 0.0, %v4648
  %v4650 = vpop.f32.mrb[0].mxu0
  %v4651 = vpop.f32.mrb[0].mxu0
  %v4652 = vadd.f32 0.0, %v4651
  %v4653 = vpop.f32.mrb[0].mxu0
  %4654 = vmatprep.mubr.bf16.mxu0 %v4159
  %4655 = vmatmul.mubr.bf16.gmra.mrb[0].mxu0 %v4158
  %v4656 = vpop.f32.mrb[0].mxu0
  %v4657 = vadd.f32 0.0, %v4656
  %v4658 = vpop.f32.mrb[0].mxu0
  %v4659 = vpop.f32.mrb[0].mxu0
  %v4660 = vadd.f32 0.0, %v4659
  %v4661 = vpop.f32.mrb[0].mxu0
  %4662 = vmatprep.mubr.bf16.mxu0 %v4167
  %4663 = vmatmul.mubr.bf16.gmra.mrb[0].mxu0 %v4166
  %v4664 = vpop.f32.mrb[0].mxu0
  %v4665 = vadd.f32 0.0, %v4664
  %v4666 = vpop.f32.mrb[0].mxu0
  %v4667 = vpop.f32.mrb[0].mxu0
  %v4668 = vpop.f32.mrb[0].mxu0
  %4669 = vdwg.mxu0
  %4670 = vmatprep.subr.bf16.mxu0 0
  %4671 = vmatpush1.bf16.msra.mxu0 %v3210
  %4672 = vmatprep.subr.bf16.mxu0 0
  %4673 = vmatpush1.bf16.msra.mxu0 %v3211
  %4674 = vmatprep.subr.bf16.mxu0 0
  %4675 = vmatpush1.bf16.msra.mxu0 %v3212
  %4676 = vmatprep.subr.bf16.mxu0 0
  %4677 = vmatpush1.bf16.msra.mxu0 %v3213
  %4678 = vmatprep.subr.bf16.mxu0 0
  %4679 = vmatpush1.bf16.msra.mxu0 %v3214
  %4680 = vmatprep.subr.bf16.mxu0 0
  %4681 = vmatpush1.bf16.msra.mxu0 %v3215
  %4682 = vmatprep.subr.bf16.mxu0 0
  %4683 = vmatpush1.bf16.msra.mxu0 %v3216
  %4684 = vmatprep.subr.bf16.mxu0 0
  %4685 = vmatpush1.bf16.msra.mxu0 %v3217
  %4686 = vmatprep.subr.bf16.mxu0 0
  %4687 = vmatpush1.bf16.msra.mxu0 %v3218
  %4688 = vmatprep.subr.bf16.mxu0 0
  %4689 = vmatpush1.bf16.msra.mxu0 %v3219
  %4690 = vmatprep.subr.bf16.mxu0 0
  %4691 = vmatpush1.bf16.msra.mxu0 %v3220
  %4692 = vmatprep.subr.bf16.mxu0 0
  %4693 = vmatpush1.bf16.msra.mxu0 %v3221
  %4694 = vmatprep.subr.bf16.mxu0 0
  %4695 = vmatpush1.bf16.msra.mxu0 %v3222
  %4696 = vmatprep.subr.bf16.mxu0 0
  %4697 = vmatpush1.bf16.msra.mxu0 %v3223
  %4698 = vmatprep.subr.bf16.mxu0 0
  %4699 = vmatpush1.bf16.msra.mxu0 %v3224
  %4700 = vmatprep.subr.bf16.mxu0 0
  %4701 = vmatpush1.bf16.msra.mxu0 %v3225
  %4702 = vmatprep.mubr.bf16.mxu0 %v3945
  %4703 = vmatmul.mubr.bf16.gmra.mrb[0].mxu0 %v3944
  %v4704 = vpop.f32.mrb[0].mxu0
  %v4705 = vadd.f32 %v4441, %v4704
  %v4706 = vpop.f32.mrb[0].mxu0
  %v4707 = vpop.f32.mrb[0].mxu0
  %v4708 = vadd.f32 %v4444, %v4707
  %v4709 = vpop.f32.mrb[0].mxu0
  %4710 = vmatprep.mubr.bf16.mxu0 %v3953
  %4711 = vmatmul.mubr.bf16.gmra.mrb[0].mxu0 %v3952
  %v4712 = vpop.f32.mrb[0].mxu0
  %v4713 = vadd.f32 %v4449, %v4712
  %v4714 = vpop.f32.mrb[0].mxu0
  %v4715 = vpop.f32.mrb[0].mxu0
  %v4716 = vadd.f32 %v4452, %v4715
  %v4717 = vpop.f32.mrb[0].mxu0
  %4718 = vmatprep.mubr.bf16.mxu0 %v3961
  %4719 = vmatmul.mubr.bf16.gmra.mrb[0].mxu0 %v3960
  %v4720 = vpop.f32.mrb[0].mxu0
  %v4721 = vadd.f32 %v4457, %v4720
  %v4722 = vpop.f32.mrb[0].mxu0
  %v4723 = vpop.f32.mrb[0].mxu0
  %v4724 = vadd.f32 %v4460, %v4723
  %v4725 = vpop.f32.mrb[0].mxu0
  %4726 = vmatprep.mubr.bf16.mxu0 %v3969
  %4727 = vmatmul.mubr.bf16.gmra.mrb[0].mxu0 %v3968
  %v4728 = vpop.f32.mrb[0].mxu0
  %v4729 = vadd.f32 %v4465, %v4728
  %v4730 = vpop.f32.mrb[0].mxu0
  %v4731 = vpop.f32.mrb[0].mxu0
  %v4732 = vadd.f32 %v4468, %v4731
  %v4733 = vpop.f32.mrb[0].mxu0
  %4734 = vmatprep.mubr.bf16.mxu0 %v3977
  %4735 = vmatmul.mubr.bf16.gmra.mrb[0].mxu0 %v3976
  %v4736 = vpop.f32.mrb[0].mxu0
  %v4737 = vadd.f32 %v4473, %v4736
  %v4738 = vpop.f32.mrb[0].mxu0
  %v4739 = vpop.f32.mrb[0].mxu0
  %v4740 = vadd.f32 %v4476, %v4739
  %v4741 = vpop.f32.mrb[0].mxu0
  %4742 = vmatprep.mubr.bf16.mxu0 %v3985
  %4743 = vmatmul.mubr.bf16.gmra.mrb[0].mxu0 %v3984
  %v4744 = vpop.f32.mrb[0].mxu0
  %v4745 = vadd.f32 %v4481, %v4744
  %v4746 = vpop.f32.mrb[0].mxu0
  %v4747 = vpop.f32.mrb[0].mxu0
  %v4748 = vadd.f32 %v4484, %v4747
  %v4749 = vpop.f32.mrb[0].mxu0
  %4750 = vmatprep.mubr.bf16.mxu0 %v3993
  %4751 = vmatmul.mubr.bf16.gmra.mrb[0].mxu0 %v3992
  %v4752 = vpop.f32.mrb[0].mxu0
  %v4753 = vadd.f32 %v4489, %v4752
  %v4754 = vpop.f32.mrb[0].mxu0
  %v4755 = vpop.f32.mrb[0].mxu0
  %v4756 = vadd.f32 %v4492, %v4755
  %v4757 = vpop.f32.mrb[0].mxu0
  %4758 = vmatprep.mubr.bf16.mxu0 %v4001
  %4759 = vmatmul.mubr.bf16.gmra.mrb[0].mxu0 %v4000
  %v4760 = vpop.f32.mrb[0].mxu0
  %v4761 = vadd.f32 %v4497, %v4760
  %v4762 = vpop.f32.mrb[0].mxu0
  %v4763 = vpop.f32.mrb[0].mxu0
  %v4764 = vadd.f32 %v4500, %v4763
  %v4765 = vpop.f32.mrb[0].mxu0
  %4766 = vmatprep.mubr.bf16.mxu0 %v4009
  %4767 = vmatmul.mubr.bf16.gmra.mrb[0].mxu0 %v4008
  %v4768 = vpop.f32.mrb[0].mxu0
  %v4769 = vadd.f32 %v4505, %v4768
  %v4770 = vpop.f32.mrb[0].mxu0
  %v4771 = vpop.f32.mrb[0].mxu0
  %v4772 = vadd.f32 %v4508, %v4771
  %v4773 = vpop.f32.mrb[0].mxu0
  %4774 = vmatprep.mubr.bf16.mxu0 %v4017
  %4775 = vmatmul.mubr.bf16.gmra.mrb[0].mxu0 %v4016
  %v4776 = vpop.f32.mrb[0].mxu0
  %v4777 = vadd.f32 %v4513, %v4776
  %v4778 = vpop.f32.mrb[0].mxu0
  %v4779 = vpop.f32.mrb[0].mxu0
  %v4780 = vadd.f32 %v4516, %v4779
  %v4781 = vpop.f32.mrb[0].mxu0
  %4782 = vmatprep.mubr.bf16.mxu0 %v4025
  %4783 = vmatmul.mubr.bf16.gmra.mrb[0].mxu0 %v4024
  %v4784 = vpop.f32.mrb[0].mxu0
  %v4785 = vadd.f32 %v4521, %v4784
  %v4786 = vpop.f32.mrb[0].mxu0
  %v4787 = vpop.f32.mrb[0].mxu0
  %v4788 = vadd.f32 %v4524, %v4787
  %v4789 = vpop.f32.mrb[0].mxu0
  %4790 = vmatprep.mubr.bf16.mxu0 %v4033
  %4791 = vmatmul.mubr.bf16.gmra.mrb[0].mxu0 %v4032
  %v4792 = vpop.f32.mrb[0].mxu0
  %v4793 = vadd.f32 %v4529, %v4792
  %v4794 = vpop.f32.mrb[0].mxu0
  %v4795 = vpop.f32.mrb[0].mxu0
  %v4796 = vadd.f32 %v4532, %v4795
  %v4797 = vpop.f32.mrb[0].mxu0
  %4798 = vmatprep.mubr.bf16.mxu0 %v4041
  %4799 = vmatmul.mubr.bf16.gmra.mrb[0].mxu0 %v4040
  %v4800 = vpop.f32.mrb[0].mxu0
  %v4801 = vadd.f32 %v4537, %v4800
  %v4802 = vpop.f32.mrb[0].mxu0
  %v4803 = vpop.f32.mrb[0].mxu0
  %v4804 = vadd.f32 %v4540, %v4803
  %v4805 = vpop.f32.mrb[0].mxu0
  %4806 = vmatprep.mubr.bf16.mxu0 %v4049
  %4807 = vmatmul.mubr.bf16.gmra.mrb[0].mxu0 %v4048
  %v4808 = vpop.f32.mrb[0].mxu0
  %v4809 = vadd.f32 %v4545, %v4808
  %v4810 = vpop.f32.mrb[0].mxu0
  %v4811 = vpop.f32.mrb[0].mxu0
  %v4812 = vadd.f32 %v4548, %v4811
  %v4813 = vpop.f32.mrb[0].mxu0
  %4814 = vmatprep.mubr.bf16.mxu0 %v4057
  %4815 = vmatmul.mubr.bf16.gmra.mrb[0].mxu0 %v4056
  %v4816 = vpop.f32.mrb[0].mxu0
  %v4817 = vadd.f32 %v4553, %v4816
  %v4818 = vpop.f32.mrb[0].mxu0
  %v4819 = vpop.f32.mrb[0].mxu0
  %v4820 = vadd.f32 %v4556, %v4819
  %v4821 = vpop.f32.mrb[0].mxu0
  %4822 = vmatprep.mubr.bf16.mxu0 %v4065
  %4823 = vmatmul.mubr.bf16.gmra.mrb[0].mxu0 %v4064
  %v4824 = vpop.f32.mrb[0].mxu0
  %v4825 = vadd.f32 %v4561, %v4824
  %v4826 = vpop.f32.mrb[0].mxu0
  %v4827 = vpop.f32.mrb[0].mxu0
  %v4828 = vadd.f32 %v4564, %v4827
  %v4829 = vpop.f32.mrb[0].mxu0
  %4830 = vmatprep.mubr.bf16.mxu0 %v4073
  %4831 = vmatmul.mubr.bf16.gmra.mrb[0].mxu0 %v4072
  %v4832 = vpop.f32.mrb[0].mxu0
  %v4833 = vadd.f32 %v4569, %v4832
  %v4834 = vpop.f32.mrb[0].mxu0
  %v4835 = vpop.f32.mrb[0].mxu0
  %v4836 = vadd.f32 %v4572, %v4835
  %v4837 = vpop.f32.mrb[0].mxu0
  %4838 = vmatprep.mubr.bf16.mxu0 %v4081
  %4839 = vmatmul.mubr.bf16.gmra.mrb[0].mxu0 %v4080
  %v4840 = vpop.f32.mrb[0].mxu0
  %v4841 = vadd.f32 %v4577, %v4840
  %v4842 = vpop.f32.mrb[0].mxu0
  %v4843 = vpop.f32.mrb[0].mxu0
  %v4844 = vadd.f32 %v4580, %v4843
  %v4845 = vpop.f32.mrb[0].mxu0
  %4846 = vmatprep.mubr.bf16.mxu0 %v4089
  %4847 = vmatmul.mubr.bf16.gmra.mrb[0].mxu0 %v4088
  %v4848 = vpop.f32.mrb[0].mxu0
  %v4849 = vadd.f32 %v4585, %v4848
  %v4850 = vpop.f32.mrb[0].mxu0
  %v4851 = vpop.f32.mrb[0].mxu0
  %v4852 = vadd.f32 %v4588, %v4851
  %v4853 = vpop.f32.mrb[0].mxu0
  %4854 = vmatprep.mubr.bf16.mxu0 %v4097
  %4855 = vmatmul.mubr.bf16.gmra.mrb[0].mxu0 %v4096
  %v4856 = vpop.f32.mrb[0].mxu0
  %v4857 = vadd.f32 %v4593, %v4856
  %v4858 = vpop.f32.mrb[0].mxu0
  %v4859 = vpop.f32.mrb[0].mxu0
  %v4860 = vadd.f32 %v4596, %v4859
  %v4861 = vpop.f32.mrb[0].mxu0
  %4862 = vmatprep.mubr.bf16.mxu0 %v4105
  %4863 = vmatmul.mubr.bf16.gmra.mrb[0].mxu0 %v4104
  %v4864 = vpop.f32.mrb[0].mxu0
  %v4865 = vadd.f32 %v4601, %v4864
  %v4866 = vpop.f32.mrb[0].mxu0
  %v4867 = vpop.f32.mrb[0].mxu0
  %v4868 = vadd.f32 %v4604, %v4867
  %v4869 = vpop.f32.mrb[0].mxu0
  %4870 = vmatprep.mubr.bf16.mxu0 %v4113
  %4871 = vmatmul.mubr.bf16.gmra.mrb[0].mxu0 %v4112
  %v4872 = vpop.f32.mrb[0].mxu0
  %v4873 = vadd.f32 %v4609, %v4872
  %v4874 = vpop.f32.mrb[0].mxu0
  %v4875 = vpop.f32.mrb[0].mxu0
  %v4876 = vadd.f32 %v4612, %v4875
  %v4877 = vpop.f32.mrb[0].mxu0
  %4878 = vmatprep.mubr.bf16.mxu0 %v4121
  %4879 = vmatmul.mubr.bf16.gmra.mrb[0].mxu0 %v4120
  %v4880 = vpop.f32.mrb[0].mxu0
  %v4881 = vadd.f32 %v4617, %v4880
  %v4882 = vpop.f32.mrb[0].mxu0
  %v4883 = vpop.f32.mrb[0].mxu0
  %v4884 = vadd.f32 %v4620, %v4883
  %v4885 = vpop.f32.mrb[0].mxu0
  %4886 = vmatprep.mubr.bf16.mxu0 %v4129
  %4887 = vmatmul.mubr.bf16.gmra.mrb[0].mxu0 %v4128
  %v4888 = vpop.f32.mrb[0].mxu0
  %v4889 = vadd.f32 %v4625, %v4888
  %v4890 = vpop.f32.mrb[0].mxu0
  %v4891 = vpop.f32.mrb[0].mxu0
  %v4892 = vadd.f32 %v4628, %v4891
  %v4893 = vpop.f32.mrb[0].mxu0
  %4894 = vmatprep.mubr.bf16.mxu0 %v4137
  %4895 = vmatmul.mubr.bf16.gmra.mrb[0].mxu0 %v4136
  %v4896 = vpop.f32.mrb[0].mxu0
  %v4897 = vadd.f32 %v4633, %v4896
  %v4898 = vpop.f32.mrb[0].mxu0
  %v4899 = vpop.f32.mrb[0].mxu0
  %v4900 = vadd.f32 %v4636, %v4899
  %v4901 = vpop.f32.mrb[0].mxu0
  %4902 = vmatprep.mubr.bf16.mxu0 %v4145
  %4903 = vmatmul.mubr.bf16.gmra.mrb[0].mxu0 %v4144
  %v4904 = vpop.f32.mrb[0].mxu0
  %v4905 = vadd.f32 %v4641, %v4904
  %v4906 = vpop.f32.mrb[0].mxu0
  %v4907 = vpop.f32.mrb[0].mxu0
  %v4908 = vadd.f32 %v4644, %v4907
  %v4909 = vpop.f32.mrb[0].mxu0
  %4910 = vmatprep.mubr.bf16.mxu0 %v4153
  %4911 = vmatmul.mubr.bf16.gmra.mrb[0].mxu0 %v4152
  %v4912 = vpop.f32.mrb[0].mxu0
  %v4913 = vadd.f32 %v4649, %v4912
  %v4914 = vpop.f32.mrb[0].mxu0
  %v4915 = vpop.f32.mrb[0].mxu0
  %v4916 = vadd.f32 %v4652, %v4915
  %v4917 = vpop.f32.mrb[0].mxu0
  %4918 = vmatprep.mubr.bf16.mxu0 %v4161
  %4919 = vmatmul.mubr.bf16.gmra.mrb[0].mxu0 %v4160
  %v4920 = vpop.f32.mrb[0].mxu0
  %v4921 = vadd.f32 %v4657, %v4920
  %v4922 = vpop.f32.mrb[0].mxu0
  %v4923 = vpop.f32.mrb[0].mxu0
  %v4924 = vadd.f32 %v4660, %v4923
  %v4925 = vpop.f32.mrb[0].mxu0
  %4926 = vmatprep.mubr.bf16.mxu0 %v4169
  %4927 = vmatmul.mubr.bf16.gmra.mrb[0].mxu0 %v4168
  %v4928 = vpop.f32.mrb[0].mxu0
  %v4929 = vadd.f32 %v4665, %v4928
  %v4930 = vpop.f32.mrb[0].mxu0
  %v4931 = vpop.f32.mrb[0].mxu0
  %v4932 = vpop.f32.mrb[0].mxu0
  %4933 = vdwg.mxu0
  %4934 = vmatprep.subr.bf16.mxu0 0
  %4935 = vmatpush1.bf16.msra.mxu0 %v3226
  %4936 = vmatprep.subr.bf16.mxu0 0
  %4937 = vmatpush1.bf16.msra.mxu0 %v3227
  %4938 = vmatprep.subr.bf16.mxu0 0
  %4939 = vmatpush1.bf16.msra.mxu0 %v3228
  %4940 = vmatprep.subr.bf16.mxu0 0
  %4941 = vmatpush1.bf16.msra.mxu0 %v3229
  %4942 = vmatprep.subr.bf16.mxu0 0
  %4943 = vmatpush1.bf16.msra.mxu0 %v3230
  %4944 = vmatprep.subr.bf16.mxu0 0
  %4945 = vmatpush1.bf16.msra.mxu0 %v3231
  %4946 = vmatprep.subr.bf16.mxu0 0
  %4947 = vmatpush1.bf16.msra.mxu0 %v3232
  %4948 = vmatprep.subr.bf16.mxu0 0
  %4949 = vmatpush1.bf16.msra.mxu0 %v3233
  %4950 = vmatprep.subr.bf16.mxu0 0
  %4951 = vmatpush1.bf16.msra.mxu0 %v3234
  %4952 = vmatprep.subr.bf16.mxu0 0
  %4953 = vmatpush1.bf16.msra.mxu0 %v3235
  %4954 = vmatprep.subr.bf16.mxu0 0
  %4955 = vmatpush1.bf16.msra.mxu0 %v3236
  %4956 = vmatprep.subr.bf16.mxu0 0
  %4957 = vmatpush1.bf16.msra.mxu0 %v3237
  %4958 = vmatprep.subr.bf16.mxu0 0
  %4959 = vmatpush1.bf16.msra.mxu0 %v3238
  %4960 = vmatprep.subr.bf16.mxu0 0
  %4961 = vmatpush1.bf16.msra.mxu0 %v3239
  %4962 = vmatprep.subr.bf16.mxu0 0
  %4963 = vmatpush1.bf16.msra.mxu0 %v3240
  %4964 = vmatprep.subr.bf16.mxu0 0
  %4965 = vmatpush1.bf16.msra.mxu0 %v3241
  %4966 = vmatprep.mubr.bf16.mxu0 %v3947
  %4967 = vmatmul.mubr.bf16.gmra.mrb[0].mxu0 %v3946
  %v4968 = vpop.f32.mrb[0].mxu0
  %v4969 = vadd.f32 %v4705, %v4968
  %v4970 = vpop.f32.mrb[0].mxu0
  %v4971 = vpop.f32.mrb[0].mxu0
  %v4972 = vadd.f32 %v4708, %v4971
  %v4973 = vpop.f32.mrb[0].mxu0
  %4974 = vmatprep.mubr.bf16.mxu0 %v3955
  %4975 = vmatmul.mubr.bf16.gmra.mrb[0].mxu0 %v3954
  %v4976 = vpop.f32.mrb[0].mxu0
  %v4977 = vadd.f32 %v4713, %v4976
  %v4978 = vpop.f32.mrb[0].mxu0
  %v4979 = vpop.f32.mrb[0].mxu0
  %v4980 = vadd.f32 %v4716, %v4979
  %v4981 = vpop.f32.mrb[0].mxu0
  %4982 = vmatprep.mubr.bf16.mxu0 %v3963
  %4983 = vmatmul.mubr.bf16.gmra.mrb[0].mxu0 %v3962
  %v4984 = vpop.f32.mrb[0].mxu0
  %v4985 = vadd.f32 %v4721, %v4984
  %v4986 = vpop.f32.mrb[0].mxu0
  %v4987 = vpop.f32.mrb[0].mxu0
  %v4988 = vadd.f32 %v4724, %v4987
  %v4989 = vpop.f32.mrb[0].mxu0
  %4990 = vmatprep.mubr.bf16.mxu0 %v3971
  %4991 = vmatmul.mubr.bf16.gmra.mrb[0].mxu0 %v3970
  %v4992 = vpop.f32.mrb[0].mxu0
  %v4993 = vadd.f32 %v4729, %v4992
  %v4994 = vpop.f32.mrb[0].mxu0
  %v4995 = vpop.f32.mrb[0].mxu0
  %v4996 = vadd.f32 %v4732, %v4995
  %v4997 = vpop.f32.mrb[0].mxu0
  %4998 = vmatprep.mubr.bf16.mxu0 %v3979
  %4999 = vmatmul.mubr.bf16.gmra.mrb[0].mxu0 %v3978
  %v5000 = vpop.f32.mrb[0].mxu0
  %v5001 = vadd.f32 %v4737, %v5000
  %v5002 = vpop.f32.mrb[0].mxu0
  %v5003 = vpop.f32.mrb[0].mxu0
  %v5004 = vadd.f32 %v4740, %v5003
  %v5005 = vpop.f32.mrb[0].mxu0
  %5006 = vmatprep.mubr.bf16.mxu0 %v3987
  %5007 = vmatmul.mubr.bf16.gmra.mrb[0].mxu0 %v3986
  %v5008 = vpop.f32.mrb[0].mxu0
  %v5009 = vadd.f32 %v4745, %v5008
  %v5010 = vpop.f32.mrb[0].mxu0
  %v5011 = vpop.f32.mrb[0].mxu0
  %v5012 = vadd.f32 %v4748, %v5011
  %v5013 = vpop.f32.mrb[0].mxu0
  %5014 = vmatprep.mubr.bf16.mxu0 %v3995
  %5015 = vmatmul.mubr.bf16.gmra.mrb[0].mxu0 %v3994
  %v5016 = vpop.f32.mrb[0].mxu0
  %v5017 = vadd.f32 %v4753, %v5016
  %v5018 = vpop.f32.mrb[0].mxu0
  %v5019 = vpop.f32.mrb[0].mxu0
  %v5020 = vadd.f32 %v4756, %v5019
  %v5021 = vpop.f32.mrb[0].mxu0
  %5022 = vmatprep.mubr.bf16.mxu0 %v4003
  %5023 = vmatmul.mubr.bf16.gmra.mrb[0].mxu0 %v4002
  %v5024 = vpop.f32.mrb[0].mxu0
  %v5025 = vadd.f32 %v4761, %v5024
  %v5026 = vpop.f32.mrb[0].mxu0
  %v5027 = vpop.f32.mrb[0].mxu0
  %v5028 = vadd.f32 %v4764, %v5027
  %v5029 = vpop.f32.mrb[0].mxu0
  %5030 = vmatprep.mubr.bf16.mxu0 %v4011
  %5031 = vmatmul.mubr.bf16.gmra.mrb[0].mxu0 %v4010
  %v5032 = vpop.f32.mrb[0].mxu0
  %v5033 = vadd.f32 %v4769, %v5032
  %v5034 = vpop.f32.mrb[0].mxu0
  %v5035 = vpop.f32.mrb[0].mxu0
  %v5036 = vadd.f32 %v4772, %v5035
  %v5037 = vpop.f32.mrb[0].mxu0
  %5038 = vmatprep.mubr.bf16.mxu0 %v4019
  %5039 = vmatmul.mubr.bf16.gmra.mrb[0].mxu0 %v4018
  %v5040 = vpop.f32.mrb[0].mxu0
  %v5041 = vadd.f32 %v4777, %v5040
  %v5042 = vpop.f32.mrb[0].mxu0
  %v5043 = vpop.f32.mrb[0].mxu0
  %v5044 = vadd.f32 %v4780, %v5043
  %v5045 = vpop.f32.mrb[0].mxu0
  %5046 = vmatprep.mubr.bf16.mxu0 %v4027
  %5047 = vmatmul.mubr.bf16.gmra.mrb[0].mxu0 %v4026
  %v5048 = vpop.f32.mrb[0].mxu0
  %v5049 = vadd.f32 %v4785, %v5048
  %v5050 = vpop.f32.mrb[0].mxu0
  %v5051 = vpop.f32.mrb[0].mxu0
  %v5052 = vadd.f32 %v4788, %v5051
  %v5053 = vpop.f32.mrb[0].mxu0
  %5054 = vmatprep.mubr.bf16.mxu0 %v4035
  %5055 = vmatmul.mubr.bf16.gmra.mrb[0].mxu0 %v4034
  %v5056 = vpop.f32.mrb[0].mxu0
  %v5057 = vadd.f32 %v4793, %v5056
  %v5058 = vpop.f32.mrb[0].mxu0
  %v5059 = vpop.f32.mrb[0].mxu0
  %v5060 = vadd.f32 %v4796, %v5059
  %v5061 = vpop.f32.mrb[0].mxu0
  %5062 = vmatprep.mubr.bf16.mxu0 %v4043
  %5063 = vmatmul.mubr.bf16.gmra.mrb[0].mxu0 %v4042
  %v5064 = vpop.f32.mrb[0].mxu0
  %v5065 = vadd.f32 %v4801, %v5064
  %v5066 = vpop.f32.mrb[0].mxu0
  %v5067 = vpop.f32.mrb[0].mxu0
  %v5068 = vadd.f32 %v4804, %v5067
  %v5069 = vpop.f32.mrb[0].mxu0
  %5070 = vmatprep.mubr.bf16.mxu0 %v4051
  %5071 = vmatmul.mubr.bf16.gmra.mrb[0].mxu0 %v4050
  %v5072 = vpop.f32.mrb[0].mxu0
  %v5073 = vadd.f32 %v4809, %v5072
  %v5074 = vpop.f32.mrb[0].mxu0
  %v5075 = vpop.f32.mrb[0].mxu0
  %v5076 = vadd.f32 %v4812, %v5075
  %v5077 = vpop.f32.mrb[0].mxu0
  %5078 = vmatprep.mubr.bf16.mxu0 %v4059
  %5079 = vmatmul.mubr.bf16.gmra.mrb[0].mxu0 %v4058
  %v5080 = vpop.f32.mrb[0].mxu0
  %v5081 = vadd.f32 %v4817, %v5080
  %v5082 = vpop.f32.mrb[0].mxu0
  %v5083 = vpop.f32.mrb[0].mxu0
  %v5084 = vadd.f32 %v4820, %v5083
  %v5085 = vpop.f32.mrb[0].mxu0
  %5086 = vmatprep.mubr.bf16.mxu0 %v4067
  %5087 = vmatmul.mubr.bf16.gmra.mrb[0].mxu0 %v4066
  %v5088 = vpop.f32.mrb[0].mxu0
  %v5089 = vadd.f32 %v4825, %v5088
  %v5090 = vpop.f32.mrb[0].mxu0
  %v5091 = vpop.f32.mrb[0].mxu0
  %v5092 = vadd.f32 %v4828, %v5091
  %v5093 = vpop.f32.mrb[0].mxu0
  %5094 = vmatprep.mubr.bf16.mxu0 %v4075
  %5095 = vmatmul.mubr.bf16.gmra.mrb[0].mxu0 %v4074
  %v5096 = vpop.f32.mrb[0].mxu0
  %v5097 = vadd.f32 %v4833, %v5096
  %v5098 = vpop.f32.mrb[0].mxu0
  %v5099 = vpop.f32.mrb[0].mxu0
  %v5100 = vadd.f32 %v4836, %v5099
  %v5101 = vpop.f32.mrb[0].mxu0
  %5102 = vmatprep.mubr.bf16.mxu0 %v4083
  %5103 = vmatmul.mubr.bf16.gmra.mrb[0].mxu0 %v4082
  %v5104 = vpop.f32.mrb[0].mxu0
  %v5105 = vadd.f32 %v4841, %v5104
  %v5106 = vpop.f32.mrb[0].mxu0
  %v5107 = vpop.f32.mrb[0].mxu0
  %v5108 = vadd.f32 %v4844, %v5107
  %v5109 = vpop.f32.mrb[0].mxu0
  %5110 = vmatprep.mubr.bf16.mxu0 %v4091
  %5111 = vmatmul.mubr.bf16.gmra.mrb[0].mxu0 %v4090
  %v5112 = vpop.f32.mrb[0].mxu0
  %v5113 = vadd.f32 %v4849, %v5112
  %v5114 = vpop.f32.mrb[0].mxu0
  %v5115 = vpop.f32.mrb[0].mxu0
  %v5116 = vadd.f32 %v4852, %v5115
  %v5117 = vpop.f32.mrb[0].mxu0
  %5118 = vmatprep.mubr.bf16.mxu0 %v4099
  %5119 = vmatmul.mubr.bf16.gmra.mrb[0].mxu0 %v4098
  %v5120 = vpop.f32.mrb[0].mxu0
  %v5121 = vadd.f32 %v4857, %v5120
  %v5122 = vpop.f32.mrb[0].mxu0
  %v5123 = vpop.f32.mrb[0].mxu0
  %v5124 = vadd.f32 %v4860, %v5123
  %v5125 = vpop.f32.mrb[0].mxu0
  %5126 = vmatprep.mubr.bf16.mxu0 %v4107
  %5127 = vmatmul.mubr.bf16.gmra.mrb[0].mxu0 %v4106
  %v5128 = vpop.f32.mrb[0].mxu0
  %v5129 = vadd.f32 %v4865, %v5128
  %v5130 = vpop.f32.mrb[0].mxu0
  %v5131 = vpop.f32.mrb[0].mxu0
  %v5132 = vadd.f32 %v4868, %v5131
  %v5133 = vpop.f32.mrb[0].mxu0
  %5134 = vmatprep.mubr.bf16.mxu0 %v4115
  %5135 = vmatmul.mubr.bf16.gmra.mrb[0].mxu0 %v4114
  %v5136 = vpop.f32.mrb[0].mxu0
  %v5137 = vadd.f32 %v4873, %v5136
  %v5138 = vpop.f32.mrb[0].mxu0
  %v5139 = vpop.f32.mrb[0].mxu0
  %v5140 = vadd.f32 %v4876, %v5139
  %v5141 = vpop.f32.mrb[0].mxu0
  %5142 = vmatprep.mubr.bf16.mxu0 %v4123
  %5143 = vmatmul.mubr.bf16.gmra.mrb[0].mxu0 %v4122
  %v5144 = vpop.f32.mrb[0].mxu0
  %v5145 = vadd.f32 %v4881, %v5144
  %v5146 = vpop.f32.mrb[0].mxu0
  %v5147 = vpop.f32.mrb[0].mxu0
  %v5148 = vadd.f32 %v4884, %v5147
  %v5149 = vpop.f32.mrb[0].mxu0
  %5150 = vmatprep.mubr.bf16.mxu0 %v4131
  %5151 = vmatmul.mubr.bf16.gmra.mrb[0].mxu0 %v4130
  %v5152 = vpop.f32.mrb[0].mxu0
  %v5153 = vadd.f32 %v4889, %v5152
  %v5154 = vpop.f32.mrb[0].mxu0
  %v5155 = vpop.f32.mrb[0].mxu0
  %v5156 = vadd.f32 %v4892, %v5155
  %v5157 = vpop.f32.mrb[0].mxu0
  %5158 = vmatprep.mubr.bf16.mxu0 %v4139
  %5159 = vmatmul.mubr.bf16.gmra.mrb[0].mxu0 %v4138
  %v5160 = vpop.f32.mrb[0].mxu0
  %v5161 = vadd.f32 %v4897, %v5160
  %v5162 = vpop.f32.mrb[0].mxu0
  %v5163 = vpop.f32.mrb[0].mxu0
  %v5164 = vadd.f32 %v4900, %v5163
  %v5165 = vpop.f32.mrb[0].mxu0
  %5166 = vmatprep.mubr.bf16.mxu0 %v4147
  %5167 = vmatmul.mubr.bf16.gmra.mrb[0].mxu0 %v4146
  %v5168 = vpop.f32.mrb[0].mxu0
  %v5169 = vadd.f32 %v4905, %v5168
  %v5170 = vpop.f32.mrb[0].mxu0
  %v5171 = vpop.f32.mrb[0].mxu0
  %v5172 = vadd.f32 %v4908, %v5171
  %v5173 = vpop.f32.mrb[0].mxu0
  %5174 = vmatprep.mubr.bf16.mxu0 %v4155
  %5175 = vmatmul.mubr.bf16.gmra.mrb[0].mxu0 %v4154
  %v5176 = vpop.f32.mrb[0].mxu0
  %v5177 = vadd.f32 %v4913, %v5176
  %v5178 = vpop.f32.mrb[0].mxu0
  %v5179 = vpop.f32.mrb[0].mxu0
  %v5180 = vadd.f32 %v4916, %v5179
  %v5181 = vpop.f32.mrb[0].mxu0
  %5182 = vmatprep.mubr.bf16.mxu0 %v4163
  %5183 = vmatmul.mubr.bf16.gmra.mrb[0].mxu0 %v4162
  %v5184 = vpop.f32.mrb[0].mxu0
  %v5185 = vadd.f32 %v4921, %v5184
  %v5186 = vpop.f32.mrb[0].mxu0
  %v5187 = vpop.f32.mrb[0].mxu0
  %v5188 = vadd.f32 %v4924, %v5187
  %v5189 = vpop.f32.mrb[0].mxu0
  %5190 = vmatprep.mubr.bf16.mxu0 %v4171
  %5191 = vmatmul.mubr.bf16.gmra.mrb[0].mxu0 %v4170
  %v5192 = vpop.f32.mrb[0].mxu0
  %v5193 = vadd.f32 %v4929, %v5192
  %v5194 = vpop.f32.mrb[0].mxu0
  %v5195 = vpop.f32.mrb[0].mxu0
  %v5196 = vpop.f32.mrb[0].mxu0
  %5197 = vdwg.mxu0
  %5198 = vmatprep.subr.bf16.mxu0 0
  %5199 = vmatpush1.bf16.msra.mxu0 %v3242
  %5200 = vmatprep.subr.bf16.mxu0 0
  %5201 = vmatpush1.bf16.msra.mxu0 %v3243
  %5202 = vmatprep.subr.bf16.mxu0 0
  %5203 = vmatpush1.bf16.msra.mxu0 %v3244
  %5204 = vmatprep.subr.bf16.mxu0 0
  %5205 = vmatpush1.bf16.msra.mxu0 %v3245
  %5206 = vmatprep.subr.bf16.mxu0 0
  %5207 = vmatpush1.bf16.msra.mxu0 %v3246
  %5208 = vmatprep.subr.bf16.mxu0 0
  %5209 = vmatpush1.bf16.msra.mxu0 %v3247
  %5210 = vmatprep.subr.bf16.mxu0 0
  %5211 = vmatpush1.bf16.msra.mxu0 %v3248
  %5212 = vmatprep.subr.bf16.mxu0 0
  %5213 = vmatpush1.bf16.msra.mxu0 %v3249
  %5214 = vmatprep.subr.bf16.mxu0 0
  %5215 = vmatpush1.bf16.msra.mxu0 %v3250
  %5216 = vmatprep.subr.bf16.mxu0 0
  %5217 = vmatpush1.bf16.msra.mxu0 %v3251
  %5218 = vmatprep.subr.bf16.mxu0 0
  %5219 = vmatpush1.bf16.msra.mxu0 %v3252
  %5220 = vmatprep.subr.bf16.mxu0 0
  %5221 = vmatpush1.bf16.msra.mxu0 %v3253
  %5222 = vmatprep.subr.bf16.mxu0 0
  %5223 = vmatpush1.bf16.msra.mxu0 %v3254
  %5224 = vmatprep.subr.bf16.mxu0 0
  %5225 = vmatpush1.bf16.msra.mxu0 %v3255
  %5226 = vmatprep.subr.bf16.mxu0 0
  %5227 = vmatpush1.bf16.msra.mxu0 %v3256
  %5228 = vmatprep.subr.bf16.mxu0 0
  %5229 = vmatpush1.bf16.msra.mxu0 %v3257
  %5230 = vmatprep.mubr.bf16.mxu0 %v3949
  %5231 = vmatmul.mubr.bf16.gmra.mrb[0].mxu0 %v3948
  %v5232 = vpop.f32.mrb[0].mxu0
  %v5233 = vadd.f32 %v4969, %v5232
  %v5234 = vpop.f32.mrb[0].mxu0
  %v5235 = vpop.f32.mrb[0].mxu0
  %v5236 = vadd.f32 %v4972, %v5235
  %v5237 = vpop.f32.mrb[0].mxu0
  %5238 = vmatprep.mubr.bf16.mxu0 %v3957
  %5239 = vmatmul.mubr.bf16.gmra.mrb[0].mxu0 %v3956
  %v5240 = vpop.f32.mrb[0].mxu0
  %v5241 = vadd.f32 %v4977, %v5240
  %v5242 = vpop.f32.mrb[0].mxu0
  %v5243 = vpop.f32.mrb[0].mxu0
  %v5244 = vadd.f32 %v4980, %v5243
  %v5245 = vpop.f32.mrb[0].mxu0
  %5246 = vmatprep.mubr.bf16.mxu0 %v3965
  %5247 = vmatmul.mubr.bf16.gmra.mrb[0].mxu0 %v3964
  %v5248 = vpop.f32.mrb[0].mxu0
  %v5249 = vadd.f32 %v4985, %v5248
  %v5250 = vpop.f32.mrb[0].mxu0
  %v5251 = vpop.f32.mrb[0].mxu0
  %v5252 = vadd.f32 %v4988, %v5251
  %v5253 = vpop.f32.mrb[0].mxu0
  %5254 = vmatprep.mubr.bf16.mxu0 %v3973
  %5255 = vmatmul.mubr.bf16.gmra.mrb[0].mxu0 %v3972
  %v5256 = vpop.f32.mrb[0].mxu0
  %v5257 = vadd.f32 %v4993, %v5256
  %v5258 = vpop.f32.mrb[0].mxu0
  %v5259 = vpop.f32.mrb[0].mxu0
  %v5260 = vadd.f32 %v4996, %v5259
  %v5261 = vpop.f32.mrb[0].mxu0
  %5262 = vmatprep.mubr.bf16.mxu0 %v3981
  %5263 = vmatmul.mubr.bf16.gmra.mrb[0].mxu0 %v3980
  %v5264 = vpop.f32.mrb[0].mxu0
  %v5265 = vadd.f32 %v5001, %v5264
  %v5266 = vpop.f32.mrb[0].mxu0
  %v5267 = vpop.f32.mrb[0].mxu0
  %v5268 = vadd.f32 %v5004, %v5267
  %v5269 = vpop.f32.mrb[0].mxu0
  %5270 = vmatprep.mubr.bf16.mxu0 %v3989
  %5271 = vmatmul.mubr.bf16.gmra.mrb[0].mxu0 %v3988
  %v5272 = vpop.f32.mrb[0].mxu0
  %v5273 = vadd.f32 %v5009, %v5272
  %v5274 = vpop.f32.mrb[0].mxu0
  %v5275 = vpop.f32.mrb[0].mxu0
  %v5276 = vadd.f32 %v5012, %v5275
  %v5277 = vpop.f32.mrb[0].mxu0
  %5278 = vmatprep.mubr.bf16.mxu0 %v3997
  %5279 = vmatmul.mubr.bf16.gmra.mrb[0].mxu0 %v3996
  %v5280 = vpop.f32.mrb[0].mxu0
  %v5281 = vadd.f32 %v5017, %v5280
  %v5282 = vpop.f32.mrb[0].mxu0
  %v5283 = vpop.f32.mrb[0].mxu0
  %v5284 = vadd.f32 %v5020, %v5283
  %v5285 = vpop.f32.mrb[0].mxu0
  %5286 = vmatprep.mubr.bf16.mxu0 %v4005
  %5287 = vmatmul.mubr.bf16.gmra.mrb[0].mxu0 %v4004
  %v5288 = vpop.f32.mrb[0].mxu0
  %v5289 = vadd.f32 %v5025, %v5288
  %v5290 = vpop.f32.mrb[0].mxu0
  %v5291 = vpop.f32.mrb[0].mxu0
  %v5292 = vadd.f32 %v5028, %v5291
  %v5293 = vpop.f32.mrb[0].mxu0
  %5294 = vmatprep.mubr.bf16.mxu0 %v4013
  %5295 = vmatmul.mubr.bf16.gmra.mrb[0].mxu0 %v4012
  %v5296 = vpop.f32.mrb[0].mxu0
  %v5297 = vadd.f32 %v5033, %v5296
  %v5298 = vpop.f32.mrb[0].mxu0
  %v5299 = vpop.f32.mrb[0].mxu0
  %v5300 = vadd.f32 %v5036, %v5299
  %v5301 = vpop.f32.mrb[0].mxu0
  %5302 = vmatprep.mubr.bf16.mxu0 %v4021
  %5303 = vmatmul.mubr.bf16.gmra.mrb[0].mxu0 %v4020
  %v5304 = vpop.f32.mrb[0].mxu0
  %v5305 = vadd.f32 %v5041, %v5304
  %v5306 = vpop.f32.mrb[0].mxu0
  %v5307 = vpop.f32.mrb[0].mxu0
  %v5308 = vadd.f32 %v5044, %v5307
  %v5309 = vpop.f32.mrb[0].mxu0
  %5310 = vmatprep.mubr.bf16.mxu0 %v4029
  %5311 = vmatmul.mubr.bf16.gmra.mrb[0].mxu0 %v4028
  %v5312 = vpop.f32.mrb[0].mxu0
  %v5313 = vadd.f32 %v5049, %v5312
  %v5314 = vpop.f32.mrb[0].mxu0
  %v5315 = vpop.f32.mrb[0].mxu0
  %v5316 = vadd.f32 %v5052, %v5315
  %v5317 = vpop.f32.mrb[0].mxu0
  %5318 = vmatprep.mubr.bf16.mxu0 %v4037
  %5319 = vmatmul.mubr.bf16.gmra.mrb[0].mxu0 %v4036
  %v5320 = vpop.f32.mrb[0].mxu0
  %v5321 = vadd.f32 %v5057, %v5320
  %v5322 = vpop.f32.mrb[0].mxu0
  %v5323 = vpop.f32.mrb[0].mxu0
  %v5324 = vadd.f32 %v5060, %v5323
  %v5325 = vpop.f32.mrb[0].mxu0
  %5326 = vmatprep.mubr.bf16.mxu0 %v4045
  %5327 = vmatmul.mubr.bf16.gmra.mrb[0].mxu0 %v4044
  %v5328 = vpop.f32.mrb[0].mxu0
  %v5329 = vadd.f32 %v5065, %v5328
  %v5330 = vpop.f32.mrb[0].mxu0
  %v5331 = vpop.f32.mrb[0].mxu0
  %v5332 = vadd.f32 %v5068, %v5331
  %v5333 = vpop.f32.mrb[0].mxu0
  %5334 = vmatprep.mubr.bf16.mxu0 %v4053
  %5335 = vmatmul.mubr.bf16.gmra.mrb[0].mxu0 %v4052
  %v5336 = vpop.f32.mrb[0].mxu0
  %v5337 = vadd.f32 %v5073, %v5336
  %v5338 = vpop.f32.mrb[0].mxu0
  %v5339 = vpop.f32.mrb[0].mxu0
  %v5340 = vadd.f32 %v5076, %v5339
  %v5341 = vpop.f32.mrb[0].mxu0
  %5342 = vmatprep.mubr.bf16.mxu0 %v4061
  %5343 = vmatmul.mubr.bf16.gmra.mrb[0].mxu0 %v4060
  %v5344 = vpop.f32.mrb[0].mxu0
  %v5345 = vadd.f32 %v5081, %v5344
  %v5346 = vpop.f32.mrb[0].mxu0
  %v5347 = vpop.f32.mrb[0].mxu0
  %v5348 = vadd.f32 %v5084, %v5347
  %v5349 = vpop.f32.mrb[0].mxu0
  %5350 = vmatprep.mubr.bf16.mxu0 %v4069
  %5351 = vmatmul.mubr.bf16.gmra.mrb[0].mxu0 %v4068
  %v5352 = vpop.f32.mrb[0].mxu0
  %v5353 = vadd.f32 %v5089, %v5352
  %v5354 = vpop.f32.mrb[0].mxu0
  %v5355 = vpop.f32.mrb[0].mxu0
  %v5356 = vadd.f32 %v5092, %v5355
  %v5357 = vpop.f32.mrb[0].mxu0
  %5358 = vmatprep.mubr.bf16.mxu0 %v4077
  %5359 = vmatmul.mubr.bf16.gmra.mrb[0].mxu0 %v4076
  %v5360 = vpop.f32.mrb[0].mxu0
  %v5361 = vadd.f32 %v5097, %v5360
  %v5362 = vpop.f32.mrb[0].mxu0
  %v5363 = vpop.f32.mrb[0].mxu0
  %v5364 = vadd.f32 %v5100, %v5363
  %v5365 = vpop.f32.mrb[0].mxu0
  %5366 = vmatprep.mubr.bf16.mxu0 %v4085
  %5367 = vmatmul.mubr.bf16.gmra.mrb[0].mxu0 %v4084
  %v5368 = vpop.f32.mrb[0].mxu0
  %v5369 = vadd.f32 %v5105, %v5368
  %v5370 = vpop.f32.mrb[0].mxu0
  %v5371 = vpop.f32.mrb[0].mxu0
  %v5372 = vadd.f32 %v5108, %v5371
  %v5373 = vpop.f32.mrb[0].mxu0
  %5374 = vmatprep.mubr.bf16.mxu0 %v4093
  %5375 = vmatmul.mubr.bf16.gmra.mrb[0].mxu0 %v4092
  %v5376 = vpop.f32.mrb[0].mxu0
  %v5377 = vadd.f32 %v5113, %v5376
  %v5378 = vpop.f32.mrb[0].mxu0
  %v5379 = vpop.f32.mrb[0].mxu0
  %v5380 = vadd.f32 %v5116, %v5379
  %v5381 = vpop.f32.mrb[0].mxu0
  %5382 = vmatprep.mubr.bf16.mxu0 %v4101
  %5383 = vmatmul.mubr.bf16.gmra.mrb[0].mxu0 %v4100
  %v5384 = vpop.f32.mrb[0].mxu0
  %v5385 = vadd.f32 %v5121, %v5384
  %v5386 = vpop.f32.mrb[0].mxu0
  %v5387 = vpop.f32.mrb[0].mxu0
  %v5388 = vadd.f32 %v5124, %v5387
  %v5389 = vpop.f32.mrb[0].mxu0
  %5390 = vmatprep.mubr.bf16.mxu0 %v4109
  %5391 = vmatmul.mubr.bf16.gmra.mrb[0].mxu0 %v4108
  %v5392 = vpop.f32.mrb[0].mxu0
  %v5393 = vadd.f32 %v5129, %v5392
  %v5394 = vpop.f32.mrb[0].mxu0
  %v5395 = vpop.f32.mrb[0].mxu0
  %v5396 = vadd.f32 %v5132, %v5395
  %v5397 = vpop.f32.mrb[0].mxu0
  %5398 = vmatprep.mubr.bf16.mxu0 %v4117
  %5399 = vmatmul.mubr.bf16.gmra.mrb[0].mxu0 %v4116
  %v5400 = vpop.f32.mrb[0].mxu0
  %v5401 = vadd.f32 %v5137, %v5400
  %v5402 = vpop.f32.mrb[0].mxu0
  %v5403 = vpop.f32.mrb[0].mxu0
  %v5404 = vadd.f32 %v5140, %v5403
  %v5405 = vpop.f32.mrb[0].mxu0
  %5406 = vmatprep.mubr.bf16.mxu0 %v4125
  %5407 = vmatmul.mubr.bf16.gmra.mrb[0].mxu0 %v4124
  %v5408 = vpop.f32.mrb[0].mxu0
  %v5409 = vadd.f32 %v5145, %v5408
  %v5410 = vpop.f32.mrb[0].mxu0
  %v5411 = vpop.f32.mrb[0].mxu0
  %v5412 = vadd.f32 %v5148, %v5411
  %v5413 = vpop.f32.mrb[0].mxu0
  %5414 = vmatprep.mubr.bf16.mxu0 %v4133
  %5415 = vmatmul.mubr.bf16.gmra.mrb[0].mxu0 %v4132
  %v5416 = vpop.f32.mrb[0].mxu0
  %v5417 = vadd.f32 %v5153, %v5416
  %v5418 = vpop.f32.mrb[0].mxu0
  %v5419 = vpop.f32.mrb[0].mxu0
  %v5420 = vadd.f32 %v5156, %v5419
  %v5421 = vpop.f32.mrb[0].mxu0
  %5422 = vmatprep.mubr.bf16.mxu0 %v4141
  %5423 = vmatmul.mubr.bf16.gmra.mrb[0].mxu0 %v4140
  %v5424 = vpop.f32.mrb[0].mxu0
  %v5425 = vadd.f32 %v5161, %v5424
  %v5426 = vpop.f32.mrb[0].mxu0
  %v5427 = vpop.f32.mrb[0].mxu0
  %v5428 = vadd.f32 %v5164, %v5427
  %v5429 = vpop.f32.mrb[0].mxu0
  %5430 = vmatprep.mubr.bf16.mxu0 %v4149
  %5431 = vmatmul.mubr.bf16.gmra.mrb[0].mxu0 %v4148
  %v5432 = vpop.f32.mrb[0].mxu0
  %v5433 = vadd.f32 %v5169, %v5432
  %v5434 = vpop.f32.mrb[0].mxu0
  %v5435 = vpop.f32.mrb[0].mxu0
  %v5436 = vadd.f32 %v5172, %v5435
  %v5437 = vpop.f32.mrb[0].mxu0
  %5438 = vmatprep.mubr.bf16.mxu0 %v4157
  %5439 = vmatmul.mubr.bf16.gmra.mrb[0].mxu0 %v4156
  %v5440 = vpop.f32.mrb[0].mxu0
  %v5441 = vadd.f32 %v5177, %v5440
  %v5442 = vpop.f32.mrb[0].mxu0
  %v5443 = vpop.f32.mrb[0].mxu0
  %v5444 = vadd.f32 %v5180, %v5443
  %v5445 = vpop.f32.mrb[0].mxu0
  %5446 = vmatprep.mubr.bf16.mxu0 %v4165
  %5447 = vmatmul.mubr.bf16.gmra.mrb[0].mxu0 %v4164
  %v5448 = vpop.f32.mrb[0].mxu0
  %v5449 = vadd.f32 %v5185, %v5448
  %v5450 = vpop.f32.mrb[0].mxu0
  %v5451 = vpop.f32.mrb[0].mxu0
  %v5452 = vadd.f32 %v5188, %v5451
  %v5453 = vpop.f32.mrb[0].mxu0
  %5454 = vmatprep.mubr.bf16.mxu0 %v4173
  %5455 = vmatmul.mubr.bf16.gmra.mrb[0].mxu0 %v4172
  %v5456 = vpop.f32.mrb[0].mxu0
  %v5457 = vadd.f32 %v5193, %v5456
  %v5458 = vpop.f32.mrb[0].mxu0
  %v5459 = vpop.f32.mrb[0].mxu0
  %v5460 = vpop.f32.mrb[0].mxu0
  %5461 = vdwg.mxu0
  %vm5462 = vcmask 687104
  %5463 = vst.msk [vmem:[#allocation2] sm:$0xff] %vm5462, %v5233
  %5464 = vst.msk [vmem:[#allocation2 + $0x8] sm:$0xff] %vm5462, %v5236
  %5465 = vst.msk [vmem:[#allocation2 + $0x10] sm:$0xff] %vm5462, %v5241
  %5466 = vst.msk [vmem:[#allocation2 + $0x18] sm:$0xff] %vm5462, %v5244
  %5467 = vst.msk [vmem:[#allocation2 + $0x20] sm:$0xff] %vm5462, %v5249
  %5468 = vst.msk [vmem:[#allocation2 + $0x28] sm:$0xff] %vm5462, %v5252
  %5469 = vst.msk [vmem:[#allocation2 + $0x30] sm:$0xff] %vm5462, %v5257
  %5470 = vst.msk [vmem:[#allocation2 + $0x38] sm:$0xff] %vm5462, %v5260
  %5471 = vst.msk [vmem:[#allocation2 + $0x40] sm:$0xff] %vm5462, %v5265
  %5472 = vst.msk [vmem:[#allocation2 + $0x48] sm:$0xff] %vm5462, %v5268
  %5473 = vst.msk [vmem:[#allocation2 + $0x50] sm:$0xff] %vm5462, %v5273
  %5474 = vst.msk [vmem:[#allocation2 + $0x58] sm:$0xff] %vm5462, %v5276
  %5475 = vst.msk [vmem:[#allocation2 + $0x60] sm:$0xff] %vm5462, %v5281
  %5476 = vst.msk [vmem:[#allocation2 + $0x68] sm:$0xff] %vm5462, %v5284
  %5477 = vst.msk [vmem:[#allocation2 + $0x70] sm:$0xff] %vm5462, %v5289
  %5478 = vst.msk [vmem:[#allocation2 + $0x78] sm:$0xff] %vm5462, %v5292
  %5479 = vst.msk [vmem:[#allocation2 + $0x80] sm:$0xff] %vm5462, %v5297
  %5480 = vst.msk [vmem:[#allocation2 + $0x88] sm:$0xff] %vm5462, %v5300
  %5481 = vst.msk [vmem:[#allocation2 + $0x90] sm:$0xff] %vm5462, %v5305
  %5482 = vst.msk [vmem:[#allocation2 + $0x98] sm:$0xff] %vm5462, %v5308
  %5483 = vst.msk [vmem:[#allocation2 + $0xa0] sm:$0xff] %vm5462, %v5313
  %5484 = vst.msk [vmem:[#allocation2 + $0xa8] sm:$0xff] %vm5462, %v5316
  %5485 = vst.msk [vmem:[#allocation2 + $0xb0] sm:$0xff] %vm5462, %v5321
  %5486 = vst.msk [vmem:[#allocation2 + $0xb8] sm:$0xff] %vm5462, %v5324
  %5487 = vst.msk [vmem:[#allocation2 + $0xc0] sm:$0xff] %vm5462, %v5329
  %5488 = vst.msk [vmem:[#allocation2 + $0xc8] sm:$0xff] %vm5462, %v5332
  %5489 = vst.msk [vmem:[#allocation2 + $0xd0] sm:$0xff] %vm5462, %v5337
  %5490 = vst.msk [vmem:[#allocation2 + $0xd8] sm:$0xff] %vm5462, %v5340
  %5491 = vst.msk [vmem:[#allocation2 + $0xe0] sm:$0xff] %vm5462, %v5345
  %5492 = vst.msk [vmem:[#allocation2 + $0xe8] sm:$0xff] %vm5462, %v5348
  %5493 = vst.msk [vmem:[#allocation2 + $0xf0] sm:$0xff] %vm5462, %v5353
  %5494 = vst.msk [vmem:[#allocation2 + $0xf8] sm:$0xff] %vm5462, %v5356
  %5495 = vst.msk [vmem:[#allocation2 + $0x100] sm:$0xff] %vm5462, %v5361
  %5496 = vst.msk [vmem:[#allocation2 + $0x108] sm:$0xff] %vm5462, %v5364
  %5497 = vst.msk [vmem:[#allocation2 + $0x110] sm:$0xff] %vm5462, %v5369
  %5498 = vst.msk [vmem:[#allocation2 + $0x118] sm:$0xff] %vm5462, %v5372
  %5499 = vst.msk [vmem:[#allocation2 + $0x120] sm:$0xff] %vm5462, %v5377
  %5500 = vst.msk [vmem:[#allocation2 + $0x128] sm:$0xff] %vm5462, %v5380
  %5501 = vst.msk [vmem:[#allocation2 + $0x130] sm:$0xff] %vm5462, %v5385
  %5502 = vst.msk [vmem:[#allocation2 + $0x138] sm:$0xff] %vm5462, %v5388
  %5503 = vst.msk [vmem:[#allocation2 + $0x140] sm:$0xff] %vm5462, %v5393
  %5504 = vst.msk [vmem:[#allocation2 + $0x148] sm:$0xff] %vm5462, %v5396
  %5505 = vst.msk [vmem:[#allocation2 + $0x150] sm:$0xff] %vm5462, %v5401
  %5506 = vst.msk [vmem:[#allocation2 + $0x158] sm:$0xff] %vm5462, %v5404
  %5507 = vst.msk [vmem:[#allocation2 + $0x160] sm:$0xff] %vm5462, %v5409
  %5508 = vst.msk [vmem:[#allocation2 + $0x168] sm:$0xff] %vm5462, %v5412
  %5509 = vst.msk [vmem:[#allocation2 + $0x170] sm:$0xff] %vm5462, %v5417
  %5510 = vst.msk [vmem:[#allocation2 + $0x178] sm:$0xff] %vm5462, %v5420
  %5511 = vst.msk [vmem:[#allocation2 + $0x180] sm:$0xff] %vm5462, %v5425
  %5512 = vst.msk [vmem:[#allocation2 + $0x188] sm:$0xff] %vm5462, %v5428
  %5513 = vst.msk [vmem:[#allocation2 + $0x190] sm:$0xff] %vm5462, %v5433
  %5514 = vst.msk [vmem:[#allocation2 + $0x198] sm:$0xff] %vm5462, %v5436
  %5515 = vst.msk [vmem:[#allocation2 + $0x1a0] sm:$0xff] %vm5462, %v5441
  %5516 = vst.msk [vmem:[#allocation2 + $0x1a8] sm:$0xff] %vm5462, %v5444
  %5517 = vst.msk [vmem:[#allocation2 + $0x1b0] sm:$0xff] %vm5462, %v5449
  %5518 = vst.msk [vmem:[#allocation2 + $0x1b8] sm:$0xff] %vm5462, %v5452
  %5519 = vst.msk [vmem:[#allocation2 + $0x1c0] sm:$0xff] %vm5462, %v5457
  %v5520 = vld [vmem:[%s6] sm:$0x3]
  %v5521 = vld [vmem:[#allocation2] sm:$0xff]
  %v5522 = vld [vmem:[#allocation2 + $0x8] sm:$0xff]
  %v5523 = vld [vmem:[#allocation2 + $0x10] sm:$0xff]
  %v5524 = vld [vmem:[#allocation2 + $0x18] sm:$0xff]
  %v5525 = vld [vmem:[#allocation2 + $0x20] sm:$0xff]
  %v5526 = vld [vmem:[#allocation2 + $0x28] sm:$0xff]
  %v5527 = vld [vmem:[#allocation2 + $0x30] sm:$0xff]
  %v5528 = vld [vmem:[#allocation2 + $0x38] sm:$0xff]
  %v5529 = vld [vmem:[#allocation2 + $0x40] sm:$0xff]
  %v5530 = vld [vmem:[#allocation2 + $0x48] sm:$0xff]
  %v5531 = vld [vmem:[#allocation2 + $0x50] sm:$0xff]
  %v5532 = vld [vmem:[#allocation2 + $0x58] sm:$0xff]
  %v5533 = vld [vmem:[#allocation2 + $0x60] sm:$0xff]
  %v5534 = vld [vmem:[#allocation2 + $0x68] sm:$0xff]
  %v5535 = vld [vmem:[#allocation2 + $0x70] sm:$0xff]
  %v5536 = vld [vmem:[#allocation2 + $0x78] sm:$0xff]
  %v5537 = vld [vmem:[#allocation2 + $0x80] sm:$0xff]
  %v5538 = vld [vmem:[#allocation2 + $0x88] sm:$0xff]
  %v5539 = vld [vmem:[#allocation2 + $0x90] sm:$0xff]
  %v5540 = vld [vmem:[#allocation2 + $0x98] sm:$0xff]
  %v5541 = vld [vmem:[#allocation2 + $0xa0] sm:$0xff]
  %v5542 = vld [vmem:[#allocation2 + $0xa8] sm:$0xff]
  %v5543 = vld [vmem:[#allocation2 + $0xb0] sm:$0xff]
  %v5544 = vld [vmem:[#allocation2 + $0xb8] sm:$0xff]
  %v5545 = vld [vmem:[#allocation2 + $0xc0] sm:$0xff]
  %v5546 = vld [vmem:[#allocation2 + $0xc8] sm:$0xff]
  %v5547 = vld [vmem:[#allocation2 + $0xd0] sm:$0xff]
  %v5548 = vld [vmem:[#allocation2 + $0xd8] sm:$0xff]
  %v5549 = vld [vmem:[#allocation2 + $0xe0] sm:$0xff]
  %v5550 = vld [vmem:[#allocation2 + $0xe8] sm:$0xff]
  %v5551 = vld [vmem:[#allocation2 + $0xf0] sm:$0xff]
  %v5552 = vld [vmem:[#allocation2 + $0xf8] sm:$0xff]
  %v5553 = vld [vmem:[#allocation2 + $0x100] sm:$0xff]
  %v5554 = vld [vmem:[#allocation2 + $0x108] sm:$0xff]
  %v5555 = vld [vmem:[#allocation2 + $0x110] sm:$0xff]
  %v5556 = vld [vmem:[#allocation2 + $0x118] sm:$0xff]
  %v5557 = vld [vmem:[#allocation2 + $0x120] sm:$0xff]
  %v5558 = vld [vmem:[#allocation2 + $0x128] sm:$0xff]
  %v5559 = vld [vmem:[#allocation2 + $0x130] sm:$0xff]
  %v5560 = vld [vmem:[#allocation2 + $0x138] sm:$0xff]
  %v5561 = vld [vmem:[#allocation2 + $0x140] sm:$0xff]
  %v5562 = vld [vmem:[#allocation2 + $0x148] sm:$0xff]
  %v5563 = vld [vmem:[#allocation2 + $0x150] sm:$0xff]
  %v5564 = vld [vmem:[#allocation2 + $0x158] sm:$0xff]
  %v5565 = vld [vmem:[#allocation2 + $0x160] sm:$0xff]
  %v5566 = vld [vmem:[#allocation2 + $0x168] sm:$0xff]
  %v5567 = vld [vmem:[#allocation2 + $0x170] sm:$0xff]
  %v5568 = vld [vmem:[#allocation2 + $0x178] sm:$0xff]
  %v5569 = vld [vmem:[#allocation2 + $0x180] sm:$0xff]
  %v5570 = vld [vmem:[#allocation2 + $0x188] sm:$0xff]
  %v5571 = vld [vmem:[#allocation2 + $0x190] sm:$0xff]
  %v5572 = vld [vmem:[#allocation2 + $0x198] sm:$0xff]
  %v5573 = vld [vmem:[#allocation2 + $0x1a0] sm:$0xff]
  %v5574 = vld [vmem:[#allocation2 + $0x1a8] sm:$0xff]
  %v5575 = vld [vmem:[#allocation2 + $0x1b0] sm:$0xff]
  %v5576 = vld [vmem:[#allocation2 + $0x1b8] sm:$0xff]
  %v5577 = vld [vmem:[%s5] sm:$0xff]
  %v5578 = vld [vmem:[%s5 + $0x8] sm:$0xff]
  %v5579 = vld [vmem:[%s5 + $0x10] sm:$0xff]
  %v5580 = vld [vmem:[%s5 + $0x18] sm:$0xff]
  %v5581 = vld [vmem:[%s5 + $0x20] sm:$0xff]
  %v5582 = vld [vmem:[%s5 + $0x28] sm:$0xff]
  %v5583 = vld [vmem:[%s5 + $0x30] sm:$0xff]
  %v5584 = vld [vmem:[%s5 + $0x38] sm:$0xff]
  %v5585 = vld [vmem:[%s5 + $0x40] sm:$0xff]
  %v5586 = vld [vmem:[%s5 + $0x48] sm:$0xff]
  %v5587 = vld [vmem:[%s5 + $0x50] sm:$0x33]
  %v5588 = vpack.c.bf16 %v5522, %v5521
  %v5589 = vpack.c.bf16 %v5524, %v5523
  %v5590 = vpack.c.bf16 %v5526, %v5525
  %v5591 = vpack.c.bf16 %v5528, %v5527
  %v5592 = vpack.c.bf16 %v5530, %v5529
  %v5593 = vpack.c.bf16 %v5532, %v5531
  %v5594 = vpack.c.bf16 %v5534, %v5533
  %v5595 = vpack.c.bf16 %v5536, %v5535
  %v5596 = vpack.c.bf16 %v5538, %v5537
  %v5597 = vpack.c.bf16 %v5540, %v5539
  %v5598 = vpack.c.bf16 %v5542, %v5541
  %v5599 = vpack.c.bf16 %v5544, %v5543
  %v5600 = vpack.c.bf16 %v5546, %v5545
  %v5601 = vpack.c.bf16 %v5548, %v5547
  %v5602 = vpack.c.bf16 %v5550, %v5549
  %v5603 = vpack.c.bf16 %v5552, %v5551
  %v5604 = vpack.c.bf16 %v5554, %v5553
  %v5605 = vpack.c.bf16 %v5556, %v5555
  %v5606 = vpack.c.bf16 %v5558, %v5557
  %v5607 = vpack.c.bf16 %v5560, %v5559
  %v5608 = vpack.c.bf16 %v5562, %v5561
  %v5609 = vpack.c.bf16 %v5564, %v5563
  %v5610 = vpack.c.bf16 %v5566, %v5565
  %v5611 = vpack.c.bf16 %v5568, %v5567
  %v5612 = vpack.c.bf16 %v5570, %v5569
  %v5613 = vpack.c.bf16 %v5572, %v5571
  %v5614 = vpack.c.bf16 %v5574, %v5573
  %v5615 = vpack.c.bf16 %v5576, %v5575
  %v5627 = vunpack.c.l.b16 %v5577
  %v5628 = vunpack.c.h.b16 %v5577
  %v5629 = vunpack.c.l.b16 %v5578
  %v5630 = vunpack.c.h.b16 %v5578
  %v5631 = vunpack.c.l.b16 %v5579
  %v5632 = vunpack.c.h.b16 %v5579
  %v5633 = vunpack.c.l.b16 %v5580
  %v5634 = vunpack.c.h.b16 %v5580
  %v5635 = vunpack.c.l.b16 %v5581
  %v5636 = vunpack.c.h.b16 %v5581
  %v5637 = vunpack.c.l.b16 %v5582
  %v5638 = vunpack.c.h.b16 %v5582
  %v5639 = vunpack.c.l.b16 %v5583
  %v5640 = vunpack.c.h.b16 %v5583
  %v5641 = vunpack.c.l.b16 %v5584
  %v5642 = vunpack.c.h.b16 %v5584
  %v5643 = vunpack.c.l.b16 %v5585
  %v5644 = vunpack.c.h.b16 %v5585
  %v5645 = vunpack.c.l.b16 %v5586
  %v5646 = vunpack.c.h.b16 %v5586
  %v5647 = vunpack.c.l.b16 %v5587
  %v5648 = vunpack.c.h.b16 %v5587
  %v5649 = vpack.c.b16 %v5629, %v5627
  %v5650 = vpack.c.b16 %v5630, %v5628
  %v5651 = vpack.c.b16 %v5633, %v5631
  %v5652 = vpack.c.b16 %v5634, %v5632
  %v5653 = vpack.c.b16 %v5637, %v5635
  %v5654 = vpack.c.b16 %v5638, %v5636
  %v5655 = vpack.c.b16 %v5641, %v5639
  %v5656 = vpack.c.b16 %v5642, %v5640
  %v5657 = vpack.c.b16 %v5645, %v5643
  %v5658 = vpack.c.b16 %v5646, %v5644
  %v5659 = vpack.c.b16 %v5647, %v5647
  %v5660 = vpack.c.b16 %v5648, %v5648
  %v5672 = vsel %vm5462, %v5588, 0
  %v5675 = vsel %vm5462, %v5589, 0
  %v5678 = vsel %vm5462, %v5590, 0
  %v5681 = vsel %vm5462, %v5591, 0
  %v5684 = vsel %vm5462, %v5592, 0
  %v5687 = vsel %vm5462, %v5593, 0
  %v5690 = vsel %vm5462, %v5594, 0
  %v5693 = vsel %vm5462, %v5595, 0
  %v5696 = vsel %vm5462, %v5596, 0
  %v5699 = vsel %vm5462, %v5597, 0
  %v5702 = vsel %vm5462, %v5598, 0
  %v5705 = vsel %vm5462, %v5599, 0
  %v5708 = vsel %vm5462, %v5600, 0
  %v5711 = vsel %vm5462, %v5601, 0
  %v5714 = vsel %vm5462, %v5602, 0
  %v5717 = vsel %vm5462, %v5603, 0
  %v5720 = vsel %vm5462, %v5604, 0
  %v5723 = vsel %vm5462, %v5605, 0
  %v5726 = vsel %vm5462, %v5606, 0
  %v5729 = vsel %vm5462, %v5607, 0
  %v5732 = vsel %vm5462, %v5608, 0
  %v5735 = vsel %vm5462, %v5609, 0
  %v5738 = vsel %vm5462, %v5610, 0
  %v5741 = vsel %vm5462, %v5611, 0
  %v5744 = vsel %vm5462, %v5612, 0
  %v5747 = vsel %vm5462, %v5613, 0
  %v5750 = vsel %vm5462, %v5614, 0
  %v5753 = vsel %vm5462, %v5615, 0
  %vm5755 = vcmask 1041408
  %v5757 = vsel %vm5755, %v5659, 0
  %v5760 = vsel %vm5755, %v5660, 0
  %5762 = vmatprep.subr.bf16.mxu0 %v5650
  %5763 = vmatpush1.bf16.msra.mxu0 %v5649
  %5764 = vmatprep.subr.bf16.mxu0 %v5652
  %5765 = vmatpush1.bf16.msra.mxu0 %v5651
  %5766 = vmatprep.subr.bf16.mxu0 %v5654
  %5767 = vmatpush1.bf16.msra.mxu0 %v5653
  %5768 = vmatprep.subr.bf16.mxu0 %v5656
  %5769 = vmatpush1.bf16.msra.mxu0 %v5655
  %5770 = vmatprep.subr.bf16.mxu0 %v5658
  %5771 = vmatpush1.bf16.msra.mxu0 %v5657
  %5772 = vmatprep.subr.bf16.mxu0 %v5760
  %5773 = vmatpush1.bf16.msra.mxu0 %v5757
  %5774 = vmatprep.subr.bf16.mxu0 0
  %5775 = vmatpush1.bf16.msra.mxu0 0
  %5776 = vmatprep.subr.bf16.mxu0 0
  %5777 = vmatpush1.bf16.msra.mxu0 0
  %5778 = vmatprep.subr.bf16.mxu0 0
  %5779 = vmatpush1.bf16.msra.mxu0 0
  %5780 = vmatprep.subr.bf16.mxu0 0
  %5781 = vmatpush1.bf16.msra.mxu0 0
  %5782 = vmatprep.subr.bf16.mxu0 0
  %5783 = vmatpush1.bf16.msra.mxu0 0
  %5784 = vmatprep.subr.bf16.mxu0 0
  %5785 = vmatpush1.bf16.msra.mxu0 0
  %5786 = vmatprep.subr.bf16.mxu0 0
  %5787 = vmatpush1.bf16.msra.mxu0 0
  %5788 = vmatprep.subr.bf16.mxu0 0
  %5789 = vmatpush1.bf16.msra.mxu0 0
  %5790 = vmatprep.subr.bf16.mxu0 0
  %5791 = vmatpush1.bf16.msra.mxu0 0
  %5792 = vmatprep.subr.bf16.mxu0 0
  %5793 = vmatpush1.bf16.msra.mxu0 0
  %5794 = vmatprep.mubr.bf16.mxu0 0
  %5795 = vmatmul.mubr.bf16.gmra.mrb[0].mxu0 %v5672
  %v5796 = vpop.f32.mrb[0].mxu0
  %v5797 = vadd.f32 0.0, %v5796
  %v5798 = vpop.f32.mrb[0].mxu0
  %v5799 = vadd.f32 0.0, %v5798
  %v5800 = vpop.f32.mrb[0].mxu0
  %v5801 = vadd.f32 0.0, %v5800
  %v5802 = vpop.f32.mrb[0].mxu0
  %v5803 = vadd.f32 0.0, %v5802
  %5804 = vmatprep.mubr.bf16.mxu0 0
  %5805 = vmatmul.mubr.bf16.gmra.mrb[0].mxu0 %v5675
  %v5806 = vpop.f32.mrb[0].mxu0
  %v5807 = vadd.f32 0.0, %v5806
  %v5808 = vpop.f32.mrb[0].mxu0
  %v5809 = vadd.f32 0.0, %v5808
  %v5810 = vpop.f32.mrb[0].mxu0
  %v5811 = vadd.f32 0.0, %v5810
  %v5812 = vpop.f32.mrb[0].mxu0
  %v5813 = vadd.f32 0.0, %v5812
  %5814 = vmatprep.mubr.bf16.mxu0 0
  %5815 = vmatmul.mubr.bf16.gmra.mrb[0].mxu0 %v5678
  %v5816 = vpop.f32.mrb[0].mxu0
  %v5817 = vadd.f32 0.0, %v5816
  %v5818 = vpop.f32.mrb[0].mxu0
  %v5819 = vadd.f32 0.0, %v5818
  %v5820 = vpop.f32.mrb[0].mxu0
  %v5821 = vadd.f32 0.0, %v5820
  %v5822 = vpop.f32.mrb[0].mxu0
  %v5823 = vadd.f32 0.0, %v5822
  %5824 = vmatprep.mubr.bf16.mxu0 0
  %5825 = vmatmul.mubr.bf16.gmra.mrb[0].mxu0 %v5681
  %v5826 = vpop.f32.mrb[0].mxu0
  %v5827 = vadd.f32 0.0, %v5826
  %v5828 = vpop.f32.mrb[0].mxu0
  %v5829 = vadd.f32 0.0, %v5828
  %v5830 = vpop.f32.mrb[0].mxu0
  %v5831 = vadd.f32 0.0, %v5830
  %v5832 = vpop.f32.mrb[0].mxu0
  %v5833 = vadd.f32 0.0, %v5832
  %5834 = vmatprep.mubr.bf16.mxu0 0
  %5835 = vmatmul.mubr.bf16.gmra.mrb[0].mxu0 %v5684
  %v5836 = vpop.f32.mrb[0].mxu0
  %v5837 = vadd.f32 0.0, %v5836
  %v5838 = vpop.f32.mrb[0].mxu0
  %v5839 = vadd.f32 0.0, %v5838
  %v5840 = vpop.f32.mrb[0].mxu0
  %v5841 = vadd.f32 0.0, %v5840
  %v5842 = vpop.f32.mrb[0].mxu0
  %v5843 = vadd.f32 0.0, %v5842
  %5844 = vmatprep.mubr.bf16.mxu0 0
  %5845 = vmatmul.mubr.bf16.gmra.mrb[0].mxu0 %v5687
  %v5846 = vpop.f32.mrb[0].mxu0
  %v5847 = vadd.f32 0.0, %v5846
  %v5848 = vpop.f32.mrb[0].mxu0
  %v5849 = vadd.f32 0.0, %v5848
  %v5850 = vpop.f32.mrb[0].mxu0
  %v5851 = vadd.f32 0.0, %v5850
  %v5852 = vpop.f32.mrb[0].mxu0
  %v5853 = vadd.f32 0.0, %v5852
  %5854 = vmatprep.mubr.bf16.mxu0 0
  %5855 = vmatmul.mubr.bf16.gmra.mrb[0].mxu0 %v5690
  %v5856 = vpop.f32.mrb[0].mxu0
  %v5857 = vadd.f32 0.0, %v5856
  %v5858 = vpop.f32.mrb[0].mxu0
  %v5859 = vadd.f32 0.0, %v5858
  %v5860 = vpop.f32.mrb[0].mxu0
  %v5861 = vadd.f32 0.0, %v5860
  %v5862 = vpop.f32.mrb[0].mxu0
  %v5863 = vadd.f32 0.0, %v5862
  %5864 = vmatprep.mubr.bf16.mxu0 0
  %5865 = vmatmul.mubr.bf16.gmra.mrb[0].mxu0 %v5693
  %v5866 = vpop.f32.mrb[0].mxu0
  %v5867 = vadd.f32 0.0, %v5866
  %v5868 = vpop.f32.mrb[0].mxu0
  %v5869 = vadd.f32 0.0, %v5868
  %v5870 = vpop.f32.mrb[0].mxu0
  %v5871 = vadd.f32 0.0, %v5870
  %v5872 = vpop.f32.mrb[0].mxu0
  %v5873 = vadd.f32 0.0, %v5872
  %5874 = vmatprep.mubr.bf16.mxu0 0
  %5875 = vmatmul.mubr.bf16.gmra.mrb[0].mxu0 %v5696
  %v5876 = vpop.f32.mrb[0].mxu0
  %v5877 = vadd.f32 0.0, %v5876
  %v5878 = vpop.f32.mrb[0].mxu0
  %v5879 = vadd.f32 0.0, %v5878
  %v5880 = vpop.f32.mrb[0].mxu0
  %v5881 = vadd.f32 0.0, %v5880
  %v5882 = vpop.f32.mrb[0].mxu0
  %v5883 = vadd.f32 0.0, %v5882
  %5884 = vmatprep.mubr.bf16.mxu0 0
  %5885 = vmatmul.mubr.bf16.gmra.mrb[0].mxu0 %v5699
  %v5886 = vpop.f32.mrb[0].mxu0
  %v5887 = vadd.f32 0.0, %v5886
  %v5888 = vpop.f32.mrb[0].mxu0
  %v5889 = vadd.f32 0.0, %v5888
  %v5890 = vpop.f32.mrb[0].mxu0
  %v5891 = vadd.f32 0.0, %v5890
  %v5892 = vpop.f32.mrb[0].mxu0
  %v5893 = vadd.f32 0.0, %v5892
  %5894 = vmatprep.mubr.bf16.mxu0 0
  %5895 = vmatmul.mubr.bf16.gmra.mrb[0].mxu0 %v5702
  %v5896 = vpop.f32.mrb[0].mxu0
  %v5897 = vadd.f32 0.0, %v5896
  %v5898 = vpop.f32.mrb[0].mxu0
  %v5899 = vadd.f32 0.0, %v5898
  %v5900 = vpop.f32.mrb[0].mxu0
  %v5901 = vadd.f32 0.0, %v5900
  %v5902 = vpop.f32.mrb[0].mxu0
  %v5903 = vadd.f32 0.0, %v5902
  %5904 = vmatprep.mubr.bf16.mxu0 0
  %5905 = vmatmul.mubr.bf16.gmra.mrb[0].mxu0 %v5705
  %v5906 = vpop.f32.mrb[0].mxu0
  %v5907 = vadd.f32 0.0, %v5906
  %v5908 = vpop.f32.mrb[0].mxu0
  %v5909 = vadd.f32 0.0, %v5908
  %v5910 = vpop.f32.mrb[0].mxu0
  %v5911 = vadd.f32 0.0, %v5910
  %v5912 = vpop.f32.mrb[0].mxu0
  %v5913 = vadd.f32 0.0, %v5912
  %5914 = vmatprep.mubr.bf16.mxu0 0
  %5915 = vmatmul.mubr.bf16.gmra.mrb[0].mxu0 %v5708
  %v5916 = vpop.f32.mrb[0].mxu0
  %v5917 = vadd.f32 0.0, %v5916
  %v5918 = vpop.f32.mrb[0].mxu0
  %v5919 = vadd.f32 0.0, %v5918
  %v5920 = vpop.f32.mrb[0].mxu0
  %v5921 = vadd.f32 0.0, %v5920
  %v5922 = vpop.f32.mrb[0].mxu0
  %v5923 = vadd.f32 0.0, %v5922
  %5924 = vmatprep.mubr.bf16.mxu0 0
  %5925 = vmatmul.mubr.bf16.gmra.mrb[0].mxu0 %v5711
  %v5926 = vpop.f32.mrb[0].mxu0
  %v5927 = vadd.f32 0.0, %v5926
  %v5928 = vpop.f32.mrb[0].mxu0
  %v5929 = vadd.f32 0.0, %v5928
  %v5930 = vpop.f32.mrb[0].mxu0
  %v5931 = vadd.f32 0.0, %v5930
  %v5932 = vpop.f32.mrb[0].mxu0
  %v5933 = vadd.f32 0.0, %v5932
  %5934 = vmatprep.mubr.bf16.mxu0 0
  %5935 = vmatmul.mubr.bf16.gmra.mrb[0].mxu0 %v5714
  %v5936 = vpop.f32.mrb[0].mxu0
  %v5937 = vadd.f32 0.0, %v5936
  %v5938 = vpop.f32.mrb[0].mxu0
  %v5939 = vadd.f32 0.0, %v5938
  %v5940 = vpop.f32.mrb[0].mxu0
  %v5941 = vadd.f32 0.0, %v5940
  %v5942 = vpop.f32.mrb[0].mxu0
  %v5943 = vadd.f32 0.0, %v5942
  %5944 = vmatprep.mubr.bf16.mxu0 0
  %5945 = vmatmul.mubr.bf16.gmra.mrb[0].mxu0 %v5717
  %v5946 = vpop.f32.mrb[0].mxu0
  %v5947 = vadd.f32 0.0, %v5946
  %v5948 = vpop.f32.mrb[0].mxu0
  %v5949 = vadd.f32 0.0, %v5948
  %v5950 = vpop.f32.mrb[0].mxu0
  %v5951 = vadd.f32 0.0, %v5950
  %v5952 = vpop.f32.mrb[0].mxu0
  %v5953 = vadd.f32 0.0, %v5952
  %5954 = vmatprep.mubr.bf16.mxu0 0
  %5955 = vmatmul.mubr.bf16.gmra.mrb[0].mxu0 %v5720
  %v5956 = vpop.f32.mrb[0].mxu0
  %v5957 = vadd.f32 0.0, %v5956
  %v5958 = vpop.f32.mrb[0].mxu0
  %v5959 = vadd.f32 0.0, %v5958
  %v5960 = vpop.f32.mrb[0].mxu0
  %v5961 = vadd.f32 0.0, %v5960
  %v5962 = vpop.f32.mrb[0].mxu0
  %v5963 = vadd.f32 0.0, %v5962
  %5964 = vmatprep.mubr.bf16.mxu0 0
  %5965 = vmatmul.mubr.bf16.gmra.mrb[0].mxu0 %v5723
  %v5966 = vpop.f32.mrb[0].mxu0
  %v5967 = vadd.f32 0.0, %v5966
  %v5968 = vpop.f32.mrb[0].mxu0
  %v5969 = vadd.f32 0.0, %v5968
  %v5970 = vpop.f32.mrb[0].mxu0
  %v5971 = vadd.f32 0.0, %v5970
  %v5972 = vpop.f32.mrb[0].mxu0
  %v5973 = vadd.f32 0.0, %v5972
  %5974 = vmatprep.mubr.bf16.mxu0 0
  %5975 = vmatmul.mubr.bf16.gmra.mrb[0].mxu0 %v5726
  %v5976 = vpop.f32.mrb[0].mxu0
  %v5977 = vadd.f32 0.0, %v5976
  %v5978 = vpop.f32.mrb[0].mxu0
  %v5979 = vadd.f32 0.0, %v5978
  %v5980 = vpop.f32.mrb[0].mxu0
  %v5981 = vadd.f32 0.0, %v5980
  %v5982 = vpop.f32.mrb[0].mxu0
  %v5983 = vadd.f32 0.0, %v5982
  %5984 = vmatprep.mubr.bf16.mxu0 0
  %5985 = vmatmul.mubr.bf16.gmra.mrb[0].mxu0 %v5729
  %v5986 = vpop.f32.mrb[0].mxu0
  %v5987 = vadd.f32 0.0, %v5986
  %v5988 = vpop.f32.mrb[0].mxu0
  %v5989 = vadd.f32 0.0, %v5988
  %v5990 = vpop.f32.mrb[0].mxu0
  %v5991 = vadd.f32 0.0, %v5990
  %v5992 = vpop.f32.mrb[0].mxu0
  %v5993 = vadd.f32 0.0, %v5992
  %5994 = vmatprep.mubr.bf16.mxu0 0
  %5995 = vmatmul.mubr.bf16.gmra.mrb[0].mxu0 %v5732
  %v5996 = vpop.f32.mrb[0].mxu0
  %v5997 = vadd.f32 0.0, %v5996
  %v5998 = vpop.f32.mrb[0].mxu0
  %v5999 = vadd.f32 0.0, %v5998
  %v6000 = vpop.f32.mrb[0].mxu0
  %v6001 = vadd.f32 0.0, %v6000
  %v6002 = vpop.f32.mrb[0].mxu0
  %v6003 = vadd.f32 0.0, %v6002
  %6004 = vmatprep.mubr.bf16.mxu0 0
  %6005 = vmatmul.mubr.bf16.gmra.mrb[0].mxu0 %v5735
  %v6006 = vpop.f32.mrb[0].mxu0
  %v6007 = vadd.f32 0.0, %v6006
  %v6008 = vpop.f32.mrb[0].mxu0
  %v6009 = vadd.f32 0.0, %v6008
  %v6010 = vpop.f32.mrb[0].mxu0
  %v6011 = vadd.f32 0.0, %v6010
  %v6012 = vpop.f32.mrb[0].mxu0
  %v6013 = vadd.f32 0.0, %v6012
  %6014 = vmatprep.mubr.bf16.mxu0 0
  %6015 = vmatmul.mubr.bf16.gmra.mrb[0].mxu0 %v5738
  %v6016 = vpop.f32.mrb[0].mxu0
  %v6017 = vadd.f32 0.0, %v6016
  %v6018 = vpop.f32.mrb[0].mxu0
  %v6019 = vadd.f32 0.0, %v6018
  %v6020 = vpop.f32.mrb[0].mxu0
  %v6021 = vadd.f32 0.0, %v6020
  %v6022 = vpop.f32.mrb[0].mxu0
  %v6023 = vadd.f32 0.0, %v6022
  %6024 = vmatprep.mubr.bf16.mxu0 0
  %6025 = vmatmul.mubr.bf16.gmra.mrb[0].mxu0 %v5741
  %v6026 = vpop.f32.mrb[0].mxu0
  %v6027 = vadd.f32 0.0, %v6026
  %v6028 = vpop.f32.mrb[0].mxu0
  %v6029 = vadd.f32 0.0, %v6028
  %v6030 = vpop.f32.mrb[0].mxu0
  %v6031 = vadd.f32 0.0, %v6030
  %v6032 = vpop.f32.mrb[0].mxu0
  %v6033 = vadd.f32 0.0, %v6032
  %6034 = vmatprep.mubr.bf16.mxu0 0
  %6035 = vmatmul.mubr.bf16.gmra.mrb[0].mxu0 %v5744
  %v6036 = vpop.f32.mrb[0].mxu0
  %v6037 = vadd.f32 0.0, %v6036
  %v6038 = vpop.f32.mrb[0].mxu0
  %v6039 = vadd.f32 0.0, %v6038
  %v6040 = vpop.f32.mrb[0].mxu0
  %v6041 = vadd.f32 0.0, %v6040
  %v6042 = vpop.f32.mrb[0].mxu0
  %v6043 = vadd.f32 0.0, %v6042
  %6044 = vmatprep.mubr.bf16.mxu0 0
  %6045 = vmatmul.mubr.bf16.gmra.mrb[0].mxu0 %v5747
  %v6046 = vpop.f32.mrb[0].mxu0
  %v6047 = vadd.f32 0.0, %v6046
  %v6048 = vpop.f32.mrb[0].mxu0
  %v6049 = vadd.f32 0.0, %v6048
  %v6050 = vpop.f32.mrb[0].mxu0
  %v6051 = vadd.f32 0.0, %v6050
  %v6052 = vpop.f32.mrb[0].mxu0
  %v6053 = vadd.f32 0.0, %v6052
  %6054 = vmatprep.mubr.bf16.mxu0 0
  %6055 = vmatmul.mubr.bf16.gmra.mrb[0].mxu0 %v5750
  %v6056 = vpop.f32.mrb[0].mxu0
  %v6057 = vadd.f32 0.0, %v6056
  %v6058 = vpop.f32.mrb[0].mxu0
  %v6059 = vadd.f32 0.0, %v6058
  %v6060 = vpop.f32.mrb[0].mxu0
  %v6061 = vadd.f32 0.0, %v6060
  %v6062 = vpop.f32.mrb[0].mxu0
  %v6063 = vadd.f32 0.0, %v6062
  %6064 = vmatprep.mubr.bf16.mxu0 0
  %6065 = vmatmul.mubr.bf16.gmra.mrb[0].mxu0 %v5753
  %v6066 = vpop.f32.mrb[0].mxu0
  %v6067 = vadd.f32 0.0, %v6066
  %v6068 = vpop.f32.mrb[0].mxu0
  %v6069 = vadd.f32 0.0, %v6068
  %v6070 = vpop.f32.mrb[0].mxu0
  %v6071 = vadd.f32 0.0, %v6070
  %v6072 = vpop.f32.mrb[0].mxu0
  %v6073 = vadd.f32 0.0, %v6072
  %6074 = vdwg.mxu0
  %v6076 = vlaneseq
  %v6077 = vshrl.u32 %v6076, 7
  %v6078 = vsub.s32 0, %v6077
  %v6079 = vrot.slane %v5520, %v6078
  %v6080 = vlaneseq
  %v6081 = vshrl.u32 %v6080, 7
  %v6082 = vsub.s32 1, %v6081
  %v6083 = vrot.slane %v5520, %v6082
  %v6086 = vadd.f32 %v6079, %v5797
  %v6087 = vadd.f32 %v6083, %v5799
  %v6088 = vadd.f32 %v6079, %v5801
  %v6089 = vadd.f32 %v6083, %v5803
  %v6090 = vadd.f32 %v6079, %v5807
  %v6091 = vadd.f32 %v6083, %v5809
  %v6092 = vadd.f32 %v6079, %v5811
  %v6093 = vadd.f32 %v6083, %v5813
  %v6094 = vadd.f32 %v6079, %v5817
  %v6095 = vadd.f32 %v6083, %v5819
  %v6096 = vadd.f32 %v6079, %v5821
  %v6097 = vadd.f32 %v6083, %v5823
  %v6098 = vadd.f32 %v6079, %v5827
  %v6099 = vadd.f32 %v6083, %v5829
  %v6100 = vadd.f32 %v6079, %v5831
  %v6101 = vadd.f32 %v6083, %v5833
  %v6102 = vadd.f32 %v6079, %v5837
  %v6103 = vadd.f32 %v6083, %v5839
  %v6104 = vadd.f32 %v6079, %v5841
  %v6105 = vadd.f32 %v6083, %v5843
  %v6106 = vadd.f32 %v6079, %v5847
  %v6107 = vadd.f32 %v6083, %v5849
  %v6108 = vadd.f32 %v6079, %v5851
  %v6109 = vadd.f32 %v6083, %v5853
  %v6110 = vadd.f32 %v6079, %v5857
  %v6111 = vadd.f32 %v6083, %v5859
  %v6112 = vadd.f32 %v6079, %v5861
  %v6113 = vadd.f32 %v6083, %v5863
  %v6114 = vadd.f32 %v6079, %v5867
  %v6115 = vadd.f32 %v6083, %v5869
  %v6116 = vadd.f32 %v6079, %v5871
  %v6117 = vadd.f32 %v6083, %v5873
  %v6118 = vadd.f32 %v6079, %v5877
  %v6119 = vadd.f32 %v6083, %v5879
  %v6120 = vadd.f32 %v6079, %v5881
  %v6121 = vadd.f32 %v6083, %v5883
  %v6122 = vadd.f32 %v6079, %v5887
  %v6123 = vadd.f32 %v6083, %v5889
  %v6124 = vadd.f32 %v6079, %v5891
  %v6125 = vadd.f32 %v6083, %v5893
  %v6126 = vadd.f32 %v6079, %v5897
  %v6127 = vadd.f32 %v6083, %v5899
  %v6128 = vadd.f32 %v6079, %v5901
  %v6129 = vadd.f32 %v6083, %v5903
  %v6130 = vadd.f32 %v6079, %v5907
  %v6131 = vadd.f32 %v6083, %v5909
  %v6132 = vadd.f32 %v6079, %v5911
  %v6133 = vadd.f32 %v6083, %v5913
  %v6134 = vadd.f32 %v6079, %v5917
  %v6135 = vadd.f32 %v6083, %v5919
  %v6136 = vadd.f32 %v6079, %v5921
  %v6137 = vadd.f32 %v6083, %v5923
  %v6138 = vadd.f32 %v6079, %v5927
  %v6139 = vadd.f32 %v6083, %v5929
  %v6140 = vadd.f32 %v6079, %v5931
  %v6141 = vadd.f32 %v6083, %v5933
  %v6142 = vadd.f32 %v6079, %v5937
  %v6143 = vadd.f32 %v6083, %v5939
  %v6144 = vadd.f32 %v6079, %v5941
  %v6145 = vadd.f32 %v6083, %v5943
  %v6146 = vadd.f32 %v6079, %v5947
  %v6147 = vadd.f32 %v6083, %v5949
  %v6148 = vadd.f32 %v6079, %v5951
  %v6149 = vadd.f32 %v6083, %v5953
  %v6150 = vadd.f32 %v6079, %v5957
  %v6151 = vadd.f32 %v6083, %v5959
  %v6152 = vadd.f32 %v6079, %v5961
  %v6153 = vadd.f32 %v6083, %v5963
  %v6154 = vadd.f32 %v6079, %v5967
  %v6155 = vadd.f32 %v6083, %v5969
  %v6156 = vadd.f32 %v6079, %v5971
  %v6157 = vadd.f32 %v6083, %v5973
  %v6158 = vadd.f32 %v6079, %v5977
  %v6159 = vadd.f32 %v6083, %v5979
  %v6160 = vadd.f32 %v6079, %v5981
  %v6161 = vadd.f32 %v6083, %v5983
  %v6162 = vadd.f32 %v6079, %v5987
  %v6163 = vadd.f32 %v6083, %v5989
  %v6164 = vadd.f32 %v6079, %v5991
  %v6165 = vadd.f32 %v6083, %v5993
  %v6166 = vadd.f32 %v6079, %v5997
  %v6167 = vadd.f32 %v6083, %v5999
  %v6168 = vadd.f32 %v6079, %v6001
  %v6169 = vadd.f32 %v6083, %v6003
  %v6170 = vadd.f32 %v6079, %v6007
  %v6171 = vadd.f32 %v6083, %v6009
  %v6172 = vadd.f32 %v6079, %v6011
  %v6173 = vadd.f32 %v6083, %v6013
  %v6174 = vadd.f32 %v6079, %v6017
  %v6175 = vadd.f32 %v6083, %v6019
  %v6176 = vadd.f32 %v6079, %v6021
  %v6177 = vadd.f32 %v6083, %v6023
  %v6178 = vadd.f32 %v6079, %v6027
  %v6179 = vadd.f32 %v6083, %v6029
  %v6180 = vadd.f32 %v6079, %v6031
  %v6181 = vadd.f32 %v6083, %v6033
  %v6182 = vadd.f32 %v6079, %v6037
  %v6183 = vadd.f32 %v6083, %v6039
  %v6184 = vadd.f32 %v6079, %v6041
  %v6185 = vadd.f32 %v6083, %v6043
  %v6186 = vadd.f32 %v6079, %v6047
  %v6187 = vadd.f32 %v6083, %v6049
  %v6188 = vadd.f32 %v6079, %v6051
  %v6189 = vadd.f32 %v6083, %v6053
  %v6190 = vadd.f32 %v6079, %v6057
  %v6191 = vadd.f32 %v6083, %v6059
  %v6192 = vadd.f32 %v6079, %v6061
  %v6193 = vadd.f32 %v6083, %v6063
  %v6194 = vadd.f32 %v6079, %v6067
  %v6195 = vadd.f32 %v6083, %v6069
  %v6196 = vadd.f32 %v6079, %v6071
  %v6197 = vadd.f32 %v6083, %v6073
  %v6198 = vld [vmem:[#allocation2 + $0x1] sm:$0xff]
  %v6199 = vld [vmem:[#allocation2 + $0x9] sm:$0xff]
  %v6200 = vld [vmem:[#allocation2 + $0x11] sm:$0xff]
  %v6201 = vld [vmem:[#allocation2 + $0x19] sm:$0xff]
  %v6202 = vld [vmem:[#allocation2 + $0x21] sm:$0xff]
  %v6203 = vld [vmem:[#allocation2 + $0x29] sm:$0xff]
  %v6204 = vld [vmem:[#allocation2 + $0x31] sm:$0xff]
  %v6205 = vld [vmem:[#allocation2 + $0x39] sm:$0xff]
  %v6206 = vld [vmem:[#allocation2 + $0x41] sm:$0xff]
  %v6207 = vld [vmem:[#allocation2 + $0x49] sm:$0xff]
  %v6208 = vld [vmem:[#allocation2 + $0x51] sm:$0xff]
  %v6209 = vld [vmem:[#allocation2 + $0x59] sm:$0xff]
  %v6210 = vld [vmem:[#allocation2 + $0x61] sm:$0xff]
  %v6211 = vld [vmem:[#allocation2 + $0x69] sm:$0xff]
  %v6212 = vld [vmem:[#allocation2 + $0x71] sm:$0xff]
  %v6213 = vld [vmem:[#allocation2 + $0x79] sm:$0xff]
  %v6214 = vld [vmem:[#allocation2 + $0x81] sm:$0xff]
  %v6215 = vld [vmem:[#allocation2 + $0x89] sm:$0xff]
  %v6216 = vld [vmem:[#allocation2 + $0x91] sm:$0xff]
  %v6217 = vld [vmem:[#allocation2 + $0x99] sm:$0xff]
  %v6218 = vld [vmem:[#allocation2 + $0xa1] sm:$0xff]
  %v6219 = vld [vmem:[#allocation2 + $0xa9] sm:$0xff]
  %v6220 = vld [vmem:[#allocation2 + $0xb1] sm:$0xff]
  %v6221 = vld [vmem:[#allocation2 + $0xb9] sm:$0xff]
  %v6222 = vld [vmem:[#allocation2 + $0xc1] sm:$0xff]
  %v6223 = vld [vmem:[#allocation2 + $0xc9] sm:$0xff]
  %v6224 = vld [vmem:[#allocation2 + $0xd1] sm:$0xff]
  %v6225 = vld [vmem:[#allocation2 + $0xd9] sm:$0xff]
  %v6226 = vld [vmem:[#allocation2 + $0xe1] sm:$0xff]
  %v6227 = vld [vmem:[#allocation2 + $0xe9] sm:$0xff]
  %v6228 = vld [vmem:[#allocation2 + $0xf1] sm:$0xff]
  %v6229 = vld [vmem:[#allocation2 + $0xf9] sm:$0xff]
  %v6230 = vld [vmem:[#allocation2 + $0x101] sm:$0xff]
  %v6231 = vld [vmem:[#allocation2 + $0x109] sm:$0xff]
  %v6232 = vld [vmem:[#allocation2 + $0x111] sm:$0xff]
  %v6233 = vld [vmem:[#allocation2 + $0x119] sm:$0xff]
  %v6234 = vld [vmem:[#allocation2 + $0x121] sm:$0xff]
  %v6235 = vld [vmem:[#allocation2 + $0x129] sm:$0xff]
  %v6236 = vld [vmem:[#allocation2 + $0x131] sm:$0xff]
  %v6237 = vld [vmem:[#allocation2 + $0x139] sm:$0xff]
  %v6238 = vld [vmem:[#allocation2 + $0x141] sm:$0xff]
  %v6239 = vld [vmem:[#allocation2 + $0x149] sm:$0xff]
  %v6240 = vld [vmem:[#allocation2 + $0x151] sm:$0xff]
  %v6241 = vld [vmem:[#allocation2 + $0x159] sm:$0xff]
  %v6242 = vld [vmem:[#allocation2 + $0x161] sm:$0xff]
  %v6243 = vld [vmem:[#allocation2 + $0x169] sm:$0xff]
  %v6244 = vld [vmem:[#allocation2 + $0x171] sm:$0xff]
  %v6245 = vld [vmem:[#allocation2 + $0x179] sm:$0xff]
  %v6246 = vld [vmem:[#allocation2 + $0x181] sm:$0xff]
  %v6247 = vld [vmem:[#allocation2 + $0x189] sm:$0xff]
  %v6248 = vld [vmem:[#allocation2 + $0x191] sm:$0xff]
  %v6249 = vld [vmem:[#allocation2 + $0x199] sm:$0xff]
  %v6250 = vld [vmem:[#allocation2 + $0x1a1] sm:$0xff]
  %v6251 = vld [vmem:[#allocation2 + $0x1a9] sm:$0xff]
  %v6252 = vld [vmem:[#allocation2 + $0x1b1] sm:$0xff]
  %v6253 = vld [vmem:[#allocation2 + $0x1b9] sm:$0xff]
  %s6254 = scalar_lea.vmem %s5, 88
  %v6255 = vld [vmem:[%s6254] sm:$0xff]
  %v6256 = vld [vmem:[%s6254 + $0x8] sm:$0xff]
  %v6257 = vld [vmem:[%s6254 + $0x10] sm:$0xff]
  %v6258 = vld [vmem:[%s6254 + $0x18] sm:$0xff]
  %v6259 = vld [vmem:[%s6254 + $0x20] sm:$0xff]
  %v6260 = vld [vmem:[%s6254 + $0x28] sm:$0xff]
  %v6261 = vld [vmem:[%s6254 + $0x30] sm:$0xff]
  %v6262 = vld [vmem:[%s6254 + $0x38] sm:$0xff]
  %v6263 = vld [vmem:[%s6254 + $0x40] sm:$0xff]
  %v6264 = vld [vmem:[%s6254 + $0x48] sm:$0xff]
  %v6265 = vld [vmem:[%s6254 + $0x50] sm:$0x33]
  %v6266 = vpack.c.bf16 %v6199, %v6198
  %v6267 = vpack.c.bf16 %v6201, %v6200
  %v6268 = vpack.c.bf16 %v6203, %v6202
  %v6269 = vpack.c.bf16 %v6205, %v6204
  %v6270 = vpack.c.bf16 %v6207, %v6206
  %v6271 = vpack.c.bf16 %v6209, %v6208
  %v6272 = vpack.c.bf16 %v6211, %v6210
  %v6273 = vpack.c.bf16 %v6213, %v6212
  %v6274 = vpack.c.bf16 %v6215, %v6214
  %v6275 = vpack.c.bf16 %v6217, %v6216
  %v6276 = vpack.c.bf16 %v6219, %v6218
  %v6277 = vpack.c.bf16 %v6221, %v6220
  %v6278 = vpack.c.bf16 %v6223, %v6222
  %v6279 = vpack.c.bf16 %v6225, %v6224
  %v6280 = vpack.c.bf16 %v6227, %v6226
  %v6281 = vpack.c.bf16 %v6229, %v6228
  %v6282 = vpack.c.bf16 %v6231, %v6230
  %v6283 = vpack.c.bf16 %v6233, %v6232
  %v6284 = vpack.c.bf16 %v6235, %v6234
  %v6285 = vpack.c.bf16 %v6237, %v6236
  %v6286 = vpack.c.bf16 %v6239, %v6238
  %v6287 = vpack.c.bf16 %v6241, %v6240
  %v6288 = vpack.c.bf16 %v6243, %v6242
  %v6289 = vpack.c.bf16 %v6245, %v6244
  %v6290 = vpack.c.bf16 %v6247, %v6246
  %v6291 = vpack.c.bf16 %v6249, %v6248
  %v6292 = vpack.c.bf16 %v6251, %v6250
  %v6293 = vpack.c.bf16 %v6253, %v6252
  %v6305 = vunpack.c.l.b16 %v6255
  %v6306 = vunpack.c.h.b16 %v6255
  %v6307 = vunpack.c.l.b16 %v6256
  %v6308 = vunpack.c.h.b16 %v6256
  %v6309 = vunpack.c.l.b16 %v6257
  %v6310 = vunpack.c.h.b16 %v6257
  %v6311 = vunpack.c.l.b16 %v6258
  %v6312 = vunpack.c.h.b16 %v6258
  %v6313 = vunpack.c.l.b16 %v6259
  %v6314 = vunpack.c.h.b16 %v6259
  %v6315 = vunpack.c.l.b16 %v6260
  %v6316 = vunpack.c.h.b16 %v6260
  %v6317 = vunpack.c.l.b16 %v6261
  %v6318 = vunpack.c.h.b16 %v6261
  %v6319 = vunpack.c.l.b16 %v6262
  %v6320 = vunpack.c.h.b16 %v6262
  %v6321 = vunpack.c.l.b16 %v6263
  %v6322 = vunpack.c.h.b16 %v6263
  %v6323 = vunpack.c.l.b16 %v6264
  %v6324 = vunpack.c.h.b16 %v6264
  %v6325 = vunpack.c.l.b16 %v6265
  %v6326 = vunpack.c.h.b16 %v6265
  %v6327 = vpack.c.b16 %v6307, %v6305
  %v6328 = vpack.c.b16 %v6308, %v6306
  %v6329 = vpack.c.b16 %v6311, %v6309
  %v6330 = vpack.c.b16 %v6312, %v6310
  %v6331 = vpack.c.b16 %v6315, %v6313
  %v6332 = vpack.c.b16 %v6316, %v6314
  %v6333 = vpack.c.b16 %v6319, %v6317
  %v6334 = vpack.c.b16 %v6320, %v6318
  %v6335 = vpack.c.b16 %v6323, %v6321
  %v6336 = vpack.c.b16 %v6324, %v6322
  %v6337 = vpack.c.b16 %v6325, %v6325
  %v6338 = vpack.c.b16 %v6326, %v6326
  %v6350 = vsel %vm5462, %v6266, 0
  %v6353 = vsel %vm5462, %v6267, 0
  %v6356 = vsel %vm5462, %v6268, 0
  %v6359 = vsel %vm5462, %v6269, 0
  %v6362 = vsel %vm5462, %v6270, 0
  %v6365 = vsel %vm5462, %v6271, 0
  %v6368 = vsel %vm5462, %v6272, 0
  %v6371 = vsel %vm5462, %v6273, 0
  %v6374 = vsel %vm5462, %v6274, 0
  %v6377 = vsel %vm5462, %v6275, 0
  %v6380 = vsel %vm5462, %v6276, 0
  %v6383 = vsel %vm5462, %v6277, 0
  %v6386 = vsel %vm5462, %v6278, 0
  %v6389 = vsel %vm5462, %v6279, 0
  %v6392 = vsel %vm5462, %v6280, 0
  %v6395 = vsel %vm5462, %v6281, 0
  %v6398 = vsel %vm5462, %v6282, 0
  %v6401 = vsel %vm5462, %v6283, 0
  %v6404 = vsel %vm5462, %v6284, 0
  %v6407 = vsel %vm5462, %v6285, 0
  %v6410 = vsel %vm5462, %v6286, 0
  %v6413 = vsel %vm5462, %v6287, 0
  %v6416 = vsel %vm5462, %v6288, 0
  %v6419 = vsel %vm5462, %v6289, 0
  %v6422 = vsel %vm5462, %v6290, 0
  %v6425 = vsel %vm5462, %v6291, 0
  %v6428 = vsel %vm5462, %v6292, 0
  %v6431 = vsel %vm5462, %v6293, 0
  %v6434 = vsel %vm5755, %v6337, 0
  %v6437 = vsel %vm5755, %v6338, 0
  %6439 = vmatprep.subr.bf16.mxu0 %v6328
  %6440 = vmatpush1.bf16.msra.mxu0 %v6327
  %6441 = vmatprep.subr.bf16.mxu0 %v6330
  %6442 = vmatpush1.bf16.msra.mxu0 %v6329
  %6443 = vmatprep.subr.bf16.mxu0 %v6332
  %6444 = vmatpush1.bf16.msra.mxu0 %v6331
  %6445 = vmatprep.subr.bf16.mxu0 %v6334
  %6446 = vmatpush1.bf16.msra.mxu0 %v6333
  %6447 = vmatprep.subr.bf16.mxu0 %v6336
  %6448 = vmatpush1.bf16.msra.mxu0 %v6335
  %6449 = vmatprep.subr.bf16.mxu0 %v6437
  %6450 = vmatpush1.bf16.msra.mxu0 %v6434
  %6451 = vmatprep.subr.bf16.mxu0 0
  %6452 = vmatpush1.bf16.msra.mxu0 0
  %6453 = vmatprep.subr.bf16.mxu0 0
  %6454 = vmatpush1.bf16.msra.mxu0 0
  %6455 = vmatprep.subr.bf16.mxu0 0
  %6456 = vmatpush1.bf16.msra.mxu0 0
  %6457 = vmatprep.subr.bf16.mxu0 0
  %6458 = vmatpush1.bf16.msra.mxu0 0
  %6459 = vmatprep.subr.bf16.mxu0 0
  %6460 = vmatpush1.bf16.msra.mxu0 0
  %6461 = vmatprep.subr.bf16.mxu0 0
  %6462 = vmatpush1.bf16.msra.mxu0 0
  %6463 = vmatprep.subr.bf16.mxu0 0
  %6464 = vmatpush1.bf16.msra.mxu0 0
  %6465 = vmatprep.subr.bf16.mxu0 0
  %6466 = vmatpush1.bf16.msra.mxu0 0
  %6467 = vmatprep.subr.bf16.mxu0 0
  %6468 = vmatpush1.bf16.msra.mxu0 0
  %6469 = vmatprep.subr.bf16.mxu0 0
  %6470 = vmatpush1.bf16.msra.mxu0 0
  %6471 = vmatprep.mubr.bf16.mxu0 0
  %6472 = vmatmul.mubr.bf16.gmra.mrb[0].mxu0 %v6350
  %v6473 = vpop.f32.mrb[0].mxu0
  %v6474 = vadd.f32 0.0, %v6473
  %v6475 = vpop.f32.mrb[0].mxu0
  %v6476 = vadd.f32 0.0, %v6475
  %v6477 = vpop.f32.mrb[0].mxu0
  %v6478 = vadd.f32 0.0, %v6477
  %v6479 = vpop.f32.mrb[0].mxu0
  %v6480 = vadd.f32 0.0, %v6479
  %6481 = vmatprep.mubr.bf16.mxu0 0
  %6482 = vmatmul.mubr.bf16.gmra.mrb[0].mxu0 %v6353
  %v6483 = vpop.f32.mrb[0].mxu0
  %v6484 = vadd.f32 0.0, %v6483
  %v6485 = vpop.f32.mrb[0].mxu0
  %v6486 = vadd.f32 0.0, %v6485
  %v6487 = vpop.f32.mrb[0].mxu0
  %v6488 = vadd.f32 0.0, %v6487
  %v6489 = vpop.f32.mrb[0].mxu0
  %v6490 = vadd.f32 0.0, %v6489
  %6491 = vmatprep.mubr.bf16.mxu0 0
  %6492 = vmatmul.mubr.bf16.gmra.mrb[0].mxu0 %v6356
  %v6493 = vpop.f32.mrb[0].mxu0
  %v6494 = vadd.f32 0.0, %v6493
  %v6495 = vpop.f32.mrb[0].mxu0
  %v6496 = vadd.f32 0.0, %v6495
  %v6497 = vpop.f32.mrb[0].mxu0
  %v6498 = vadd.f32 0.0, %v6497
  %v6499 = vpop.f32.mrb[0].mxu0
  %v6500 = vadd.f32 0.0, %v6499
  %6501 = vmatprep.mubr.bf16.mxu0 0
  %6502 = vmatmul.mubr.bf16.gmra.mrb[0].mxu0 %v6359
  %v6503 = vpop.f32.mrb[0].mxu0
  %v6504 = vadd.f32 0.0, %v6503
  %v6505 = vpop.f32.mrb[0].mxu0
  %v6506 = vadd.f32 0.0, %v6505
  %v6507 = vpop.f32.mrb[0].mxu0
  %v6508 = vadd.f32 0.0, %v6507
  %v6509 = vpop.f32.mrb[0].mxu0
  %v6510 = vadd.f32 0.0, %v6509
  %6511 = vmatprep.mubr.bf16.mxu0 0
  %6512 = vmatmul.mubr.bf16.gmra.mrb[0].mxu0 %v6362
  %v6513 = vpop.f32.mrb[0].mxu0
  %v6514 = vadd.f32 0.0, %v6513
  %v6515 = vpop.f32.mrb[0].mxu0
  %v6516 = vadd.f32 0.0, %v6515
  %v6517 = vpop.f32.mrb[0].mxu0
  %v6518 = vadd.f32 0.0, %v6517
  %v6519 = vpop.f32.mrb[0].mxu0
  %v6520 = vadd.f32 0.0, %v6519
  %6521 = vmatprep.mubr.bf16.mxu0 0
  %6522 = vmatmul.mubr.bf16.gmra.mrb[0].mxu0 %v6365
  %v6523 = vpop.f32.mrb[0].mxu0
  %v6524 = vadd.f32 0.0, %v6523
  %v6525 = vpop.f32.mrb[0].mxu0
  %v6526 = vadd.f32 0.0, %v6525
  %v6527 = vpop.f32.mrb[0].mxu0
  %v6528 = vadd.f32 0.0, %v6527
  %v6529 = vpop.f32.mrb[0].mxu0
  %v6530 = vadd.f32 0.0, %v6529
  %6531 = vmatprep.mubr.bf16.mxu0 0
  %6532 = vmatmul.mubr.bf16.gmra.mrb[0].mxu0 %v6368
  %v6533 = vpop.f32.mrb[0].mxu0
  %v6534 = vadd.f32 0.0, %v6533
  %v6535 = vpop.f32.mrb[0].mxu0
  %v6536 = vadd.f32 0.0, %v6535
  %v6537 = vpop.f32.mrb[0].mxu0
  %v6538 = vadd.f32 0.0, %v6537
  %v6539 = vpop.f32.mrb[0].mxu0
  %v6540 = vadd.f32 0.0, %v6539
  %6541 = vmatprep.mubr.bf16.mxu0 0
  %6542 = vmatmul.mubr.bf16.gmra.mrb[0].mxu0 %v6371
  %v6543 = vpop.f32.mrb[0].mxu0
  %v6544 = vadd.f32 0.0, %v6543
  %v6545 = vpop.f32.mrb[0].mxu0
  %v6546 = vadd.f32 0.0, %v6545
  %v6547 = vpop.f32.mrb[0].mxu0
  %v6548 = vadd.f32 0.0, %v6547
  %v6549 = vpop.f32.mrb[0].mxu0
  %v6550 = vadd.f32 0.0, %v6549
  %6551 = vmatprep.mubr.bf16.mxu0 0
  %6552 = vmatmul.mubr.bf16.gmra.mrb[0].mxu0 %v6374
  %v6553 = vpop.f32.mrb[0].mxu0
  %v6554 = vadd.f32 0.0, %v6553
  %v6555 = vpop.f32.mrb[0].mxu0
  %v6556 = vadd.f32 0.0, %v6555
  %v6557 = vpop.f32.mrb[0].mxu0
  %v6558 = vadd.f32 0.0, %v6557
  %v6559 = vpop.f32.mrb[0].mxu0
  %v6560 = vadd.f32 0.0, %v6559
  %6561 = vmatprep.mubr.bf16.mxu0 0
  %6562 = vmatmul.mubr.bf16.gmra.mrb[0].mxu0 %v6377
  %v6563 = vpop.f32.mrb[0].mxu0
  %v6564 = vadd.f32 0.0, %v6563
  %v6565 = vpop.f32.mrb[0].mxu0
  %v6566 = vadd.f32 0.0, %v6565
  %v6567 = vpop.f32.mrb[0].mxu0
  %v6568 = vadd.f32 0.0, %v6567
  %v6569 = vpop.f32.mrb[0].mxu0
  %v6570 = vadd.f32 0.0, %v6569
  %6571 = vmatprep.mubr.bf16.mxu0 0
  %6572 = vmatmul.mubr.bf16.gmra.mrb[0].mxu0 %v6380
  %v6573 = vpop.f32.mrb[0].mxu0
  %v6574 = vadd.f32 0.0, %v6573
  %v6575 = vpop.f32.mrb[0].mxu0
  %v6576 = vadd.f32 0.0, %v6575
  %v6577 = vpop.f32.mrb[0].mxu0
  %v6578 = vadd.f32 0.0, %v6577
  %v6579 = vpop.f32.mrb[0].mxu0
  %v6580 = vadd.f32 0.0, %v6579
  %6581 = vmatprep.mubr.bf16.mxu0 0
  %6582 = vmatmul.mubr.bf16.gmra.mrb[0].mxu0 %v6383
  %v6583 = vpop.f32.mrb[0].mxu0
  %v6584 = vadd.f32 0.0, %v6583
  %v6585 = vpop.f32.mrb[0].mxu0
  %v6586 = vadd.f32 0.0, %v6585
  %v6587 = vpop.f32.mrb[0].mxu0
  %v6588 = vadd.f32 0.0, %v6587
  %v6589 = vpop.f32.mrb[0].mxu0
  %v6590 = vadd.f32 0.0, %v6589
  %6591 = vmatprep.mubr.bf16.mxu0 0
  %6592 = vmatmul.mubr.bf16.gmra.mrb[0].mxu0 %v6386
  %v6593 = vpop.f32.mrb[0].mxu0
  %v6594 = vadd.f32 0.0, %v6593
  %v6595 = vpop.f32.mrb[0].mxu0
  %v6596 = vadd.f32 0.0, %v6595
  %v6597 = vpop.f32.mrb[0].mxu0
  %v6598 = vadd.f32 0.0, %v6597
  %v6599 = vpop.f32.mrb[0].mxu0
  %v6600 = vadd.f32 0.0, %v6599
  %6601 = vmatprep.mubr.bf16.mxu0 0
  %6602 = vmatmul.mubr.bf16.gmra.mrb[0].mxu0 %v6389
  %v6603 = vpop.f32.mrb[0].mxu0
  %v6604 = vadd.f32 0.0, %v6603
  %v6605 = vpop.f32.mrb[0].mxu0
  %v6606 = vadd.f32 0.0, %v6605
  %v6607 = vpop.f32.mrb[0].mxu0
  %v6608 = vadd.f32 0.0, %v6607
  %v6609 = vpop.f32.mrb[0].mxu0
  %v6610 = vadd.f32 0.0, %v6609
  %6611 = vmatprep.mubr.bf16.mxu0 0
  %6612 = vmatmul.mubr.bf16.gmra.mrb[0].mxu0 %v6392
  %v6613 = vpop.f32.mrb[0].mxu0
  %v6614 = vadd.f32 0.0, %v6613
  %v6615 = vpop.f32.mrb[0].mxu0
  %v6616 = vadd.f32 0.0, %v6615
  %v6617 = vpop.f32.mrb[0].mxu0
  %v6618 = vadd.f32 0.0, %v6617
  %v6619 = vpop.f32.mrb[0].mxu0
  %v6620 = vadd.f32 0.0, %v6619
  %6621 = vmatprep.mubr.bf16.mxu0 0
  %6622 = vmatmul.mubr.bf16.gmra.mrb[0].mxu0 %v6395
  %v6623 = vpop.f32.mrb[0].mxu0
  %v6624 = vadd.f32 0.0, %v6623
  %v6625 = vpop.f32.mrb[0].mxu0
  %v6626 = vadd.f32 0.0, %v6625
  %v6627 = vpop.f32.mrb[0].mxu0
  %v6628 = vadd.f32 0.0, %v6627
  %v6629 = vpop.f32.mrb[0].mxu0
  %v6630 = vadd.f32 0.0, %v6629
  %6631 = vmatprep.mubr.bf16.mxu0 0
  %6632 = vmatmul.mubr.bf16.gmra.mrb[0].mxu0 %v6398
  %v6633 = vpop.f32.mrb[0].mxu0
  %v6634 = vadd.f32 0.0, %v6633
  %v6635 = vpop.f32.mrb[0].mxu0
  %v6636 = vadd.f32 0.0, %v6635
  %v6637 = vpop.f32.mrb[0].mxu0
  %v6638 = vadd.f32 0.0, %v6637
  %v6639 = vpop.f32.mrb[0].mxu0
  %v6640 = vadd.f32 0.0, %v6639
  %6641 = vmatprep.mubr.bf16.mxu0 0
  %6642 = vmatmul.mubr.bf16.gmra.mrb[0].mxu0 %v6401
  %v6643 = vpop.f32.mrb[0].mxu0
  %v6644 = vadd.f32 0.0, %v6643
  %v6645 = vpop.f32.mrb[0].mxu0
  %v6646 = vadd.f32 0.0, %v6645
  %v6647 = vpop.f32.mrb[0].mxu0
  %v6648 = vadd.f32 0.0, %v6647
  %v6649 = vpop.f32.mrb[0].mxu0
  %v6650 = vadd.f32 0.0, %v6649
  %6651 = vmatprep.mubr.bf16.mxu0 0
  %6652 = vmatmul.mubr.bf16.gmra.mrb[0].mxu0 %v6404
  %v6653 = vpop.f32.mrb[0].mxu0
  %v6654 = vadd.f32 0.0, %v6653
  %v6655 = vpop.f32.mrb[0].mxu0
  %v6656 = vadd.f32 0.0, %v6655
  %v6657 = vpop.f32.mrb[0].mxu0
  %v6658 = vadd.f32 0.0, %v6657
  %v6659 = vpop.f32.mrb[0].mxu0
  %v6660 = vadd.f32 0.0, %v6659
  %6661 = vmatprep.mubr.bf16.mxu0 0
  %6662 = vmatmul.mubr.bf16.gmra.mrb[0].mxu0 %v6407
  %v6663 = vpop.f32.mrb[0].mxu0
  %v6664 = vadd.f32 0.0, %v6663
  %v6665 = vpop.f32.mrb[0].mxu0
  %v6666 = vadd.f32 0.0, %v6665
  %v6667 = vpop.f32.mrb[0].mxu0
  %v6668 = vadd.f32 0.0, %v6667
  %v6669 = vpop.f32.mrb[0].mxu0
  %v6670 = vadd.f32 0.0, %v6669
  %6671 = vmatprep.mubr.bf16.mxu0 0
  %6672 = vmatmul.mubr.bf16.gmra.mrb[0].mxu0 %v6410
  %v6673 = vpop.f32.mrb[0].mxu0
  %v6674 = vadd.f32 0.0, %v6673
  %v6675 = vpop.f32.mrb[0].mxu0
  %v6676 = vadd.f32 0.0, %v6675
  %v6677 = vpop.f32.mrb[0].mxu0
  %v6678 = vadd.f32 0.0, %v6677
  %v6679 = vpop.f32.mrb[0].mxu0
  %v6680 = vadd.f32 0.0, %v6679
  %6681 = vmatprep.mubr.bf16.mxu0 0
  %6682 = vmatmul.mubr.bf16.gmra.mrb[0].mxu0 %v6413
  %v6683 = vpop.f32.mrb[0].mxu0
  %v6684 = vadd.f32 0.0, %v6683
  %v6685 = vpop.f32.mrb[0].mxu0
  %v6686 = vadd.f32 0.0, %v6685
  %v6687 = vpop.f32.mrb[0].mxu0
  %v6688 = vadd.f32 0.0, %v6687
  %v6689 = vpop.f32.mrb[0].mxu0
  %v6690 = vadd.f32 0.0, %v6689
  %6691 = vmatprep.mubr.bf16.mxu0 0
  %6692 = vmatmul.mubr.bf16.gmra.mrb[0].mxu0 %v6416
  %v6693 = vpop.f32.mrb[0].mxu0
  %v6694 = vadd.f32 0.0, %v6693
  %v6695 = vpop.f32.mrb[0].mxu0
  %v6696 = vadd.f32 0.0, %v6695
  %v6697 = vpop.f32.mrb[0].mxu0
  %v6698 = vadd.f32 0.0, %v6697
  %v6699 = vpop.f32.mrb[0].mxu0
  %v6700 = vadd.f32 0.0, %v6699
  %6701 = vmatprep.mubr.bf16.mxu0 0
  %6702 = vmatmul.mubr.bf16.gmra.mrb[0].mxu0 %v6419
  %v6703 = vpop.f32.mrb[0].mxu0
  %v6704 = vadd.f32 0.0, %v6703
  %v6705 = vpop.f32.mrb[0].mxu0
  %v6706 = vadd.f32 0.0, %v6705
  %v6707 = vpop.f32.mrb[0].mxu0
  %v6708 = vadd.f32 0.0, %v6707
  %v6709 = vpop.f32.mrb[0].mxu0
  %v6710 = vadd.f32 0.0, %v6709
  %6711 = vmatprep.mubr.bf16.mxu0 0
  %6712 = vmatmul.mubr.bf16.gmra.mrb[0].mxu0 %v6422
  %v6713 = vpop.f32.mrb[0].mxu0
  %v6714 = vadd.f32 0.0, %v6713
  %v6715 = vpop.f32.mrb[0].mxu0
  %v6716 = vadd.f32 0.0, %v6715
  %v6717 = vpop.f32.mrb[0].mxu0
  %v6718 = vadd.f32 0.0, %v6717
  %v6719 = vpop.f32.mrb[0].mxu0
  %v6720 = vadd.f32 0.0, %v6719
  %6721 = vmatprep.mubr.bf16.mxu0 0
  %6722 = vmatmul.mubr.bf16.gmra.mrb[0].mxu0 %v6425
  %v6723 = vpop.f32.mrb[0].mxu0
  %v6724 = vadd.f32 0.0, %v6723
  %v6725 = vpop.f32.mrb[0].mxu0
  %v6726 = vadd.f32 0.0, %v6725
  %v6727 = vpop.f32.mrb[0].mxu0
  %v6728 = vadd.f32 0.0, %v6727
  %v6729 = vpop.f32.mrb[0].mxu0
  %v6730 = vadd.f32 0.0, %v6729
  %6731 = vmatprep.mubr.bf16.mxu0 0
  %6732 = vmatmul.mubr.bf16.gmra.mrb[0].mxu0 %v6428
  %v6733 = vpop.f32.mrb[0].mxu0
  %v6734 = vadd.f32 0.0, %v6733
  %v6735 = vpop.f32.mrb[0].mxu0
  %v6736 = vadd.f32 0.0, %v6735
  %v6737 = vpop.f32.mrb[0].mxu0
  %v6738 = vadd.f32 0.0, %v6737
  %v6739 = vpop.f32.mrb[0].mxu0
  %v6740 = vadd.f32 0.0, %v6739
  %6741 = vmatprep.mubr.bf16.mxu0 0
  %6742 = vmatmul.mubr.bf16.gmra.mrb[0].mxu0 %v6431
  %v6743 = vpop.f32.mrb[0].mxu0
  %v6744 = vadd.f32 0.0, %v6743
  %v6745 = vpop.f32.mrb[0].mxu0
  %v6746 = vadd.f32 0.0, %v6745
  %v6747 = vpop.f32.mrb[0].mxu0
  %v6748 = vadd.f32 0.0, %v6747
  %v6749 = vpop.f32.mrb[0].mxu0
  %v6750 = vadd.f32 0.0, %v6749
  %6751 = vdwg.mxu0
  %v6752 = vadd.f32 %v6086, %v6474
  %v6753 = vadd.f32 %v6087, %v6476
  %v6754 = vadd.f32 %v6088, %v6478
  %v6755 = vadd.f32 %v6089, %v6480
  %v6756 = vadd.f32 %v6090, %v6484
  %v6757 = vadd.f32 %v6091, %v6486
  %v6758 = vadd.f32 %v6092, %v6488
  %v6759 = vadd.f32 %v6093, %v6490
  %v6760 = vadd.f32 %v6094, %v6494
  %v6761 = vadd.f32 %v6095, %v6496
  %v6762 = vadd.f32 %v6096, %v6498
  %v6763 = vadd.f32 %v6097, %v6500
  %v6764 = vadd.f32 %v6098, %v6504
  %v6765 = vadd.f32 %v6099, %v6506
  %v6766 = vadd.f32 %v6100, %v6508
  %v6767 = vadd.f32 %v6101, %v6510
  %v6768 = vadd.f32 %v6102, %v6514
  %v6769 = vadd.f32 %v6103, %v6516
  %v6770 = vadd.f32 %v6104, %v6518
  %v6771 = vadd.f32 %v6105, %v6520
  %v6772 = vadd.f32 %v6106, %v6524
  %v6773 = vadd.f32 %v6107, %v6526
  %v6774 = vadd.f32 %v6108, %v6528
  %v6775 = vadd.f32 %v6109, %v6530
  %v6776 = vadd.f32 %v6110, %v6534
  %v6777 = vadd.f32 %v6111, %v6536
  %v6778 = vadd.f32 %v6112, %v6538
  %v6779 = vadd.f32 %v6113, %v6540
  %v6780 = vadd.f32 %v6114, %v6544
  %v6781 = vadd.f32 %v6115, %v6546
  %v6782 = vadd.f32 %v6116, %v6548
  %v6783 = vadd.f32 %v6117, %v6550
  %v6784 = vadd.f32 %v6118, %v6554
  %v6785 = vadd.f32 %v6119, %v6556
  %v6786 = vadd.f32 %v6120, %v6558
  %v6787 = vadd.f32 %v6121, %v6560
  %v6788 = vadd.f32 %v6122, %v6564
  %v6789 = vadd.f32 %v6123, %v6566
  %v6790 = vadd.f32 %v6124, %v6568
  %v6791 = vadd.f32 %v6125, %v6570
  %v6792 = vadd.f32 %v6126, %v6574
  %v6793 = vadd.f32 %v6127, %v6576
  %v6794 = vadd.f32 %v6128, %v6578
  %v6795 = vadd.f32 %v6129, %v6580
  %v6796 = vadd.f32 %v6130, %v6584
  %v6797 = vadd.f32 %v6131, %v6586
  %v6798 = vadd.f32 %v6132, %v6588
  %v6799 = vadd.f32 %v6133, %v6590
  %v6800 = vadd.f32 %v6134, %v6594
  %v6801 = vadd.f32 %v6135, %v6596
  %v6802 = vadd.f32 %v6136, %v6598
  %v6803 = vadd.f32 %v6137, %v6600
  %v6804 = vadd.f32 %v6138, %v6604
  %v6805 = vadd.f32 %v6139, %v6606
  %v6806 = vadd.f32 %v6140, %v6608
  %v6807 = vadd.f32 %v6141, %v6610
  %v6808 = vadd.f32 %v6142, %v6614
  %v6809 = vadd.f32 %v6143, %v6616
  %v6810 = vadd.f32 %v6144, %v6618
  %v6811 = vadd.f32 %v6145, %v6620
  %v6812 = vadd.f32 %v6146, %v6624
  %v6813 = vadd.f32 %v6147, %v6626
  %v6814 = vadd.f32 %v6148, %v6628
  %v6815 = vadd.f32 %v6149, %v6630
  %v6816 = vadd.f32 %v6150, %v6634
  %v6817 = vadd.f32 %v6151, %v6636
  %v6818 = vadd.f32 %v6152, %v6638
  %v6819 = vadd.f32 %v6153, %v6640
  %v6820 = vadd.f32 %v6154, %v6644
  %v6821 = vadd.f32 %v6155, %v6646
  %v6822 = vadd.f32 %v6156, %v6648
  %v6823 = vadd.f32 %v6157, %v6650
  %v6824 = vadd.f32 %v6158, %v6654
  %v6825 = vadd.f32 %v6159, %v6656
  %v6826 = vadd.f32 %v6160, %v6658
  %v6827 = vadd.f32 %v6161, %v6660
  %v6828 = vadd.f32 %v6162, %v6664
  %v6829 = vadd.f32 %v6163, %v6666
  %v6830 = vadd.f32 %v6164, %v6668
  %v6831 = vadd.f32 %v6165, %v6670
  %v6832 = vadd.f32 %v6166, %v6674
  %v6833 = vadd.f32 %v6167, %v6676
  %v6834 = vadd.f32 %v6168, %v6678
  %v6835 = vadd.f32 %v6169, %v6680
  %v6836 = vadd.f32 %v6170, %v6684
  %v6837 = vadd.f32 %v6171, %v6686
  %v6838 = vadd.f32 %v6172, %v6688
  %v6839 = vadd.f32 %v6173, %v6690
  %v6840 = vadd.f32 %v6174, %v6694
  %v6841 = vadd.f32 %v6175, %v6696
  %v6842 = vadd.f32 %v6176, %v6698
  %v6843 = vadd.f32 %v6177, %v6700
  %v6844 = vadd.f32 %v6178, %v6704
  %v6845 = vadd.f32 %v6179, %v6706
  %v6846 = vadd.f32 %v6180, %v6708
  %v6847 = vadd.f32 %v6181, %v6710
  %v6848 = vadd.f32 %v6182, %v6714
  %v6849 = vadd.f32 %v6183, %v6716
  %v6850 = vadd.f32 %v6184, %v6718
  %v6851 = vadd.f32 %v6185, %v6720
  %v6852 = vadd.f32 %v6186, %v6724
  %v6853 = vadd.f32 %v6187, %v6726
  %v6854 = vadd.f32 %v6188, %v6728
  %v6855 = vadd.f32 %v6189, %v6730
  %v6856 = vadd.f32 %v6190, %v6734
  %v6857 = vadd.f32 %v6191, %v6736
  %v6858 = vadd.f32 %v6192, %v6738
  %v6859 = vadd.f32 %v6193, %v6740
  %v6860 = vadd.f32 %v6194, %v6744
  %v6861 = vadd.f32 %v6195, %v6746
  %v6862 = vadd.f32 %v6196, %v6748
  %v6863 = vadd.f32 %v6197, %v6750
  %v6864 = vld [vmem:[#allocation2 + $0x2] sm:$0xff]
  %v6865 = vld [vmem:[#allocation2 + $0xa] sm:$0xff]
  %v6866 = vld [vmem:[#allocation2 + $0x12] sm:$0xff]
  %v6867 = vld [vmem:[#allocation2 + $0x1a] sm:$0xff]
  %v6868 = vld [vmem:[#allocation2 + $0x22] sm:$0xff]
  %v6869 = vld [vmem:[#allocation2 + $0x2a] sm:$0xff]
  %v6870 = vld [vmem:[#allocation2 + $0x32] sm:$0xff]
  %v6871 = vld [vmem:[#allocation2 + $0x3a] sm:$0xff]
  %v6872 = vld [vmem:[#allocation2 + $0x42] sm:$0xff]
  %v6873 = vld [vmem:[#allocation2 + $0x4a] sm:$0xff]
  %v6874 = vld [vmem:[#allocation2 + $0x52] sm:$0xff]
  %v6875 = vld [vmem:[#allocation2 + $0x5a] sm:$0xff]
  %v6876 = vld [vmem:[#allocation2 + $0x62] sm:$0xff]
  %v6877 = vld [vmem:[#allocation2 + $0x6a] sm:$0xff]
  %v6878 = vld [vmem:[#allocation2 + $0x72] sm:$0xff]
  %v6879 = vld [vmem:[#allocation2 + $0x7a] sm:$0xff]
  %v6880 = vld [vmem:[#allocation2 + $0x82] sm:$0xff]
  %v6881 = vld [vmem:[#allocation2 + $0x8a] sm:$0xff]
  %v6882 = vld [vmem:[#allocation2 + $0x92] sm:$0xff]
  %v6883 = vld [vmem:[#allocation2 + $0x9a] sm:$0xff]
  %v6884 = vld [vmem:[#allocation2 + $0xa2] sm:$0xff]
  %v6885 = vld [vmem:[#allocation2 + $0xaa] sm:$0xff]
  %v6886 = vld [vmem:[#allocation2 + $0xb2] sm:$0xff]
  %v6887 = vld [vmem:[#allocation2 + $0xba] sm:$0xff]
  %v6888 = vld [vmem:[#allocation2 + $0xc2] sm:$0xff]
  %v6889 = vld [vmem:[#allocation2 + $0xca] sm:$0xff]
  %v6890 = vld [vmem:[#allocation2 + $0xd2] sm:$0xff]
  %v6891 = vld [vmem:[#allocation2 + $0xda] sm:$0xff]
  %v6892 = vld [vmem:[#allocation2 + $0xe2] sm:$0xff]
  %v6893 = vld [vmem:[#allocation2 + $0xea] sm:$0xff]
  %v6894 = vld [vmem:[#allocation2 + $0xf2] sm:$0xff]
  %v6895 = vld [vmem:[#allocation2 + $0xfa] sm:$0xff]
  %v6896 = vld [vmem:[#allocation2 + $0x102] sm:$0xff]
  %v6897 = vld [vmem:[#allocation2 + $0x10a] sm:$0xff]
  %v6898 = vld [vmem:[#allocation2 + $0x112] sm:$0xff]
  %v6899 = vld [vmem:[#allocation2 + $0x11a] sm:$0xff]
  %v6900 = vld [vmem:[#allocation2 + $0x122] sm:$0xff]
  %v6901 = vld [vmem:[#allocation2 + $0x12a] sm:$0xff]
  %v6902 = vld [vmem:[#allocation2 + $0x132] sm:$0xff]
  %v6903 = vld [vmem:[#allocation2 + $0x13a] sm:$0xff]
  %v6904 = vld [vmem:[#allocation2 + $0x142] sm:$0xff]
  %v6905 = vld [vmem:[#allocation2 + $0x14a] sm:$0xff]
  %v6906 = vld [vmem:[#allocation2 + $0x152] sm:$0xff]
  %v6907 = vld [vmem:[#allocation2 + $0x15a] sm:$0xff]
  %v6908 = vld [vmem:[#allocation2 + $0x162] sm:$0xff]
  %v6909 = vld [vmem:[#allocation2 + $0x16a] sm:$0xff]
  %v6910 = vld [vmem:[#allocation2 + $0x172] sm:$0xff]
  %v6911 = vld [vmem:[#allocation2 + $0x17a] sm:$0xff]
  %v6912 = vld [vmem:[#allocation2 + $0x182] sm:$0xff]
  %v6913 = vld [vmem:[#allocation2 + $0x18a] sm:$0xff]
  %v6914 = vld [vmem:[#allocation2 + $0x192] sm:$0xff]
  %v6915 = vld [vmem:[#allocation2 + $0x19a] sm:$0xff]
  %v6916 = vld [vmem:[#allocation2 + $0x1a2] sm:$0xff]
  %v6917 = vld [vmem:[#allocation2 + $0x1aa] sm:$0xff]
  %v6918 = vld [vmem:[#allocation2 + $0x1b2] sm:$0xff]
  %v6919 = vld [vmem:[#allocation2 + $0x1ba] sm:$0xff]
  %s6920 = scalar_lea.vmem %s5, 176
  %v6921 = vld [vmem:[%s6920] sm:$0xff]
  %v6922 = vld [vmem:[%s6920 + $0x8] sm:$0xff]
  %v6923 = vld [vmem:[%s6920 + $0x10] sm:$0xff]
  %v6924 = vld [vmem:[%s6920 + $0x18] sm:$0xff]
  %v6925 = vld [vmem:[%s6920 + $0x20] sm:$0xff]
  %v6926 = vld [vmem:[%s6920 + $0x28] sm:$0xff]
  %v6927 = vld [vmem:[%s6920 + $0x30] sm:$0xff]
  %v6928 = vld [vmem:[%s6920 + $0x38] sm:$0xff]
  %v6929 = vld [vmem:[%s6920 + $0x40] sm:$0xff]
  %v6930 = vld [vmem:[%s6920 + $0x48] sm:$0xff]
  %v6931 = vld [vmem:[%s6920 + $0x50] sm:$0x33]
  %v6932 = vpack.c.bf16 %v6865, %v6864
  %v6933 = vpack.c.bf16 %v6867, %v6866
  %v6934 = vpack.c.bf16 %v6869, %v6868
  %v6935 = vpack.c.bf16 %v6871, %v6870
  %v6936 = vpack.c.bf16 %v6873, %v6872
  %v6937 = vpack.c.bf16 %v6875, %v6874
  %v6938 = vpack.c.bf16 %v6877, %v6876
  %v6939 = vpack.c.bf16 %v6879, %v6878
  %v6940 = vpack.c.bf16 %v6881, %v6880
  %v6941 = vpack.c.bf16 %v6883, %v6882
  %v6942 = vpack.c.bf16 %v6885, %v6884
  %v6943 = vpack.c.bf16 %v6887, %v6886
  %v6944 = vpack.c.bf16 %v6889, %v6888
  %v6945 = vpack.c.bf16 %v6891, %v6890
  %v6946 = vpack.c.bf16 %v6893, %v6892
  %v6947 = vpack.c.bf16 %v6895, %v6894
  %v6948 = vpack.c.bf16 %v6897, %v6896
  %v6949 = vpack.c.bf16 %v6899, %v6898
  %v6950 = vpack.c.bf16 %v6901, %v6900
  %v6951 = vpack.c.bf16 %v6903, %v6902
  %v6952 = vpack.c.bf16 %v6905, %v6904
  %v6953 = vpack.c.bf16 %v6907, %v6906
  %v6954 = vpack.c.bf16 %v6909, %v6908
  %v6955 = vpack.c.bf16 %v6911, %v6910
  %v6956 = vpack.c.bf16 %v6913, %v6912
  %v6957 = vpack.c.bf16 %v6915, %v6914
  %v6958 = vpack.c.bf16 %v6917, %v6916
  %v6959 = vpack.c.bf16 %v6919, %v6918
  %v6971 = vunpack.c.l.b16 %v6921
  %v6972 = vunpack.c.h.b16 %v6921
  %v6973 = vunpack.c.l.b16 %v6922
  %v6974 = vunpack.c.h.b16 %v6922
  %v6975 = vunpack.c.l.b16 %v6923
  %v6976 = vunpack.c.h.b16 %v6923
  %v6977 = vunpack.c.l.b16 %v6924
  %v6978 = vunpack.c.h.b16 %v6924
  %v6979 = vunpack.c.l.b16 %v6925
  %v6980 = vunpack.c.h.b16 %v6925
  %v6981 = vunpack.c.l.b16 %v6926
  %v6982 = vunpack.c.h.b16 %v6926
  %v6983 = vunpack.c.l.b16 %v6927
  %v6984 = vunpack.c.h.b16 %v6927
  %v6985 = vunpack.c.l.b16 %v6928
  %v6986 = vunpack.c.h.b16 %v6928
  %v6987 = vunpack.c.l.b16 %v6929
  %v6988 = vunpack.c.h.b16 %v6929
  %v6989 = vunpack.c.l.b16 %v6930
  %v6990 = vunpack.c.h.b16 %v6930
  %v6991 = vunpack.c.l.b16 %v6931
  %v6992 = vunpack.c.h.b16 %v6931
  %v6993 = vpack.c.b16 %v6973, %v6971
  %v6994 = vpack.c.b16 %v6974, %v6972
  %v6995 = vpack.c.b16 %v6977, %v6975
  %v6996 = vpack.c.b16 %v6978, %v6976
  %v6997 = vpack.c.b16 %v6981, %v6979
  %v6998 = vpack.c.b16 %v6982, %v6980
  %v6999 = vpack.c.b16 %v6985, %v6983
  %v7000 = vpack.c.b16 %v6986, %v6984
  %v7001 = vpack.c.b16 %v6989, %v6987
  %v7002 = vpack.c.b16 %v6990, %v6988
  %v7003 = vpack.c.b16 %v6991, %v6991
  %v7004 = vpack.c.b16 %v6992, %v6992
  %v7016 = vsel %vm5462, %v6932, 0
  %v7019 = vsel %vm5462, %v6933, 0
  %v7022 = vsel %vm5462, %v6934, 0
  %v7025 = vsel %vm5462, %v6935, 0
  %v7028 = vsel %vm5462, %v6936, 0
  %v7031 = vsel %vm5462, %v6937, 0
  %v7034 = vsel %vm5462, %v6938, 0
  %v7037 = vsel %vm5462, %v6939, 0
  %v7040 = vsel %vm5462, %v6940, 0
  %v7043 = vsel %vm5462, %v6941, 0
  %v7046 = vsel %vm5462, %v6942, 0
  %v7049 = vsel %vm5462, %v6943, 0
  %v7052 = vsel %vm5462, %v6944, 0
  %v7055 = vsel %vm5462, %v6945, 0
  %v7058 = vsel %vm5462, %v6946, 0
  %v7061 = vsel %vm5462, %v6947, 0
  %v7064 = vsel %vm5462, %v6948, 0
  %v7067 = vsel %vm5462, %v6949, 0
  %v7070 = vsel %vm5462, %v6950, 0
  %v7073 = vsel %vm5462, %v6951, 0
  %v7076 = vsel %vm5462, %v6952, 0
  %v7079 = vsel %vm5462, %v6953, 0
  %v7082 = vsel %vm5462, %v6954, 0
  %v7085 = vsel %vm5462, %v6955, 0
  %v7088 = vsel %vm5462, %v6956, 0
  %v7091 = vsel %vm5462, %v6957, 0
  %v7094 = vsel %vm5462, %v6958, 0
  %v7097 = vsel %vm5462, %v6959, 0
  %v7100 = vsel %vm5755, %v7003, 0
  %v7103 = vsel %vm5755, %v7004, 0
  %7105 = vmatprep.subr.bf16.mxu0 %v6994
  %7106 = vmatpush1.bf16.msra.mxu0 %v6993
  %7107 = vmatprep.subr.bf16.mxu0 %v6996
  %7108 = vmatpush1.bf16.msra.mxu0 %v6995
  %7109 = vmatprep.subr.bf16.mxu0 %v6998
  %7110 = vmatpush1.bf16.msra.mxu0 %v6997
  %7111 = vmatprep.subr.bf16.mxu0 %v7000
  %7112 = vmatpush1.bf16.msra.mxu0 %v6999
  %7113 = vmatprep.subr.bf16.mxu0 %v7002
  %7114 = vmatpush1.bf16.msra.mxu0 %v7001
  %7115 = vmatprep.subr.bf16.mxu0 %v7103
  %7116 = vmatpush1.bf16.msra.mxu0 %v7100
  %7117 = vmatprep.subr.bf16.mxu0 0
  %7118 = vmatpush1.bf16.msra.mxu0 0
  %7119 = vmatprep.subr.bf16.mxu0 0
  %7120 = vmatpush1.bf16.msra.mxu0 0
  %7121 = vmatprep.subr.bf16.mxu0 0
  %7122 = vmatpush1.bf16.msra.mxu0 0
  %7123 = vmatprep.subr.bf16.mxu0 0
  %7124 = vmatpush1.bf16.msra.mxu0 0
  %7125 = vmatprep.subr.bf16.mxu0 0
  %7126 = vmatpush1.bf16.msra.mxu0 0
  %7127 = vmatprep.subr.bf16.mxu0 0
  %7128 = vmatpush1.bf16.msra.mxu0 0
  %7129 = vmatprep.subr.bf16.mxu0 0
  %7130 = vmatpush1.bf16.msra.mxu0 0
  %7131 = vmatprep.subr.bf16.mxu0 0
  %7132 = vmatpush1.bf16.msra.mxu0 0
  %7133 = vmatprep.subr.bf16.mxu0 0
  %7134 = vmatpush1.bf16.msra.mxu0 0
  %7135 = vmatprep.subr.bf16.mxu0 0
  %7136 = vmatpush1.bf16.msra.mxu0 0
  %7137 = vmatprep.mubr.bf16.mxu0 0
  %7138 = vmatmul.mubr.bf16.gmra.mrb[0].mxu0 %v7016
  %v7139 = vpop.f32.mrb[0].mxu0
  %v7140 = vadd.f32 0.0, %v7139
  %v7141 = vpop.f32.mrb[0].mxu0
  %v7142 = vadd.f32 0.0, %v7141
  %v7143 = vpop.f32.mrb[0].mxu0
  %v7144 = vadd.f32 0.0, %v7143
  %v7145 = vpop.f32.mrb[0].mxu0
  %v7146 = vadd.f32 0.0, %v7145
  %7147 = vmatprep.mubr.bf16.mxu0 0
  %7148 = vmatmul.mubr.bf16.gmra.mrb[0].mxu0 %v7019
  %v7149 = vpop.f32.mrb[0].mxu0
  %v7150 = vadd.f32 0.0, %v7149
  %v7151 = vpop.f32.mrb[0].mxu0
  %v7152 = vadd.f32 0.0, %v7151
  %v7153 = vpop.f32.mrb[0].mxu0
  %v7154 = vadd.f32 0.0, %v7153
  %v7155 = vpop.f32.mrb[0].mxu0
  %v7156 = vadd.f32 0.0, %v7155
  %7157 = vmatprep.mubr.bf16.mxu0 0
  %7158 = vmatmul.mubr.bf16.gmra.mrb[0].mxu0 %v7022
  %v7159 = vpop.f32.mrb[0].mxu0
  %v7160 = vadd.f32 0.0, %v7159
  %v7161 = vpop.f32.mrb[0].mxu0
  %v7162 = vadd.f32 0.0, %v7161
  %v7163 = vpop.f32.mrb[0].mxu0
  %v7164 = vadd.f32 0.0, %v7163
  %v7165 = vpop.f32.mrb[0].mxu0
  %v7166 = vadd.f32 0.0, %v7165
  %7167 = vmatprep.mubr.bf16.mxu0 0
  %7168 = vmatmul.mubr.bf16.gmra.mrb[0].mxu0 %v7025
  %v7169 = vpop.f32.mrb[0].mxu0
  %v7170 = vadd.f32 0.0, %v7169
  %v7171 = vpop.f32.mrb[0].mxu0
  %v7172 = vadd.f32 0.0, %v7171
  %v7173 = vpop.f32.mrb[0].mxu0
  %v7174 = vadd.f32 0.0, %v7173
  %v7175 = vpop.f32.mrb[0].mxu0
  %v7176 = vadd.f32 0.0, %v7175
  %7177 = vmatprep.mubr.bf16.mxu0 0
  %7178 = vmatmul.mubr.bf16.gmra.mrb[0].mxu0 %v7028
  %v7179 = vpop.f32.mrb[0].mxu0
  %v7180 = vadd.f32 0.0, %v7179
  %v7181 = vpop.f32.mrb[0].mxu0
  %v7182 = vadd.f32 0.0, %v7181
  %v7183 = vpop.f32.mrb[0].mxu0
  %v7184 = vadd.f32 0.0, %v7183
  %v7185 = vpop.f32.mrb[0].mxu0
  %v7186 = vadd.f32 0.0, %v7185
  %7187 = vmatprep.mubr.bf16.mxu0 0
  %7188 = vmatmul.mubr.bf16.gmra.mrb[0].mxu0 %v7031
  %v7189 = vpop.f32.mrb[0].mxu0
  %v7190 = vadd.f32 0.0, %v7189
  %v7191 = vpop.f32.mrb[0].mxu0
  %v7192 = vadd.f32 0.0, %v7191
  %v7193 = vpop.f32.mrb[0].mxu0
  %v7194 = vadd.f32 0.0, %v7193
  %v7195 = vpop.f32.mrb[0].mxu0
  %v7196 = vadd.f32 0.0, %v7195
  %7197 = vmatprep.mubr.bf16.mxu0 0
  %7198 = vmatmul.mubr.bf16.gmra.mrb[0].mxu0 %v7034
  %v7199 = vpop.f32.mrb[0].mxu0
  %v7200 = vadd.f32 0.0, %v7199
  %v7201 = vpop.f32.mrb[0].mxu0
  %v7202 = vadd.f32 0.0, %v7201
  %v7203 = vpop.f32.mrb[0].mxu0
  %v7204 = vadd.f32 0.0, %v7203
  %v7205 = vpop.f32.mrb[0].mxu0
  %v7206 = vadd.f32 0.0, %v7205
  %7207 = vmatprep.mubr.bf16.mxu0 0
  %7208 = vmatmul.mubr.bf16.gmra.mrb[0].mxu0 %v7037
  %v7209 = vpop.f32.mrb[0].mxu0
  %v7210 = vadd.f32 0.0, %v7209
  %v7211 = vpop.f32.mrb[0].mxu0
  %v7212 = vadd.f32 0.0, %v7211
  %v7213 = vpop.f32.mrb[0].mxu0
  %v7214 = vadd.f32 0.0, %v7213
  %v7215 = vpop.f32.mrb[0].mxu0
  %v7216 = vadd.f32 0.0, %v7215
  %7217 = vmatprep.mubr.bf16.mxu0 0
  %7218 = vmatmul.mubr.bf16.gmra.mrb[0].mxu0 %v7040
  %v7219 = vpop.f32.mrb[0].mxu0
  %v7220 = vadd.f32 0.0, %v7219
  %v7221 = vpop.f32.mrb[0].mxu0
  %v7222 = vadd.f32 0.0, %v7221
  %v7223 = vpop.f32.mrb[0].mxu0
  %v7224 = vadd.f32 0.0, %v7223
  %v7225 = vpop.f32.mrb[0].mxu0
  %v7226 = vadd.f32 0.0, %v7225
  %7227 = vmatprep.mubr.bf16.mxu0 0
  %7228 = vmatmul.mubr.bf16.gmra.mrb[0].mxu0 %v7043
  %v7229 = vpop.f32.mrb[0].mxu0
  %v7230 = vadd.f32 0.0, %v7229
  %v7231 = vpop.f32.mrb[0].mxu0
  %v7232 = vadd.f32 0.0, %v7231
  %v7233 = vpop.f32.mrb[0].mxu0
  %v7234 = vadd.f32 0.0, %v7233
  %v7235 = vpop.f32.mrb[0].mxu0
  %v7236 = vadd.f32 0.0, %v7235
  %7237 = vmatprep.mubr.bf16.mxu0 0
  %7238 = vmatmul.mubr.bf16.gmra.mrb[0].mxu0 %v7046
  %v7239 = vpop.f32.mrb[0].mxu0
  %v7240 = vadd.f32 0.0, %v7239
  %v7241 = vpop.f32.mrb[0].mxu0
  %v7242 = vadd.f32 0.0, %v7241
  %v7243 = vpop.f32.mrb[0].mxu0
  %v7244 = vadd.f32 0.0, %v7243
  %v7245 = vpop.f32.mrb[0].mxu0
  %v7246 = vadd.f32 0.0, %v7245
  %7247 = vmatprep.mubr.bf16.mxu0 0
  %7248 = vmatmul.mubr.bf16.gmra.mrb[0].mxu0 %v7049
  %v7249 = vpop.f32.mrb[0].mxu0
  %v7250 = vadd.f32 0.0, %v7249
  %v7251 = vpop.f32.mrb[0].mxu0
  %v7252 = vadd.f32 0.0, %v7251
  %v7253 = vpop.f32.mrb[0].mxu0
  %v7254 = vadd.f32 0.0, %v7253
  %v7255 = vpop.f32.mrb[0].mxu0
  %v7256 = vadd.f32 0.0, %v7255
  %7257 = vmatprep.mubr.bf16.mxu0 0
  %7258 = vmatmul.mubr.bf16.gmra.mrb[0].mxu0 %v7052
  %v7259 = vpop.f32.mrb[0].mxu0
  %v7260 = vadd.f32 0.0, %v7259
  %v7261 = vpop.f32.mrb[0].mxu0
  %v7262 = vadd.f32 0.0, %v7261
  %v7263 = vpop.f32.mrb[0].mxu0
  %v7264 = vadd.f32 0.0, %v7263
  %v7265 = vpop.f32.mrb[0].mxu0
  %v7266 = vadd.f32 0.0, %v7265
  %7267 = vmatprep.mubr.bf16.mxu0 0
  %7268 = vmatmul.mubr.bf16.gmra.mrb[0].mxu0 %v7055
  %v7269 = vpop.f32.mrb[0].mxu0
  %v7270 = vadd.f32 0.0, %v7269
  %v7271 = vpop.f32.mrb[0].mxu0
  %v7272 = vadd.f32 0.0, %v7271
  %v7273 = vpop.f32.mrb[0].mxu0
  %v7274 = vadd.f32 0.0, %v7273
  %v7275 = vpop.f32.mrb[0].mxu0
  %v7276 = vadd.f32 0.0, %v7275
  %7277 = vmatprep.mubr.bf16.mxu0 0
  %7278 = vmatmul.mubr.bf16.gmra.mrb[0].mxu0 %v7058
  %v7279 = vpop.f32.mrb[0].mxu0
  %v7280 = vadd.f32 0.0, %v7279
  %v7281 = vpop.f32.mrb[0].mxu0
  %v7282 = vadd.f32 0.0, %v7281
  %v7283 = vpop.f32.mrb[0].mxu0
  %v7284 = vadd.f32 0.0, %v7283
  %v7285 = vpop.f32.mrb[0].mxu0
  %v7286 = vadd.f32 0.0, %v7285
  %7287 = vmatprep.mubr.bf16.mxu0 0
  %7288 = vmatmul.mubr.bf16.gmra.mrb[0].mxu0 %v7061
  %v7289 = vpop.f32.mrb[0].mxu0
  %v7290 = vadd.f32 0.0, %v7289
  %v7291 = vpop.f32.mrb[0].mxu0
  %v7292 = vadd.f32 0.0, %v7291
  %v7293 = vpop.f32.mrb[0].mxu0
  %v7294 = vadd.f32 0.0, %v7293
  %v7295 = vpop.f32.mrb[0].mxu0
  %v7296 = vadd.f32 0.0, %v7295
  %7297 = vmatprep.mubr.bf16.mxu0 0
  %7298 = vmatmul.mubr.bf16.gmra.mrb[0].mxu0 %v7064
  %v7299 = vpop.f32.mrb[0].mxu0
  %v7300 = vadd.f32 0.0, %v7299
  %v7301 = vpop.f32.mrb[0].mxu0
  %v7302 = vadd.f32 0.0, %v7301
  %v7303 = vpop.f32.mrb[0].mxu0
  %v7304 = vadd.f32 0.0, %v7303
  %v7305 = vpop.f32.mrb[0].mxu0
  %v7306 = vadd.f32 0.0, %v7305
  %7307 = vmatprep.mubr.bf16.mxu0 0
  %7308 = vmatmul.mubr.bf16.gmra.mrb[0].mxu0 %v7067
  %v7309 = vpop.f32.mrb[0].mxu0
  %v7310 = vadd.f32 0.0, %v7309
  %v7311 = vpop.f32.mrb[0].mxu0
  %v7312 = vadd.f32 0.0, %v7311
  %v7313 = vpop.f32.mrb[0].mxu0
  %v7314 = vadd.f32 0.0, %v7313
  %v7315 = vpop.f32.mrb[0].mxu0
  %v7316 = vadd.f32 0.0, %v7315
  %7317 = vmatprep.mubr.bf16.mxu0 0
  %7318 = vmatmul.mubr.bf16.gmra.mrb[0].mxu0 %v7070
  %v7319 = vpop.f32.mrb[0].mxu0
  %v7320 = vadd.f32 0.0, %v7319
  %v7321 = vpop.f32.mrb[0].mxu0
  %v7322 = vadd.f32 0.0, %v7321
  %v7323 = vpop.f32.mrb[0].mxu0
  %v7324 = vadd.f32 0.0, %v7323
  %v7325 = vpop.f32.mrb[0].mxu0
  %v7326 = vadd.f32 0.0, %v7325
  %7327 = vmatprep.mubr.bf16.mxu0 0
  %7328 = vmatmul.mubr.bf16.gmra.mrb[0].mxu0 %v7073
  %v7329 = vpop.f32.mrb[0].mxu0
  %v7330 = vadd.f32 0.0, %v7329
  %v7331 = vpop.f32.mrb[0].mxu0
  %v7332 = vadd.f32 0.0, %v7331
  %v7333 = vpop.f32.mrb[0].mxu0
  %v7334 = vadd.f32 0.0, %v7333
  %v7335 = vpop.f32.mrb[0].mxu0
  %v7336 = vadd.f32 0.0, %v7335
  %7337 = vmatprep.mubr.bf16.mxu0 0
  %7338 = vmatmul.mubr.bf16.gmra.mrb[0].mxu0 %v7076
  %v7339 = vpop.f32.mrb[0].mxu0
  %v7340 = vadd.f32 0.0, %v7339
  %v7341 = vpop.f32.mrb[0].mxu0
  %v7342 = vadd.f32 0.0, %v7341
  %v7343 = vpop.f32.mrb[0].mxu0
  %v7344 = vadd.f32 0.0, %v7343
  %v7345 = vpop.f32.mrb[0].mxu0
  %v7346 = vadd.f32 0.0, %v7345
  %7347 = vmatprep.mubr.bf16.mxu0 0
  %7348 = vmatmul.mubr.bf16.gmra.mrb[0].mxu0 %v7079
  %v7349 = vpop.f32.mrb[0].mxu0
  %v7350 = vadd.f32 0.0, %v7349
  %v7351 = vpop.f32.mrb[0].mxu0
  %v7352 = vadd.f32 0.0, %v7351
  %v7353 = vpop.f32.mrb[0].mxu0
  %v7354 = vadd.f32 0.0, %v7353
  %v7355 = vpop.f32.mrb[0].mxu0
  %v7356 = vadd.f32 0.0, %v7355
  %7357 = vmatprep.mubr.bf16.mxu0 0
  %7358 = vmatmul.mubr.bf16.gmra.mrb[0].mxu0 %v7082
  %v7359 = vpop.f32.mrb[0].mxu0
  %v7360 = vadd.f32 0.0, %v7359
  %v7361 = vpop.f32.mrb[0].mxu0
  %v7362 = vadd.f32 0.0, %v7361
  %v7363 = vpop.f32.mrb[0].mxu0
  %v7364 = vadd.f32 0.0, %v7363
  %v7365 = vpop.f32.mrb[0].mxu0
  %v7366 = vadd.f32 0.0, %v7365
  %7367 = vmatprep.mubr.bf16.mxu0 0
  %7368 = vmatmul.mubr.bf16.gmra.mrb[0].mxu0 %v7085
  %v7369 = vpop.f32.mrb[0].mxu0
  %v7370 = vadd.f32 0.0, %v7369
  %v7371 = vpop.f32.mrb[0].mxu0
  %v7372 = vadd.f32 0.0, %v7371
  %v7373 = vpop.f32.mrb[0].mxu0
  %v7374 = vadd.f32 0.0, %v7373
  %v7375 = vpop.f32.mrb[0].mxu0
  %v7376 = vadd.f32 0.0, %v7375
  %7377 = vmatprep.mubr.bf16.mxu0 0
  %7378 = vmatmul.mubr.bf16.gmra.mrb[0].mxu0 %v7088
  %v7379 = vpop.f32.mrb[0].mxu0
  %v7380 = vadd.f32 0.0, %v7379
  %v7381 = vpop.f32.mrb[0].mxu0
  %v7382 = vadd.f32 0.0, %v7381
  %v7383 = vpop.f32.mrb[0].mxu0
  %v7384 = vadd.f32 0.0, %v7383
  %v7385 = vpop.f32.mrb[0].mxu0
  %v7386 = vadd.f32 0.0, %v7385
  %7387 = vmatprep.mubr.bf16.mxu0 0
  %7388 = vmatmul.mubr.bf16.gmra.mrb[0].mxu0 %v7091
  %v7389 = vpop.f32.mrb[0].mxu0
  %v7390 = vadd.f32 0.0, %v7389
  %v7391 = vpop.f32.mrb[0].mxu0
  %v7392 = vadd.f32 0.0, %v7391
  %v7393 = vpop.f32.mrb[0].mxu0
  %v7394 = vadd.f32 0.0, %v7393
  %v7395 = vpop.f32.mrb[0].mxu0
  %v7396 = vadd.f32 0.0, %v7395
  %7397 = vmatprep.mubr.bf16.mxu0 0
  %7398 = vmatmul.mubr.bf16.gmra.mrb[0].mxu0 %v7094
  %v7399 = vpop.f32.mrb[0].mxu0
  %v7400 = vadd.f32 0.0, %v7399
  %v7401 = vpop.f32.mrb[0].mxu0
  %v7402 = vadd.f32 0.0, %v7401
  %v7403 = vpop.f32.mrb[0].mxu0
  %v7404 = vadd.f32 0.0, %v7403
  %v7405 = vpop.f32.mrb[0].mxu0
  %v7406 = vadd.f32 0.0, %v7405
  %7407 = vmatprep.mubr.bf16.mxu0 0
  %7408 = vmatmul.mubr.bf16.gmra.mrb[0].mxu0 %v7097
  %v7409 = vpop.f32.mrb[0].mxu0
  %v7410 = vadd.f32 0.0, %v7409
  %v7411 = vpop.f32.mrb[0].mxu0
  %v7412 = vadd.f32 0.0, %v7411
  %v7413 = vpop.f32.mrb[0].mxu0
  %v7414 = vadd.f32 0.0, %v7413
  %v7415 = vpop.f32.mrb[0].mxu0
  %v7416 = vadd.f32 0.0, %v7415
  %7417 = vdwg.mxu0
  %v7418 = vadd.f32 %v6752, %v7140
  %v7419 = vadd.f32 %v6753, %v7142
  %v7420 = vadd.f32 %v6754, %v7144
  %v7421 = vadd.f32 %v6755, %v7146
  %v7422 = vadd.f32 %v6756, %v7150
  %v7423 = vadd.f32 %v6757, %v7152
  %v7424 = vadd.f32 %v6758, %v7154
  %v7425 = vadd.f32 %v6759, %v7156
  %v7426 = vadd.f32 %v6760, %v7160
  %v7427 = vadd.f32 %v6761, %v7162
  %v7428 = vadd.f32 %v6762, %v7164
  %v7429 = vadd.f32 %v6763, %v7166
  %v7430 = vadd.f32 %v6764, %v7170
  %v7431 = vadd.f32 %v6765, %v7172
  %v7432 = vadd.f32 %v6766, %v7174
  %v7433 = vadd.f32 %v6767, %v7176
  %v7434 = vadd.f32 %v6768, %v7180
  %v7435 = vadd.f32 %v6769, %v7182
  %v7436 = vadd.f32 %v6770, %v7184
  %v7437 = vadd.f32 %v6771, %v7186
  %v7438 = vadd.f32 %v6772, %v7190
  %v7439 = vadd.f32 %v6773, %v7192
  %v7440 = vadd.f32 %v6774, %v7194
  %v7441 = vadd.f32 %v6775, %v7196
  %v7442 = vadd.f32 %v6776, %v7200
  %v7443 = vadd.f32 %v6777, %v7202
  %v7444 = vadd.f32 %v6778, %v7204
  %v7445 = vadd.f32 %v6779, %v7206
  %v7446 = vadd.f32 %v6780, %v7210
  %v7447 = vadd.f32 %v6781, %v7212
  %v7448 = vadd.f32 %v6782, %v7214
  %v7449 = vadd.f32 %v6783, %v7216
  %v7450 = vadd.f32 %v6784, %v7220
  %v7451 = vadd.f32 %v6785, %v7222
  %v7452 = vadd.f32 %v6786, %v7224
  %v7453 = vadd.f32 %v6787, %v7226
  %v7454 = vadd.f32 %v6788, %v7230
  %v7455 = vadd.f32 %v6789, %v7232
  %v7456 = vadd.f32 %v6790, %v7234
  %v7457 = vadd.f32 %v6791, %v7236
  %v7458 = vadd.f32 %v6792, %v7240
  %v7459 = vadd.f32 %v6793, %v7242
  %v7460 = vadd.f32 %v6794, %v7244
  %v7461 = vadd.f32 %v6795, %v7246
  %v7462 = vadd.f32 %v6796, %v7250
  %v7463 = vadd.f32 %v6797, %v7252
  %v7464 = vadd.f32 %v6798, %v7254
  %v7465 = vadd.f32 %v6799, %v7256
  %v7466 = vadd.f32 %v6800, %v7260
  %v7467 = vadd.f32 %v6801, %v7262
  %v7468 = vadd.f32 %v6802, %v7264
  %v7469 = vadd.f32 %v6803, %v7266
  %v7470 = vadd.f32 %v6804, %v7270
  %v7471 = vadd.f32 %v6805, %v7272
  %v7472 = vadd.f32 %v6806, %v7274
  %v7473 = vadd.f32 %v6807, %v7276
  %v7474 = vadd.f32 %v6808, %v7280
  %v7475 = vadd.f32 %v6809, %v7282
  %v7476 = vadd.f32 %v6810, %v7284
  %v7477 = vadd.f32 %v6811, %v7286
  %v7478 = vadd.f32 %v6812, %v7290
  %v7479 = vadd.f32 %v6813, %v7292
  %v7480 = vadd.f32 %v6814, %v7294
  %v7481 = vadd.f32 %v6815, %v7296
  %v7482 = vadd.f32 %v6816, %v7300
  %v7483 = vadd.f32 %v6817, %v7302
  %v7484 = vadd.f32 %v6818, %v7304
  %v7485 = vadd.f32 %v6819, %v7306
  %v7486 = vadd.f32 %v6820, %v7310
  %v7487 = vadd.f32 %v6821, %v7312
  %v7488 = vadd.f32 %v6822, %v7314
  %v7489 = vadd.f32 %v6823, %v7316
  %v7490 = vadd.f32 %v6824, %v7320
  %v7491 = vadd.f32 %v6825, %v7322
  %v7492 = vadd.f32 %v6826, %v7324
  %v7493 = vadd.f32 %v6827, %v7326
  %v7494 = vadd.f32 %v6828, %v7330
  %v7495 = vadd.f32 %v6829, %v7332
  %v7496 = vadd.f32 %v6830, %v7334
  %v7497 = vadd.f32 %v6831, %v7336
  %v7498 = vadd.f32 %v6832, %v7340
  %v7499 = vadd.f32 %v6833, %v7342
  %v7500 = vadd.f32 %v6834, %v7344
  %v7501 = vadd.f32 %v6835, %v7346
  %v7502 = vadd.f32 %v6836, %v7350
  %v7503 = vadd.f32 %v6837, %v7352
  %v7504 = vadd.f32 %v6838, %v7354
  %v7505 = vadd.f32 %v6839, %v7356
  %v7506 = vadd.f32 %v6840, %v7360
  %v7507 = vadd.f32 %v6841, %v7362
  %v7508 = vadd.f32 %v6842, %v7364
  %v7509 = vadd.f32 %v6843, %v7366
  %v7510 = vadd.f32 %v6844, %v7370
  %v7511 = vadd.f32 %v6845, %v7372
  %v7512 = vadd.f32 %v6846, %v7374
  %v7513 = vadd.f32 %v6847, %v7376
  %v7514 = vadd.f32 %v6848, %v7380
  %v7515 = vadd.f32 %v6849, %v7382
  %v7516 = vadd.f32 %v6850, %v7384
  %v7517 = vadd.f32 %v6851, %v7386
  %v7518 = vadd.f32 %v6852, %v7390
  %v7519 = vadd.f32 %v6853, %v7392
  %v7520 = vadd.f32 %v6854, %v7394
  %v7521 = vadd.f32 %v6855, %v7396
  %v7522 = vadd.f32 %v6856, %v7400
  %v7523 = vadd.f32 %v6857, %v7402
  %v7524 = vadd.f32 %v6858, %v7404
  %v7525 = vadd.f32 %v6859, %v7406
  %v7526 = vadd.f32 %v6860, %v7410
  %v7527 = vadd.f32 %v6861, %v7412
  %v7528 = vadd.f32 %v6862, %v7414
  %v7529 = vadd.f32 %v6863, %v7416
  %v7530 = vld [vmem:[#allocation2 + $0x3] sm:$0xff]
  %v7531 = vld [vmem:[#allocation2 + $0xb] sm:$0xff]
  %v7532 = vld [vmem:[#allocation2 + $0x13] sm:$0xff]
  %v7533 = vld [vmem:[#allocation2 + $0x1b] sm:$0xff]
  %v7534 = vld [vmem:[#allocation2 + $0x23] sm:$0xff]
  %v7535 = vld [vmem:[#allocation2 + $0x2b] sm:$0xff]
  %v7536 = vld [vmem:[#allocation2 + $0x33] sm:$0xff]
  %v7537 = vld [vmem:[#allocation2 + $0x3b] sm:$0xff]
  %v7538 = vld [vmem:[#allocation2 + $0x43] sm:$0xff]
  %v7539 = vld [vmem:[#allocation2 + $0x4b] sm:$0xff]
  %v7540 = vld [vmem:[#allocation2 + $0x53] sm:$0xff]
  %v7541 = vld [vmem:[#allocation2 + $0x5b] sm:$0xff]
  %v7542 = vld [vmem:[#allocation2 + $0x63] sm:$0xff]
  %v7543 = vld [vmem:[#allocation2 + $0x6b] sm:$0xff]
  %v7544 = vld [vmem:[#allocation2 + $0x73] sm:$0xff]
  %v7545 = vld [vmem:[#allocation2 + $0x7b] sm:$0xff]
  %v7546 = vld [vmem:[#allocation2 + $0x83] sm:$0xff]
  %v7547 = vld [vmem:[#allocation2 + $0x8b] sm:$0xff]
  %v7548 = vld [vmem:[#allocation2 + $0x93] sm:$0xff]
  %v7549 = vld [vmem:[#allocation2 + $0x9b] sm:$0xff]
  %v7550 = vld [vmem:[#allocation2 + $0xa3] sm:$0xff]
  %v7551 = vld [vmem:[#allocation2 + $0xab] sm:$0xff]
  %v7552 = vld [vmem:[#allocation2 + $0xb3] sm:$0xff]
  %v7553 = vld [vmem:[#allocation2 + $0xbb] sm:$0xff]
  %v7554 = vld [vmem:[#allocation2 + $0xc3] sm:$0xff]
  %v7555 = vld [vmem:[#allocation2 + $0xcb] sm:$0xff]
  %v7556 = vld [vmem:[#allocation2 + $0xd3] sm:$0xff]
  %v7557 = vld [vmem:[#allocation2 + $0xdb] sm:$0xff]
  %v7558 = vld [vmem:[#allocation2 + $0xe3] sm:$0xff]
  %v7559 = vld [vmem:[#allocation2 + $0xeb] sm:$0xff]
  %v7560 = vld [vmem:[#allocation2 + $0xf3] sm:$0xff]
  %v7561 = vld [vmem:[#allocation2 + $0xfb] sm:$0xff]
  %v7562 = vld [vmem:[#allocation2 + $0x103] sm:$0xff]
  %v7563 = vld [vmem:[#allocation2 + $0x10b] sm:$0xff]
  %v7564 = vld [vmem:[#allocation2 + $0x113] sm:$0xff]
  %v7565 = vld [vmem:[#allocation2 + $0x11b] sm:$0xff]
  %v7566 = vld [vmem:[#allocation2 + $0x123] sm:$0xff]
  %v7567 = vld [vmem:[#allocation2 + $0x12b] sm:$0xff]
  %v7568 = vld [vmem:[#allocation2 + $0x133] sm:$0xff]
  %v7569 = vld [vmem:[#allocation2 + $0x13b] sm:$0xff]
  %v7570 = vld [vmem:[#allocation2 + $0x143] sm:$0xff]
  %v7571 = vld [vmem:[#allocation2 + $0x14b] sm:$0xff]
  %v7572 = vld [vmem:[#allocation2 + $0x153] sm:$0xff]
  %v7573 = vld [vmem:[#allocation2 + $0x15b] sm:$0xff]
  %v7574 = vld [vmem:[#allocation2 + $0x163] sm:$0xff]
  %v7575 = vld [vmem:[#allocation2 + $0x16b] sm:$0xff]
  %v7576 = vld [vmem:[#allocation2 + $0x173] sm:$0xff]
  %v7577 = vld [vmem:[#allocation2 + $0x17b] sm:$0xff]
  %v7578 = vld [vmem:[#allocation2 + $0x183] sm:$0xff]
  %v7579 = vld [vmem:[#allocation2 + $0x18b] sm:$0xff]
  %v7580 = vld [vmem:[#allocation2 + $0x193] sm:$0xff]
  %v7581 = vld [vmem:[#allocation2 + $0x19b] sm:$0xff]
  %v7582 = vld [vmem:[#allocation2 + $0x1a3] sm:$0xff]
  %v7583 = vld [vmem:[#allocation2 + $0x1ab] sm:$0xff]
  %v7584 = vld [vmem:[#allocation2 + $0x1b3] sm:$0xff]
  %v7585 = vld [vmem:[#allocation2 + $0x1bb] sm:$0xff]
  %s7586 = scalar_lea.vmem %s5, 264
  %v7587 = vld [vmem:[%s7586] sm:$0xff]
  %v7588 = vld [vmem:[%s7586 + $0x8] sm:$0xff]
  %v7589 = vld [vmem:[%s7586 + $0x10] sm:$0xff]
  %v7590 = vld [vmem:[%s7586 + $0x18] sm:$0xff]
  %v7591 = vld [vmem:[%s7586 + $0x20] sm:$0xff]
  %v7592 = vld [vmem:[%s7586 + $0x28] sm:$0xff]
  %v7593 = vld [vmem:[%s7586 + $0x30] sm:$0xff]
  %v7594 = vld [vmem:[%s7586 + $0x38] sm:$0xff]
  %v7595 = vld [vmem:[%s7586 + $0x40] sm:$0xff]
  %v7596 = vld [vmem:[%s7586 + $0x48] sm:$0xff]
  %v7597 = vld [vmem:[%s7586 + $0x50] sm:$0x33]
  %v7598 = vpack.c.bf16 %v7531, %v7530
  %v7599 = vpack.c.bf16 %v7533, %v7532
  %v7600 = vpack.c.bf16 %v7535, %v7534
  %v7601 = vpack.c.bf16 %v7537, %v7536
  %v7602 = vpack.c.bf16 %v7539, %v7538
  %v7603 = vpack.c.bf16 %v7541, %v7540
  %v7604 = vpack.c.bf16 %v7543, %v7542
  %v7605 = vpack.c.bf16 %v7545, %v7544
  %v7606 = vpack.c.bf16 %v7547, %v7546
  %v7607 = vpack.c.bf16 %v7549, %v7548
  %v7608 = vpack.c.bf16 %v7551, %v7550
  %v7609 = vpack.c.bf16 %v7553, %v7552
  %v7610 = vpack.c.bf16 %v7555, %v7554
  %v7611 = vpack.c.bf16 %v7557, %v7556
  %v7612 = vpack.c.bf16 %v7559, %v7558
  %v7613 = vpack.c.bf16 %v7561, %v7560
  %v7614 = vpack.c.bf16 %v7563, %v7562
  %v7615 = vpack.c.bf16 %v7565, %v7564
  %v7616 = vpack.c.bf16 %v7567, %v7566
  %v7617 = vpack.c.bf16 %v7569, %v7568
  %v7618 = vpack.c.bf16 %v7571, %v7570
  %v7619 = vpack.c.bf16 %v7573, %v7572
  %v7620 = vpack.c.bf16 %v7575, %v7574
  %v7621 = vpack.c.bf16 %v7577, %v7576
  %v7622 = vpack.c.bf16 %v7579, %v7578
  %v7623 = vpack.c.bf16 %v7581, %v7580
  %v7624 = vpack.c.bf16 %v7583, %v7582
  %v7625 = vpack.c.bf16 %v7585, %v7584
  %v7637 = vunpack.c.l.b16 %v7587
  %v7638 = vunpack.c.h.b16 %v7587
  %v7639 = vunpack.c.l.b16 %v7588
  %v7640 = vunpack.c.h.b16 %v7588
  %v7641 = vunpack.c.l.b16 %v7589
  %v7642 = vunpack.c.h.b16 %v7589
  %v7643 = vunpack.c.l.b16 %v7590
  %v7644 = vunpack.c.h.b16 %v7590
  %v7645 = vunpack.c.l.b16 %v7591
  %v7646 = vunpack.c.h.b16 %v7591
  %v7647 = vunpack.c.l.b16 %v7592
  %v7648 = vunpack.c.h.b16 %v7592
  %v7649 = vunpack.c.l.b16 %v7593
  %v7650 = vunpack.c.h.b16 %v7593
  %v7651 = vunpack.c.l.b16 %v7594
  %v7652 = vunpack.c.h.b16 %v7594
  %v7653 = vunpack.c.l.b16 %v7595
  %v7654 = vunpack.c.h.b16 %v7595
  %v7655 = vunpack.c.l.b16 %v7596
  %v7656 = vunpack.c.h.b16 %v7596
  %v7657 = vunpack.c.l.b16 %v7597
  %v7658 = vunpack.c.h.b16 %v7597
  %v7659 = vpack.c.b16 %v7639, %v7637
  %v7660 = vpack.c.b16 %v7640, %v7638
  %v7661 = vpack.c.b16 %v7643, %v7641
  %v7662 = vpack.c.b16 %v7644, %v7642
  %v7663 = vpack.c.b16 %v7647, %v7645
  %v7664 = vpack.c.b16 %v7648, %v7646
  %v7665 = vpack.c.b16 %v7651, %v7649
  %v7666 = vpack.c.b16 %v7652, %v7650
  %v7667 = vpack.c.b16 %v7655, %v7653
  %v7668 = vpack.c.b16 %v7656, %v7654
  %v7669 = vpack.c.b16 %v7657, %v7657
  %v7670 = vpack.c.b16 %v7658, %v7658
  %v7682 = vsel %vm5462, %v7598, 0
  %v7685 = vsel %vm5462, %v7599, 0
  %v7688 = vsel %vm5462, %v7600, 0
  %v7691 = vsel %vm5462, %v7601, 0
  %v7694 = vsel %vm5462, %v7602, 0
  %v7697 = vsel %vm5462, %v7603, 0
  %v7700 = vsel %vm5462, %v7604, 0
  %v7703 = vsel %vm5462, %v7605, 0
  %v7706 = vsel %vm5462, %v7606, 0
  %v7709 = vsel %vm5462, %v7607, 0
  %v7712 = vsel %vm5462, %v7608, 0
  %v7715 = vsel %vm5462, %v7609, 0
  %v7718 = vsel %vm5462, %v7610, 0
  %v7721 = vsel %vm5462, %v7611, 0
  %v7724 = vsel %vm5462, %v7612, 0
  %v7727 = vsel %vm5462, %v7613, 0
  %v7730 = vsel %vm5462, %v7614, 0
  %v7733 = vsel %vm5462, %v7615, 0
  %v7736 = vsel %vm5462, %v7616, 0
  %v7739 = vsel %vm5462, %v7617, 0
  %v7742 = vsel %vm5462, %v7618, 0
  %v7745 = vsel %vm5462, %v7619, 0
  %v7748 = vsel %vm5462, %v7620, 0
  %v7751 = vsel %vm5462, %v7621, 0
  %v7754 = vsel %vm5462, %v7622, 0
  %v7757 = vsel %vm5462, %v7623, 0
  %v7760 = vsel %vm5462, %v7624, 0
  %v7763 = vsel %vm5462, %v7625, 0
  %v7766 = vsel %vm5755, %v7669, 0
  %v7769 = vsel %vm5755, %v7670, 0
  %7771 = vmatprep.subr.bf16.mxu0 %v7660
  %7772 = vmatpush1.bf16.msra.mxu0 %v7659
  %7773 = vmatprep.subr.bf16.mxu0 %v7662
  %7774 = vmatpush1.bf16.msra.mxu0 %v7661
  %7775 = vmatprep.subr.bf16.mxu0 %v7664
  %7776 = vmatpush1.bf16.msra.mxu0 %v7663
  %7777 = vmatprep.subr.bf16.mxu0 %v7666
  %7778 = vmatpush1.bf16.msra.mxu0 %v7665
  %7779 = vmatprep.subr.bf16.mxu0 %v7668
  %7780 = vmatpush1.bf16.msra.mxu0 %v7667
  %7781 = vmatprep.subr.bf16.mxu0 %v7769
  %7782 = vmatpush1.bf16.msra.mxu0 %v7766
  %7783 = vmatprep.subr.bf16.mxu0 0
  %7784 = vmatpush1.bf16.msra.mxu0 0
  %7785 = vmatprep.subr.bf16.mxu0 0
  %7786 = vmatpush1.bf16.msra.mxu0 0
  %7787 = vmatprep.subr.bf16.mxu0 0
  %7788 = vmatpush1.bf16.msra.mxu0 0
  %7789 = vmatprep.subr.bf16.mxu0 0
  %7790 = vmatpush1.bf16.msra.mxu0 0
  %7791 = vmatprep.subr.bf16.mxu0 0
  %7792 = vmatpush1.bf16.msra.mxu0 0
  %7793 = vmatprep.subr.bf16.mxu0 0
  %7794 = vmatpush1.bf16.msra.mxu0 0
  %7795 = vmatprep.subr.bf16.mxu0 0
  %7796 = vmatpush1.bf16.msra.mxu0 0
  %7797 = vmatprep.subr.bf16.mxu0 0
  %7798 = vmatpush1.bf16.msra.mxu0 0
  %7799 = vmatprep.subr.bf16.mxu0 0
  %7800 = vmatpush1.bf16.msra.mxu0 0
  %7801 = vmatprep.subr.bf16.mxu0 0
  %7802 = vmatpush1.bf16.msra.mxu0 0
  %7803 = vmatprep.mubr.bf16.mxu0 0
  %7804 = vmatmul.mubr.bf16.gmra.mrb[0].mxu0 %v7682
  %v7805 = vpop.f32.mrb[0].mxu0
  %v7806 = vadd.f32 0.0, %v7805
  %v7807 = vpop.f32.mrb[0].mxu0
  %v7808 = vadd.f32 0.0, %v7807
  %v7809 = vpop.f32.mrb[0].mxu0
  %v7810 = vadd.f32 0.0, %v7809
  %v7811 = vpop.f32.mrb[0].mxu0
  %v7812 = vadd.f32 0.0, %v7811
  %7813 = vmatprep.mubr.bf16.mxu0 0
  %7814 = vmatmul.mubr.bf16.gmra.mrb[0].mxu0 %v7685
  %v7815 = vpop.f32.mrb[0].mxu0
  %v7816 = vadd.f32 0.0, %v7815
  %v7817 = vpop.f32.mrb[0].mxu0
  %v7818 = vadd.f32 0.0, %v7817
  %v7819 = vpop.f32.mrb[0].mxu0
  %v7820 = vadd.f32 0.0, %v7819
  %v7821 = vpop.f32.mrb[0].mxu0
  %v7822 = vadd.f32 0.0, %v7821
  %7823 = vmatprep.mubr.bf16.mxu0 0
  %7824 = vmatmul.mubr.bf16.gmra.mrb[0].mxu0 %v7688
  %v7825 = vpop.f32.mrb[0].mxu0
  %v7826 = vadd.f32 0.0, %v7825
  %v7827 = vpop.f32.mrb[0].mxu0
  %v7828 = vadd.f32 0.0, %v7827
  %v7829 = vpop.f32.mrb[0].mxu0
  %v7830 = vadd.f32 0.0, %v7829
  %v7831 = vpop.f32.mrb[0].mxu0
  %v7832 = vadd.f32 0.0, %v7831
  %7833 = vmatprep.mubr.bf16.mxu0 0
  %7834 = vmatmul.mubr.bf16.gmra.mrb[0].mxu0 %v7691
  %v7835 = vpop.f32.mrb[0].mxu0
  %v7836 = vadd.f32 0.0, %v7835
  %v7837 = vpop.f32.mrb[0].mxu0
  %v7838 = vadd.f32 0.0, %v7837
  %v7839 = vpop.f32.mrb[0].mxu0
  %v7840 = vadd.f32 0.0, %v7839
  %v7841 = vpop.f32.mrb[0].mxu0
  %v7842 = vadd.f32 0.0, %v7841
  %7843 = vmatprep.mubr.bf16.mxu0 0
  %7844 = vmatmul.mubr.bf16.gmra.mrb[0].mxu0 %v7694
  %v7845 = vpop.f32.mrb[0].mxu0
  %v7846 = vadd.f32 0.0, %v7845
  %v7847 = vpop.f32.mrb[0].mxu0
  %v7848 = vadd.f32 0.0, %v7847
  %v7849 = vpop.f32.mrb[0].mxu0
  %v7850 = vadd.f32 0.0, %v7849
  %v7851 = vpop.f32.mrb[0].mxu0
  %v7852 = vadd.f32 0.0, %v7851
  %7853 = vmatprep.mubr.bf16.mxu0 0
  %7854 = vmatmul.mubr.bf16.gmra.mrb[0].mxu0 %v7697
  %v7855 = vpop.f32.mrb[0].mxu0
  %v7856 = vadd.f32 0.0, %v7855
  %v7857 = vpop.f32.mrb[0].mxu0
  %v7858 = vadd.f32 0.0, %v7857
  %v7859 = vpop.f32.mrb[0].mxu0
  %v7860 = vadd.f32 0.0, %v7859
  %v7861 = vpop.f32.mrb[0].mxu0
  %v7862 = vadd.f32 0.0, %v7861
  %7863 = vmatprep.mubr.bf16.mxu0 0
  %7864 = vmatmul.mubr.bf16.gmra.mrb[0].mxu0 %v7700
  %v7865 = vpop.f32.mrb[0].mxu0
  %v7866 = vadd.f32 0.0, %v7865
  %v7867 = vpop.f32.mrb[0].mxu0
  %v7868 = vadd.f32 0.0, %v7867
  %v7869 = vpop.f32.mrb[0].mxu0
  %v7870 = vadd.f32 0.0, %v7869
  %v7871 = vpop.f32.mrb[0].mxu0
  %v7872 = vadd.f32 0.0, %v7871
  %7873 = vmatprep.mubr.bf16.mxu0 0
  %7874 = vmatmul.mubr.bf16.gmra.mrb[0].mxu0 %v7703
  %v7875 = vpop.f32.mrb[0].mxu0
  %v7876 = vadd.f32 0.0, %v7875
  %v7877 = vpop.f32.mrb[0].mxu0
  %v7878 = vadd.f32 0.0, %v7877
  %v7879 = vpop.f32.mrb[0].mxu0
  %v7880 = vadd.f32 0.0, %v7879
  %v7881 = vpop.f32.mrb[0].mxu0
  %v7882 = vadd.f32 0.0, %v7881
  %7883 = vmatprep.mubr.bf16.mxu0 0
  %7884 = vmatmul.mubr.bf16.gmra.mrb[0].mxu0 %v7706
  %v7885 = vpop.f32.mrb[0].mxu0
  %v7886 = vadd.f32 0.0, %v7885
  %v7887 = vpop.f32.mrb[0].mxu0
  %v7888 = vadd.f32 0.0, %v7887
  %v7889 = vpop.f32.mrb[0].mxu0
  %v7890 = vadd.f32 0.0, %v7889
  %v7891 = vpop.f32.mrb[0].mxu0
  %v7892 = vadd.f32 0.0, %v7891
  %7893 = vmatprep.mubr.bf16.mxu0 0
  %7894 = vmatmul.mubr.bf16.gmra.mrb[0].mxu0 %v7709
  %v7895 = vpop.f32.mrb[0].mxu0
  %v7896 = vadd.f32 0.0, %v7895
  %v7897 = vpop.f32.mrb[0].mxu0
  %v7898 = vadd.f32 0.0, %v7897
  %v7899 = vpop.f32.mrb[0].mxu0
  %v7900 = vadd.f32 0.0, %v7899
  %v7901 = vpop.f32.mrb[0].mxu0
  %v7902 = vadd.f32 0.0, %v7901
  %7903 = vmatprep.mubr.bf16.mxu0 0
  %7904 = vmatmul.mubr.bf16.gmra.mrb[0].mxu0 %v7712
  %v7905 = vpop.f32.mrb[0].mxu0
  %v7906 = vadd.f32 0.0, %v7905
  %v7907 = vpop.f32.mrb[0].mxu0
  %v7908 = vadd.f32 0.0, %v7907
  %v7909 = vpop.f32.mrb[0].mxu0
  %v7910 = vadd.f32 0.0, %v7909
  %v7911 = vpop.f32.mrb[0].mxu0
  %v7912 = vadd.f32 0.0, %v7911
  %7913 = vmatprep.mubr.bf16.mxu0 0
  %7914 = vmatmul.mubr.bf16.gmra.mrb[0].mxu0 %v7715
  %v7915 = vpop.f32.mrb[0].mxu0
  %v7916 = vadd.f32 0.0, %v7915
  %v7917 = vpop.f32.mrb[0].mxu0
  %v7918 = vadd.f32 0.0, %v7917
  %v7919 = vpop.f32.mrb[0].mxu0
  %v7920 = vadd.f32 0.0, %v7919
  %v7921 = vpop.f32.mrb[0].mxu0
  %v7922 = vadd.f32 0.0, %v7921
  %7923 = vmatprep.mubr.bf16.mxu0 0
  %7924 = vmatmul.mubr.bf16.gmra.mrb[0].mxu0 %v7718
  %v7925 = vpop.f32.mrb[0].mxu0
  %v7926 = vadd.f32 0.0, %v7925
  %v7927 = vpop.f32.mrb[0].mxu0
  %v7928 = vadd.f32 0.0, %v7927
  %v7929 = vpop.f32.mrb[0].mxu0
  %v7930 = vadd.f32 0.0, %v7929
  %v7931 = vpop.f32.mrb[0].mxu0
  %v7932 = vadd.f32 0.0, %v7931
  %7933 = vmatprep.mubr.bf16.mxu0 0
  %7934 = vmatmul.mubr.bf16.gmra.mrb[0].mxu0 %v7721
  %v7935 = vpop.f32.mrb[0].mxu0
  %v7936 = vadd.f32 0.0, %v7935
  %v7937 = vpop.f32.mrb[0].mxu0
  %v7938 = vadd.f32 0.0, %v7937
  %v7939 = vpop.f32.mrb[0].mxu0
  %v7940 = vadd.f32 0.0, %v7939
  %v7941 = vpop.f32.mrb[0].mxu0
  %v7942 = vadd.f32 0.0, %v7941
  %7943 = vmatprep.mubr.bf16.mxu0 0
  %7944 = vmatmul.mubr.bf16.gmra.mrb[0].mxu0 %v7724
  %v7945 = vpop.f32.mrb[0].mxu0
  %v7946 = vadd.f32 0.0, %v7945
  %v7947 = vpop.f32.mrb[0].mxu0
  %v7948 = vadd.f32 0.0, %v7947
  %v7949 = vpop.f32.mrb[0].mxu0
  %v7950 = vadd.f32 0.0, %v7949
  %v7951 = vpop.f32.mrb[0].mxu0
  %v7952 = vadd.f32 0.0, %v7951
  %7953 = vmatprep.mubr.bf16.mxu0 0
  %7954 = vmatmul.mubr.bf16.gmra.mrb[0].mxu0 %v7727
  %v7955 = vpop.f32.mrb[0].mxu0
  %v7956 = vadd.f32 0.0, %v7955
  %v7957 = vpop.f32.mrb[0].mxu0
  %v7958 = vadd.f32 0.0, %v7957
  %v7959 = vpop.f32.mrb[0].mxu0
  %v7960 = vadd.f32 0.0, %v7959
  %v7961 = vpop.f32.mrb[0].mxu0
  %v7962 = vadd.f32 0.0, %v7961
  %7963 = vmatprep.mubr.bf16.mxu0 0
  %7964 = vmatmul.mubr.bf16.gmra.mrb[0].mxu0 %v7730
  %v7965 = vpop.f32.mrb[0].mxu0
  %v7966 = vadd.f32 0.0, %v7965
  %v7967 = vpop.f32.mrb[0].mxu0
  %v7968 = vadd.f32 0.0, %v7967
  %v7969 = vpop.f32.mrb[0].mxu0
  %v7970 = vadd.f32 0.0, %v7969
  %v7971 = vpop.f32.mrb[0].mxu0
  %v7972 = vadd.f32 0.0, %v7971
  %7973 = vmatprep.mubr.bf16.mxu0 0
  %7974 = vmatmul.mubr.bf16.gmra.mrb[0].mxu0 %v7733
  %v7975 = vpop.f32.mrb[0].mxu0
  %v7976 = vadd.f32 0.0, %v7975
  %v7977 = vpop.f32.mrb[0].mxu0
  %v7978 = vadd.f32 0.0, %v7977
  %v7979 = vpop.f32.mrb[0].mxu0
  %v7980 = vadd.f32 0.0, %v7979
  %v7981 = vpop.f32.mrb[0].mxu0
  %v7982 = vadd.f32 0.0, %v7981
  %7983 = vmatprep.mubr.bf16.mxu0 0
  %7984 = vmatmul.mubr.bf16.gmra.mrb[0].mxu0 %v7736
  %v7985 = vpop.f32.mrb[0].mxu0
  %v7986 = vadd.f32 0.0, %v7985
  %v7987 = vpop.f32.mrb[0].mxu0
  %v7988 = vadd.f32 0.0, %v7987
  %v7989 = vpop.f32.mrb[0].mxu0
  %v7990 = vadd.f32 0.0, %v7989
  %v7991 = vpop.f32.mrb[0].mxu0
  %v7992 = vadd.f32 0.0, %v7991
  %7993 = vmatprep.mubr.bf16.mxu0 0
  %7994 = vmatmul.mubr.bf16.gmra.mrb[0].mxu0 %v7739
  %v7995 = vpop.f32.mrb[0].mxu0
  %v7996 = vadd.f32 0.0, %v7995
  %v7997 = vpop.f32.mrb[0].mxu0
  %v7998 = vadd.f32 0.0, %v7997
  %v7999 = vpop.f32.mrb[0].mxu0
  %v8000 = vadd.f32 0.0, %v7999
  %v8001 = vpop.f32.mrb[0].mxu0
  %v8002 = vadd.f32 0.0, %v8001
  %8003 = vmatprep.mubr.bf16.mxu0 0
  %8004 = vmatmul.mubr.bf16.gmra.mrb[0].mxu0 %v7742
  %v8005 = vpop.f32.mrb[0].mxu0
  %v8006 = vadd.f32 0.0, %v8005
  %v8007 = vpop.f32.mrb[0].mxu0
  %v8008 = vadd.f32 0.0, %v8007
  %v8009 = vpop.f32.mrb[0].mxu0
  %v8010 = vadd.f32 0.0, %v8009
  %v8011 = vpop.f32.mrb[0].mxu0
  %v8012 = vadd.f32 0.0, %v8011
  %8013 = vmatprep.mubr.bf16.mxu0 0
  %8014 = vmatmul.mubr.bf16.gmra.mrb[0].mxu0 %v7745
  %v8015 = vpop.f32.mrb[0].mxu0
  %v8016 = vadd.f32 0.0, %v8015
  %v8017 = vpop.f32.mrb[0].mxu0
  %v8018 = vadd.f32 0.0, %v8017
  %v8019 = vpop.f32.mrb[0].mxu0
  %v8020 = vadd.f32 0.0, %v8019
  %v8021 = vpop.f32.mrb[0].mxu0
  %v8022 = vadd.f32 0.0, %v8021
  %8023 = vmatprep.mubr.bf16.mxu0 0
  %8024 = vmatmul.mubr.bf16.gmra.mrb[0].mxu0 %v7748
  %v8025 = vpop.f32.mrb[0].mxu0
  %v8026 = vadd.f32 0.0, %v8025
  %v8027 = vpop.f32.mrb[0].mxu0
  %v8028 = vadd.f32 0.0, %v8027
  %v8029 = vpop.f32.mrb[0].mxu0
  %v8030 = vadd.f32 0.0, %v8029
  %v8031 = vpop.f32.mrb[0].mxu0
  %v8032 = vadd.f32 0.0, %v8031
  %8033 = vmatprep.mubr.bf16.mxu0 0
  %8034 = vmatmul.mubr.bf16.gmra.mrb[0].mxu0 %v7751
  %v8035 = vpop.f32.mrb[0].mxu0
  %v8036 = vadd.f32 0.0, %v8035
  %v8037 = vpop.f32.mrb[0].mxu0
  %v8038 = vadd.f32 0.0, %v8037
  %v8039 = vpop.f32.mrb[0].mxu0
  %v8040 = vadd.f32 0.0, %v8039
  %v8041 = vpop.f32.mrb[0].mxu0
  %v8042 = vadd.f32 0.0, %v8041
  %8043 = vmatprep.mubr.bf16.mxu0 0
  %8044 = vmatmul.mubr.bf16.gmra.mrb[0].mxu0 %v7754
  %v8045 = vpop.f32.mrb[0].mxu0
  %v8046 = vadd.f32 0.0, %v8045
  %v8047 = vpop.f32.mrb[0].mxu0
  %v8048 = vadd.f32 0.0, %v8047
  %v8049 = vpop.f32.mrb[0].mxu0
  %v8050 = vadd.f32 0.0, %v8049
  %v8051 = vpop.f32.mrb[0].mxu0
  %v8052 = vadd.f32 0.0, %v8051
  %8053 = vmatprep.mubr.bf16.mxu0 0
  %8054 = vmatmul.mubr.bf16.gmra.mrb[0].mxu0 %v7757
  %v8055 = vpop.f32.mrb[0].mxu0
  %v8056 = vadd.f32 0.0, %v8055
  %v8057 = vpop.f32.mrb[0].mxu0
  %v8058 = vadd.f32 0.0, %v8057
  %v8059 = vpop.f32.mrb[0].mxu0
  %v8060 = vadd.f32 0.0, %v8059
  %v8061 = vpop.f32.mrb[0].mxu0
  %v8062 = vadd.f32 0.0, %v8061
  %8063 = vmatprep.mubr.bf16.mxu0 0
  %8064 = vmatmul.mubr.bf16.gmra.mrb[0].mxu0 %v7760
  %v8065 = vpop.f32.mrb[0].mxu0
  %v8066 = vadd.f32 0.0, %v8065
  %v8067 = vpop.f32.mrb[0].mxu0
  %v8068 = vadd.f32 0.0, %v8067
  %v8069 = vpop.f32.mrb[0].mxu0
  %v8070 = vadd.f32 0.0, %v8069
  %v8071 = vpop.f32.mrb[0].mxu0
  %v8072 = vadd.f32 0.0, %v8071
  %8073 = vmatprep.mubr.bf16.mxu0 0
  %8074 = vmatmul.mubr.bf16.gmra.mrb[0].mxu0 %v7763
  %v8075 = vpop.f32.mrb[0].mxu0
  %v8076 = vadd.f32 0.0, %v8075
  %v8077 = vpop.f32.mrb[0].mxu0
  %v8078 = vadd.f32 0.0, %v8077
  %v8079 = vpop.f32.mrb[0].mxu0
  %v8080 = vadd.f32 0.0, %v8079
  %v8081 = vpop.f32.mrb[0].mxu0
  %v8082 = vadd.f32 0.0, %v8081
  %8083 = vdwg.mxu0
  %v8084 = vadd.f32 %v7418, %v7806
  %v8085 = vadd.f32 %v7419, %v7808
  %v8086 = vadd.f32 %v7420, %v7810
  %v8087 = vadd.f32 %v7421, %v7812
  %v8088 = vadd.f32 %v7422, %v7816
  %v8089 = vadd.f32 %v7423, %v7818
  %v8090 = vadd.f32 %v7424, %v7820
  %v8091 = vadd.f32 %v7425, %v7822
  %v8092 = vadd.f32 %v7426, %v7826
  %v8093 = vadd.f32 %v7427, %v7828
  %v8094 = vadd.f32 %v7428, %v7830
  %v8095 = vadd.f32 %v7429, %v7832
  %v8096 = vadd.f32 %v7430, %v7836
  %v8097 = vadd.f32 %v7431, %v7838
  %v8098 = vadd.f32 %v7432, %v7840
  %v8099 = vadd.f32 %v7433, %v7842
  %v8100 = vadd.f32 %v7434, %v7846
  %v8101 = vadd.f32 %v7435, %v7848
  %v8102 = vadd.f32 %v7436, %v7850
  %v8103 = vadd.f32 %v7437, %v7852
  %v8104 = vadd.f32 %v7438, %v7856
  %v8105 = vadd.f32 %v7439, %v7858
  %v8106 = vadd.f32 %v7440, %v7860
  %v8107 = vadd.f32 %v7441, %v7862
  %v8108 = vadd.f32 %v7442, %v7866
  %v8109 = vadd.f32 %v7443, %v7868
  %v8110 = vadd.f32 %v7444, %v7870
  %v8111 = vadd.f32 %v7445, %v7872
  %v8112 = vadd.f32 %v7446, %v7876
  %v8113 = vadd.f32 %v7447, %v7878
  %v8114 = vadd.f32 %v7448, %v7880
  %v8115 = vadd.f32 %v7449, %v7882
  %v8116 = vadd.f32 %v7450, %v7886
  %v8117 = vadd.f32 %v7451, %v7888
  %v8118 = vadd.f32 %v7452, %v7890
  %v8119 = vadd.f32 %v7453, %v7892
  %v8120 = vadd.f32 %v7454, %v7896
  %v8121 = vadd.f32 %v7455, %v7898
  %v8122 = vadd.f32 %v7456, %v7900
  %v8123 = vadd.f32 %v7457, %v7902
  %v8124 = vadd.f32 %v7458, %v7906
  %v8125 = vadd.f32 %v7459, %v7908
  %v8126 = vadd.f32 %v7460, %v7910
  %v8127 = vadd.f32 %v7461, %v7912
  %v8128 = vadd.f32 %v7462, %v7916
  %v8129 = vadd.f32 %v7463, %v7918
  %v8130 = vadd.f32 %v7464, %v7920
  %v8131 = vadd.f32 %v7465, %v7922
  %v8132 = vadd.f32 %v7466, %v7926
  %v8133 = vadd.f32 %v7467, %v7928
  %v8134 = vadd.f32 %v7468, %v7930
  %v8135 = vadd.f32 %v7469, %v7932
  %v8136 = vadd.f32 %v7470, %v7936
  %v8137 = vadd.f32 %v7471, %v7938
  %v8138 = vadd.f32 %v7472, %v7940
  %v8139 = vadd.f32 %v7473, %v7942
  %v8140 = vadd.f32 %v7474, %v7946
  %v8141 = vadd.f32 %v7475, %v7948
  %v8142 = vadd.f32 %v7476, %v7950
  %v8143 = vadd.f32 %v7477, %v7952
  %v8144 = vadd.f32 %v7478, %v7956
  %v8145 = vadd.f32 %v7479, %v7958
  %v8146 = vadd.f32 %v7480, %v7960
  %v8147 = vadd.f32 %v7481, %v7962
  %v8148 = vadd.f32 %v7482, %v7966
  %v8149 = vadd.f32 %v7483, %v7968
  %v8150 = vadd.f32 %v7484, %v7970
  %v8151 = vadd.f32 %v7485, %v7972
  %v8152 = vadd.f32 %v7486, %v7976
  %v8153 = vadd.f32 %v7487, %v7978
  %v8154 = vadd.f32 %v7488, %v7980
  %v8155 = vadd.f32 %v7489, %v7982
  %v8156 = vadd.f32 %v7490, %v7986
  %v8157 = vadd.f32 %v7491, %v7988
  %v8158 = vadd.f32 %v7492, %v7990
  %v8159 = vadd.f32 %v7493, %v7992
  %v8160 = vadd.f32 %v7494, %v7996
  %v8161 = vadd.f32 %v7495, %v7998
  %v8162 = vadd.f32 %v7496, %v8000
  %v8163 = vadd.f32 %v7497, %v8002
  %v8164 = vadd.f32 %v7498, %v8006
  %v8165 = vadd.f32 %v7499, %v8008
  %v8166 = vadd.f32 %v7500, %v8010
  %v8167 = vadd.f32 %v7501, %v8012
  %v8168 = vadd.f32 %v7502, %v8016
  %v8169 = vadd.f32 %v7503, %v8018
  %v8170 = vadd.f32 %v7504, %v8020
  %v8171 = vadd.f32 %v7505, %v8022
  %v8172 = vadd.f32 %v7506, %v8026
  %v8173 = vadd.f32 %v7507, %v8028
  %v8174 = vadd.f32 %v7508, %v8030
  %v8175 = vadd.f32 %v7509, %v8032
  %v8176 = vadd.f32 %v7510, %v8036
  %v8177 = vadd.f32 %v7511, %v8038
  %v8178 = vadd.f32 %v7512, %v8040
  %v8179 = vadd.f32 %v7513, %v8042
  %v8180 = vadd.f32 %v7514, %v8046
  %v8181 = vadd.f32 %v7515, %v8048
  %v8182 = vadd.f32 %v7516, %v8050
  %v8183 = vadd.f32 %v7517, %v8052
  %v8184 = vadd.f32 %v7518, %v8056
  %v8185 = vadd.f32 %v7519, %v8058
  %v8186 = vadd.f32 %v7520, %v8060
  %v8187 = vadd.f32 %v7521, %v8062
  %v8188 = vadd.f32 %v7522, %v8066
  %v8189 = vadd.f32 %v7523, %v8068
  %v8190 = vadd.f32 %v7524, %v8070
  %v8191 = vadd.f32 %v7525, %v8072
  %v8192 = vadd.f32 %v7526, %v8076
  %v8193 = vadd.f32 %v7527, %v8078
  %v8194 = vadd.f32 %v7528, %v8080
  %v8195 = vadd.f32 %v7529, %v8082
  %v8196 = vld [vmem:[#allocation2 + $0x4] sm:$0xff]
  %v8197 = vld [vmem:[#allocation2 + $0xc] sm:$0xff]
  %v8198 = vld [vmem:[#allocation2 + $0x14] sm:$0xff]
  %v8199 = vld [vmem:[#allocation2 + $0x1c] sm:$0xff]
  %v8200 = vld [vmem:[#allocation2 + $0x24] sm:$0xff]
  %v8201 = vld [vmem:[#allocation2 + $0x2c] sm:$0xff]
  %v8202 = vld [vmem:[#allocation2 + $0x34] sm:$0xff]
  %v8203 = vld [vmem:[#allocation2 + $0x3c] sm:$0xff]
  %v8204 = vld [vmem:[#allocation2 + $0x44] sm:$0xff]
  %v8205 = vld [vmem:[#allocation2 + $0x4c] sm:$0xff]
  %v8206 = vld [vmem:[#allocation2 + $0x54] sm:$0xff]
  %v8207 = vld [vmem:[#allocation2 + $0x5c] sm:$0xff]
  %v8208 = vld [vmem:[#allocation2 + $0x64] sm:$0xff]
  %v8209 = vld [vmem:[#allocation2 + $0x6c] sm:$0xff]
  %v8210 = vld [vmem:[#allocation2 + $0x74] sm:$0xff]
  %v8211 = vld [vmem:[#allocation2 + $0x7c] sm:$0xff]
  %v8212 = vld [vmem:[#allocation2 + $0x84] sm:$0xff]
  %v8213 = vld [vmem:[#allocation2 + $0x8c] sm:$0xff]
  %v8214 = vld [vmem:[#allocation2 + $0x94] sm:$0xff]
  %v8215 = vld [vmem:[#allocation2 + $0x9c] sm:$0xff]
  %v8216 = vld [vmem:[#allocation2 + $0xa4] sm:$0xff]
  %v8217 = vld [vmem:[#allocation2 + $0xac] sm:$0xff]
  %v8218 = vld [vmem:[#allocation2 + $0xb4] sm:$0xff]
  %v8219 = vld [vmem:[#allocation2 + $0xbc] sm:$0xff]
  %v8220 = vld [vmem:[#allocation2 + $0xc4] sm:$0xff]
  %v8221 = vld [vmem:[#allocation2 + $0xcc] sm:$0xff]
  %v8222 = vld [vmem:[#allocation2 + $0xd4] sm:$0xff]
  %v8223 = vld [vmem:[#allocation2 + $0xdc] sm:$0xff]
  %v8224 = vld [vmem:[#allocation2 + $0xe4] sm:$0xff]
  %v8225 = vld [vmem:[#allocation2 + $0xec] sm:$0xff]
  %v8226 = vld [vmem:[#allocation2 + $0xf4] sm:$0xff]
  %v8227 = vld [vmem:[#allocation2 + $0xfc] sm:$0xff]
  %v8228 = vld [vmem:[#allocation2 + $0x104] sm:$0xff]
  %v8229 = vld [vmem:[#allocation2 + $0x10c] sm:$0xff]
  %v8230 = vld [vmem:[#allocation2 + $0x114] sm:$0xff]
  %v8231 = vld [vmem:[#allocation2 + $0x11c] sm:$0xff]
  %v8232 = vld [vmem:[#allocation2 + $0x124] sm:$0xff]
  %v8233 = vld [vmem:[#allocation2 + $0x12c] sm:$0xff]
  %v8234 = vld [vmem:[#allocation2 + $0x134] sm:$0xff]
  %v8235 = vld [vmem:[#allocation2 + $0x13c] sm:$0xff]
  %v8236 = vld [vmem:[#allocation2 + $0x144] sm:$0xff]
  %v8237 = vld [vmem:[#allocation2 + $0x14c] sm:$0xff]
  %v8238 = vld [vmem:[#allocation2 + $0x154] sm:$0xff]
  %v8239 = vld [vmem:[#allocation2 + $0x15c] sm:$0xff]
  %v8240 = vld [vmem:[#allocation2 + $0x164] sm:$0xff]
  %v8241 = vld [vmem:[#allocation2 + $0x16c] sm:$0xff]
  %v8242 = vld [vmem:[#allocation2 + $0x174] sm:$0xff]
  %v8243 = vld [vmem:[#allocation2 + $0x17c] sm:$0xff]
  %v8244 = vld [vmem:[#allocation2 + $0x184] sm:$0xff]
  %v8245 = vld [vmem:[#allocation2 + $0x18c] sm:$0xff]
  %v8246 = vld [vmem:[#allocation2 + $0x194] sm:$0xff]
  %v8247 = vld [vmem:[#allocation2 + $0x19c] sm:$0xff]
  %v8248 = vld [vmem:[#allocation2 + $0x1a4] sm:$0xff]
  %v8249 = vld [vmem:[#allocation2 + $0x1ac] sm:$0xff]
  %v8250 = vld [vmem:[#allocation2 + $0x1b4] sm:$0xff]
  %v8251 = vld [vmem:[#allocation2 + $0x1bc] sm:$0xff]
  %s8252 = scalar_lea.vmem %s5, 352
  %v8253 = vld [vmem:[%s8252] sm:$0xff]
  %v8254 = vld [vmem:[%s8252 + $0x8] sm:$0xff]
  %v8255 = vld [vmem:[%s8252 + $0x10] sm:$0xff]
  %v8256 = vld [vmem:[%s8252 + $0x18] sm:$0xff]
  %v8257 = vld [vmem:[%s8252 + $0x20] sm:$0xff]
  %v8258 = vld [vmem:[%s8252 + $0x28] sm:$0xff]
  %v8259 = vld [vmem:[%s8252 + $0x30] sm:$0xff]
  %v8260 = vld [vmem:[%s8252 + $0x38] sm:$0xff]
  %v8261 = vld [vmem:[%s8252 + $0x40] sm:$0xff]
  %v8262 = vld [vmem:[%s8252 + $0x48] sm:$0xff]
  %v8263 = vld [vmem:[%s8252 + $0x50] sm:$0x33]
  %v8264 = vpack.c.bf16 %v8197, %v8196
  %v8265 = vpack.c.bf16 %v8199, %v8198
  %v8266 = vpack.c.bf16 %v8201, %v8200
  %v8267 = vpack.c.bf16 %v8203, %v8202
  %v8268 = vpack.c.bf16 %v8205, %v8204
  %v8269 = vpack.c.bf16 %v8207, %v8206
  %v8270 = vpack.c.bf16 %v8209, %v8208
  %v8271 = vpack.c.bf16 %v8211, %v8210
  %v8272 = vpack.c.bf16 %v8213, %v8212
  %v8273 = vpack.c.bf16 %v8215, %v8214
  %v8274 = vpack.c.bf16 %v8217, %v8216
  %v8275 = vpack.c.bf16 %v8219, %v8218
  %v8276 = vpack.c.bf16 %v8221, %v8220
  %v8277 = vpack.c.bf16 %v8223, %v8222
  %v8278 = vpack.c.bf16 %v8225, %v8224
  %v8279 = vpack.c.bf16 %v8227, %v8226
  %v8280 = vpack.c.bf16 %v8229, %v8228
  %v8281 = vpack.c.bf16 %v8231, %v8230
  %v8282 = vpack.c.bf16 %v8233, %v8232
  %v8283 = vpack.c.bf16 %v8235, %v8234
  %v8284 = vpack.c.bf16 %v8237, %v8236
  %v8285 = vpack.c.bf16 %v8239, %v8238
  %v8286 = vpack.c.bf16 %v8241, %v8240
  %v8287 = vpack.c.bf16 %v8243, %v8242
  %v8288 = vpack.c.bf16 %v8245, %v8244
  %v8289 = vpack.c.bf16 %v8247, %v8246
  %v8290 = vpack.c.bf16 %v8249, %v8248
  %v8291 = vpack.c.bf16 %v8251, %v8250
  %v8303 = vunpack.c.l.b16 %v8253
  %v8304 = vunpack.c.h.b16 %v8253
  %v8305 = vunpack.c.l.b16 %v8254
  %v8306 = vunpack.c.h.b16 %v8254
  %v8307 = vunpack.c.l.b16 %v8255
  %v8308 = vunpack.c.h.b16 %v8255
  %v8309 = vunpack.c.l.b16 %v8256
  %v8310 = vunpack.c.h.b16 %v8256
  %v8311 = vunpack.c.l.b16 %v8257
  %v8312 = vunpack.c.h.b16 %v8257
  %v8313 = vunpack.c.l.b16 %v8258
  %v8314 = vunpack.c.h.b16 %v8258
  %v8315 = vunpack.c.l.b16 %v8259
  %v8316 = vunpack.c.h.b16 %v8259
  %v8317 = vunpack.c.l.b16 %v8260
  %v8318 = vunpack.c.h.b16 %v8260
  %v8319 = vunpack.c.l.b16 %v8261
  %v8320 = vunpack.c.h.b16 %v8261
  %v8321 = vunpack.c.l.b16 %v8262
  %v8322 = vunpack.c.h.b16 %v8262
  %v8323 = vunpack.c.l.b16 %v8263
  %v8324 = vunpack.c.h.b16 %v8263
  %v8325 = vpack.c.b16 %v8305, %v8303
  %v8326 = vpack.c.b16 %v8306, %v8304
  %v8327 = vpack.c.b16 %v8309, %v8307
  %v8328 = vpack.c.b16 %v8310, %v8308
  %v8329 = vpack.c.b16 %v8313, %v8311
  %v8330 = vpack.c.b16 %v8314, %v8312
  %v8331 = vpack.c.b16 %v8317, %v8315
  %v8332 = vpack.c.b16 %v8318, %v8316
  %v8333 = vpack.c.b16 %v8321, %v8319
  %v8334 = vpack.c.b16 %v8322, %v8320
  %v8335 = vpack.c.b16 %v8323, %v8323
  %v8336 = vpack.c.b16 %v8324, %v8324
  %v8348 = vsel %vm5462, %v8264, 0
  %v8351 = vsel %vm5462, %v8265, 0
  %v8354 = vsel %vm5462, %v8266, 0
  %v8357 = vsel %vm5462, %v8267, 0
  %v8360 = vsel %vm5462, %v8268, 0
  %v8363 = vsel %vm5462, %v8269, 0
  %v8366 = vsel %vm5462, %v8270, 0
  %v8369 = vsel %vm5462, %v8271, 0
  %v8372 = vsel %vm5462, %v8272, 0
  %v8375 = vsel %vm5462, %v8273, 0
  %v8378 = vsel %vm5462, %v8274, 0
  %v8381 = vsel %vm5462, %v8275, 0
  %v8384 = vsel %vm5462, %v8276, 0
  %v8387 = vsel %vm5462, %v8277, 0
  %v8390 = vsel %vm5462, %v8278, 0
  %v8393 = vsel %vm5462, %v8279, 0
  %v8396 = vsel %vm5462, %v8280, 0
  %v8399 = vsel %vm5462, %v8281, 0
  %v8402 = vsel %vm5462, %v8282, 0
  %v8405 = vsel %vm5462, %v8283, 0
  %v8408 = vsel %vm5462, %v8284, 0
  %v8411 = vsel %vm5462, %v8285, 0
  %v8414 = vsel %vm5462, %v8286, 0
  %v8417 = vsel %vm5462, %v8287, 0
  %v8420 = vsel %vm5462, %v8288, 0
  %v8423 = vsel %vm5462, %v8289, 0
  %v8426 = vsel %vm5462, %v8290, 0
  %v8429 = vsel %vm5462, %v8291, 0
  %v8432 = vsel %vm5755, %v8335, 0
  %v8435 = vsel %vm5755, %v8336, 0
  %8437 = vmatprep.subr.bf16.mxu0 %v8326
  %8438 = vmatpush1.bf16.msra.mxu0 %v8325
  %8439 = vmatprep.subr.bf16.mxu0 %v8328
  %8440 = vmatpush1.bf16.msra.mxu0 %v8327
  %8441 = vmatprep.subr.bf16.mxu0 %v8330
  %8442 = vmatpush1.bf16.msra.mxu0 %v8329
  %8443 = vmatprep.subr.bf16.mxu0 %v8332
  %8444 = vmatpush1.bf16.msra.mxu0 %v8331
  %8445 = vmatprep.subr.bf16.mxu0 %v8334
  %8446 = vmatpush1.bf16.msra.mxu0 %v8333
  %8447 = vmatprep.subr.bf16.mxu0 %v8435
  %8448 = vmatpush1.bf16.msra.mxu0 %v8432
  %8449 = vmatprep.subr.bf16.mxu0 0
  %8450 = vmatpush1.bf16.msra.mxu0 0
  %8451 = vmatprep.subr.bf16.mxu0 0
  %8452 = vmatpush1.bf16.msra.mxu0 0
  %8453 = vmatprep.subr.bf16.mxu0 0
  %8454 = vmatpush1.bf16.msra.mxu0 0
  %8455 = vmatprep.subr.bf16.mxu0 0
  %8456 = vmatpush1.bf16.msra.mxu0 0
  %8457 = vmatprep.subr.bf16.mxu0 0
  %8458 = vmatpush1.bf16.msra.mxu0 0
  %8459 = vmatprep.subr.bf16.mxu0 0
  %8460 = vmatpush1.bf16.msra.mxu0 0
  %8461 = vmatprep.subr.bf16.mxu0 0
  %8462 = vmatpush1.bf16.msra.mxu0 0
  %8463 = vmatprep.subr.bf16.mxu0 0
  %8464 = vmatpush1.bf16.msra.mxu0 0
  %8465 = vmatprep.subr.bf16.mxu0 0
  %8466 = vmatpush1.bf16.msra.mxu0 0
  %8467 = vmatprep.subr.bf16.mxu0 0
  %8468 = vmatpush1.bf16.msra.mxu0 0
  %8469 = vmatprep.mubr.bf16.mxu0 0
  %8470 = vmatmul.mubr.bf16.gmra.mrb[0].mxu0 %v8348
  %v8471 = vpop.f32.mrb[0].mxu0
  %v8472 = vadd.f32 0.0, %v8471
  %v8473 = vpop.f32.mrb[0].mxu0
  %v8474 = vadd.f32 0.0, %v8473
  %v8475 = vpop.f32.mrb[0].mxu0
  %v8476 = vadd.f32 0.0, %v8475
  %v8477 = vpop.f32.mrb[0].mxu0
  %v8478 = vadd.f32 0.0, %v8477
  %8479 = vmatprep.mubr.bf16.mxu0 0
  %8480 = vmatmul.mubr.bf16.gmra.mrb[0].mxu0 %v8351
  %v8481 = vpop.f32.mrb[0].mxu0
  %v8482 = vadd.f32 0.0, %v8481
  %v8483 = vpop.f32.mrb[0].mxu0
  %v8484 = vadd.f32 0.0, %v8483
  %v8485 = vpop.f32.mrb[0].mxu0
  %v8486 = vadd.f32 0.0, %v8485
  %v8487 = vpop.f32.mrb[0].mxu0
  %v8488 = vadd.f32 0.0, %v8487
  %8489 = vmatprep.mubr.bf16.mxu0 0
  %8490 = vmatmul.mubr.bf16.gmra.mrb[0].mxu0 %v8354
  %v8491 = vpop.f32.mrb[0].mxu0
  %v8492 = vadd.f32 0.0, %v8491
  %v8493 = vpop.f32.mrb[0].mxu0
  %v8494 = vadd.f32 0.0, %v8493
  %v8495 = vpop.f32.mrb[0].mxu0
  %v8496 = vadd.f32 0.0, %v8495
  %v8497 = vpop.f32.mrb[0].mxu0
  %v8498 = vadd.f32 0.0, %v8497
  %8499 = vmatprep.mubr.bf16.mxu0 0
  %8500 = vmatmul.mubr.bf16.gmra.mrb[0].mxu0 %v8357
  %v8501 = vpop.f32.mrb[0].mxu0
  %v8502 = vadd.f32 0.0, %v8501
  %v8503 = vpop.f32.mrb[0].mxu0
  %v8504 = vadd.f32 0.0, %v8503
  %v8505 = vpop.f32.mrb[0].mxu0
  %v8506 = vadd.f32 0.0, %v8505
  %v8507 = vpop.f32.mrb[0].mxu0
  %v8508 = vadd.f32 0.0, %v8507
  %8509 = vmatprep.mubr.bf16.mxu0 0
  %8510 = vmatmul.mubr.bf16.gmra.mrb[0].mxu0 %v8360
  %v8511 = vpop.f32.mrb[0].mxu0
  %v8512 = vadd.f32 0.0, %v8511
  %v8513 = vpop.f32.mrb[0].mxu0
  %v8514 = vadd.f32 0.0, %v8513
  %v8515 = vpop.f32.mrb[0].mxu0
  %v8516 = vadd.f32 0.0, %v8515
  %v8517 = vpop.f32.mrb[0].mxu0
  %v8518 = vadd.f32 0.0, %v8517
  %8519 = vmatprep.mubr.bf16.mxu0 0
  %8520 = vmatmul.mubr.bf16.gmra.mrb[0].mxu0 %v8363
  %v8521 = vpop.f32.mrb[0].mxu0
  %v8522 = vadd.f32 0.0, %v8521
  %v8523 = vpop.f32.mrb[0].mxu0
  %v8524 = vadd.f32 0.0, %v8523
  %v8525 = vpop.f32.mrb[0].mxu0
  %v8526 = vadd.f32 0.0, %v8525
  %v8527 = vpop.f32.mrb[0].mxu0
  %v8528 = vadd.f32 0.0, %v8527
  %8529 = vmatprep.mubr.bf16.mxu0 0
  %8530 = vmatmul.mubr.bf16.gmra.mrb[0].mxu0 %v8366
  %v8531 = vpop.f32.mrb[0].mxu0
  %v8532 = vadd.f32 0.0, %v8531
  %v8533 = vpop.f32.mrb[0].mxu0
  %v8534 = vadd.f32 0.0, %v8533
  %v8535 = vpop.f32.mrb[0].mxu0
  %v8536 = vadd.f32 0.0, %v8535
  %v8537 = vpop.f32.mrb[0].mxu0
  %v8538 = vadd.f32 0.0, %v8537
  %8539 = vmatprep.mubr.bf16.mxu0 0
  %8540 = vmatmul.mubr.bf16.gmra.mrb[0].mxu0 %v8369
  %v8541 = vpop.f32.mrb[0].mxu0
  %v8542 = vadd.f32 0.0, %v8541
  %v8543 = vpop.f32.mrb[0].mxu0
  %v8544 = vadd.f32 0.0, %v8543
  %v8545 = vpop.f32.mrb[0].mxu0
  %v8546 = vadd.f32 0.0, %v8545
  %v8547 = vpop.f32.mrb[0].mxu0
  %v8548 = vadd.f32 0.0, %v8547
  %8549 = vmatprep.mubr.bf16.mxu0 0
  %8550 = vmatmul.mubr.bf16.gmra.mrb[0].mxu0 %v8372
  %v8551 = vpop.f32.mrb[0].mxu0
  %v8552 = vadd.f32 0.0, %v8551
  %v8553 = vpop.f32.mrb[0].mxu0
  %v8554 = vadd.f32 0.0, %v8553
  %v8555 = vpop.f32.mrb[0].mxu0
  %v8556 = vadd.f32 0.0, %v8555
  %v8557 = vpop.f32.mrb[0].mxu0
  %v8558 = vadd.f32 0.0, %v8557
  %8559 = vmatprep.mubr.bf16.mxu0 0
  %8560 = vmatmul.mubr.bf16.gmra.mrb[0].mxu0 %v8375
  %v8561 = vpop.f32.mrb[0].mxu0
  %v8562 = vadd.f32 0.0, %v8561
  %v8563 = vpop.f32.mrb[0].mxu0
  %v8564 = vadd.f32 0.0, %v8563
  %v8565 = vpop.f32.mrb[0].mxu0
  %v8566 = vadd.f32 0.0, %v8565
  %v8567 = vpop.f32.mrb[0].mxu0
  %v8568 = vadd.f32 0.0, %v8567
  %8569 = vmatprep.mubr.bf16.mxu0 0
  %8570 = vmatmul.mubr.bf16.gmra.mrb[0].mxu0 %v8378
  %v8571 = vpop.f32.mrb[0].mxu0
  %v8572 = vadd.f32 0.0, %v8571
  %v8573 = vpop.f32.mrb[0].mxu0
  %v8574 = vadd.f32 0.0, %v8573
  %v8575 = vpop.f32.mrb[0].mxu0
  %v8576 = vadd.f32 0.0, %v8575
  %v8577 = vpop.f32.mrb[0].mxu0
  %v8578 = vadd.f32 0.0, %v8577
  %8579 = vmatprep.mubr.bf16.mxu0 0
  %8580 = vmatmul.mubr.bf16.gmra.mrb[0].mxu0 %v8381
  %v8581 = vpop.f32.mrb[0].mxu0
  %v8582 = vadd.f32 0.0, %v8581
  %v8583 = vpop.f32.mrb[0].mxu0
  %v8584 = vadd.f32 0.0, %v8583
  %v8585 = vpop.f32.mrb[0].mxu0
  %v8586 = vadd.f32 0.0, %v8585
  %v8587 = vpop.f32.mrb[0].mxu0
  %v8588 = vadd.f32 0.0, %v8587
  %8589 = vmatprep.mubr.bf16.mxu0 0
  %8590 = vmatmul.mubr.bf16.gmra.mrb[0].mxu0 %v8384
  %v8591 = vpop.f32.mrb[0].mxu0
  %v8592 = vadd.f32 0.0, %v8591
  %v8593 = vpop.f32.mrb[0].mxu0
  %v8594 = vadd.f32 0.0, %v8593
  %v8595 = vpop.f32.mrb[0].mxu0
  %v8596 = vadd.f32 0.0, %v8595
  %v8597 = vpop.f32.mrb[0].mxu0
  %v8598 = vadd.f32 0.0, %v8597
  %8599 = vmatprep.mubr.bf16.mxu0 0
  %8600 = vmatmul.mubr.bf16.gmra.mrb[0].mxu0 %v8387
  %v8601 = vpop.f32.mrb[0].mxu0
  %v8602 = vadd.f32 0.0, %v8601
  %v8603 = vpop.f32.mrb[0].mxu0
  %v8604 = vadd.f32 0.0, %v8603
  %v8605 = vpop.f32.mrb[0].mxu0
  %v8606 = vadd.f32 0.0, %v8605
  %v8607 = vpop.f32.mrb[0].mxu0
  %v8608 = vadd.f32 0.0, %v8607
  %8609 = vmatprep.mubr.bf16.mxu0 0
  %8610 = vmatmul.mubr.bf16.gmra.mrb[0].mxu0 %v8390
  %v8611 = vpop.f32.mrb[0].mxu0
  %v8612 = vadd.f32 0.0, %v8611
  %v8613 = vpop.f32.mrb[0].mxu0
  %v8614 = vadd.f32 0.0, %v8613
  %v8615 = vpop.f32.mrb[0].mxu0
  %v8616 = vadd.f32 0.0, %v8615
  %v8617 = vpop.f32.mrb[0].mxu0
  %v8618 = vadd.f32 0.0, %v8617
  %8619 = vmatprep.mubr.bf16.mxu0 0
  %8620 = vmatmul.mubr.bf16.gmra.mrb[0].mxu0 %v8393
  %v8621 = vpop.f32.mrb[0].mxu0
  %v8622 = vadd.f32 0.0, %v8621
  %v8623 = vpop.f32.mrb[0].mxu0
  %v8624 = vadd.f32 0.0, %v8623
  %v8625 = vpop.f32.mrb[0].mxu0
  %v8626 = vadd.f32 0.0, %v8625
  %v8627 = vpop.f32.mrb[0].mxu0
  %v8628 = vadd.f32 0.0, %v8627
  %8629 = vmatprep.mubr.bf16.mxu0 0
  %8630 = vmatmul.mubr.bf16.gmra.mrb[0].mxu0 %v8396
  %v8631 = vpop.f32.mrb[0].mxu0
  %v8632 = vadd.f32 0.0, %v8631
  %v8633 = vpop.f32.mrb[0].mxu0
  %v8634 = vadd.f32 0.0, %v8633
  %v8635 = vpop.f32.mrb[0].mxu0
  %v8636 = vadd.f32 0.0, %v8635
  %v8637 = vpop.f32.mrb[0].mxu0
  %v8638 = vadd.f32 0.0, %v8637
  %8639 = vmatprep.mubr.bf16.mxu0 0
  %8640 = vmatmul.mubr.bf16.gmra.mrb[0].mxu0 %v8399
  %v8641 = vpop.f32.mrb[0].mxu0
  %v8642 = vadd.f32 0.0, %v8641
  %v8643 = vpop.f32.mrb[0].mxu0
  %v8644 = vadd.f32 0.0, %v8643
  %v8645 = vpop.f32.mrb[0].mxu0
  %v8646 = vadd.f32 0.0, %v8645
  %v8647 = vpop.f32.mrb[0].mxu0
  %v8648 = vadd.f32 0.0, %v8647
  %8649 = vmatprep.mubr.bf16.mxu0 0
  %8650 = vmatmul.mubr.bf16.gmra.mrb[0].mxu0 %v8402
  %v8651 = vpop.f32.mrb[0].mxu0
  %v8652 = vadd.f32 0.0, %v8651
  %v8653 = vpop.f32.mrb[0].mxu0
  %v8654 = vadd.f32 0.0, %v8653
  %v8655 = vpop.f32.mrb[0].mxu0
  %v8656 = vadd.f32 0.0, %v8655
  %v8657 = vpop.f32.mrb[0].mxu0
  %v8658 = vadd.f32 0.0, %v8657
  %8659 = vmatprep.mubr.bf16.mxu0 0
  %8660 = vmatmul.mubr.bf16.gmra.mrb[0].mxu0 %v8405
  %v8661 = vpop.f32.mrb[0].mxu0
  %v8662 = vadd.f32 0.0, %v8661
  %v8663 = vpop.f32.mrb[0].mxu0
  %v8664 = vadd.f32 0.0, %v8663
  %v8665 = vpop.f32.mrb[0].mxu0
  %v8666 = vadd.f32 0.0, %v8665
  %v8667 = vpop.f32.mrb[0].mxu0
  %v8668 = vadd.f32 0.0, %v8667
  %8669 = vmatprep.mubr.bf16.mxu0 0
  %8670 = vmatmul.mubr.bf16.gmra.mrb[0].mxu0 %v8408
  %v8671 = vpop.f32.mrb[0].mxu0
  %v8672 = vadd.f32 0.0, %v8671
  %v8673 = vpop.f32.mrb[0].mxu0
  %v8674 = vadd.f32 0.0, %v8673
  %v8675 = vpop.f32.mrb[0].mxu0
  %v8676 = vadd.f32 0.0, %v8675
  %v8677 = vpop.f32.mrb[0].mxu0
  %v8678 = vadd.f32 0.0, %v8677
  %8679 = vmatprep.mubr.bf16.mxu0 0
  %8680 = vmatmul.mubr.bf16.gmra.mrb[0].mxu0 %v8411
  %v8681 = vpop.f32.mrb[0].mxu0
  %v8682 = vadd.f32 0.0, %v8681
  %v8683 = vpop.f32.mrb[0].mxu0
  %v8684 = vadd.f32 0.0, %v8683
  %v8685 = vpop.f32.mrb[0].mxu0
  %v8686 = vadd.f32 0.0, %v8685
  %v8687 = vpop.f32.mrb[0].mxu0
  %v8688 = vadd.f32 0.0, %v8687
  %8689 = vmatprep.mubr.bf16.mxu0 0
  %8690 = vmatmul.mubr.bf16.gmra.mrb[0].mxu0 %v8414
  %v8691 = vpop.f32.mrb[0].mxu0
  %v8692 = vadd.f32 0.0, %v8691
  %v8693 = vpop.f32.mrb[0].mxu0
  %v8694 = vadd.f32 0.0, %v8693
  %v8695 = vpop.f32.mrb[0].mxu0
  %v8696 = vadd.f32 0.0, %v8695
  %v8697 = vpop.f32.mrb[0].mxu0
  %v8698 = vadd.f32 0.0, %v8697
  %8699 = vmatprep.mubr.bf16.mxu0 0
  %8700 = vmatmul.mubr.bf16.gmra.mrb[0].mxu0 %v8417
  %v8701 = vpop.f32.mrb[0].mxu0
  %v8702 = vadd.f32 0.0, %v8701
  %v8703 = vpop.f32.mrb[0].mxu0
  %v8704 = vadd.f32 0.0, %v8703
  %v8705 = vpop.f32.mrb[0].mxu0
  %v8706 = vadd.f32 0.0, %v8705
  %v8707 = vpop.f32.mrb[0].mxu0
  %v8708 = vadd.f32 0.0, %v8707
  %8709 = vmatprep.mubr.bf16.mxu0 0
  %8710 = vmatmul.mubr.bf16.gmra.mrb[0].mxu0 %v8420
  %v8711 = vpop.f32.mrb[0].mxu0
  %v8712 = vadd.f32 0.0, %v8711
  %v8713 = vpop.f32.mrb[0].mxu0
  %v8714 = vadd.f32 0.0, %v8713
  %v8715 = vpop.f32.mrb[0].mxu0
  %v8716 = vadd.f32 0.0, %v8715
  %v8717 = vpop.f32.mrb[0].mxu0
  %v8718 = vadd.f32 0.0, %v8717
  %8719 = vmatprep.mubr.bf16.mxu0 0
  %8720 = vmatmul.mubr.bf16.gmra.mrb[0].mxu0 %v8423
  %v8721 = vpop.f32.mrb[0].mxu0
  %v8722 = vadd.f32 0.0, %v8721
  %v8723 = vpop.f32.mrb[0].mxu0
  %v8724 = vadd.f32 0.0, %v8723
  %v8725 = vpop.f32.mrb[0].mxu0
  %v8726 = vadd.f32 0.0, %v8725
  %v8727 = vpop.f32.mrb[0].mxu0
  %v8728 = vadd.f32 0.0, %v8727
  %8729 = vmatprep.mubr.bf16.mxu0 0
  %8730 = vmatmul.mubr.bf16.gmra.mrb[0].mxu0 %v8426
  %v8731 = vpop.f32.mrb[0].mxu0
  %v8732 = vadd.f32 0.0, %v8731
  %v8733 = vpop.f32.mrb[0].mxu0
  %v8734 = vadd.f32 0.0, %v8733
  %v8735 = vpop.f32.mrb[0].mxu0
  %v8736 = vadd.f32 0.0, %v8735
  %v8737 = vpop.f32.mrb[0].mxu0
  %v8738 = vadd.f32 0.0, %v8737
  %8739 = vmatprep.mubr.bf16.mxu0 0
  %8740 = vmatmul.mubr.bf16.gmra.mrb[0].mxu0 %v8429
  %v8741 = vpop.f32.mrb[0].mxu0
  %v8742 = vadd.f32 0.0, %v8741
  %v8743 = vpop.f32.mrb[0].mxu0
  %v8744 = vadd.f32 0.0, %v8743
  %v8745 = vpop.f32.mrb[0].mxu0
  %v8746 = vadd.f32 0.0, %v8745
  %v8747 = vpop.f32.mrb[0].mxu0
  %v8748 = vadd.f32 0.0, %v8747
  %8749 = vdwg.mxu0
  %v8750 = vadd.f32 %v8084, %v8472
  %v8751 = vadd.f32 %v8085, %v8474
  %v8752 = vadd.f32 %v8086, %v8476
  %v8753 = vadd.f32 %v8087, %v8478
  %v8754 = vadd.f32 %v8088, %v8482
  %v8755 = vadd.f32 %v8089, %v8484
  %v8756 = vadd.f32 %v8090, %v8486
  %v8757 = vadd.f32 %v8091, %v8488
  %v8758 = vadd.f32 %v8092, %v8492
  %v8759 = vadd.f32 %v8093, %v8494
  %v8760 = vadd.f32 %v8094, %v8496
  %v8761 = vadd.f32 %v8095, %v8498
  %v8762 = vadd.f32 %v8096, %v8502
  %v8763 = vadd.f32 %v8097, %v8504
  %v8764 = vadd.f32 %v8098, %v8506
  %v8765 = vadd.f32 %v8099, %v8508
  %v8766 = vadd.f32 %v8100, %v8512
  %v8767 = vadd.f32 %v8101, %v8514
  %v8768 = vadd.f32 %v8102, %v8516
  %v8769 = vadd.f32 %v8103, %v8518
  %v8770 = vadd.f32 %v8104, %v8522
  %v8771 = vadd.f32 %v8105, %v8524
  %v8772 = vadd.f32 %v8106, %v8526
  %v8773 = vadd.f32 %v8107, %v8528
  %v8774 = vadd.f32 %v8108, %v8532
  %v8775 = vadd.f32 %v8109, %v8534
  %v8776 = vadd.f32 %v8110, %v8536
  %v8777 = vadd.f32 %v8111, %v8538
  %v8778 = vadd.f32 %v8112, %v8542
  %v8779 = vadd.f32 %v8113, %v8544
  %v8780 = vadd.f32 %v8114, %v8546
  %v8781 = vadd.f32 %v8115, %v8548
  %v8782 = vadd.f32 %v8116, %v8552
  %v8783 = vadd.f32 %v8117, %v8554
  %v8784 = vadd.f32 %v8118, %v8556
  %v8785 = vadd.f32 %v8119, %v8558
  %v8786 = vadd.f32 %v8120, %v8562
  %v8787 = vadd.f32 %v8121, %v8564
  %v8788 = vadd.f32 %v8122, %v8566
  %v8789 = vadd.f32 %v8123, %v8568
  %v8790 = vadd.f32 %v8124, %v8572
  %v8791 = vadd.f32 %v8125, %v8574
  %v8792 = vadd.f32 %v8126, %v8576
  %v8793 = vadd.f32 %v8127, %v8578
  %v8794 = vadd.f32 %v8128, %v8582
  %v8795 = vadd.f32 %v8129, %v8584
  %v8796 = vadd.f32 %v8130, %v8586
  %v8797 = vadd.f32 %v8131, %v8588
  %v8798 = vadd.f32 %v8132, %v8592
  %v8799 = vadd.f32 %v8133, %v8594
  %v8800 = vadd.f32 %v8134, %v8596
  %v8801 = vadd.f32 %v8135, %v8598
  %v8802 = vadd.f32 %v8136, %v8602
  %v8803 = vadd.f32 %v8137, %v8604
  %v8804 = vadd.f32 %v8138, %v8606
  %v8805 = vadd.f32 %v8139, %v8608
  %v8806 = vadd.f32 %v8140, %v8612
  %v8807 = vadd.f32 %v8141, %v8614
  %v8808 = vadd.f32 %v8142, %v8616
  %v8809 = vadd.f32 %v8143, %v8618
  %v8810 = vadd.f32 %v8144, %v8622
  %v8811 = vadd.f32 %v8145, %v8624
  %v8812 = vadd.f32 %v8146, %v8626
  %v8813 = vadd.f32 %v8147, %v8628
  %v8814 = vadd.f32 %v8148, %v8632
  %v8815 = vadd.f32 %v8149, %v8634
  %v8816 = vadd.f32 %v8150, %v8636
  %v8817 = vadd.f32 %v8151, %v8638
  %v8818 = vadd.f32 %v8152, %v8642
  %v8819 = vadd.f32 %v8153, %v8644
  %v8820 = vadd.f32 %v8154, %v8646
  %v8821 = vadd.f32 %v8155, %v8648
  %v8822 = vadd.f32 %v8156, %v8652
  %v8823 = vadd.f32 %v8157, %v8654
  %v8824 = vadd.f32 %v8158, %v8656
  %v8825 = vadd.f32 %v8159, %v8658
  %v8826 = vadd.f32 %v8160, %v8662
  %v8827 = vadd.f32 %v8161, %v8664
  %v8828 = vadd.f32 %v8162, %v8666
  %v8829 = vadd.f32 %v8163, %v8668
  %v8830 = vadd.f32 %v8164, %v8672
  %v8831 = vadd.f32 %v8165, %v8674
  %v8832 = vadd.f32 %v8166, %v8676
  %v8833 = vadd.f32 %v8167, %v8678
  %v8834 = vadd.f32 %v8168, %v8682
  %v8835 = vadd.f32 %v8169, %v8684
  %v8836 = vadd.f32 %v8170, %v8686
  %v8837 = vadd.f32 %v8171, %v8688
  %v8838 = vadd.f32 %v8172, %v8692
  %v8839 = vadd.f32 %v8173, %v8694
  %v8840 = vadd.f32 %v8174, %v8696
  %v8841 = vadd.f32 %v8175, %v8698
  %v8842 = vadd.f32 %v8176, %v8702
  %v8843 = vadd.f32 %v8177, %v8704
  %v8844 = vadd.f32 %v8178, %v8706
  %v8845 = vadd.f32 %v8179, %v8708
  %v8846 = vadd.f32 %v8180, %v8712
  %v8847 = vadd.f32 %v8181, %v8714
  %v8848 = vadd.f32 %v8182, %v8716
  %v8849 = vadd.f32 %v8183, %v8718
  %v8850 = vadd.f32 %v8184, %v8722
  %v8851 = vadd.f32 %v8185, %v8724
  %v8852 = vadd.f32 %v8186, %v8726
  %v8853 = vadd.f32 %v8187, %v8728
  %v8854 = vadd.f32 %v8188, %v8732
  %v8855 = vadd.f32 %v8189, %v8734
  %v8856 = vadd.f32 %v8190, %v8736
  %v8857 = vadd.f32 %v8191, %v8738
  %v8858 = vadd.f32 %v8192, %v8742
  %v8859 = vadd.f32 %v8193, %v8744
  %v8860 = vadd.f32 %v8194, %v8746
  %v8861 = vadd.f32 %v8195, %v8748
  %v8862 = vtanh.pop %v8750
  %v8863 = vtanh.pop %v8751
  %v8864 = vtanh.pop %v8752
  %v8865 = vtanh.pop %v8753
  %v8866 = vtanh.pop %v8754
  %v8867 = vtanh.pop %v8755
  %v8868 = vtanh.pop %v8756
  %v8869 = vtanh.pop %v8757
  %v8870 = vtanh.pop %v8758
  %v8871 = vtanh.pop %v8759
  %v8872 = vtanh.pop %v8760
  %v8873 = vtanh.pop %v8761
  %v8874 = vtanh.pop %v8762
  %v8875 = vtanh.pop %v8763
  %v8876 = vtanh.pop %v8764
  %v8877 = vtanh.pop %v8765
  %v8878 = vtanh.pop %v8766
  %v8879 = vtanh.pop %v8767
  %v8880 = vtanh.pop %v8768
  %v8881 = vtanh.pop %v8769
  %v8882 = vtanh.pop %v8770
  %v8883 = vtanh.pop %v8771
  %v8884 = vtanh.pop %v8772
  %v8885 = vtanh.pop %v8773
  %v8886 = vtanh.pop %v8774
  %v8887 = vtanh.pop %v8775
  %v8888 = vtanh.pop %v8776
  %v8889 = vtanh.pop %v8777
  %v8890 = vtanh.pop %v8778
  %v8891 = vtanh.pop %v8779
  %v8892 = vtanh.pop %v8780
  %v8893 = vtanh.pop %v8781
  %v8894 = vtanh.pop %v8782
  %v8895 = vtanh.pop %v8783
  %v8896 = vtanh.pop %v8784
  %v8897 = vtanh.pop %v8785
  %v8898 = vtanh.pop %v8786
  %v8899 = vtanh.pop %v8787
  %v8900 = vtanh.pop %v8788
  %v8901 = vtanh.pop %v8789
  %v8902 = vtanh.pop %v8790
  %v8903 = vtanh.pop %v8791
  %v8904 = vtanh.pop %v8792
  %v8905 = vtanh.pop %v8793
  %v8906 = vtanh.pop %v8794
  %v8907 = vtanh.pop %v8795
  %v8908 = vtanh.pop %v8796
  %v8909 = vtanh.pop %v8797
  %v8910 = vtanh.pop %v8798
  %v8911 = vtanh.pop %v8799
  %v8912 = vtanh.pop %v8800
  %v8913 = vtanh.pop %v8801
  %v8914 = vtanh.pop %v8802
  %v8915 = vtanh.pop %v8803
  %v8916 = vtanh.pop %v8804
  %v8917 = vtanh.pop %v8805
  %v8918 = vtanh.pop %v8806
  %v8919 = vtanh.pop %v8807
  %v8920 = vtanh.pop %v8808
  %v8921 = vtanh.pop %v8809
  %v8922 = vtanh.pop %v8810
  %v8923 = vtanh.pop %v8811
  %v8924 = vtanh.pop %v8812
  %v8925 = vtanh.pop %v8813
  %v8926 = vtanh.pop %v8814
  %v8927 = vtanh.pop %v8815
  %v8928 = vtanh.pop %v8816
  %v8929 = vtanh.pop %v8817
  %v8930 = vtanh.pop %v8818
  %v8931 = vtanh.pop %v8819
  %v8932 = vtanh.pop %v8820
  %v8933 = vtanh.pop %v8821
  %v8934 = vtanh.pop %v8822
  %v8935 = vtanh.pop %v8823
  %v8936 = vtanh.pop %v8824
  %v8937 = vtanh.pop %v8825
  %v8938 = vtanh.pop %v8826
  %v8939 = vtanh.pop %v8827
  %v8940 = vtanh.pop %v8828
  %v8941 = vtanh.pop %v8829
  %v8942 = vtanh.pop %v8830
  %v8943 = vtanh.pop %v8831
  %v8944 = vtanh.pop %v8832
  %v8945 = vtanh.pop %v8833
  %v8946 = vtanh.pop %v8834
  %v8947 = vtanh.pop %v8835
  %v8948 = vtanh.pop %v8836
  %v8949 = vtanh.pop %v8837
  %v8950 = vtanh.pop %v8838
  %v8951 = vtanh.pop %v8839
  %v8952 = vtanh.pop %v8840
  %v8953 = vtanh.pop %v8841
  %v8954 = vtanh.pop %v8842
  %v8955 = vtanh.pop %v8843
  %v8956 = vtanh.pop %v8844
  %v8957 = vtanh.pop %v8845
  %v8958 = vtanh.pop %v8846
  %v8959 = vtanh.pop %v8847
  %v8960 = vtanh.pop %v8848
  %v8961 = vtanh.pop %v8849
  %v8962 = vtanh.pop %v8850
  %v8963 = vtanh.pop %v8851
  %v8964 = vtanh.pop %v8852
  %v8965 = vtanh.pop %v8853
  %v8966 = vtanh.pop %v8854
  %v8967 = vtanh.pop %v8855
  %v8968 = vtanh.pop %v8856
  %v8969 = vtanh.pop %v8857
  %v8970 = vtanh.pop %v8858
  %v8971 = vtanh.pop %v8859
  %v8972 = vtanh.pop %v8860
  %v8973 = vtanh.pop %v8861
  %v8974 = vld [vmem:[%s7] sm:$0xf]
  %v8975 = vld [vmem:[%s7 + $0x4] sm:$0xf]
  %v8976 = vld [vmem:[%s7 + $0x8] sm:$0xf]
  %v8977 = vld [vmem:[%s7 + $0xc] sm:$0xf]
  %v8978 = vld [vmem:[%s7 + $0x10] sm:$0xf]
  %v8979 = vld [vmem:[%s7 + $0x14] sm:$0xf]
  %v8980 = vld [vmem:[%s7 + $0x18] sm:$0xf]
  %v8981 = vld [vmem:[%s7 + $0x1c] sm:$0xf]
  %v8982 = vld [vmem:[%s7 + $0x20] sm:$0xf]
  %v8983 = vld [vmem:[%s7 + $0x24] sm:$0xf]
  %v8984 = vld [vmem:[%s7 + $0x28] sm:$0xf]
  %v8985 = vld [vmem:[%s7 + $0x2c] sm:$0xf]
  %v8986 = vld [vmem:[%s7 + $0x30] sm:$0xf]
  %v8987 = vld [vmem:[%s7 + $0x34] sm:$0xf]
  %v8988 = vld [vmem:[%s7 + $0x38] sm:$0xf]
  %v8989 = vld [vmem:[%s7 + $0x3c] sm:$0xf]
  %v8990 = vld [vmem:[%s7 + $0x40] sm:$0xf]
  %v8991 = vld [vmem:[%s7 + $0x44] sm:$0xf]
  %v8992 = vld [vmem:[%s7 + $0x48] sm:$0xf]
  %v8993 = vld [vmem:[%s7 + $0x4c] sm:$0xf]
  %v8994 = vpack.c.bf16 %v8864, %v8862
  %v8995 = vpack.c.bf16 %v8865, %v8863
  %v8996 = vpack.c.bf16 %v8868, %v8866
  %v8997 = vpack.c.bf16 %v8869, %v8867
  %v8998 = vpack.c.bf16 %v8872, %v8870
  %v8999 = vpack.c.bf16 %v8873, %v8871
  %v9000 = vpack.c.bf16 %v8876, %v8874
  %v9001 = vpack.c.bf16 %v8877, %v8875
  %v9002 = vpack.c.bf16 %v8880, %v8878
  %v9003 = vpack.c.bf16 %v8881, %v8879
  %v9004 = vpack.c.bf16 %v8884, %v8882
  %v9005 = vpack.c.bf16 %v8885, %v8883
  %v9006 = vpack.c.bf16 %v8888, %v8886
  %v9007 = vpack.c.bf16 %v8889, %v8887
  %v9008 = vpack.c.bf16 %v8892, %v8890
  %v9009 = vpack.c.bf16 %v8893, %v8891
  %v9010 = vpack.c.bf16 %v8896, %v8894
  %v9011 = vpack.c.bf16 %v8897, %v8895
  %v9012 = vpack.c.bf16 %v8900, %v8898
  %v9013 = vpack.c.bf16 %v8901, %v8899
  %v9014 = vpack.c.bf16 %v8904, %v8902
  %v9015 = vpack.c.bf16 %v8905, %v8903
  %v9016 = vpack.c.bf16 %v8908, %v8906
  %v9017 = vpack.c.bf16 %v8909, %v8907
  %v9018 = vpack.c.bf16 %v8912, %v8910
  %v9019 = vpack.c.bf16 %v8913, %v8911
  %v9020 = vpack.c.bf16 %v8916, %v8914
  %v9021 = vpack.c.bf16 %v8917, %v8915
  %v9022 = vpack.c.bf16 %v8920, %v8918
  %v9023 = vpack.c.bf16 %v8921, %v8919
  %v9024 = vpack.c.bf16 %v8924, %v8922
  %v9025 = vpack.c.bf16 %v8925, %v8923
  %v9026 = vpack.c.bf16 %v8928, %v8926
  %v9027 = vpack.c.bf16 %v8929, %v8927
  %v9028 = vpack.c.bf16 %v8932, %v8930
  %v9029 = vpack.c.bf16 %v8933, %v8931
  %v9030 = vpack.c.bf16 %v8936, %v8934
  %v9031 = vpack.c.bf16 %v8937, %v8935
  %v9032 = vpack.c.bf16 %v8940, %v8938
  %v9033 = vpack.c.bf16 %v8941, %v8939
  %v9034 = vpack.c.bf16 %v8944, %v8942
  %v9035 = vpack.c.bf16 %v8945, %v8943
  %v9036 = vpack.c.bf16 %v8948, %v8946
  %v9037 = vpack.c.bf16 %v8949, %v8947
  %v9038 = vpack.c.bf16 %v8952, %v8950
  %v9039 = vpack.c.bf16 %v8953, %v8951
  %v9040 = vpack.c.bf16 %v8956, %v8954
  %v9041 = vpack.c.bf16 %v8957, %v8955
  %v9042 = vpack.c.bf16 %v8960, %v8958
  %v9043 = vpack.c.bf16 %v8961, %v8959
  %v9044 = vpack.c.bf16 %v8964, %v8962
  %v9045 = vpack.c.bf16 %v8965, %v8963
  %v9046 = vpack.c.bf16 %v8968, %v8966
  %v9047 = vpack.c.bf16 %v8969, %v8967
  %v9048 = vpack.c.bf16 %v8972, %v8970
  %v9049 = vpack.c.bf16 %v8973, %v8971
  %v9070 = vunpack.c.l.b16 %v8974
  %v9071 = vunpack.c.l.b16 %v8975
  %v9072 = vunpack.c.l.b16 %v8976
  %v9073 = vunpack.c.l.b16 %v8977
  %v9074 = vunpack.c.l.b16 %v8978
  %v9075 = vunpack.c.l.b16 %v8979
  %v9076 = vunpack.c.l.b16 %v8980
  %v9077 = vunpack.c.l.b16 %v8981
  %v9078 = vunpack.c.l.b16 %v8982
  %v9079 = vunpack.c.l.b16 %v8983
  %v9080 = vunpack.c.l.b16 %v8984
  %v9081 = vunpack.c.l.b16 %v8985
  %v9082 = vunpack.c.l.b16 %v8986
  %v9083 = vunpack.c.l.b16 %v8987
  %v9084 = vunpack.c.l.b16 %v8988
  %v9085 = vunpack.c.l.b16 %v8989
  %v9086 = vunpack.c.l.b16 %v8990
  %v9087 = vunpack.c.l.b16 %v8991
  %v9088 = vunpack.c.l.b16 %v8992
  %v9089 = vunpack.c.l.b16 %v8993
  %v9090 = vpack.c.b16 %v9071, %v9070
  %v9091 = vpack.c.b16 %v9073, %v9072
  %v9092 = vpack.c.b16 %v9075, %v9074
  %v9093 = vpack.c.b16 %v9077, %v9076
  %v9094 = vpack.c.b16 %v9079, %v9078
  %v9095 = vpack.c.b16 %v9081, %v9080
  %v9096 = vpack.c.b16 %v9083, %v9082
  %v9097 = vpack.c.b16 %v9085, %v9084
  %v9098 = vpack.c.b16 %v9087, %v9086
  %v9099 = vpack.c.b16 %v9089, %v9088
  %v9111 = vsel %vm890, %v8995, 0
  %v9114 = vsel %vm890, %v8997, 0
  %v9117 = vsel %vm890, %v8999, 0
  %v9120 = vsel %vm890, %v9001, 0
  %v9123 = vsel %vm890, %v9003, 0
  %v9126 = vsel %vm890, %v9005, 0
  %v9129 = vsel %vm890, %v9007, 0
  %v9132 = vsel %vm890, %v9009, 0
  %v9135 = vsel %vm890, %v9011, 0
  %v9138 = vsel %vm890, %v9013, 0
  %v9141 = vsel %vm890, %v9015, 0
  %v9144 = vsel %vm890, %v9017, 0
  %v9147 = vsel %vm890, %v9019, 0
  %v9150 = vsel %vm890, %v9021, 0
  %v9153 = vsel %vm890, %v9023, 0
  %v9156 = vsel %vm890, %v9025, 0
  %v9159 = vsel %vm890, %v9027, 0
  %v9162 = vsel %vm890, %v9029, 0
  %v9165 = vsel %vm890, %v9031, 0
  %v9168 = vsel %vm890, %v9033, 0
  %v9171 = vsel %vm890, %v9035, 0
  %v9174 = vsel %vm890, %v9037, 0
  %v9177 = vsel %vm890, %v9039, 0
  %v9180 = vsel %vm890, %v9041, 0
  %v9183 = vsel %vm890, %v9043, 0
  %v9186 = vsel %vm890, %v9045, 0
  %v9189 = vsel %vm890, %v9047, 0
  %v9192 = vsel %vm890, %v9049, 0
  %9194 = vmatprep.subr.bf16.mxu0 0
  %9195 = vmatpush1.bf16.msra.mxu0 %v9090
  %9196 = vmatprep.subr.bf16.mxu0 0
  %9197 = vmatpush1.bf16.msra.mxu0 %v9091
  %9198 = vmatprep.subr.bf16.mxu0 0
  %9199 = vmatpush1.bf16.msra.mxu0 %v9092
  %9200 = vmatprep.subr.bf16.mxu0 0
  %9201 = vmatpush1.bf16.msra.mxu0 %v9093
  %9202 = vmatprep.subr.bf16.mxu0 0
  %9203 = vmatpush1.bf16.msra.mxu0 %v9094
  %9204 = vmatprep.subr.bf16.mxu0 0
  %9205 = vmatpush1.bf16.msra.mxu0 %v9095
  %9206 = vmatprep.subr.bf16.mxu0 0
  %9207 = vmatpush1.bf16.msra.mxu0 %v9096
  %9208 = vmatprep.subr.bf16.mxu0 0
  %9209 = vmatpush1.bf16.msra.mxu0 %v9097
  %9210 = vmatprep.subr.bf16.mxu0 0
  %9211 = vmatpush1.bf16.msra.mxu0 %v9098
  %9212 = vmatprep.subr.bf16.mxu0 0
  %9213 = vmatpush1.bf16.msra.mxu0 %v9099
  %9214 = vmatprep.subr.bf16.mxu0 0
  %9215 = vmatpush1.bf16.msra.mxu0 0
  %9216 = vmatprep.subr.bf16.mxu0 0
  %9217 = vmatpush1.bf16.msra.mxu0 0
  %9218 = vmatprep.subr.bf16.mxu0 0
  %9219 = vmatpush1.bf16.msra.mxu0 0
  %9220 = vmatprep.subr.bf16.mxu0 0
  %9221 = vmatpush1.bf16.msra.mxu0 0
  %9222 = vmatprep.subr.bf16.mxu0 0
  %9223 = vmatpush1.bf16.msra.mxu0 0
  %9224 = vmatprep.subr.bf16.mxu0 0
  %9225 = vmatpush1.bf16.msra.mxu0 0
  %9226 = vmatprep.mubr.bf16.mxu0 %v9111
  %9227 = vmatmul.mubr.bf16.gmra.mrb[0].mxu0 %v8994
  %v9228 = vpop.f32.mrb[0].mxu0
  %v9229 = vadd.f32 0.0, %v9228
  %v9230 = vpop.f32.mrb[0].mxu0
  %v9231 = vpop.f32.mrb[0].mxu0
  %v9232 = vadd.f32 0.0, %v9231
  %v9233 = vpop.f32.mrb[0].mxu0
  %9234 = vmatprep.mubr.bf16.mxu0 %v9114
  %9235 = vmatmul.mubr.bf16.gmra.mrb[0].mxu0 %v8996
  %v9236 = vpop.f32.mrb[0].mxu0
  %v9237 = vadd.f32 0.0, %v9236
  %v9238 = vpop.f32.mrb[0].mxu0
  %v9239 = vpop.f32.mrb[0].mxu0
  %v9240 = vadd.f32 0.0, %v9239
  %v9241 = vpop.f32.mrb[0].mxu0
  %9242 = vmatprep.mubr.bf16.mxu0 %v9117
  %9243 = vmatmul.mubr.bf16.gmra.mrb[0].mxu0 %v8998
  %v9244 = vpop.f32.mrb[0].mxu0
  %v9245 = vadd.f32 0.0, %v9244
  %v9246 = vpop.f32.mrb[0].mxu0
  %v9247 = vpop.f32.mrb[0].mxu0
  %v9248 = vadd.f32 0.0, %v9247
  %v9249 = vpop.f32.mrb[0].mxu0
  %9250 = vmatprep.mubr.bf16.mxu0 %v9120
  %9251 = vmatmul.mubr.bf16.gmra.mrb[0].mxu0 %v9000
  %v9252 = vpop.f32.mrb[0].mxu0
  %v9253 = vadd.f32 0.0, %v9252
  %v9254 = vpop.f32.mrb[0].mxu0
  %v9255 = vpop.f32.mrb[0].mxu0
  %v9256 = vadd.f32 0.0, %v9255
  %v9257 = vpop.f32.mrb[0].mxu0
  %9258 = vmatprep.mubr.bf16.mxu0 %v9123
  %9259 = vmatmul.mubr.bf16.gmra.mrb[0].mxu0 %v9002
  %v9260 = vpop.f32.mrb[0].mxu0
  %v9261 = vadd.f32 0.0, %v9260
  %v9262 = vpop.f32.mrb[0].mxu0
  %v9263 = vpop.f32.mrb[0].mxu0
  %v9264 = vadd.f32 0.0, %v9263
  %v9265 = vpop.f32.mrb[0].mxu0
  %9266 = vmatprep.mubr.bf16.mxu0 %v9126
  %9267 = vmatmul.mubr.bf16.gmra.mrb[0].mxu0 %v9004
  %v9268 = vpop.f32.mrb[0].mxu0
  %v9269 = vadd.f32 0.0, %v9268
  %v9270 = vpop.f32.mrb[0].mxu0
  %v9271 = vpop.f32.mrb[0].mxu0
  %v9272 = vadd.f32 0.0, %v9271
  %v9273 = vpop.f32.mrb[0].mxu0
  %9274 = vmatprep.mubr.bf16.mxu0 %v9129
  %9275 = vmatmul.mubr.bf16.gmra.mrb[0].mxu0 %v9006
  %v9276 = vpop.f32.mrb[0].mxu0
  %v9277 = vadd.f32 0.0, %v9276
  %v9278 = vpop.f32.mrb[0].mxu0
  %v9279 = vpop.f32.mrb[0].mxu0
  %v9280 = vadd.f32 0.0, %v9279
  %v9281 = vpop.f32.mrb[0].mxu0
  %9282 = vmatprep.mubr.bf16.mxu0 %v9132
  %9283 = vmatmul.mubr.bf16.gmra.mrb[0].mxu0 %v9008
  %v9284 = vpop.f32.mrb[0].mxu0
  %v9285 = vadd.f32 0.0, %v9284
  %v9286 = vpop.f32.mrb[0].mxu0
  %v9287 = vpop.f32.mrb[0].mxu0
  %v9288 = vadd.f32 0.0, %v9287
  %v9289 = vpop.f32.mrb[0].mxu0
  %9290 = vmatprep.mubr.bf16.mxu0 %v9135
  %9291 = vmatmul.mubr.bf16.gmra.mrb[0].mxu0 %v9010
  %v9292 = vpop.f32.mrb[0].mxu0
  %v9293 = vadd.f32 0.0, %v9292
  %v9294 = vpop.f32.mrb[0].mxu0
  %v9295 = vpop.f32.mrb[0].mxu0
  %v9296 = vadd.f32 0.0, %v9295
  %v9297 = vpop.f32.mrb[0].mxu0
  %9298 = vmatprep.mubr.bf16.mxu0 %v9138
  %9299 = vmatmul.mubr.bf16.gmra.mrb[0].mxu0 %v9012
  %v9300 = vpop.f32.mrb[0].mxu0
  %v9301 = vadd.f32 0.0, %v9300
  %v9302 = vpop.f32.mrb[0].mxu0
  %v9303 = vpop.f32.mrb[0].mxu0
  %v9304 = vadd.f32 0.0, %v9303
  %v9305 = vpop.f32.mrb[0].mxu0
  %9306 = vmatprep.mubr.bf16.mxu0 %v9141
  %9307 = vmatmul.mubr.bf16.gmra.mrb[0].mxu0 %v9014
  %v9308 = vpop.f32.mrb[0].mxu0
  %v9309 = vadd.f32 0.0, %v9308
  %v9310 = vpop.f32.mrb[0].mxu0
  %v9311 = vpop.f32.mrb[0].mxu0
  %v9312 = vadd.f32 0.0, %v9311
  %v9313 = vpop.f32.mrb[0].mxu0
  %9314 = vmatprep.mubr.bf16.mxu0 %v9144
  %9315 = vmatmul.mubr.bf16.gmra.mrb[0].mxu0 %v9016
  %v9316 = vpop.f32.mrb[0].mxu0
  %v9317 = vadd.f32 0.0, %v9316
  %v9318 = vpop.f32.mrb[0].mxu0
  %v9319 = vpop.f32.mrb[0].mxu0
  %v9320 = vadd.f32 0.0, %v9319
  %v9321 = vpop.f32.mrb[0].mxu0
  %9322 = vmatprep.mubr.bf16.mxu0 %v9147
  %9323 = vmatmul.mubr.bf16.gmra.mrb[0].mxu0 %v9018
  %v9324 = vpop.f32.mrb[0].mxu0
  %v9325 = vadd.f32 0.0, %v9324
  %v9326 = vpop.f32.mrb[0].mxu0
  %v9327 = vpop.f32.mrb[0].mxu0
  %v9328 = vadd.f32 0.0, %v9327
  %v9329 = vpop.f32.mrb[0].mxu0
  %9330 = vmatprep.mubr.bf16.mxu0 %v9150
  %9331 = vmatmul.mubr.bf16.gmra.mrb[0].mxu0 %v9020
  %v9332 = vpop.f32.mrb[0].mxu0
  %v9333 = vadd.f32 0.0, %v9332
  %v9334 = vpop.f32.mrb[0].mxu0
  %v9335 = vpop.f32.mrb[0].mxu0
  %v9336 = vadd.f32 0.0, %v9335
  %v9337 = vpop.f32.mrb[0].mxu0
  %9338 = vmatprep.mubr.bf16.mxu0 %v9153
  %9339 = vmatmul.mubr.bf16.gmra.mrb[0].mxu0 %v9022
  %v9340 = vpop.f32.mrb[0].mxu0
  %v9341 = vadd.f32 0.0, %v9340
  %v9342 = vpop.f32.mrb[0].mxu0
  %v9343 = vpop.f32.mrb[0].mxu0
  %v9344 = vadd.f32 0.0, %v9343
  %v9345 = vpop.f32.mrb[0].mxu0
  %9346 = vmatprep.mubr.bf16.mxu0 %v9156
  %9347 = vmatmul.mubr.bf16.gmra.mrb[0].mxu0 %v9024
  %v9348 = vpop.f32.mrb[0].mxu0
  %v9349 = vadd.f32 0.0, %v9348
  %v9350 = vpop.f32.mrb[0].mxu0
  %v9351 = vpop.f32.mrb[0].mxu0
  %v9352 = vadd.f32 0.0, %v9351
  %v9353 = vpop.f32.mrb[0].mxu0
  %9354 = vmatprep.mubr.bf16.mxu0 %v9159
  %9355 = vmatmul.mubr.bf16.gmra.mrb[0].mxu0 %v9026
  %v9356 = vpop.f32.mrb[0].mxu0
  %v9357 = vadd.f32 0.0, %v9356
  %v9358 = vpop.f32.mrb[0].mxu0
  %v9359 = vpop.f32.mrb[0].mxu0
  %v9360 = vadd.f32 0.0, %v9359
  %v9361 = vpop.f32.mrb[0].mxu0
  %9362 = vmatprep.mubr.bf16.mxu0 %v9162
  %9363 = vmatmul.mubr.bf16.gmra.mrb[0].mxu0 %v9028
  %v9364 = vpop.f32.mrb[0].mxu0
  %v9365 = vadd.f32 0.0, %v9364
  %v9366 = vpop.f32.mrb[0].mxu0
  %v9367 = vpop.f32.mrb[0].mxu0
  %v9368 = vadd.f32 0.0, %v9367
  %v9369 = vpop.f32.mrb[0].mxu0
  %9370 = vmatprep.mubr.bf16.mxu0 %v9165
  %9371 = vmatmul.mubr.bf16.gmra.mrb[0].mxu0 %v9030
  %v9372 = vpop.f32.mrb[0].mxu0
  %v9373 = vadd.f32 0.0, %v9372
  %v9374 = vpop.f32.mrb[0].mxu0
  %v9375 = vpop.f32.mrb[0].mxu0
  %v9376 = vadd.f32 0.0, %v9375
  %v9377 = vpop.f32.mrb[0].mxu0
  %9378 = vmatprep.mubr.bf16.mxu0 %v9168
  %9379 = vmatmul.mubr.bf16.gmra.mrb[0].mxu0 %v9032
  %v9380 = vpop.f32.mrb[0].mxu0
  %v9381 = vadd.f32 0.0, %v9380
  %v9382 = vpop.f32.mrb[0].mxu0
  %v9383 = vpop.f32.mrb[0].mxu0
  %v9384 = vadd.f32 0.0, %v9383
  %v9385 = vpop.f32.mrb[0].mxu0
  %9386 = vmatprep.mubr.bf16.mxu0 %v9171
  %9387 = vmatmul.mubr.bf16.gmra.mrb[0].mxu0 %v9034
  %v9388 = vpop.f32.mrb[0].mxu0
  %v9389 = vadd.f32 0.0, %v9388
  %v9390 = vpop.f32.mrb[0].mxu0
  %v9391 = vpop.f32.mrb[0].mxu0
  %v9392 = vadd.f32 0.0, %v9391
  %v9393 = vpop.f32.mrb[0].mxu0
  %9394 = vmatprep.mubr.bf16.mxu0 %v9174
  %9395 = vmatmul.mubr.bf16.gmra.mrb[0].mxu0 %v9036
  %v9396 = vpop.f32.mrb[0].mxu0
  %v9397 = vadd.f32 0.0, %v9396
  %v9398 = vpop.f32.mrb[0].mxu0
  %v9399 = vpop.f32.mrb[0].mxu0
  %v9400 = vadd.f32 0.0, %v9399
  %v9401 = vpop.f32.mrb[0].mxu0
  %9402 = vmatprep.mubr.bf16.mxu0 %v9177
  %9403 = vmatmul.mubr.bf16.gmra.mrb[0].mxu0 %v9038
  %v9404 = vpop.f32.mrb[0].mxu0
  %v9405 = vadd.f32 0.0, %v9404
  %v9406 = vpop.f32.mrb[0].mxu0
  %v9407 = vpop.f32.mrb[0].mxu0
  %v9408 = vadd.f32 0.0, %v9407
  %v9409 = vpop.f32.mrb[0].mxu0
  %9410 = vmatprep.mubr.bf16.mxu0 %v9180
  %9411 = vmatmul.mubr.bf16.gmra.mrb[0].mxu0 %v9040
  %v9412 = vpop.f32.mrb[0].mxu0
  %v9413 = vadd.f32 0.0, %v9412
  %v9414 = vpop.f32.mrb[0].mxu0
  %v9415 = vpop.f32.mrb[0].mxu0
  %v9416 = vadd.f32 0.0, %v9415
  %v9417 = vpop.f32.mrb[0].mxu0
  %9418 = vmatprep.mubr.bf16.mxu0 %v9183
  %9419 = vmatmul.mubr.bf16.gmra.mrb[0].mxu0 %v9042
  %v9420 = vpop.f32.mrb[0].mxu0
  %v9421 = vadd.f32 0.0, %v9420
  %v9422 = vpop.f32.mrb[0].mxu0
  %v9423 = vpop.f32.mrb[0].mxu0
  %v9424 = vadd.f32 0.0, %v9423
  %v9425 = vpop.f32.mrb[0].mxu0
  %9426 = vmatprep.mubr.bf16.mxu0 %v9186
  %9427 = vmatmul.mubr.bf16.gmra.mrb[0].mxu0 %v9044
  %v9428 = vpop.f32.mrb[0].mxu0
  %v9429 = vadd.f32 0.0, %v9428
  %v9430 = vpop.f32.mrb[0].mxu0
  %v9431 = vpop.f32.mrb[0].mxu0
  %v9432 = vadd.f32 0.0, %v9431
  %v9433 = vpop.f32.mrb[0].mxu0
  %9434 = vmatprep.mubr.bf16.mxu0 %v9189
  %9435 = vmatmul.mubr.bf16.gmra.mrb[0].mxu0 %v9046
  %v9436 = vpop.f32.mrb[0].mxu0
  %v9437 = vadd.f32 0.0, %v9436
  %v9438 = vpop.f32.mrb[0].mxu0
  %v9439 = vpop.f32.mrb[0].mxu0
  %v9440 = vadd.f32 0.0, %v9439
  %v9441 = vpop.f32.mrb[0].mxu0
  %9442 = vmatprep.mubr.bf16.mxu0 %v9192
  %9443 = vmatmul.mubr.bf16.gmra.mrb[0].mxu0 %v9048
  %v9444 = vpop.f32.mrb[0].mxu0
  %v9445 = vadd.f32 0.0, %v9444
  %v9446 = vpop.f32.mrb[0].mxu0
  %v9447 = vpop.f32.mrb[0].mxu0
  %v9448 = vadd.f32 0.0, %v9447
  %v9449 = vpop.f32.mrb[0].mxu0
  %9450 = vdwg.mxu0
  %v9451 = vld [vmem:[%s8] sm:$0xff]
  %v9452 = vld [vmem:[%s8 + $0x8] sm:$0xff]
  %v9453 = vld [vmem:[%s8 + $0x10] sm:$0xff]
  %v9454 = vld [vmem:[%s8 + $0x18] sm:$0xff]
  %v9455 = vld [vmem:[%s8 + $0x20] sm:$0xff]
  %v9456 = vld [vmem:[%s8 + $0x28] sm:$0xff]
  %v9457 = vld [vmem:[%s8 + $0x30] sm:$0xff]
  %v9458 = vld [vmem:[%s8 + $0x38] sm:$0xff]
  %v9459 = vld [vmem:[%s8 + $0x40] sm:$0xff]
  %v9460 = vld [vmem:[%s8 + $0x48] sm:$0xff]
  %v9461 = vld [vmem:[%s8 + $0x50] sm:$0xff]
  %v9462 = vld [vmem:[%s8 + $0x58] sm:$0xff]
  %v9463 = vld [vmem:[%s8 + $0x60] sm:$0xff]
  %v9464 = vld [vmem:[%s8 + $0x68] sm:$0xff]
  %v9465 = vld [vmem:[%s8 + $0x70] sm:$0xff]
  %v9466 = vld [vmem:[%s8 + $0x78] sm:$0xff]
  %v9467 = vld [vmem:[%s8 + $0x80] sm:$0xff]
  %v9468 = vld [vmem:[%s8 + $0x88] sm:$0xff]
  %v9469 = vld [vmem:[%s8 + $0x90] sm:$0xff]
  %v9470 = vld [vmem:[%s8 + $0x98] sm:$0xff]
  %v9471 = vld [vmem:[%s8 + $0xa0] sm:$0xff]
  %v9472 = vld [vmem:[%s8 + $0xa8] sm:$0xff]
  %v9473 = vld [vmem:[%s8 + $0xb0] sm:$0xff]
  %v9474 = vld [vmem:[%s8 + $0xb8] sm:$0xff]
  %v9475 = vld [vmem:[%s8 + $0xc0] sm:$0xff]
  %v9476 = vld [vmem:[%s8 + $0xc8] sm:$0xff]
  %v9477 = vld [vmem:[%s8 + $0xd0] sm:$0xff]
  %v9478 = vld [vmem:[%s8 + $0xd8] sm:$0xff]
  %v9479 = vld [vmem:[%s8 + $0xe0] sm:$0xff]
  %v9480 = vld [vmem:[%s8 + $0xe8] sm:$0xff]
  %v9481 = vld [vmem:[%s8 + $0xf0] sm:$0xff]
  %v9482 = vld [vmem:[%s8 + $0xf8] sm:$0xff]
  %v9483 = vld [vmem:[%s8 + $0x100] sm:$0xff]
  %v9484 = vld [vmem:[%s8 + $0x108] sm:$0xff]
  %v9485 = vld [vmem:[%s8 + $0x110] sm:$0xff]
  %v9486 = vld [vmem:[%s8 + $0x118] sm:$0xff]
  %v9487 = vld [vmem:[%s8 + $0x120] sm:$0xff]
  %v9488 = vld [vmem:[%s8 + $0x128] sm:$0xff]
  %v9489 = vld [vmem:[%s8 + $0x130] sm:$0xff]
  %v9490 = vld [vmem:[%s8 + $0x138] sm:$0xff]
  %v9491 = vpack.c.bf16 %v9232, %v9229
  %v9492 = vpack.c.bf16 %v9240, %v9237
  %v9493 = vpack.c.bf16 %v9248, %v9245
  %v9494 = vpack.c.bf16 %v9256, %v9253
  %v9495 = vpack.c.bf16 %v9264, %v9261
  %v9496 = vpack.c.bf16 %v9272, %v9269
  %v9497 = vpack.c.bf16 %v9280, %v9277
  %v9498 = vpack.c.bf16 %v9288, %v9285
  %v9499 = vpack.c.bf16 %v9296, %v9293
  %v9500 = vpack.c.bf16 %v9304, %v9301
  %v9501 = vpack.c.bf16 %v9312, %v9309
  %v9502 = vpack.c.bf16 %v9320, %v9317
  %v9503 = vpack.c.bf16 %v9328, %v9325
  %v9504 = vpack.c.bf16 %v9336, %v9333
  %v9505 = vpack.c.bf16 %v9344, %v9341
  %v9506 = vpack.c.bf16 %v9352, %v9349
  %v9507 = vpack.c.bf16 %v9360, %v9357
  %v9508 = vpack.c.bf16 %v9368, %v9365
  %v9509 = vpack.c.bf16 %v9376, %v9373
  %v9510 = vpack.c.bf16 %v9384, %v9381
  %v9511 = vpack.c.bf16 %v9392, %v9389
  %v9512 = vpack.c.bf16 %v9400, %v9397
  %v9513 = vpack.c.bf16 %v9408, %v9405
  %v9514 = vpack.c.bf16 %v9416, %v9413
  %v9515 = vpack.c.bf16 %v9424, %v9421
  %v9516 = vpack.c.bf16 %v9432, %v9429
  %v9517 = vpack.c.bf16 %v9440, %v9437
  %v9518 = vpack.c.bf16 %v9448, %v9445
  %v9559 = vunpack.c.l.b16 %v9451
  %v9560 = vunpack.c.h.b16 %v9451
  %v9561 = vunpack.c.l.b16 %v9452
  %v9562 = vunpack.c.h.b16 %v9452
  %v9563 = vunpack.c.l.b16 %v9453
  %v9564 = vunpack.c.h.b16 %v9453
  %v9565 = vunpack.c.l.b16 %v9454
  %v9566 = vunpack.c.h.b16 %v9454
  %v9567 = vunpack.c.l.b16 %v9455
  %v9568 = vunpack.c.h.b16 %v9455
  %v9569 = vunpack.c.l.b16 %v9456
  %v9570 = vunpack.c.h.b16 %v9456
  %v9571 = vunpack.c.l.b16 %v9457
  %v9572 = vunpack.c.h.b16 %v9457
  %v9573 = vunpack.c.l.b16 %v9458
  %v9574 = vunpack.c.h.b16 %v9458
  %v9575 = vunpack.c.l.b16 %v9459
  %v9576 = vunpack.c.h.b16 %v9459
  %v9577 = vunpack.c.l.b16 %v9460
  %v9578 = vunpack.c.h.b16 %v9460
  %v9579 = vunpack.c.l.b16 %v9461
  %v9580 = vunpack.c.h.b16 %v9461
  %v9581 = vunpack.c.l.b16 %v9462
  %v9582 = vunpack.c.h.b16 %v9462
  %v9583 = vunpack.c.l.b16 %v9463
  %v9584 = vunpack.c.h.b16 %v9463
  %v9585 = vunpack.c.l.b16 %v9464
  %v9586 = vunpack.c.h.b16 %v9464
  %v9587 = vunpack.c.l.b16 %v9465
  %v9588 = vunpack.c.h.b16 %v9465
  %v9589 = vunpack.c.l.b16 %v9466
  %v9590 = vunpack.c.h.b16 %v9466
  %v9591 = vunpack.c.l.b16 %v9467
  %v9592 = vunpack.c.h.b16 %v9467
  %v9593 = vunpack.c.l.b16 %v9468
  %v9594 = vunpack.c.h.b16 %v9468
  %v9595 = vunpack.c.l.b16 %v9469
  %v9596 = vunpack.c.h.b16 %v9469
  %v9597 = vunpack.c.l.b16 %v9470
  %v9598 = vunpack.c.h.b16 %v9470
  %v9599 = vunpack.c.l.b16 %v9471
  %v9600 = vunpack.c.h.b16 %v9471
  %v9601 = vunpack.c.l.b16 %v9472
  %v9602 = vunpack.c.h.b16 %v9472
  %v9603 = vunpack.c.l.b16 %v9473
  %v9604 = vunpack.c.h.b16 %v9473
  %v9605 = vunpack.c.l.b16 %v9474
  %v9606 = vunpack.c.h.b16 %v9474
  %v9607 = vunpack.c.l.b16 %v9475
  %v9608 = vunpack.c.h.b16 %v9475
  %v9609 = vunpack.c.l.b16 %v9476
  %v9610 = vunpack.c.h.b16 %v9476
  %v9611 = vunpack.c.l.b16 %v9477
  %v9612 = vunpack.c.h.b16 %v9477
  %v9613 = vunpack.c.l.b16 %v9478
  %v9614 = vunpack.c.h.b16 %v9478
  %v9615 = vunpack.c.l.b16 %v9479
  %v9616 = vunpack.c.h.b16 %v9479
  %v9617 = vunpack.c.l.b16 %v9480
  %v9618 = vunpack.c.h.b16 %v9480
  %v9619 = vunpack.c.l.b16 %v9481
  %v9620 = vunpack.c.h.b16 %v9481
  %v9621 = vunpack.c.l.b16 %v9482
  %v9622 = vunpack.c.h.b16 %v9482
  %v9623 = vunpack.c.l.b16 %v9483
  %v9624 = vunpack.c.h.b16 %v9483
  %v9625 = vunpack.c.l.b16 %v9484
  %v9626 = vunpack.c.h.b16 %v9484
  %v9627 = vunpack.c.l.b16 %v9485
  %v9628 = vunpack.c.h.b16 %v9485
  %v9629 = vunpack.c.l.b16 %v9486
  %v9630 = vunpack.c.h.b16 %v9486
  %v9631 = vunpack.c.l.b16 %v9487
  %v9632 = vunpack.c.h.b16 %v9487
  %v9633 = vunpack.c.l.b16 %v9488
  %v9634 = vunpack.c.h.b16 %v9488
  %v9635 = vunpack.c.l.b16 %v9489
  %v9636 = vunpack.c.h.b16 %v9489
  %v9637 = vunpack.c.l.b16 %v9490
  %v9638 = vunpack.c.h.b16 %v9490
  %v9639 = vpack.c.b16 %v9563, %v9559
  %v9640 = vpack.c.b16 %v9564, %v9560
  %v9641 = vpack.c.b16 %v9565, %v9561
  %v9642 = vpack.c.b16 %v9566, %v9562
  %v9643 = vpack.c.b16 %v9571, %v9567
  %v9644 = vpack.c.b16 %v9572, %v9568
  %v9645 = vpack.c.b16 %v9573, %v9569
  %v9646 = vpack.c.b16 %v9574, %v9570
  %v9647 = vpack.c.b16 %v9579, %v9575
  %v9648 = vpack.c.b16 %v9580, %v9576
  %v9649 = vpack.c.b16 %v9581, %v9577
  %v9650 = vpack.c.b16 %v9582, %v9578
  %v9651 = vpack.c.b16 %v9587, %v9583
  %v9652 = vpack.c.b16 %v9588, %v9584
  %v9653 = vpack.c.b16 %v9589, %v9585
  %v9654 = vpack.c.b16 %v9590, %v9586
  %v9655 = vpack.c.b16 %v9595, %v9591
  %v9656 = vpack.c.b16 %v9596, %v9592
  %v9657 = vpack.c.b16 %v9597, %v9593
  %v9658 = vpack.c.b16 %v9598, %v9594
  %v9659 = vpack.c.b16 %v9603, %v9599
  %v9660 = vpack.c.b16 %v9604, %v9600
  %v9661 = vpack.c.b16 %v9605, %v9601
  %v9662 = vpack.c.b16 %v9606, %v9602
  %v9663 = vpack.c.b16 %v9611, %v9607
  %v9664 = vpack.c.b16 %v9612, %v9608
  %v9665 = vpack.c.b16 %v9613, %v9609
  %v9666 = vpack.c.b16 %v9614, %v9610
  %v9667 = vpack.c.b16 %v9619, %v9615
  %v9668 = vpack.c.b16 %v9620, %v9616
  %v9669 = vpack.c.b16 %v9621, %v9617
  %v9670 = vpack.c.b16 %v9622, %v9618
  %v9671 = vpack.c.b16 %v9627, %v9623
  %v9672 = vpack.c.b16 %v9628, %v9624
  %v9673 = vpack.c.b16 %v9629, %v9625
  %v9674 = vpack.c.b16 %v9630, %v9626
  %v9675 = vpack.c.b16 %v9635, %v9631
  %v9676 = vpack.c.b16 %v9636, %v9632
  %v9677 = vpack.c.b16 %v9637, %v9633
  %v9678 = vpack.c.b16 %v9638, %v9634
  %vm9709 = vcmask 523264
  %v9711 = vsel %vm9709, %v9642, 0
  %v9714 = vsel %vm9709, %v9646, 0
  %v9717 = vsel %vm9709, %v9650, 0
  %v9720 = vsel %vm9709, %v9654, 0
  %v9723 = vsel %vm9709, %v9658, 0
  %v9726 = vsel %vm9709, %v9662, 0
  %v9729 = vsel %vm9709, %v9666, 0
  %v9732 = vsel %vm9709, %v9670, 0
  %v9735 = vsel %vm9709, %v9674, 0
  %v9738 = vsel %vm9709, %v9678, 0
  %9740 = vmatprep.subr.bf16.mxu0 0
  %9741 = vmatpush1.bf16.msra.mxu0 %v9491
  %9742 = vmatprep.subr.bf16.mxu0 0
  %9743 = vmatpush1.bf16.msra.mxu0 %v9492
  %9744 = vmatprep.subr.bf16.mxu0 0
  %9745 = vmatpush1.bf16.msra.mxu0 %v9493
  %9746 = vmatprep.subr.bf16.mxu0 0
  %9747 = vmatpush1.bf16.msra.mxu0 %v9494
  %9748 = vmatprep.subr.bf16.mxu0 0
  %9749 = vmatpush1.bf16.msra.mxu0 %v9495
  %9750 = vmatprep.subr.bf16.mxu0 0
  %9751 = vmatpush1.bf16.msra.mxu0 %v9496
  %9752 = vmatprep.subr.bf16.mxu0 0
  %9753 = vmatpush1.bf16.msra.mxu0 %v9497
  %9754 = vmatprep.subr.bf16.mxu0 0
  %9755 = vmatpush1.bf16.msra.mxu0 %v9498
  %9756 = vmatprep.subr.bf16.mxu0 0
  %9757 = vmatpush1.bf16.msra.mxu0 %v9499
  %9758 = vmatprep.subr.bf16.mxu0 0
  %9759 = vmatpush1.bf16.msra.mxu0 %v9500
  %9760 = vmatprep.subr.bf16.mxu0 0
  %9761 = vmatpush1.bf16.msra.mxu0 %v9501
  %9762 = vmatprep.subr.bf16.mxu0 0
  %9763 = vmatpush1.bf16.msra.mxu0 %v9502
  %9764 = vmatprep.subr.bf16.mxu0 0
  %9765 = vmatpush1.bf16.msra.mxu0 %v9503
  %9766 = vmatprep.subr.bf16.mxu0 0
  %9767 = vmatpush1.bf16.msra.mxu0 %v9504
  %9768 = vmatprep.subr.bf16.mxu0 0
  %9769 = vmatpush1.bf16.msra.mxu0 %v9505
  %9770 = vmatprep.subr.bf16.mxu0 0
  %9771 = vmatpush1.bf16.msra.mxu0 %v9506
  %9772 = vmatprep.mubr.bf16.mxu0 %v9640
  %9773 = vmatmul.mubr.bf16.gmra.mrb[0].mxu0 %v9639
  %v9774 = vpop.f32.mrb[0].mxu0
  %v9775 = vadd.f32 0.0, %v9774
  %v9776 = vpop.f32.mrb[0].mxu0
  %v9777 = vpop.f32.mrb[0].mxu0
  %v9778 = vadd.f32 0.0, %v9777
  %v9779 = vpop.f32.mrb[0].mxu0
  %9780 = vmatprep.mubr.bf16.mxu0 %v9644
  %9781 = vmatmul.mubr.bf16.gmra.mrb[0].mxu0 %v9643
  %v9782 = vpop.f32.mrb[0].mxu0
  %v9783 = vadd.f32 0.0, %v9782
  %v9784 = vpop.f32.mrb[0].mxu0
  %v9785 = vpop.f32.mrb[0].mxu0
  %v9786 = vadd.f32 0.0, %v9785
  %v9787 = vpop.f32.mrb[0].mxu0
  %9788 = vmatprep.mubr.bf16.mxu0 %v9648
  %9789 = vmatmul.mubr.bf16.gmra.mrb[0].mxu0 %v9647
  %v9790 = vpop.f32.mrb[0].mxu0
  %v9791 = vadd.f32 0.0, %v9790
  %v9792 = vpop.f32.mrb[0].mxu0
  %v9793 = vpop.f32.mrb[0].mxu0
  %v9794 = vadd.f32 0.0, %v9793
  %v9795 = vpop.f32.mrb[0].mxu0
  %9796 = vmatprep.mubr.bf16.mxu0 %v9652
  %9797 = vmatmul.mubr.bf16.gmra.mrb[0].mxu0 %v9651
  %v9798 = vpop.f32.mrb[0].mxu0
  %v9799 = vadd.f32 0.0, %v9798
  %v9800 = vpop.f32.mrb[0].mxu0
  %v9801 = vpop.f32.mrb[0].mxu0
  %v9802 = vadd.f32 0.0, %v9801
  %v9803 = vpop.f32.mrb[0].mxu0
  %9804 = vmatprep.mubr.bf16.mxu0 %v9656
  %9805 = vmatmul.mubr.bf16.gmra.mrb[0].mxu0 %v9655
  %v9806 = vpop.f32.mrb[0].mxu0
  %v9807 = vadd.f32 0.0, %v9806
  %v9808 = vpop.f32.mrb[0].mxu0
  %v9809 = vpop.f32.mrb[0].mxu0
  %v9810 = vadd.f32 0.0, %v9809
  %v9811 = vpop.f32.mrb[0].mxu0
  %9812 = vmatprep.mubr.bf16.mxu0 %v9660
  %9813 = vmatmul.mubr.bf16.gmra.mrb[0].mxu0 %v9659
  %v9814 = vpop.f32.mrb[0].mxu0
  %v9815 = vadd.f32 0.0, %v9814
  %v9816 = vpop.f32.mrb[0].mxu0
  %v9817 = vpop.f32.mrb[0].mxu0
  %v9818 = vadd.f32 0.0, %v9817
  %v9819 = vpop.f32.mrb[0].mxu0
  %9820 = vmatprep.mubr.bf16.mxu0 %v9664
  %9821 = vmatmul.mubr.bf16.gmra.mrb[0].mxu0 %v9663
  %v9822 = vpop.f32.mrb[0].mxu0
  %v9823 = vadd.f32 0.0, %v9822
  %v9824 = vpop.f32.mrb[0].mxu0
  %v9825 = vpop.f32.mrb[0].mxu0
  %v9826 = vadd.f32 0.0, %v9825
  %v9827 = vpop.f32.mrb[0].mxu0
  %9828 = vmatprep.mubr.bf16.mxu0 %v9668
  %9829 = vmatmul.mubr.bf16.gmra.mrb[0].mxu0 %v9667
  %v9830 = vpop.f32.mrb[0].mxu0
  %v9831 = vadd.f32 0.0, %v9830
  %v9832 = vpop.f32.mrb[0].mxu0
  %v9833 = vpop.f32.mrb[0].mxu0
  %v9834 = vadd.f32 0.0, %v9833
  %v9835 = vpop.f32.mrb[0].mxu0
  %9836 = vmatprep.mubr.bf16.mxu0 %v9672
  %9837 = vmatmul.mubr.bf16.gmra.mrb[0].mxu0 %v9671
  %v9838 = vpop.f32.mrb[0].mxu0
  %v9839 = vadd.f32 0.0, %v9838
  %v9840 = vpop.f32.mrb[0].mxu0
  %v9841 = vpop.f32.mrb[0].mxu0
  %v9842 = vadd.f32 0.0, %v9841
  %v9843 = vpop.f32.mrb[0].mxu0
  %9844 = vmatprep.mubr.bf16.mxu0 %v9676
  %9845 = vmatmul.mubr.bf16.gmra.mrb[0].mxu0 %v9675
  %v9846 = vpop.f32.mrb[0].mxu0
  %v9847 = vadd.f32 0.0, %v9846
  %v9848 = vpop.f32.mrb[0].mxu0
  %v9849 = vpop.f32.mrb[0].mxu0
  %v9850 = vadd.f32 0.0, %v9849
  %v9851 = vpop.f32.mrb[0].mxu0
  %9852 = vdwg.mxu0
  %9853 = vmatprep.subr.bf16.mxu0 0
  %9854 = vmatpush1.bf16.msra.mxu0 %v9507
  %9855 = vmatprep.subr.bf16.mxu0 0
  %9856 = vmatpush1.bf16.msra.mxu0 %v9508
  %9857 = vmatprep.subr.bf16.mxu0 0
  %9858 = vmatpush1.bf16.msra.mxu0 %v9509
  %9859 = vmatprep.subr.bf16.mxu0 0
  %9860 = vmatpush1.bf16.msra.mxu0 %v9510
  %9861 = vmatprep.subr.bf16.mxu0 0
  %9862 = vmatpush1.bf16.msra.mxu0 %v9511
  %9863 = vmatprep.subr.bf16.mxu0 0
  %9864 = vmatpush1.bf16.msra.mxu0 %v9512
  %9865 = vmatprep.subr.bf16.mxu0 0
  %9866 = vmatpush1.bf16.msra.mxu0 %v9513
  %9867 = vmatprep.subr.bf16.mxu0 0
  %9868 = vmatpush1.bf16.msra.mxu0 %v9514
  %9869 = vmatprep.subr.bf16.mxu0 0
  %9870 = vmatpush1.bf16.msra.mxu0 %v9515
  %9871 = vmatprep.subr.bf16.mxu0 0
  %9872 = vmatpush1.bf16.msra.mxu0 %v9516
  %9873 = vmatprep.subr.bf16.mxu0 0
  %9874 = vmatpush1.bf16.msra.mxu0 %v9517
  %9875 = vmatprep.subr.bf16.mxu0 0
  %9876 = vmatpush1.bf16.msra.mxu0 %v9518
  %9877 = vmatprep.subr.bf16.mxu0 0
  %9878 = vmatpush1.bf16.msra.mxu0 0
  %9879 = vmatprep.subr.bf16.mxu0 0
  %9880 = vmatpush1.bf16.msra.mxu0 0
  %9881 = vmatprep.subr.bf16.mxu0 0
  %9882 = vmatpush1.bf16.msra.mxu0 0
  %9883 = vmatprep.subr.bf16.mxu0 0
  %9884 = vmatpush1.bf16.msra.mxu0 0
  %9885 = vmatprep.mubr.bf16.mxu0 %v9711
  %9886 = vmatmul.mubr.bf16.gmra.mrb[0].mxu0 %v9641
  %v9887 = vpop.f32.mrb[0].mxu0
  %v9888 = vadd.f32 %v9775, %v9887
  %v9889 = vpop.f32.mrb[0].mxu0
  %v9890 = vpop.f32.mrb[0].mxu0
  %v9891 = vadd.f32 %v9778, %v9890
  %v9892 = vpop.f32.mrb[0].mxu0
  %9893 = vmatprep.mubr.bf16.mxu0 %v9714
  %9894 = vmatmul.mubr.bf16.gmra.mrb[0].mxu0 %v9645
  %v9895 = vpop.f32.mrb[0].mxu0
  %v9896 = vadd.f32 %v9783, %v9895
  %v9897 = vpop.f32.mrb[0].mxu0
  %v9898 = vpop.f32.mrb[0].mxu0
  %v9899 = vadd.f32 %v9786, %v9898
  %v9900 = vpop.f32.mrb[0].mxu0
  %9901 = vmatprep.mubr.bf16.mxu0 %v9717
  %9902 = vmatmul.mubr.bf16.gmra.mrb[0].mxu0 %v9649
  %v9903 = vpop.f32.mrb[0].mxu0
  %v9904 = vadd.f32 %v9791, %v9903
  %v9905 = vpop.f32.mrb[0].mxu0
  %v9906 = vpop.f32.mrb[0].mxu0
  %v9907 = vadd.f32 %v9794, %v9906
  %v9908 = vpop.f32.mrb[0].mxu0
  %9909 = vmatprep.mubr.bf16.mxu0 %v9720
  %9910 = vmatmul.mubr.bf16.gmra.mrb[0].mxu0 %v9653
  %v9911 = vpop.f32.mrb[0].mxu0
  %v9912 = vadd.f32 %v9799, %v9911
  %v9913 = vpop.f32.mrb[0].mxu0
  %v9914 = vpop.f32.mrb[0].mxu0
  %v9915 = vadd.f32 %v9802, %v9914
  %v9916 = vpop.f32.mrb[0].mxu0
  %9917 = vmatprep.mubr.bf16.mxu0 %v9723
  %9918 = vmatmul.mubr.bf16.gmra.mrb[0].mxu0 %v9657
  %v9919 = vpop.f32.mrb[0].mxu0
  %v9920 = vadd.f32 %v9807, %v9919
  %v9921 = vpop.f32.mrb[0].mxu0
  %v9922 = vpop.f32.mrb[0].mxu0
  %v9923 = vadd.f32 %v9810, %v9922
  %v9924 = vpop.f32.mrb[0].mxu0
  %9925 = vmatprep.mubr.bf16.mxu0 %v9726
  %9926 = vmatmul.mubr.bf16.gmra.mrb[0].mxu0 %v9661
  %v9927 = vpop.f32.mrb[0].mxu0
  %v9928 = vadd.f32 %v9815, %v9927
  %v9929 = vpop.f32.mrb[0].mxu0
  %v9930 = vpop.f32.mrb[0].mxu0
  %v9931 = vadd.f32 %v9818, %v9930
  %v9932 = vpop.f32.mrb[0].mxu0
  %9933 = vmatprep.mubr.bf16.mxu0 %v9729
  %9934 = vmatmul.mubr.bf16.gmra.mrb[0].mxu0 %v9665
  %v9935 = vpop.f32.mrb[0].mxu0
  %v9936 = vadd.f32 %v9823, %v9935
  %v9937 = vpop.f32.mrb[0].mxu0
  %v9938 = vpop.f32.mrb[0].mxu0
  %v9939 = vadd.f32 %v9826, %v9938
  %v9940 = vpop.f32.mrb[0].mxu0
  %9941 = vmatprep.mubr.bf16.mxu0 %v9732
  %9942 = vmatmul.mubr.bf16.gmra.mrb[0].mxu0 %v9669
  %v9943 = vpop.f32.mrb[0].mxu0
  %v9944 = vadd.f32 %v9831, %v9943
  %v9945 = vpop.f32.mrb[0].mxu0
  %v9946 = vpop.f32.mrb[0].mxu0
  %v9947 = vadd.f32 %v9834, %v9946
  %v9948 = vpop.f32.mrb[0].mxu0
  %9949 = vmatprep.mubr.bf16.mxu0 %v9735
  %9950 = vmatmul.mubr.bf16.gmra.mrb[0].mxu0 %v9673
  %v9951 = vpop.f32.mrb[0].mxu0
  %v9952 = vadd.f32 %v9839, %v9951
  %v9953 = vpop.f32.mrb[0].mxu0
  %v9954 = vpop.f32.mrb[0].mxu0
  %v9955 = vadd.f32 %v9842, %v9954
  %v9956 = vpop.f32.mrb[0].mxu0
  %9957 = vmatprep.mubr.bf16.mxu0 %v9738
  %9958 = vmatmul.mubr.bf16.gmra.mrb[0].mxu0 %v9677
  %v9959 = vpop.f32.mrb[0].mxu0
  %v9960 = vadd.f32 %v9847, %v9959
  %v9961 = vpop.f32.mrb[0].mxu0
  %v9962 = vpop.f32.mrb[0].mxu0
  %v9963 = vadd.f32 %v9850, %v9962
  %v9964 = vpop.f32.mrb[0].mxu0
  %9965 = vdwg.mxu0
  %v9966 = vpack.c.bf16 %v9891, %v9888
  %v9967 = vpack.c.bf16 %v9899, %v9896
  %v9968 = vpack.c.bf16 %v9907, %v9904
  %v9969 = vpack.c.bf16 %v9915, %v9912
  %v9970 = vpack.c.bf16 %v9923, %v9920
  %v9971 = vpack.c.bf16 %v9931, %v9928
  %v9972 = vpack.c.bf16 %v9939, %v9936
  %v9973 = vpack.c.bf16 %v9947, %v9944
  %v9974 = vpack.c.bf16 %v9955, %v9952
  %v9975 = vpack.c.bf16 %v9963, %v9960
  %v9976 = vld [vmem:[%s11] sm:$0x1]
  %v9977 = vld [vmem:[%s9] sm:$0xff]
  %v9978 = vld [vmem:[%s9 + $0x8] sm:$0xff]
  %v9979 = vld [vmem:[%s9 + $0x10] sm:$0xff]
  %v9980 = vld [vmem:[%s9 + $0x18] sm:$0xff]
  %v9985 = vunpack.c.l.b16 %v9977
  %v9986 = vunpack.c.h.b16 %v9977
  %v9987 = vunpack.c.l.b16 %v9978
  %v9988 = vunpack.c.h.b16 %v9978
  %v9989 = vunpack.c.l.b16 %v9979
  %v9990 = vunpack.c.h.b16 %v9979
  %v9991 = vunpack.c.l.b16 %v9980
  %v9992 = vunpack.c.h.b16 %v9980
  %v9993 = vpack.c.b16 %v9987, %v9985
  %v9994 = vpack.c.b16 %v9988, %v9986
  %v9995 = vpack.c.b16 %v9991, %v9989
  %v9996 = vpack.c.b16 %v9992, %v9990
  %v10000 = vsel %vm890, %v9994, 0
  %v10003 = vsel %vm890, %v9996, 0
  %10005 = vmatprep.subr.bf16.mxu0 0
  %10006 = vmatpush1.bf16.msra.mxu0 %v9966
  %10007 = vmatprep.subr.bf16.mxu0 0
  %10008 = vmatpush1.bf16.msra.mxu0 %v9967
  %10009 = vmatprep.subr.bf16.mxu0 0
  %10010 = vmatpush1.bf16.msra.mxu0 %v9968
  %10011 = vmatprep.subr.bf16.mxu0 0
  %10012 = vmatpush1.bf16.msra.mxu0 %v9969
  %10013 = vmatprep.subr.bf16.mxu0 0
  %10014 = vmatpush1.bf16.msra.mxu0 %v9970
  %10015 = vmatprep.subr.bf16.mxu0 0
  %10016 = vmatpush1.bf16.msra.mxu0 %v9971
  %10017 = vmatprep.subr.bf16.mxu0 0
  %10018 = vmatpush1.bf16.msra.mxu0 %v9972
  %10019 = vmatprep.subr.bf16.mxu0 0
  %10020 = vmatpush1.bf16.msra.mxu0 %v9973
  %10021 = vmatprep.subr.bf16.mxu0 0
  %10022 = vmatpush1.bf16.msra.mxu0 %v9974
  %10023 = vmatprep.subr.bf16.mxu0 0
  %10024 = vmatpush1.bf16.msra.mxu0 %v9975
  %10025 = vmatprep.subr.bf16.mxu0 0
  %10026 = vmatpush1.bf16.msra.mxu0 0
  %10027 = vmatprep.subr.bf16.mxu0 0
  %10028 = vmatpush1.bf16.msra.mxu0 0
  %10029 = vmatprep.subr.bf16.mxu0 0
  %10030 = vmatpush1.bf16.msra.mxu0 0
  %10031 = vmatprep.subr.bf16.mxu0 0
  %10032 = vmatpush1.bf16.msra.mxu0 0
  %10033 = vmatprep.subr.bf16.mxu0 0
  %10034 = vmatpush1.bf16.msra.mxu0 0
  %10035 = vmatprep.subr.bf16.mxu0 0
  %10036 = vmatpush1.bf16.msra.mxu0 0
  %10037 = vmatprep.mubr.bf16.mxu0 %v10000
  %10038 = vmatmul.mubr.bf16.gmra.mrb[0].mxu0 %v9993
  %v10039 = vpop.f32.mrb[0].mxu0
  %v10040 = vadd.f32 0.0, %v10039
  %v10041 = vpop.f32.mrb[0].mxu0
  %v10042 = vpop.f32.mrb[0].mxu0
  %v10043 = vadd.f32 0.0, %v10042
  %v10044 = vpop.f32.mrb[0].mxu0
  %10045 = vmatprep.mubr.bf16.mxu0 %v10003
  %10046 = vmatmul.mubr.bf16.gmra.mrb[0].mxu0 %v9995
  %v10047 = vpop.f32.mrb[0].mxu0
  %v10048 = vadd.f32 0.0, %v10047
  %v10049 = vpop.f32.mrb[0].mxu0
  %v10050 = vpop.f32.mrb[0].mxu0
  %v10051 = vadd.f32 0.0, %v10050
  %v10052 = vpop.f32.mrb[0].mxu0
  %10053 = vdwg.mxu0
  %v10054 = vld [vmem:[%s10] sm:$0xf]
  %v10055 = vld [vmem:[%s10 + $0x4] sm:$0xf]
  %v10056 = vld [vmem:[%s10 + $0x8] sm:$0xf]
  %v10057 = vld [vmem:[%s10 + $0xc] sm:$0xf]
  %v10058 = vld [vmem:[%s10 + $0x10] sm:$0xf]
  %v10059 = vld [vmem:[%s10 + $0x14] sm:$0xf]
  %v10060 = vld [vmem:[%s10 + $0x18] sm:$0xf]
  %v10061 = vld [vmem:[%s10 + $0x1c] sm:$0xf]
  %v10062 = vld [vmem:[%s10 + $0x20] sm:$0xf]
  %v10063 = vld [vmem:[%s10 + $0x24] sm:$0xf]
  %v10064 = vpack.c.bf16 %v10043, %v10040
  %v10065 = vpack.c.bf16 %v10051, %v10048
  %v10076 = vunpack.c.l.b16 %v10054
  %v10077 = vunpack.c.l.b16 %v10055
  %v10078 = vunpack.c.l.b16 %v10056
  %v10079 = vunpack.c.l.b16 %v10057
  %v10080 = vunpack.c.l.b16 %v10058
  %v10081 = vunpack.c.l.b16 %v10059
  %v10082 = vunpack.c.l.b16 %v10060
  %v10083 = vunpack.c.l.b16 %v10061
  %v10084 = vunpack.c.l.b16 %v10062
  %v10085 = vunpack.c.l.b16 %v10063
  %v10086 = vpack.c.b16 %v10077, %v10076
  %v10087 = vpack.c.b16 %v10079, %v10078
  %v10088 = vpack.c.b16 %v10081, %v10080
  %v10089 = vpack.c.b16 %v10083, %v10082
  %v10090 = vpack.c.b16 %v10085, %v10084
  %vm10096 = vcmask 654336
  %v10098 = vsel %vm10096, %v10064, 0
  %v10101 = vsel %vm10096, %v10065, 0
  %10103 = vmatprep.subr.bf16.mxu0 0
  %10104 = vmatpush1.bf16.msra.mxu0 %v10086
  %10105 = vmatprep.subr.bf16.mxu0 0
  %10106 = vmatpush1.bf16.msra.mxu0 %v10087
  %10107 = vmatprep.subr.bf16.mxu0 0
  %10108 = vmatpush1.bf16.msra.mxu0 %v10088
  %10109 = vmatprep.subr.bf16.mxu0 0
  %10110 = vmatpush1.bf16.msra.mxu0 %v10089
  %10111 = vmatprep.subr.bf16.mxu0 0
  %10112 = vmatpush1.bf16.msra.mxu0 %v10090
  %10113 = vmatprep.subr.bf16.mxu0 0
  %10114 = vmatpush1.bf16.msra.mxu0 0
  %10115 = vmatprep.subr.bf16.mxu0 0
  %10116 = vmatpush1.bf16.msra.mxu0 0
  %10117 = vmatprep.subr.bf16.mxu0 0
  %10118 = vmatpush1.bf16.msra.mxu0 0
  %10119 = vmatprep.subr.bf16.mxu0 0
  %10120 = vmatpush1.bf16.msra.mxu0 0
  %10121 = vmatprep.subr.bf16.mxu0 0
  %10122 = vmatpush1.bf16.msra.mxu0 0
  %10123 = vmatprep.subr.bf16.mxu0 0
  %10124 = vmatpush1.bf16.msra.mxu0 0
  %10125 = vmatprep.subr.bf16.mxu0 0
  %10126 = vmatpush1.bf16.msra.mxu0 0
  %10127 = vmatprep.subr.bf16.mxu0 0
  %10128 = vmatpush1.bf16.msra.mxu0 0
  %10129 = vmatprep.subr.bf16.mxu0 0
  %10130 = vmatpush1.bf16.msra.mxu0 0
  %10131 = vmatprep.subr.bf16.mxu0 0
  %10132 = vmatpush1.bf16.msra.mxu0 0
  %10133 = vmatprep.subr.bf16.mxu0 0
  %10134 = vmatpush1.bf16.msra.mxu0 0
  %10135 = vmatprep.mubr.bf16.mxu0 0
  %10136 = vmatmul.mubr.bf16.gmra.mrb[0].mxu0 %v10098
  %v10137 = vpop.f32.mrb[0].mxu0
  %v10138 = vadd.f32 0.0, %v10137
  %v10139 = vpop.f32.mrb[0].mxu0
  %v10140 = vpop.f32.mrb[0].mxu0
  %v10141 = vadd.f32 0.0, %v10140
  %v10142 = vpop.f32.mrb[0].mxu0
  %10143 = vmatprep.mubr.bf16.mxu0 0
  %10144 = vmatmul.mubr.bf16.gmra.mrb[0].mxu0 %v10101
  %v10145 = vpop.f32.mrb[0].mxu0
  %v10146 = vadd.f32 0.0, %v10145
  %v10147 = vpop.f32.mrb[0].mxu0
  %v10148 = vpop.f32.mrb[0].mxu0
  %v10149 = vadd.f32 0.0, %v10148
  %v10150 = vpop.f32.mrb[0].mxu0
  %10151 = vdwg.mxu0
  %v10153 = vlaneseq
  %v10154 = vshrl.u32 %v10153, 7
  %v10155 = vsub.s32 0, %v10154
  %v10156 = vrot.slane %v9976, %v10155
  %v10158 = vadd.f32 %v10156, %v10138
  %v10159 = vadd.f32 %v10156, %v10141
  %v10160 = vadd.f32 %v10156, %v10146
  %v10161 = vadd.f32 %v10156, %v10149
  %s10162 = scalar_lea.vmem %s9, 32
  %v10163 = vld [vmem:[%s10162] sm:$0xff]
  %v10164 = vld [vmem:[%s10162 + $0x8] sm:$0xff]
  %v10165 = vld [vmem:[%s10162 + $0x10] sm:$0xff]
  %v10166 = vld [vmem:[%s10162 + $0x18] sm:$0xff]
  %v10171 = vunpack.c.l.b16 %v10163
  %v10172 = vunpack.c.h.b16 %v10163
  %v10173 = vunpack.c.l.b16 %v10164
  %v10174 = vunpack.c.h.b16 %v10164
  %v10175 = vunpack.c.l.b16 %v10165
  %v10176 = vunpack.c.h.b16 %v10165
  %v10177 = vunpack.c.l.b16 %v10166
  %v10178 = vunpack.c.h.b16 %v10166
  %v10179 = vpack.c.b16 %v10173, %v10171
  %v10180 = vpack.c.b16 %v10174, %v10172
  %v10181 = vpack.c.b16 %v10177, %v10175
  %v10182 = vpack.c.b16 %v10178, %v10176
  %v10186 = vsel %vm890, %v10180, 0
  %v10189 = vsel %vm890, %v10182, 0
  %10191 = vmatprep.subr.bf16.mxu0 0
  %10192 = vmatpush1.bf16.msra.mxu0 %v9966
  %10193 = vmatprep.subr.bf16.mxu0 0
  %10194 = vmatpush1.bf16.msra.mxu0 %v9967
  %10195 = vmatprep.subr.bf16.mxu0 0
  %10196 = vmatpush1.bf16.msra.mxu0 %v9968
  %10197 = vmatprep.subr.bf16.mxu0 0
  %10198 = vmatpush1.bf16.msra.mxu0 %v9969
  %10199 = vmatprep.subr.bf16.mxu0 0
  %10200 = vmatpush1.bf16.msra.mxu0 %v9970
  %10201 = vmatprep.subr.bf16.mxu0 0
  %10202 = vmatpush1.bf16.msra.mxu0 %v9971
  %10203 = vmatprep.subr.bf16.mxu0 0
  %10204 = vmatpush1.bf16.msra.mxu0 %v9972
  %10205 = vmatprep.subr.bf16.mxu0 0
  %10206 = vmatpush1.bf16.msra.mxu0 %v9973
  %10207 = vmatprep.subr.bf16.mxu0 0
  %10208 = vmatpush1.bf16.msra.mxu0 %v9974
  %10209 = vmatprep.subr.bf16.mxu0 0
  %10210 = vmatpush1.bf16.msra.mxu0 %v9975
  %10211 = vmatprep.subr.bf16.mxu0 0
  %10212 = vmatpush1.bf16.msra.mxu0 0
  %10213 = vmatprep.subr.bf16.mxu0 0
  %10214 = vmatpush1.bf16.msra.mxu0 0
  %10215 = vmatprep.subr.bf16.mxu0 0
  %10216 = vmatpush1.bf16.msra.mxu0 0
  %10217 = vmatprep.subr.bf16.mxu0 0
  %10218 = vmatpush1.bf16.msra.mxu0 0
  %10219 = vmatprep.subr.bf16.mxu0 0
  %10220 = vmatpush1.bf16.msra.mxu0 0
  %10221 = vmatprep.subr.bf16.mxu0 0
  %10222 = vmatpush1.bf16.msra.mxu0 0
  %10223 = vmatprep.mubr.bf16.mxu0 %v10186
  %10224 = vmatmul.mubr.bf16.gmra.mrb[0].mxu0 %v10179
  %v10225 = vpop.f32.mrb[0].mxu0
  %v10226 = vadd.f32 0.0, %v10225
  %v10227 = vpop.f32.mrb[0].mxu0
  %v10228 = vpop.f32.mrb[0].mxu0
  %v10229 = vadd.f32 0.0, %v10228
  %v10230 = vpop.f32.mrb[0].mxu0
  %10231 = vmatprep.mubr.bf16.mxu0 %v10189
  %10232 = vmatmul.mubr.bf16.gmra.mrb[0].mxu0 %v10181
  %v10233 = vpop.f32.mrb[0].mxu0
  %v10234 = vadd.f32 0.0, %v10233
  %v10235 = vpop.f32.mrb[0].mxu0
  %v10236 = vpop.f32.mrb[0].mxu0
  %v10237 = vadd.f32 0.0, %v10236
  %v10238 = vpop.f32.mrb[0].mxu0
  %10239 = vdwg.mxu0
  %s10240 = scalar_lea.vmem %s10, 40
  %v10241 = vld [vmem:[%s10240] sm:$0xf]
  %v10242 = vld [vmem:[%s10240 + $0x4] sm:$0xf]
  %v10243 = vld [vmem:[%s10240 + $0x8] sm:$0xf]
  %v10244 = vld [vmem:[%s10240 + $0xc] sm:$0xf]
  %v10245 = vld [vmem:[%s10240 + $0x10] sm:$0xf]
  %v10246 = vld [vmem:[%s10240 + $0x14] sm:$0xf]
  %v10247 = vld [vmem:[%s10240 + $0x18] sm:$0xf]
  %v10248 = vld [vmem:[%s10240 + $0x1c] sm:$0xf]
  %v10249 = vld [vmem:[%s10240 + $0x20] sm:$0xf]
  %v10250 = vld [vmem:[%s10240 + $0x24] sm:$0xf]
  %v10251 = vpack.c.bf16 %v10229, %v10226
  %v10252 = vpack.c.bf16 %v10237, %v10234
  %v10263 = vunpack.c.l.b16 %v10241
  %v10264 = vunpack.c.l.b16 %v10242
  %v10265 = vunpack.c.l.b16 %v10243
  %v10266 = vunpack.c.l.b16 %v10244
  %v10267 = vunpack.c.l.b16 %v10245
  %v10268 = vunpack.c.l.b16 %v10246
  %v10269 = vunpack.c.l.b16 %v10247
  %v10270 = vunpack.c.l.b16 %v10248
  %v10271 = vunpack.c.l.b16 %v10249
  %v10272 = vunpack.c.l.b16 %v10250
  %v10273 = vpack.c.b16 %v10264, %v10263
  %v10274 = vpack.c.b16 %v10266, %v10265
  %v10275 = vpack.c.b16 %v10268, %v10267
  %v10276 = vpack.c.b16 %v10270, %v10269
  %v10277 = vpack.c.b16 %v10272, %v10271
  %v10284 = vsel %vm10096, %v10251, 0
  %v10287 = vsel %vm10096, %v10252, 0
  %10289 = vmatprep.subr.bf16.mxu0 0
  %10290 = vmatpush1.bf16.msra.mxu0 %v10273
  %10291 = vmatprep.subr.bf16.mxu0 0
  %10292 = vmatpush1.bf16.msra.mxu0 %v10274
  %10293 = vmatprep.subr.bf16.mxu0 0
  %10294 = vmatpush1.bf16.msra.mxu0 %v10275
  %10295 = vmatprep.subr.bf16.mxu0 0
  %10296 = vmatpush1.bf16.msra.mxu0 %v10276
  %10297 = vmatprep.subr.bf16.mxu0 0
  %10298 = vmatpush1.bf16.msra.mxu0 %v10277
  %10299 = vmatprep.subr.bf16.mxu0 0
  %10300 = vmatpush1.bf16.msra.mxu0 0
  %10301 = vmatprep.subr.bf16.mxu0 0
  %10302 = vmatpush1.bf16.msra.mxu0 0
  %10303 = vmatprep.subr.bf16.mxu0 0
  %10304 = vmatpush1.bf16.msra.mxu0 0
  %10305 = vmatprep.subr.bf16.mxu0 0
  %10306 = vmatpush1.bf16.msra.mxu0 0
  %10307 = vmatprep.subr.bf16.mxu0 0
  %10308 = vmatpush1.bf16.msra.mxu0 0
  %10309 = vmatprep.subr.bf16.mxu0 0
  %10310 = vmatpush1.bf16.msra.mxu0 0
  %10311 = vmatprep.subr.bf16.mxu0 0
  %10312 = vmatpush1.bf16.msra.mxu0 0
  %10313 = vmatprep.subr.bf16.mxu0 0
  %10314 = vmatpush1.bf16.msra.mxu0 0
  %10315 = vmatprep.subr.bf16.mxu0 0
  %10316 = vmatpush1.bf16.msra.mxu0 0
  %10317 = vmatprep.subr.bf16.mxu0 0
  %10318 = vmatpush1.bf16.msra.mxu0 0
  %10319 = vmatprep.subr.bf16.mxu0 0
  %10320 = vmatpush1.bf16.msra.mxu0 0
  %10321 = vmatprep.mubr.bf16.mxu0 0
  %10322 = vmatmul.mubr.bf16.gmra.mrb[0].mxu0 %v10284
  %v10323 = vpop.f32.mrb[0].mxu0
  %v10324 = vadd.f32 0.0, %v10323
  %v10325 = vpop.f32.mrb[0].mxu0
  %v10326 = vpop.f32.mrb[0].mxu0
  %v10327 = vadd.f32 0.0, %v10326
  %v10328 = vpop.f32.mrb[0].mxu0
  %10329 = vmatprep.mubr.bf16.mxu0 0
  %10330 = vmatmul.mubr.bf16.gmra.mrb[0].mxu0 %v10287
  %v10331 = vpop.f32.mrb[0].mxu0
  %v10332 = vadd.f32 0.0, %v10331
  %v10333 = vpop.f32.mrb[0].mxu0
  %v10334 = vpop.f32.mrb[0].mxu0
  %v10335 = vadd.f32 0.0, %v10334
  %v10336 = vpop.f32.mrb[0].mxu0
  %10337 = vdwg.mxu0
  %v10338 = vadd.f32 %v10158, %v10324
  %v10339 = vadd.f32 %v10159, %v10327
  %v10340 = vadd.f32 %v10160, %v10332
  %v10341 = vadd.f32 %v10161, %v10335
  %s10342 = scalar_lea.vmem %s9, 64
  %v10343 = vld [vmem:[%s10342] sm:$0xff]
  %v10344 = vld [vmem:[%s10342 + $0x8] sm:$0xff]
  %v10345 = vld [vmem:[%s10342 + $0x10] sm:$0xff]
  %v10346 = vld [vmem:[%s10342 + $0x18] sm:$0xff]
  %v10351 = vunpack.c.l.b16 %v10343
  %v10352 = vunpack.c.h.b16 %v10343
  %v10353 = vunpack.c.l.b16 %v10344
  %v10354 = vunpack.c.h.b16 %v10344
  %v10355 = vunpack.c.l.b16 %v10345
  %v10356 = vunpack.c.h.b16 %v10345
  %v10357 = vunpack.c.l.b16 %v10346
  %v10358 = vunpack.c.h.b16 %v10346
  %v10359 = vpack.c.b16 %v10353, %v10351
  %v10360 = vpack.c.b16 %v10354, %v10352
  %v10361 = vpack.c.b16 %v10357, %v10355
  %v10362 = vpack.c.b16 %v10358, %v10356
  %v10366 = vsel %vm890, %v10360, 0
  %v10369 = vsel %vm890, %v10362, 0
  %10371 = vmatprep.subr.bf16.mxu0 0
  %10372 = vmatpush1.bf16.msra.mxu0 %v9966
  %10373 = vmatprep.subr.bf16.mxu0 0
  %10374 = vmatpush1.bf16.msra.mxu0 %v9967
  %10375 = vmatprep.subr.bf16.mxu0 0
  %10376 = vmatpush1.bf16.msra.mxu0 %v9968
  %10377 = vmatprep.subr.bf16.mxu0 0
  %10378 = vmatpush1.bf16.msra.mxu0 %v9969
  %10379 = vmatprep.subr.bf16.mxu0 0
  %10380 = vmatpush1.bf16.msra.mxu0 %v9970
  %10381 = vmatprep.subr.bf16.mxu0 0
  %10382 = vmatpush1.bf16.msra.mxu0 %v9971
  %10383 = vmatprep.subr.bf16.mxu0 0
  %10384 = vmatpush1.bf16.msra.mxu0 %v9972
  %10385 = vmatprep.subr.bf16.mxu0 0
  %10386 = vmatpush1.bf16.msra.mxu0 %v9973
  %10387 = vmatprep.subr.bf16.mxu0 0
  %10388 = vmatpush1.bf16.msra.mxu0 %v9974
  %10389 = vmatprep.subr.bf16.mxu0 0
  %10390 = vmatpush1.bf16.msra.mxu0 %v9975
  %10391 = vmatprep.subr.bf16.mxu0 0
  %10392 = vmatpush1.bf16.msra.mxu0 0
  %10393 = vmatprep.subr.bf16.mxu0 0
  %10394 = vmatpush1.bf16.msra.mxu0 0
  %10395 = vmatprep.subr.bf16.mxu0 0
  %10396 = vmatpush1.bf16.msra.mxu0 0
  %10397 = vmatprep.subr.bf16.mxu0 0
  %10398 = vmatpush1.bf16.msra.mxu0 0
  %10399 = vmatprep.subr.bf16.mxu0 0
  %10400 = vmatpush1.bf16.msra.mxu0 0
  %10401 = vmatprep.subr.bf16.mxu0 0
  %10402 = vmatpush1.bf16.msra.mxu0 0
  %10403 = vmatprep.mubr.bf16.mxu0 %v10366
  %10404 = vmatmul.mubr.bf16.gmra.mrb[0].mxu0 %v10359
  %v10405 = vpop.f32.mrb[0].mxu0
  %v10406 = vadd.f32 0.0, %v10405
  %v10407 = vpop.f32.mrb[0].mxu0
  %v10408 = vpop.f32.mrb[0].mxu0
  %v10409 = vadd.f32 0.0, %v10408
  %v10410 = vpop.f32.mrb[0].mxu0
  %10411 = vmatprep.mubr.bf16.mxu0 %v10369
  %10412 = vmatmul.mubr.bf16.gmra.mrb[0].mxu0 %v10361
  %v10413 = vpop.f32.mrb[0].mxu0
  %v10414 = vadd.f32 0.0, %v10413
  %v10415 = vpop.f32.mrb[0].mxu0
  %v10416 = vpop.f32.mrb[0].mxu0
  %v10417 = vadd.f32 0.0, %v10416
  %v10418 = vpop.f32.mrb[0].mxu0
  %10419 = vdwg.mxu0
  %s10420 = scalar_lea.vmem %s10, 80
  %v10421 = vld [vmem:[%s10420] sm:$0xf]
  %v10422 = vld [vmem:[%s10420 + $0x4] sm:$0xf]
  %v10423 = vld [vmem:[%s10420 + $0x8] sm:$0xf]
  %v10424 = vld [vmem:[%s10420 + $0xc] sm:$0xf]
  %v10425 = vld [vmem:[%s10420 + $0x10] sm:$0xf]
  %v10426 = vld [vmem:[%s10420 + $0x14] sm:$0xf]
  %v10427 = vld [vmem:[%s10420 + $0x18] sm:$0xf]
  %v10428 = vld [vmem:[%s10420 + $0x1c] sm:$0xf]
  %v10429 = vld [vmem:[%s10420 + $0x20] sm:$0xf]
  %v10430 = vld [vmem:[%s10420 + $0x24] sm:$0xf]
  %v10431 = vpack.c.bf16 %v10409, %v10406
  %v10432 = vpack.c.bf16 %v10417, %v10414
  %v10443 = vunpack.c.l.b16 %v10421
  %v10444 = vunpack.c.l.b16 %v10422
  %v10445 = vunpack.c.l.b16 %v10423
  %v10446 = vunpack.c.l.b16 %v10424
  %v10447 = vunpack.c.l.b16 %v10425
  %v10448 = vunpack.c.l.b16 %v10426
  %v10449 = vunpack.c.l.b16 %v10427
  %v10450 = vunpack.c.l.b16 %v10428
  %v10451 = vunpack.c.l.b16 %v10429
  %v10452 = vunpack.c.l.b16 %v10430
  %v10453 = vpack.c.b16 %v10444, %v10443
  %v10454 = vpack.c.b16 %v10446, %v10445
  %v10455 = vpack.c.b16 %v10448, %v10447
  %v10456 = vpack.c.b16 %v10450, %v10449
  %v10457 = vpack.c.b16 %v10452, %v10451
  %v10464 = vsel %vm10096, %v10431, 0
  %v10467 = vsel %vm10096, %v10432, 0
  %10469 = vmatprep.subr.bf16.mxu0 0
  %10470 = vmatpush1.bf16.msra.mxu0 %v10453
  %10471 = vmatprep.subr.bf16.mxu0 0
  %10472 = vmatpush1.bf16.msra.mxu0 %v10454
  %10473 = vmatprep.subr.bf16.mxu0 0
  %10474 = vmatpush1.bf16.msra.mxu0 %v10455
  %10475 = vmatprep.subr.bf16.mxu0 0
  %10476 = vmatpush1.bf16.msra.mxu0 %v10456
  %10477 = vmatprep.subr.bf16.mxu0 0
  %10478 = vmatpush1.bf16.msra.mxu0 %v10457
  %10479 = vmatprep.subr.bf16.mxu0 0
  %10480 = vmatpush1.bf16.msra.mxu0 0
  %10481 = vmatprep.subr.bf16.mxu0 0
  %10482 = vmatpush1.bf16.msra.mxu0 0
  %10483 = vmatprep.subr.bf16.mxu0 0
  %10484 = vmatpush1.bf16.msra.mxu0 0
  %10485 = vmatprep.subr.bf16.mxu0 0
  %10486 = vmatpush1.bf16.msra.mxu0 0
  %10487 = vmatprep.subr.bf16.mxu0 0
  %10488 = vmatpush1.bf16.msra.mxu0 0
  %10489 = vmatprep.subr.bf16.mxu0 0
  %10490 = vmatpush1.bf16.msra.mxu0 0
  %10491 = vmatprep.subr.bf16.mxu0 0
  %10492 = vmatpush1.bf16.msra.mxu0 0
  %10493 = vmatprep.subr.bf16.mxu0 0
  %10494 = vmatpush1.bf16.msra.mxu0 0
  %10495 = vmatprep.subr.bf16.mxu0 0
  %10496 = vmatpush1.bf16.msra.mxu0 0
  %10497 = vmatprep.subr.bf16.mxu0 0
  %10498 = vmatpush1.bf16.msra.mxu0 0
  %10499 = vmatprep.subr.bf16.mxu0 0
  %10500 = vmatpush1.bf16.msra.mxu0 0
  %10501 = vmatprep.mubr.bf16.mxu0 0
  %10502 = vmatmul.mubr.bf16.gmra.mrb[0].mxu0 %v10464
  %v10503 = vpop.f32.mrb[0].mxu0
  %v10504 = vadd.f32 0.0, %v10503
  %v10505 = vpop.f32.mrb[0].mxu0
  %v10506 = vpop.f32.mrb[0].mxu0
  %v10507 = vadd.f32 0.0, %v10506
  %v10508 = vpop.f32.mrb[0].mxu0
  %10509 = vmatprep.mubr.bf16.mxu0 0
  %10510 = vmatmul.mubr.bf16.gmra.mrb[0].mxu0 %v10467
  %v10511 = vpop.f32.mrb[0].mxu0
  %v10512 = vadd.f32 0.0, %v10511
  %v10513 = vpop.f32.mrb[0].mxu0
  %v10514 = vpop.f32.mrb[0].mxu0
  %v10515 = vadd.f32 0.0, %v10514
  %v10516 = vpop.f32.mrb[0].mxu0
  %10517 = vdwg.mxu0
  %v10518 = vadd.f32 %v10338, %v10504
  %v10519 = vadd.f32 %v10339, %v10507
  %v10520 = vadd.f32 %v10340, %v10512
  %v10521 = vadd.f32 %v10341, %v10515
  %s10522 = scalar_lea.vmem %s9, 96
  %v10523 = vld [vmem:[%s10522] sm:$0xff]
  %v10524 = vld [vmem:[%s10522 + $0x8] sm:$0xff]
  %v10525 = vld [vmem:[%s10522 + $0x10] sm:$0xff]
  %v10526 = vld [vmem:[%s10522 + $0x18] sm:$0xff]
  %v10531 = vunpack.c.l.b16 %v10523
  %v10532 = vunpack.c.h.b16 %v10523
  %v10533 = vunpack.c.l.b16 %v10524
  %v10534 = vunpack.c.h.b16 %v10524
  %v10535 = vunpack.c.l.b16 %v10525
  %v10536 = vunpack.c.h.b16 %v10525
  %v10537 = vunpack.c.l.b16 %v10526
  %v10538 = vunpack.c.h.b16 %v10526
  %v10539 = vpack.c.b16 %v10533, %v10531
  %v10540 = vpack.c.b16 %v10534, %v10532
  %v10541 = vpack.c.b16 %v10537, %v10535
  %v10542 = vpack.c.b16 %v10538, %v10536
  %v10546 = vsel %vm890, %v10540, 0
  %v10549 = vsel %vm890, %v10542, 0
  %10551 = vmatprep.subr.bf16.mxu0 0
  %10552 = vmatpush1.bf16.msra.mxu0 %v9966
  %10553 = vmatprep.subr.bf16.mxu0 0
  %10554 = vmatpush1.bf16.msra.mxu0 %v9967
  %10555 = vmatprep.subr.bf16.mxu0 0
  %10556 = vmatpush1.bf16.msra.mxu0 %v9968
  %10557 = vmatprep.subr.bf16.mxu0 0
  %10558 = vmatpush1.bf16.msra.mxu0 %v9969
  %10559 = vmatprep.subr.bf16.mxu0 0
  %10560 = vmatpush1.bf16.msra.mxu0 %v9970
  %10561 = vmatprep.subr.bf16.mxu0 0
  %10562 = vmatpush1.bf16.msra.mxu0 %v9971
  %10563 = vmatprep.subr.bf16.mxu0 0
  %10564 = vmatpush1.bf16.msra.mxu0 %v9972
  %10565 = vmatprep.subr.bf16.mxu0 0
  %10566 = vmatpush1.bf16.msra.mxu0 %v9973
  %10567 = vmatprep.subr.bf16.mxu0 0
  %10568 = vmatpush1.bf16.msra.mxu0 %v9974
  %10569 = vmatprep.subr.bf16.mxu0 0
  %10570 = vmatpush1.bf16.msra.mxu0 %v9975
  %10571 = vmatprep.subr.bf16.mxu0 0
  %10572 = vmatpush1.bf16.msra.mxu0 0
  %10573 = vmatprep.subr.bf16.mxu0 0
  %10574 = vmatpush1.bf16.msra.mxu0 0
  %10575 = vmatprep.subr.bf16.mxu0 0
  %10576 = vmatpush1.bf16.msra.mxu0 0
  %10577 = vmatprep.subr.bf16.mxu0 0
  %10578 = vmatpush1.bf16.msra.mxu0 0
  %10579 = vmatprep.subr.bf16.mxu0 0
  %10580 = vmatpush1.bf16.msra.mxu0 0
  %10581 = vmatprep.subr.bf16.mxu0 0
  %10582 = vmatpush1.bf16.msra.mxu0 0
  %10583 = vmatprep.mubr.bf16.mxu0 %v10546
  %10584 = vmatmul.mubr.bf16.gmra.mrb[0].mxu0 %v10539
  %v10585 = vpop.f32.mrb[0].mxu0
  %v10586 = vadd.f32 0.0, %v10585
  %v10587 = vpop.f32.mrb[0].mxu0
  %v10588 = vpop.f32.mrb[0].mxu0
  %v10589 = vadd.f32 0.0, %v10588
  %v10590 = vpop.f32.mrb[0].mxu0
  %10591 = vmatprep.mubr.bf16.mxu0 %v10549
  %10592 = vmatmul.mubr.bf16.gmra.mrb[0].mxu0 %v10541
  %v10593 = vpop.f32.mrb[0].mxu0
  %v10594 = vadd.f32 0.0, %v10593
  %v10595 = vpop.f32.mrb[0].mxu0
  %v10596 = vpop.f32.mrb[0].mxu0
  %v10597 = vadd.f32 0.0, %v10596
  %v10598 = vpop.f32.mrb[0].mxu0
  %10599 = vdwg.mxu0
  %s10600 = scalar_lea.vmem %s10, 120
  %v10601 = vld [vmem:[%s10600] sm:$0xf]
  %v10602 = vld [vmem:[%s10600 + $0x4] sm:$0xf]
  %v10603 = vld [vmem:[%s10600 + $0x8] sm:$0xf]
  %v10604 = vld [vmem:[%s10600 + $0xc] sm:$0xf]
  %v10605 = vld [vmem:[%s10600 + $0x10] sm:$0xf]
  %v10606 = vld [vmem:[%s10600 + $0x14] sm:$0xf]
  %v10607 = vld [vmem:[%s10600 + $0x18] sm:$0xf]
  %v10608 = vld [vmem:[%s10600 + $0x1c] sm:$0xf]
  %v10609 = vld [vmem:[%s10600 + $0x20] sm:$0xf]
  %v10610 = vld [vmem:[%s10600 + $0x24] sm:$0xf]
  %v10611 = vpack.c.bf16 %v10589, %v10586
  %v10612 = vpack.c.bf16 %v10597, %v10594
  %v10623 = vunpack.c.l.b16 %v10601
  %v10624 = vunpack.c.l.b16 %v10602
  %v10625 = vunpack.c.l.b16 %v10603
  %v10626 = vunpack.c.l.b16 %v10604
  %v10627 = vunpack.c.l.b16 %v10605
  %v10628 = vunpack.c.l.b16 %v10606
  %v10629 = vunpack.c.l.b16 %v10607
  %v10630 = vunpack.c.l.b16 %v10608
  %v10631 = vunpack.c.l.b16 %v10609
  %v10632 = vunpack.c.l.b16 %v10610
  %v10633 = vpack.c.b16 %v10624, %v10623
  %v10634 = vpack.c.b16 %v10626, %v10625
  %v10635 = vpack.c.b16 %v10628, %v10627
  %v10636 = vpack.c.b16 %v10630, %v10629
  %v10637 = vpack.c.b16 %v10632, %v10631
  %v10644 = vsel %vm10096, %v10611, 0
  %v10647 = vsel %vm10096, %v10612, 0
  %10649 = vmatprep.subr.bf16.mxu0 0
  %10650 = vmatpush1.bf16.msra.mxu0 %v10633
  %10651 = vmatprep.subr.bf16.mxu0 0
  %10652 = vmatpush1.bf16.msra.mxu0 %v10634
  %10653 = vmatprep.subr.bf16.mxu0 0
  %10654 = vmatpush1.bf16.msra.mxu0 %v10635
  %10655 = vmatprep.subr.bf16.mxu0 0
  %10656 = vmatpush1.bf16.msra.mxu0 %v10636
  %10657 = vmatprep.subr.bf16.mxu0 0
  %10658 = vmatpush1.bf16.msra.mxu0 %v10637
  %10659 = vmatprep.subr.bf16.mxu0 0
  %10660 = vmatpush1.bf16.msra.mxu0 0
  %10661 = vmatprep.subr.bf16.mxu0 0
  %10662 = vmatpush1.bf16.msra.mxu0 0
  %10663 = vmatprep.subr.bf16.mxu0 0
  %10664 = vmatpush1.bf16.msra.mxu0 0
  %10665 = vmatprep.subr.bf16.mxu0 0
  %10666 = vmatpush1.bf16.msra.mxu0 0
  %10667 = vmatprep.subr.bf16.mxu0 0
  %10668 = vmatpush1.bf16.msra.mxu0 0
  %10669 = vmatprep.subr.bf16.mxu0 0
  %10670 = vmatpush1.bf16.msra.mxu0 0
  %10671 = vmatprep.subr.bf16.mxu0 0
  %10672 = vmatpush1.bf16.msra.mxu0 0
  %10673 = vmatprep.subr.bf16.mxu0 0
  %10674 = vmatpush1.bf16.msra.mxu0 0
  %10675 = vmatprep.subr.bf16.mxu0 0
  %10676 = vmatpush1.bf16.msra.mxu0 0
  %10677 = vmatprep.subr.bf16.mxu0 0
  %10678 = vmatpush1.bf16.msra.mxu0 0
  %10679 = vmatprep.subr.bf16.mxu0 0
  %10680 = vmatpush1.bf16.msra.mxu0 0
  %10681 = vmatprep.mubr.bf16.mxu0 0
  %10682 = vmatmul.mubr.bf16.gmra.mrb[0].mxu0 %v10644
  %v10683 = vpop.f32.mrb[0].mxu0
  %v10684 = vadd.f32 0.0, %v10683
  %v10685 = vpop.f32.mrb[0].mxu0
  %v10686 = vpop.f32.mrb[0].mxu0
  %v10687 = vadd.f32 0.0, %v10686
  %v10688 = vpop.f32.mrb[0].mxu0
  %10689 = vmatprep.mubr.bf16.mxu0 0
  %10690 = vmatmul.mubr.bf16.gmra.mrb[0].mxu0 %v10647
  %v10691 = vpop.f32.mrb[0].mxu0
  %v10692 = vadd.f32 0.0, %v10691
  %v10693 = vpop.f32.mrb[0].mxu0
  %v10694 = vpop.f32.mrb[0].mxu0
  %v10695 = vadd.f32 0.0, %v10694
  %v10696 = vpop.f32.mrb[0].mxu0
  %10697 = vdwg.mxu0
  %v10698 = vadd.f32 %v10518, %v10684
  %v10699 = vadd.f32 %v10519, %v10687
  %v10700 = vadd.f32 %v10520, %v10692
  %v10701 = vadd.f32 %v10521, %v10695
  %s10702 = scalar_lea.vmem %s9, 128
  %v10703 = vld [vmem:[%s10702] sm:$0xff]
  %v10704 = vld [vmem:[%s10702 + $0x8] sm:$0xff]
  %v10705 = vld [vmem:[%s10702 + $0x10] sm:$0xff]
  %v10706 = vld [vmem:[%s10702 + $0x18] sm:$0xff]
  %v10711 = vunpack.c.l.b16 %v10703
  %v10712 = vunpack.c.h.b16 %v10703
  %v10713 = vunpack.c.l.b16 %v10704
  %v10714 = vunpack.c.h.b16 %v10704
  %v10715 = vunpack.c.l.b16 %v10705
  %v10716 = vunpack.c.h.b16 %v10705
  %v10717 = vunpack.c.l.b16 %v10706
  %v10718 = vunpack.c.h.b16 %v10706
  %v10719 = vpack.c.b16 %v10713, %v10711
  %v10720 = vpack.c.b16 %v10714, %v10712
  %v10721 = vpack.c.b16 %v10717, %v10715
  %v10722 = vpack.c.b16 %v10718, %v10716
  %v10726 = vsel %vm890, %v10720, 0
  %v10729 = vsel %vm890, %v10722, 0
  %10731 = vmatprep.subr.bf16.mxu0 0
  %10732 = vmatpush1.bf16.msra.mxu0 %v9966
  %10733 = vmatprep.subr.bf16.mxu0 0
  %10734 = vmatpush1.bf16.msra.mxu0 %v9967
  %10735 = vmatprep.subr.bf16.mxu0 0
  %10736 = vmatpush1.bf16.msra.mxu0 %v9968
  %10737 = vmatprep.subr.bf16.mxu0 0
  %10738 = vmatpush1.bf16.msra.mxu0 %v9969
  %10739 = vmatprep.subr.bf16.mxu0 0
  %10740 = vmatpush1.bf16.msra.mxu0 %v9970
  %10741 = vmatprep.subr.bf16.mxu0 0
  %10742 = vmatpush1.bf16.msra.mxu0 %v9971
  %10743 = vmatprep.subr.bf16.mxu0 0
  %10744 = vmatpush1.bf16.msra.mxu0 %v9972
  %10745 = vmatprep.subr.bf16.mxu0 0
  %10746 = vmatpush1.bf16.msra.mxu0 %v9973
  %10747 = vmatprep.subr.bf16.mxu0 0
  %10748 = vmatpush1.bf16.msra.mxu0 %v9974
  %10749 = vmatprep.subr.bf16.mxu0 0
  %10750 = vmatpush1.bf16.msra.mxu0 %v9975
  %10751 = vmatprep.subr.bf16.mxu0 0
  %10752 = vmatpush1.bf16.msra.mxu0 0
  %10753 = vmatprep.subr.bf16.mxu0 0
  %10754 = vmatpush1.bf16.msra.mxu0 0
  %10755 = vmatprep.subr.bf16.mxu0 0
  %10756 = vmatpush1.bf16.msra.mxu0 0
  %10757 = vmatprep.subr.bf16.mxu0 0
  %10758 = vmatpush1.bf16.msra.mxu0 0
  %10759 = vmatprep.subr.bf16.mxu0 0
  %10760 = vmatpush1.bf16.msra.mxu0 0
  %10761 = vmatprep.subr.bf16.mxu0 0
  %10762 = vmatpush1.bf16.msra.mxu0 0
  %10763 = vmatprep.mubr.bf16.mxu0 %v10726
  %10764 = vmatmul.mubr.bf16.gmra.mrb[0].mxu0 %v10719
  %v10765 = vpop.f32.mrb[0].mxu0
  %v10766 = vadd.f32 0.0, %v10765
  %v10767 = vpop.f32.mrb[0].mxu0
  %v10768 = vpop.f32.mrb[0].mxu0
  %v10769 = vadd.f32 0.0, %v10768
  %v10770 = vpop.f32.mrb[0].mxu0
  %10771 = vmatprep.mubr.bf16.mxu0 %v10729
  %10772 = vmatmul.mubr.bf16.gmra.mrb[0].mxu0 %v10721
  %v10773 = vpop.f32.mrb[0].mxu0
  %v10774 = vadd.f32 0.0, %v10773
  %v10775 = vpop.f32.mrb[0].mxu0
  %v10776 = vpop.f32.mrb[0].mxu0
  %v10777 = vadd.f32 0.0, %v10776
  %v10778 = vpop.f32.mrb[0].mxu0
  %10779 = vdwg.mxu0
  %s10780 = scalar_lea.vmem %s10, 160
  %v10781 = vld [vmem:[%s10780] sm:$0xf]
  %v10782 = vld [vmem:[%s10780 + $0x4] sm:$0xf]
  %v10783 = vld [vmem:[%s10780 + $0x8] sm:$0xf]
  %v10784 = vld [vmem:[%s10780 + $0xc] sm:$0xf]
  %v10785 = vld [vmem:[%s10780 + $0x10] sm:$0xf]
  %v10786 = vld [vmem:[%s10780 + $0x14] sm:$0xf]
  %v10787 = vld [vmem:[%s10780 + $0x18] sm:$0xf]
  %v10788 = vld [vmem:[%s10780 + $0x1c] sm:$0xf]
  %v10789 = vld [vmem:[%s10780 + $0x20] sm:$0xf]
  %v10790 = vld [vmem:[%s10780 + $0x24] sm:$0xf]
  %v10791 = vpack.c.bf16 %v10769, %v10766
  %v10792 = vpack.c.bf16 %v10777, %v10774
  %v10803 = vunpack.c.l.b16 %v10781
  %v10804 = vunpack.c.l.b16 %v10782
  %v10805 = vunpack.c.l.b16 %v10783
  %v10806 = vunpack.c.l.b16 %v10784
  %v10807 = vunpack.c.l.b16 %v10785
  %v10808 = vunpack.c.l.b16 %v10786
  %v10809 = vunpack.c.l.b16 %v10787
  %v10810 = vunpack.c.l.b16 %v10788
  %v10811 = vunpack.c.l.b16 %v10789
  %v10812 = vunpack.c.l.b16 %v10790
  %v10813 = vpack.c.b16 %v10804, %v10803
  %v10814 = vpack.c.b16 %v10806, %v10805
  %v10815 = vpack.c.b16 %v10808, %v10807
  %v10816 = vpack.c.b16 %v10810, %v10809
  %v10817 = vpack.c.b16 %v10812, %v10811
  %v10824 = vsel %vm10096, %v10791, 0
  %v10827 = vsel %vm10096, %v10792, 0
  %10829 = vmatprep.subr.bf16.mxu0 0
  %10830 = vmatpush1.bf16.msra.mxu0 %v10813
  %10831 = vmatprep.subr.bf16.mxu0 0
  %10832 = vmatpush1.bf16.msra.mxu0 %v10814
  %10833 = vmatprep.subr.bf16.mxu0 0
  %10834 = vmatpush1.bf16.msra.mxu0 %v10815
  %10835 = vmatprep.subr.bf16.mxu0 0
  %10836 = vmatpush1.bf16.msra.mxu0 %v10816
  %10837 = vmatprep.subr.bf16.mxu0 0
  %10838 = vmatpush1.bf16.msra.mxu0 %v10817
  %10839 = vmatprep.subr.bf16.mxu0 0
  %10840 = vmatpush1.bf16.msra.mxu0 0
  %10841 = vmatprep.subr.bf16.mxu0 0
  %10842 = vmatpush1.bf16.msra.mxu0 0
  %10843 = vmatprep.subr.bf16.mxu0 0
  %10844 = vmatpush1.bf16.msra.mxu0 0
  %10845 = vmatprep.subr.bf16.mxu0 0
  %10846 = vmatpush1.bf16.msra.mxu0 0
  %10847 = vmatprep.subr.bf16.mxu0 0
  %10848 = vmatpush1.bf16.msra.mxu0 0
  %10849 = vmatprep.subr.bf16.mxu0 0
  %10850 = vmatpush1.bf16.msra.mxu0 0
  %10851 = vmatprep.subr.bf16.mxu0 0
  %10852 = vmatpush1.bf16.msra.mxu0 0
  %10853 = vmatprep.subr.bf16.mxu0 0
  %10854 = vmatpush1.bf16.msra.mxu0 0
  %10855 = vmatprep.subr.bf16.mxu0 0
  %10856 = vmatpush1.bf16.msra.mxu0 0
  %10857 = vmatprep.subr.bf16.mxu0 0
  %10858 = vmatpush1.bf16.msra.mxu0 0
  %10859 = vmatprep.subr.bf16.mxu0 0
  %10860 = vmatpush1.bf16.msra.mxu0 0
  %10861 = vmatprep.mubr.bf16.mxu0 0
  %10862 = vmatmul.mubr.bf16.gmra.mrb[0].mxu0 %v10824
  %v10863 = vpop.f32.mrb[0].mxu0
  %v10864 = vadd.f32 0.0, %v10863
  %v10865 = vpop.f32.mrb[0].mxu0
  %v10866 = vpop.f32.mrb[0].mxu0
  %v10867 = vadd.f32 0.0, %v10866
  %v10868 = vpop.f32.mrb[0].mxu0
  %10869 = vmatprep.mubr.bf16.mxu0 0
  %10870 = vmatmul.mubr.bf16.gmra.mrb[0].mxu0 %v10827
  %v10871 = vpop.f32.mrb[0].mxu0
  %v10872 = vadd.f32 0.0, %v10871
  %v10873 = vpop.f32.mrb[0].mxu0
  %v10874 = vpop.f32.mrb[0].mxu0
  %v10875 = vadd.f32 0.0, %v10874
  %v10876 = vpop.f32.mrb[0].mxu0
  %10877 = vdwg.mxu0
  %v10878 = vadd.f32 %v10698, %v10864
  %v10879 = vadd.f32 %v10699, %v10867
  %v10880 = vadd.f32 %v10700, %v10872
  %v10881 = vadd.f32 %v10701, %v10875
  %v10882 = vtanh.pop %v10878
  %v10883 = vtanh.pop %v10879
  %v10884 = vtanh.pop %v10880
  %v10885 = vtanh.pop %v10881
  %v10886 = vld [vmem:[%s12] sm:$0xf]
  %v10887 = vld [vmem:[%s12 + $0x4] sm:$0xf]
  %v10888 = vld [vmem:[%s12 + $0x8] sm:$0xf]
  %v10889 = vld [vmem:[%s12 + $0xc] sm:$0xf]
  %v10890 = vld [vmem:[%s12 + $0x10] sm:$0xf]
  %v10891 = vld [vmem:[%s12 + $0x14] sm:$0xf]
  %v10892 = vld [vmem:[%s12 + $0x18] sm:$0xf]
  %v10893 = vld [vmem:[%s12 + $0x1c] sm:$0xf]
  %v10894 = vld [vmem:[%s12 + $0x20] sm:$0xf]
  %v10895 = vld [vmem:[%s12 + $0x24] sm:$0xf]
  %v10896 = vld [vmem:[%s12 + $0x28] sm:$0xf]
  %v10897 = vld [vmem:[%s12 + $0x2c] sm:$0xf]
  %v10898 = vld [vmem:[%s12 + $0x30] sm:$0xf]
  %v10899 = vld [vmem:[%s12 + $0x34] sm:$0xf]
  %v10900 = vld [vmem:[%s12 + $0x38] sm:$0xf]
  %v10901 = vpack.c.bf16 %v10883, %v10882
  %v10902 = vpack.c.bf16 %v10885, %v10884
  %v10903 = vld [vmem:[%s13] sm:$0x1]
  %v10905 = vlaneseq
  %v10906 = vshrl.u32 %v10905, 7
  %v10907 = vsub.s32 0, %v10906
  %v10908 = vrot.slane %v10903, %v10907
  %v10925 = vunpack.c.l.b16 %v10886
  %v10926 = vunpack.c.l.b16 %v10887
  %v10927 = vunpack.c.l.b16 %v10888
  %v10928 = vunpack.c.l.b16 %v10889
  %v10929 = vunpack.c.l.b16 %v10890
  %v10930 = vunpack.c.l.b16 %v10891
  %v10931 = vunpack.c.l.b16 %v10892
  %v10932 = vunpack.c.l.b16 %v10893
  %v10933 = vunpack.c.l.b16 %v10894
  %v10934 = vunpack.c.l.b16 %v10895
  %v10935 = vunpack.c.l.b16 %v10896
  %v10936 = vunpack.c.l.b16 %v10897
  %v10937 = vunpack.c.l.b16 %v10898
  %v10938 = vunpack.c.l.b16 %v10899
  %v10939 = vunpack.c.l.b16 %v10900
  %v10940 = vpack.c.b16 %v10926, %v10925
  %v10941 = vpack.c.b16 %v10928, %v10927
  %v10942 = vpack.c.b16 %v10930, %v10929
  %v10943 = vpack.c.b16 %v10932, %v10931
  %v10944 = vpack.c.b16 %v10934, %v10933
  %v10945 = vpack.c.b16 %v10936, %v10935
  %v10946 = vpack.c.b16 %v10938, %v10937
  %v10947 = vpack.c.b16 %v10939, %v10939
  %vm10955 = vcmask 982016
  %v10957 = vsel %vm10955, %v10901, 0
  %v10960 = vsel %vm10955, %v10902, 0
  %v10963 = vsel %vm2417, %v10947, 0
  %10965 = vmatprep.subr.bf16.mxu0 0
  %10966 = vmatpush1.bf16.msra.mxu0 %v10940
  %10967 = vmatprep.subr.bf16.mxu0 0
  %10968 = vmatpush1.bf16.msra.mxu0 %v10941
  %10969 = vmatprep.subr.bf16.mxu0 0
  %10970 = vmatpush1.bf16.msra.mxu0 %v10942
  %10971 = vmatprep.subr.bf16.mxu0 0
  %10972 = vmatpush1.bf16.msra.mxu0 %v10943
  %10973 = vmatprep.subr.bf16.mxu0 0
  %10974 = vmatpush1.bf16.msra.mxu0 %v10944
  %10975 = vmatprep.subr.bf16.mxu0 0
  %10976 = vmatpush1.bf16.msra.mxu0 %v10945
  %10977 = vmatprep.subr.bf16.mxu0 0
  %10978 = vmatpush1.bf16.msra.mxu0 %v10946
  %10979 = vmatprep.subr.bf16.mxu0 0
  %10980 = vmatpush1.bf16.msra.mxu0 %v10963
  %10981 = vmatprep.subr.bf16.mxu0 0
  %10982 = vmatpush1.bf16.msra.mxu0 0
  %10983 = vmatprep.subr.bf16.mxu0 0
  %10984 = vmatpush1.bf16.msra.mxu0 0
  %10985 = vmatprep.subr.bf16.mxu0 0
  %10986 = vmatpush1.bf16.msra.mxu0 0
  %10987 = vmatprep.subr.bf16.mxu0 0
  %10988 = vmatpush1.bf16.msra.mxu0 0
  %10989 = vmatprep.subr.bf16.mxu0 0
  %10990 = vmatpush1.bf16.msra.mxu0 0
  %10991 = vmatprep.subr.bf16.mxu0 0
  %10992 = vmatpush1.bf16.msra.mxu0 0
  %10993 = vmatprep.subr.bf16.mxu0 0
  %10994 = vmatpush1.bf16.msra.mxu0 0
  %10995 = vmatprep.subr.bf16.mxu0 0
  %10996 = vmatpush1.bf16.msra.mxu0 0
  %10997 = vmatprep.mubr.bf16.mxu0 0
  %10998 = vmatmul.mubr.bf16.gmra.mrb[0].mxu0 %v10957
  %v10999 = vpop.f32.mrb[0].mxu0
  %v11000 = vadd.f32 %v10908, %v10999
  %v11001 = vpop.f32.mrb[0].mxu0
  %v11002 = vpop.f32.mrb[0].mxu0
  %v11003 = vadd.f32 %v10908, %v11002
  %v11004 = vpop.f32.mrb[0].mxu0
  %11005 = vmatprep.mubr.bf16.mxu0 0
  %11006 = vmatmul.mubr.bf16.gmra.mrb[0].mxu0 %v10960
  %v11007 = vpop.f32.mrb[0].mxu0
  %v11008 = vadd.f32 %v10908, %v11007
  %v11009 = vpop.f32.mrb[0].mxu0
  %v11010 = vpop.f32.mrb[0].mxu0
  %v11011 = vadd.f32 %v10908, %v11010
  %v11012 = vpop.f32.mrb[0].mxu0
  %11013 = vdwg.mxu0
  %v11014 = vtanh.pop %v11000
  %v11015 = vtanh.pop %v11003
  %v11016 = vtanh.pop %v11008
  %v11017 = vtanh.pop %v11011
  %v11018 = vld [vmem:[%s14] sm:$0xf]
  %v11019 = vld [vmem:[%s14 + $0x4] sm:$0xf]
  %v11020 = vld [vmem:[%s14 + $0x8] sm:$0xf]
  %v11021 = vld [vmem:[%s14 + $0xc] sm:$0xf]
  %v11022 = vld [vmem:[%s14 + $0x10] sm:$0xf]
  %v11023 = vld [vmem:[%s14 + $0x14] sm:$0xf]
  %v11024 = vld [vmem:[%s14 + $0x18] sm:$0xf]
  %v11025 = vld [vmem:[%s14 + $0x1c] sm:$0xf]
  %v11026 = vld [vmem:[%s14 + $0x20] sm:$0xf]
  %v11027 = vld [vmem:[%s14 + $0x24] sm:$0xf]
  %v11028 = vld [vmem:[%s14 + $0x28] sm:$0x3]
  %v11029 = vpack.c.bf16 %v11015, %v11014
  %v11030 = vpack.c.bf16 %v11017, %v11016
  %v11031 = vld [vmem:[%s15] sm:$0x1]
  %v11033 = vlaneseq
  %v11034 = vshrl.u32 %v11033, 7
  %v11035 = vsub.s32 0, %v11034
  %v11036 = vrot.slane %v11031, %v11035
  %v11049 = vunpack.c.l.b16 %v11018
  %v11050 = vunpack.c.l.b16 %v11019
  %v11051 = vunpack.c.l.b16 %v11020
  %v11052 = vunpack.c.l.b16 %v11021
  %v11053 = vunpack.c.l.b16 %v11022
  %v11054 = vunpack.c.l.b16 %v11023
  %v11055 = vunpack.c.l.b16 %v11024
  %v11056 = vunpack.c.l.b16 %v11025
  %v11057 = vunpack.c.l.b16 %v11026
  %v11058 = vunpack.c.l.b16 %v11027
  %v11059 = vunpack.c.l.b16 %v11028
  %v11060 = vpack.c.b16 %v11050, %v11049
  %v11061 = vpack.c.b16 %v11052, %v11051
  %v11062 = vpack.c.b16 %v11054, %v11053
  %v11063 = vpack.c.b16 %v11056, %v11055
  %v11064 = vpack.c.b16 %v11058, %v11057
  %v11065 = vpack.c.b16 %v11059, %v11059
  %v11072 = vsel %vm5462, %v11029, 0
  %v11075 = vsel %vm5462, %v11030, 0
  %v11078 = vsel %vm5755, %v11065, 0
  %11080 = vmatprep.subr.bf16.mxu0 0
  %11081 = vmatpush1.bf16.msra.mxu0 %v11060
  %11082 = vmatprep.subr.bf16.mxu0 0
  %11083 = vmatpush1.bf16.msra.mxu0 %v11061
  %11084 = vmatprep.subr.bf16.mxu0 0
  %11085 = vmatpush1.bf16.msra.mxu0 %v11062
  %11086 = vmatprep.subr.bf16.mxu0 0
  %11087 = vmatpush1.bf16.msra.mxu0 %v11063
  %11088 = vmatprep.subr.bf16.mxu0 0
  %11089 = vmatpush1.bf16.msra.mxu0 %v11064
  %11090 = vmatprep.subr.bf16.mxu0 0
  %11091 = vmatpush1.bf16.msra.mxu0 %v11078
  %11092 = vmatprep.subr.bf16.mxu0 0
  %11093 = vmatpush1.bf16.msra.mxu0 0
  %11094 = vmatprep.subr.bf16.mxu0 0
  %11095 = vmatpush1.bf16.msra.mxu0 0
  %11096 = vmatprep.subr.bf16.mxu0 0
  %11097 = vmatpush1.bf16.msra.mxu0 0
  %11098 = vmatprep.subr.bf16.mxu0 0
  %11099 = vmatpush1.bf16.msra.mxu0 0
  %11100 = vmatprep.subr.bf16.mxu0 0
  %11101 = vmatpush1.bf16.msra.mxu0 0
  %11102 = vmatprep.subr.bf16.mxu0 0
  %11103 = vmatpush1.bf16.msra.mxu0 0
  %11104 = vmatprep.subr.bf16.mxu0 0
  %11105 = vmatpush1.bf16.msra.mxu0 0
  %11106 = vmatprep.subr.bf16.mxu0 0
  %11107 = vmatpush1.bf16.msra.mxu0 0
  %11108 = vmatprep.subr.bf16.mxu0 0
  %11109 = vmatpush1.bf16.msra.mxu0 0
  %11110 = vmatprep.subr.bf16.mxu0 0
  %11111 = vmatpush1.bf16.msra.mxu0 0
  %11112 = vmatprep.mubr.bf16.mxu0 0
  %11113 = vmatmul.mubr.bf16.gmra.mrb[0].mxu0 %v11072
  %v11114 = vpop.f32.mrb[0].mxu0
  %v11115 = vadd.f32 %v11036, %v11114
  %v11116 = vpop.f32.mrb[0].mxu0
  %v11117 = vpop.f32.mrb[0].mxu0
  %v11118 = vadd.f32 %v11036, %v11117
  %v11119 = vpop.f32.mrb[0].mxu0
  %11120 = vmatprep.mubr.bf16.mxu0 0
  %11121 = vmatmul.mubr.bf16.gmra.mrb[0].mxu0 %v11075
  %v11122 = vpop.f32.mrb[0].mxu0
  %v11123 = vadd.f32 %v11036, %v11122
  %v11124 = vpop.f32.mrb[0].mxu0
  %v11125 = vpop.f32.mrb[0].mxu0
  %v11126 = vadd.f32 %v11036, %v11125
  %v11127 = vpop.f32.mrb[0].mxu0
  %11128 = vdwg.mxu0
  %11129 = vst [vmem:[%s16] sm:$0xff] %v11115
  %11130 = vst [vmem:[%s16 + $0x8] sm:$0xff] %v11118
  %11131 = vst [vmem:[%s16 + $0x10] sm:$0xff] %v11123
  %11132 = vst [vmem:[%s16 + $0x18] sm:$0xff] %v11126
  // Predicated region
  $region66: #{lenet5_forward.1} parent=0 // pred_check
    _
  $region67: #{lenet5_forward.1} parent=0 // pred_check_branch
    %11134 = sbr.rel (0) target = $region69
  $region68: #{lenet5_forward.1} parent=0 // pred_region
    _
  $region69: #{lenet5_forward.1} parent=0 // pred_fallthru
    _
  // Predicated region
  $region70: #{lenet5_forward.1} parent=0 // pred_check
    _
  $region71: #{lenet5_forward.1} parent=0 // pred_check_branch
    %11136 = sbr.rel (0) target = $region73
  $region72: #{lenet5_forward.1} parent=0 // pred_region
    _
  $region73: #{lenet5_forward.1} parent=0 // pred_fallthru
    _

</llo_original>
